<compile_context>
chip_gen: v7x
topology: tpu7x:2x2x1
jax: 0.10.0
libtpu: 0.0.40
codegen_flags: <defaults>
</compile_context>

<pallas_src>
import functools
import math

import jax
import jax.numpy as jnp
from jax.experimental import pallas as pl
from jax.experimental.pallas import tpu as pltpu

BN_EPS = 1e-5
_INV_SQRT2 = 1.0 / math.sqrt(2.0)
_BN_SCALE = 1.0 / math.sqrt(1.0 + BN_EPS)
_MM_PRECISION = jax.lax.Precision.HIGHEST   # f32 parity with torch Linear


def _round_up(a, b):
    return (a + b - 1) // b * b


def _min_grid_steps():
    # v7x has two TensorCores per chip -> keep >= 8 "parallel" grid steps so
    # both get balanced work; single-TC v5e/v6e only need a few steps for
    # double-buffer overlap.
    try:
        kind = jax.devices()[0].device_kind.lower()
    except Exception:
        kind = ""
    return 8 if ("v7" in kind or "7x" in kind) else 4


def _make_kernel(valid_rows, rows_t, pack):
    """valid_rows / rows_t / pack are static Python ints (closed over).

    valid_rows: number of defined packed rows in the input array.
    rows_t    : packed rows per grid step.
    pack      : original rows per packed row (= 128 // C_in).
    """

    def kernel(x_ref, w1_ref, w2_ref, o_ref):
        # x_ref : (rows_t, 128)        lane-dense packed input rows
        # w1_ref: (128, pack*hidden)   block-diagonal in_ln weight
        # w2_ref: (pack*hidden, pack)  block-diagonal out_ln weight
        # o_ref : (rows_t, pack)       sigmoid output, flat row-major order
        x = x_ref[...].astype(jnp.float32)

        # in_ln for all `pack` packed rows at once (dense K=128 MXU matmul)
        h = jnp.dot(x, w1_ref[...].astype(jnp.float32),
                    preferred_element_type=jnp.float32,
                    precision=_MM_PRECISION)                  # (rows_t, pack*hid)

        # exact (erf-based) GELU -- matches torch nn.GELU() default
        h = 0.5 * h * (1.0 + jax.lax.erf(h * _INV_SQRT2))

        # dropout(0.5): identity in inference mode

        # out_ln, block-diagonal: yields one scalar per original row, already
        # in flat row-major order -- no transpose / relayout needed.
        y = jnp.dot(h, w2_ref[...].astype(jnp.float32),
                    preferred_element_type=jnp.float32,
                    precision=_MM_PRECISION)                  # (rows_t, pack)

        # BatchNorm2d(1, affine=False) eval with default running stats, then sigmoid
        y = jax.nn.sigmoid(y * _BN_SCALE)

        if valid_rows % rows_t:
            # Only the last grid step can see undefined rows (partial block
            # read); gate the mask there so full tiles pay nothing.
            last = pl.num_programs(0) - 1

            @pl.when(pl.program_id(0) == last)
            def _():
                row = (jax.lax.broadcasted_iota(jnp.int32, (rows_t, pack), 0)
                       + pl.program_id(0) * rows_t)
                o_ref[...] = jnp.where(row < valid_rows, y, 0.0).astype(o_ref.dtype)

            @pl.when(pl.program_id(0) != last)
            def _():
                o_ref[...] = y.astype(o_ref.dtype)
        else:
            o_ref[...] = y.astype(o_ref.dtype)

    return kernel


@functools.partial(jax.jit, static_argnames=("tile_rows",))
def mlp_forward(x, w_in, w_out, tile_rows=256):
    """x: (B, H, W, C_in) f32; w_in: (hidden, C_in); w_out: (1, hidden).
    Returns (B, 1, H, W) matching the torch module's output."""
    B, H, W, Cin = x.shape
    hidden, cin_w = w_in.shape
    assert cin_w == Cin and w_out.shape == (1, hidden)
    # TODO(synk): lane-packing path requires C_in | 128; other widths would
    #             need a different pack factor / un-packed fallback.
    assert 128 % Cin == 0, "in_channels must divide 128 for the packed path"
    pack = 128 // Cin

    N = B * H * W
    total = N * Cin
    # Pad the flat element count to a multiple of 128*8 so the packed view has
    # >= 8 sublane rows; a no-op (no copy) for typical shapes incl. the demo.
    total_pad = _round_up(total, 128 * 8)
    flat = x.reshape(-1)
    if total_pad != total:
        flat = jnp.pad(flat, (0, total_pad - total))
    xp = flat.reshape(total_pad // 128, 128)        # free reshape, lane-dense
    R = xp.shape[0]                                 # packed rows (multiple of 8)

    # Block-diagonal folded weights (built once per call; tiny: <=640 KiB f32).
    w1p = jnp.kron(jnp.eye(pack, dtype=jnp.float32),
                   w_in.T.astype(jnp.float32))      # (128, pack*hidden)
    w2p = jnp.kron(jnp.eye(pack, dtype=jnp.float32),
                   w_out.T.astype(jnp.float32))     # (pack*hidden, pack)
    kh = pack * hidden

    # Tile sizing: big tiles amortize the ~0.35us/step overhead; cap so the
    # grid keeps enough steps for the available TensorCores.
    cap = max(8, _round_up(pl.cdiv(R, _min_grid_steps()), 8))
    rows_t = max(8, min(_round_up(tile_rows, 8), cap, R))
    G = pl.cdiv(R, rows_t)

    out = pl.pallas_call(
        _make_kernel(R, rows_t, pack),
        out_shape=jax.ShapeDtypeStruct((G * rows_t, pack), x.dtype),
        grid_spec=pltpu.PrefetchScalarGridSpec(
            num_scalar_prefetch=0,
            grid=(G,),
            in_specs=[
                pl.BlockSpec((rows_t, 128), lambda i: (i, 0)),
                # constant block index -> weights DMA'd to VMEM once, not per step
                pl.BlockSpec((128, kh), lambda i: (0, 0)),
                pl.BlockSpec((kh, pack), lambda i: (0, 0)),
            ],
            out_specs=pl.BlockSpec((rows_t, pack), lambda i: (i, 0)),
        ),
        compiler_params=pltpu.CompilerParams(
            dimension_semantics=("parallel",),
            vmem_limit_bytes=32 * 1024 * 1024),
        cost_estimate=pl.CostEstimate(
            flops=2 * N * Cin * hidden + 6 * N * hidden,
            transcendentals=N * hidden + N,
            bytes_accessed=4 * (N * Cin + N + 128 * kh + kh * pack)),
    )(xp, w1p, w2p)

    y = out.reshape(-1)[:N].reshape(B, H, W)        # free reshape/slice
    return y[:, None, :, :]                         # (B, 1, H, W)


if __name__ == "__main__":
    key = jax.random.PRNGKey(0)
    k_x, k_w1, k_w2 = jax.random.split(key, 3)

    B, Himg, Wimg = 2, 16, 16
    in_channels, hidden_channels, out_channels = 4, 32, 1

    x = jax.random.normal(k_x, (B, Himg, Wimg, in_channels), dtype=jnp.float32)

    # nn.Linear weight layout: (out_features, in_features)
    bound1 = 1.0 / math.sqrt(in_channels)
    w_in = jax.random.uniform(k_w1, (hidden_channels, in_channels),
                              minval=-bound1, maxval=bound1, dtype=jnp.float32)
    bound2 = 1.0 / math.sqrt(hidden_channels)
    w_out = jax.random.uniform(k_w2, (out_channels, hidden_channels),
                               minval=-bound2, maxval=bound2, dtype=jnp.float32)

    out = jax.block_until_ready(mlp_forward(x, w_in, w_out))
    assert out.shape == (B, 1, Himg, Wimg)
    assert bool(jnp.all(jnp.isfinite(out)))

    # plain-JAX reference of the same eval-mode math
    h = jnp.dot(x.reshape(-1, in_channels), w_in.T, precision=_MM_PRECISION)
    h = 0.5 * h * (1.0 + jax.lax.erf(h * _INV_SQRT2))
    yr = jnp.dot(h, w_out.T, precision=_MM_PRECISION)[:, 0] * _BN_SCALE
    ref = jax.nn.sigmoid(yr).reshape(B, Himg, Wimg)[:, None, :, :]
    assert bool(jnp.allclose(out, ref, atol=1e-5, rtol=1e-5))

    print("KERNEL_OK")
</pallas_src>

<mosaic_0001>
module attributes {stable_mosaic.version = 11 : i64} {
  func.func @kernel(%arg0: i32, %arg1: memref<8x128xf32, #tpu.memory_space<vmem>>, %arg2: memref<128x1024xf32, #tpu.memory_space<vmem>>, %arg3: memref<1024x32xf32, #tpu.memory_space<vmem>>, %arg4: memref<8x32xf32, #tpu.memory_space<vmem>>) attributes {dimension_semantics = [#tpu.dimension_semantics<parallel>], iteration_bounds = array<i64: 2>, scalar_prefetch = 0 : i64, scratch_operands = 0 : i64, tpu.core_type = #tpu.core_type<tc>, window_params = [{transform_indices = @transform_0, window_bounds = array<i64: 8, 128>}, {pipeline_mode = #tpu.pipeline_mode<synchronous>, transform_indices = @transform_1, window_bounds = array<i64: 128, 1024>}, {pipeline_mode = #tpu.pipeline_mode<synchronous>, transform_indices = @transform_2, window_bounds = array<i64: 1024, 32>}, {transform_indices = @transform_3, window_bounds = array<i64: 8, 32>}]} {
    %c0 = arith.constant 0 : index
    %c0_0 = arith.constant 0 : index
    %0 = vector.load %arg1[%c0, %c0_0] : memref<8x128xf32, #tpu.memory_space<vmem>>, vector<8x128xf32>
    %c0_1 = arith.constant 0 : index
    %c0_2 = arith.constant 0 : index
    %1 = vector.load %arg2[%c0_1, %c0_2] : memref<128x1024xf32, #tpu.memory_space<vmem>>, vector<128x1024xf32>
    %cst = arith.constant dense<0.000000e+00> : vector<8x1024xf32>
    %2 = tpu.matmul %0, %1, %cst {dimension_numbers = #tpu.dot_dimension_numbers<[1], [0], [0], [1], [0, 0, 1, 1], [], []>, precision = #tpu.contract_precision<fp32>} : vector<8x128xf32>, vector<128x1024xf32>, vector<8x1024xf32> -> vector<8x1024xf32>
    %cst_3 = arith.constant 5.000000e-01 : f32
    %3 = vector.broadcast %cst_3 : f32 to vector<8x1024xf32>
    %4 = arith.mulf %3, %2 : vector<8x1024xf32>
    %cst_4 = arith.constant 0.707106769 : f32
    %5 = vector.broadcast %cst_4 : f32 to vector<8x1024xf32>
    %6 = arith.mulf %2, %5 : vector<8x1024xf32>
    %7 = math.erf %6 : vector<8x1024xf32>
    %cst_5 = arith.constant 1.000000e+00 : f32
    %8 = vector.broadcast %cst_5 : f32 to vector<8x1024xf32>
    %9 = arith.addf %8, %7 : vector<8x1024xf32>
    %10 = arith.mulf %4, %9 : vector<8x1024xf32>
    %c0_6 = arith.constant 0 : index
    %c0_7 = arith.constant 0 : index
    %11 = vector.load %arg3[%c0_6, %c0_7] : memref<1024x32xf32, #tpu.memory_space<vmem>>, vector<1024x32xf32>
    %cst_8 = arith.constant dense<0.000000e+00> : vector<8x32xf32>
    %12 = tpu.matmul %10, %11, %cst_8 {dimension_numbers = #tpu.dot_dimension_numbers<[1], [0], [0], [1], [0, 0, 1, 1], [], []>, precision = #tpu.contract_precision<fp32>} : vector<8x1024xf32>, vector<1024x32xf32>, vector<8x32xf32> -> vector<8x32xf32>
    %cst_9 = arith.constant 0.999994993 : f32
    %13 = vector.broadcast %cst_9 : f32 to vector<8x32xf32>
    %14 = arith.mulf %12, %13 : vector<8x32xf32>
    %15 = arith.negf %14 : vector<8x32xf32>
    %16 = math.exp %15 : vector<8x32xf32>
    %cst_10 = arith.constant 1.000000e+00 : f32
    %17 = vector.broadcast %cst_10 : f32 to vector<8x32xf32>
    %18 = arith.addf %17, %16 : vector<8x32xf32>
    %19 = arith.divf %17, %18 : vector<8x32xf32>
    %c0_11 = arith.constant 0 : index
    %c0_12 = arith.constant 0 : index
    %20 = vector.load %arg4[%c0_11, %c0_12] : memref<8x32xf32, #tpu.memory_space<vmem>>, vector<8x32xf32>
    tpu.vector_store %arg4[%c0_11, %c0_12], %19 {strides = array<i32>} : memref<8x32xf32, #tpu.memory_space<vmem>>, vector<8x32xf32>,
    return
  }
  func.func @transform_0(%arg0: i32) -> (i32, i32) {
    %c0_i32 = arith.constant 0 : i32
    %c0_i32_0 = arith.constant 0 : i32
    return %arg0, %c0_i32 : i32, i32
  }
  func.func @transform_1(%arg0: i32) -> (i32, i32) {
    %c0_i32 = arith.constant 0 : i32
    %c0_i32_0 = arith.constant 0 : i32
    %c0_i32_1 = arith.constant 0 : i32
    return %c0_i32, %c0_i32_0 : i32, i32
  }
  func.func @transform_2(%arg0: i32) -> (i32, i32) {
    %c0_i32 = arith.constant 0 : i32
    %c0_i32_0 = arith.constant 0 : i32
    %c0_i32_1 = arith.constant 0 : i32
    return %c0_i32, %c0_i32_0 : i32, i32
  }
  func.func @transform_3(%arg0: i32) -> (i32, i32) {
    %c0_i32 = arith.constant 0 : i32
    %c0_i32_0 = arith.constant 0 : i32
    return %arg0, %c0_i32 : i32, i32
  }
}

</mosaic_0001>

<llo_original>
// kernel: mlp_forward.1
$region0: #{mlp_forward.1}
  #allocation0 [shape = 'u32[]', space=smem, size = 0x4, offset = 0x4, fixed_abs, tag = 'smem constant byte address 0x4 - core index']
  #allocation1 [shape = 'u32[144,128]{1,0:T(1,128)}', space=vmem, size = 0x12000, scoped, tag = 'internal scratch']
  %s0 = inlined_call_operand.vmem [shape: f32[16,128], index: 0, kind: input, shape index: {}]
  %s1 = inlined_call_operand.vmem [shape: f32[128,1024], index: 1, kind: input, shape index: {}]
  %s2 = inlined_call_operand.vmem [shape: f32[1024,32], index: 2, kind: input, shape index: {}]
  %s3 = inlined_call_operand.vmem [shape: f32[16,32], index: 3, kind: output, shape index: {}]
  %s4 = sld [smem:[#allocation0]]
  $region45: #{mlp_forward.1} parent=0
    _
  %s6 = ssub.s32 1, %s4
  %s7 = scalar_select 0, %s6, %s4
  loop: start=0, step=1, limit=4
  $region2: #{mlp_forward.1} parent=0 // loop_pre_header
    _
  $region3: #{mlp_forward.1} parent=0 // loop_header
    %s9 = sphi 0, %s13
    %p10 = scmp.ge.s32.totalorder %s9, 4
    %s19 = sphi 0, %s21
    %s22 = sphi 0, %s19
    %s23 = sphi 0, %s22
    %s39 = sphi 0, %s23
    %s43 = sphi 0, %s43
    %s45 = sphi 0, %s43
    %s46 = sphi 0, %s45
    %s60 = sphi 0, %s46
    %s64 = sphi 0, %s64
    %s66 = sphi 0, %s64
    %s67 = sphi 0, %s66
    %s81 = sphi 0, %s67
    %s87 = sphi 0, %s89
    %s90 = sphi 0, %s87
    %s91 = sphi 0, %s90
    %s107 = sphi 0, %s91
  $region4: #{mlp_forward.1} parent=0 // loop_header_branch
    %12 = sbr.rel (%p10) target = $region8
  $region5: #{mlp_forward.1} parent=0 // loop_body
    %s14 = ssub.s32 %s9, 1
    %s15 = ssub.s32 %s9, 2
    %s16 = sadd.s32 %s9, 1
    %s17 = ssub.s32 %s9, %s16
    %p18 = scmp.eq.s32.totalorder %s17, 0
    %s20 = sadd.s32 %s19, 1
    %s21 = scalar_select %p18, %s19, %s20
    %p24 = pneg %p18
    %p25 = scmp.eq.s32.totalorder %s9, 1
    %p26 = por %p24, %p25
    %p27 = scmp.ne.s32.totalorder %s19, %s22
    %p28 = scmp.eq.s32.totalorder %s9, 0
    %p29 = por %p27, %p28
    %p30 = scmp.ne.s32.totalorder %s19, %s22
    %p31 = scmp.eq.s32.totalorder %s14, 1
    %p32 = por %p30, %p31
    %p33 = scmp.ne.s32.totalorder %s22, %s23
    %p34 = scmp.eq.s32.totalorder %s14, 0
    %p35 = por %p33, %p34
    %p36 = scmp.ne.s32.totalorder %s22, %s23
    %p37 = scmp.eq.s32.totalorder %s15, 1
    %p38 = por %p36, %p37
    %p40 = scmp.ne.s32.totalorder %s23, %s39
    %p41 = scmp.eq.s32.totalorder %s15, 0
    %p42 = por %p40, %p41
    %s44 = sadd.s32 %s43, 1
    %p47 = scmp.eq.s32.totalorder %s9, 1
    %p48 = scmp.ne.s32.totalorder %s43, %s45
    %p49 = scmp.eq.s32.totalorder %s9, 0
    %p50 = por %p48, %p49
    %p51 = scmp.ne.s32.totalorder %s43, %s45
    %p52 = scmp.eq.s32.totalorder %s14, 1
    %p53 = por %p51, %p52
    %p54 = scmp.ne.s32.totalorder %s45, %s46
    %p55 = scmp.eq.s32.totalorder %s14, 0
    %p56 = por %p54, %p55
    %p57 = scmp.ne.s32.totalorder %s45, %s46
    %p58 = scmp.eq.s32.totalorder %s15, 1
    %p59 = por %p57, %p58
    %p61 = scmp.ne.s32.totalorder %s46, %s60
    %p62 = scmp.eq.s32.totalorder %s15, 0
    %p63 = por %p61, %p62
    %s65 = sadd.s32 %s64, 1
    %p68 = scmp.eq.s32.totalorder %s9, 1
    %p69 = scmp.ne.s32.totalorder %s64, %s66
    %p70 = scmp.eq.s32.totalorder %s9, 0
    %p71 = por %p69, %p70
    %p72 = scmp.ne.s32.totalorder %s64, %s66
    %p73 = scmp.eq.s32.totalorder %s14, 1
    %p74 = por %p72, %p73
    %p75 = scmp.ne.s32.totalorder %s66, %s67
    %p76 = scmp.eq.s32.totalorder %s14, 0
    %p77 = por %p75, %p76
    %p78 = scmp.ne.s32.totalorder %s66, %s67
    %p79 = scmp.eq.s32.totalorder %s15, 1
    %p80 = por %p78, %p79
    %p82 = scmp.ne.s32.totalorder %s67, %s81
    %p83 = scmp.eq.s32.totalorder %s15, 0
    %p84 = por %p82, %p83
    %s85 = ssub.s32 %s9, %s16
    %p86 = scmp.eq.s32.totalorder %s85, 0
    %s88 = sadd.s32 %s87, 1
    %s89 = scalar_select %p86, %s87, %s88
    %p92 = pneg %p86
    %p93 = scmp.eq.s32.totalorder %s9, 1
    %p94 = por %p92, %p93
    %p95 = scmp.ne.s32.totalorder %s87, %s90
    %p96 = scmp.eq.s32.totalorder %s9, 0
    %p97 = por %p95, %p96
    %p98 = scmp.ne.s32.totalorder %s87, %s90
    %p99 = scmp.eq.s32.totalorder %s14, 1
    %p100 = por %p98, %p99
    %p101 = scmp.ne.s32.totalorder %s90, %s91
    %p102 = scmp.eq.s32.totalorder %s14, 0
    %p103 = por %p101, %p102
    %p104 = scmp.ne.s32.totalorder %s90, %s91
    %p105 = scmp.eq.s32.totalorder %s15, 1
    %p106 = por %p104, %p105
    %p108 = scmp.ne.s32.totalorder %s91, %s107
    %p109 = scmp.eq.s32.totalorder %s15, 0
    %p110 = por %p108, %p109
    %p111 = scmp.le.s32.totalorder 1, %s9
    %p112 = scmp.lt.s32.totalorder %s9, 3
    %p113 = pnand %p111, %p112
    %p114 = pneg %p113
    // Predicated region
    $region9: #{mlp_forward.1} parent=5 // pred_check
      _
    $region10: #{mlp_forward.1} parent=5 // pred_check_branch
      %116 = sbr.rel (%p113) target = $region12
    $region11: #{mlp_forward.1} parent=5 // pred_region
      %s117 = ssub.s32 %s9, 1
      // Predicated region
      $region13: #{mlp_forward.1} parent=11 // pred_check
        %p118 = pneg %p56
      $region14: #{mlp_forward.1} parent=11 // pred_check_branch
        %120 = sbr.rel (%p118) target = $region16
      $region15: #{mlp_forward.1} parent=11 // pred_region
        _
      $region16: #{mlp_forward.1} parent=11 // pred_fallthru
        _
      // Predicated region
      $region17: #{mlp_forward.1} parent=11 // pred_check
        %p121 = pneg %p77
      $region18: #{mlp_forward.1} parent=11 // pred_check_branch
        %123 = sbr.rel (%p121) target = $region20
      $region19: #{mlp_forward.1} parent=11 // pred_region
        _
      $region20: #{mlp_forward.1} parent=11 // pred_fallthru
        _
    $region12: #{mlp_forward.1} parent=5 // pred_fallthru
      _
    %p124 = scmp.lt.s32.totalorder %s9, 2
    // Predicated region
    $region21: #{mlp_forward.1} parent=5 // pred_check
      %p125 = pneg %p124
    $region22: #{mlp_forward.1} parent=5 // pred_check_branch
      %127 = sbr.rel (%p125) target = $region24
    $region23: #{mlp_forward.1} parent=5 // pred_region
      // Predicated region
      $region25: #{mlp_forward.1} parent=23 // pred_check
        %p128 = pneg %p29
      $region26: #{mlp_forward.1} parent=23 // pred_check_branch
        %130 = sbr.rel (%p128) target = $region28
      $region27: #{mlp_forward.1} parent=23 // pred_region
        %p131 = scmp.lt.s32.totalorder %s9, 1
        %s132 = scalar_select %p131, %s9, 1
        %s133 = smul.addr %s132, 8
        %s134 = scalar_lea.vmem %s0, %s133
      $region28: #{mlp_forward.1} parent=23 // pred_fallthru
        _
    $region24: #{mlp_forward.1} parent=5 // pred_fallthru
      _
    %p135 = scmp.le.s32.totalorder 1, %s9
    %p136 = scmp.lt.s32.totalorder %s9, 3
    %p137 = pnand %p135, %p136
    %p138 = pneg %p137
    // Predicated region
    $region29: #{mlp_forward.1} parent=5 // pred_check
      _
    $region30: #{mlp_forward.1} parent=5 // pred_check_branch
      %140 = sbr.rel (%p137) target = $region32
    $region31: #{mlp_forward.1} parent=5 // pred_region
      %s141 = ssub.s32 %s9, 1
      %p142 = scmp.lt.s32.totalorder %s14, 1
      %s143 = scalar_select %p142, %s14, 1
      %s144 = smul.addr %s143, 8
      %s145 = scalar_lea.vmem %s0, %s144
      %p146 = pneg %p35
      %p147 = pneg %p32
      %p148 = pneg %p56
      %p149 = pneg %p53
      %p150 = pneg %p77
      %p151 = pneg %p74
      %p152 = pneg %p103
      %p153 = pneg %p100
      %p154 = scmp.lt.s32.totalorder %s14, 1
      %s155 = scalar_select %p154, %s14, 1
      %s156 = smul.addr %s155, 8
      %s157 = scalar_lea.vmem %s3, %s156
      %p158 = scmp.lt.s32.totalorder %s14, 1
      %s159 = scalar_select %p158, %s14, 1
      %s160 = smul.addr %s159, 8
      %s161 = scalar_lea.vmem %s0, %s160
      %p162 = scmp.lt.s32.totalorder %s14, 1
      %s163 = scalar_select %p162, %s14, 1
      %s164 = smul.addr %s163, 8
      %s165 = scalar_lea.vmem %s3, %s164
      %v166 = vld [vmem:[%s161] sm:$0xff]
      %v167 = vld [vmem:[%s1] sm:$0xff]
      %v168 = vld [vmem:[%s1 + $0x8] sm:$0xff]
      %v169 = vld [vmem:[%s1 + $0x10] sm:$0xff]
      %v170 = vld [vmem:[%s1 + $0x18] sm:$0xff]
      %v171 = vld [vmem:[%s1 + $0x20] sm:$0xff]
      %v172 = vld [vmem:[%s1 + $0x28] sm:$0xff]
      %v173 = vld [vmem:[%s1 + $0x30] sm:$0xff]
      %v174 = vld [vmem:[%s1 + $0x38] sm:$0xff]
      %v175 = vld [vmem:[%s1 + $0x40] sm:$0xff]
      %v176 = vld [vmem:[%s1 + $0x48] sm:$0xff]
      %v177 = vld [vmem:[%s1 + $0x50] sm:$0xff]
      %v178 = vld [vmem:[%s1 + $0x58] sm:$0xff]
      %v179 = vld [vmem:[%s1 + $0x60] sm:$0xff]
      %v180 = vld [vmem:[%s1 + $0x68] sm:$0xff]
      %v181 = vld [vmem:[%s1 + $0x70] sm:$0xff]
      %v182 = vld [vmem:[%s1 + $0x78] sm:$0xff]
      %v183 = vld [vmem:[%s1 + $0x80] sm:$0xff]
      %v184 = vld [vmem:[%s1 + $0x88] sm:$0xff]
      %v185 = vld [vmem:[%s1 + $0x90] sm:$0xff]
      %v186 = vld [vmem:[%s1 + $0x98] sm:$0xff]
      %v187 = vld [vmem:[%s1 + $0xa0] sm:$0xff]
      %v188 = vld [vmem:[%s1 + $0xa8] sm:$0xff]
      %v189 = vld [vmem:[%s1 + $0xb0] sm:$0xff]
      %v190 = vld [vmem:[%s1 + $0xb8] sm:$0xff]
      %v191 = vld [vmem:[%s1 + $0xc0] sm:$0xff]
      %v192 = vld [vmem:[%s1 + $0xc8] sm:$0xff]
      %v193 = vld [vmem:[%s1 + $0xd0] sm:$0xff]
      %v194 = vld [vmem:[%s1 + $0xd8] sm:$0xff]
      %v195 = vld [vmem:[%s1 + $0xe0] sm:$0xff]
      %v196 = vld [vmem:[%s1 + $0xe8] sm:$0xff]
      %v197 = vld [vmem:[%s1 + $0xf0] sm:$0xff]
      %v198 = vld [vmem:[%s1 + $0xf8] sm:$0xff]
      %v199 = vld [vmem:[%s1 + $0x100] sm:$0xff]
      %v200 = vld [vmem:[%s1 + $0x108] sm:$0xff]
      %v201 = vld [vmem:[%s1 + $0x110] sm:$0xff]
      %v202 = vld [vmem:[%s1 + $0x118] sm:$0xff]
      %v203 = vld [vmem:[%s1 + $0x120] sm:$0xff]
      %v204 = vld [vmem:[%s1 + $0x128] sm:$0xff]
      %v205 = vld [vmem:[%s1 + $0x130] sm:$0xff]
      %v206 = vld [vmem:[%s1 + $0x138] sm:$0xff]
      %v207 = vld [vmem:[%s1 + $0x140] sm:$0xff]
      %v208 = vld [vmem:[%s1 + $0x148] sm:$0xff]
      %v209 = vld [vmem:[%s1 + $0x150] sm:$0xff]
      %v210 = vld [vmem:[%s1 + $0x158] sm:$0xff]
      %v211 = vld [vmem:[%s1 + $0x160] sm:$0xff]
      %v212 = vld [vmem:[%s1 + $0x168] sm:$0xff]
      %v213 = vld [vmem:[%s1 + $0x170] sm:$0xff]
      %v214 = vld [vmem:[%s1 + $0x178] sm:$0xff]
      %v215 = vld [vmem:[%s1 + $0x180] sm:$0xff]
      %v216 = vld [vmem:[%s1 + $0x188] sm:$0xff]
      %v217 = vld [vmem:[%s1 + $0x190] sm:$0xff]
      %v218 = vld [vmem:[%s1 + $0x198] sm:$0xff]
      %v219 = vld [vmem:[%s1 + $0x1a0] sm:$0xff]
      %v220 = vld [vmem:[%s1 + $0x1a8] sm:$0xff]
      %v221 = vld [vmem:[%s1 + $0x1b0] sm:$0xff]
      %v222 = vld [vmem:[%s1 + $0x1b8] sm:$0xff]
      %v223 = vld [vmem:[%s1 + $0x1c0] sm:$0xff]
      %v224 = vld [vmem:[%s1 + $0x1c8] sm:$0xff]
      %v225 = vld [vmem:[%s1 + $0x1d0] sm:$0xff]
      %v226 = vld [vmem:[%s1 + $0x1d8] sm:$0xff]
      %v227 = vld [vmem:[%s1 + $0x1e0] sm:$0xff]
      %v228 = vld [vmem:[%s1 + $0x1e8] sm:$0xff]
      %v229 = vld [vmem:[%s1 + $0x1f0] sm:$0xff]
      %v230 = vld [vmem:[%s1 + $0x1f8] sm:$0xff]
      %v231 = vld [vmem:[%s1 + $0x200] sm:$0xff]
      %v232 = vld [vmem:[%s1 + $0x208] sm:$0xff]
      %v233 = vld [vmem:[%s1 + $0x210] sm:$0xff]
      %v234 = vld [vmem:[%s1 + $0x218] sm:$0xff]
      %v235 = vld [vmem:[%s1 + $0x220] sm:$0xff]
      %v236 = vld [vmem:[%s1 + $0x228] sm:$0xff]
      %v237 = vld [vmem:[%s1 + $0x230] sm:$0xff]
      %v238 = vld [vmem:[%s1 + $0x238] sm:$0xff]
      %v239 = vld [vmem:[%s1 + $0x240] sm:$0xff]
      %v240 = vld [vmem:[%s1 + $0x248] sm:$0xff]
      %v241 = vld [vmem:[%s1 + $0x250] sm:$0xff]
      %v242 = vld [vmem:[%s1 + $0x258] sm:$0xff]
      %v243 = vld [vmem:[%s1 + $0x260] sm:$0xff]
      %v244 = vld [vmem:[%s1 + $0x268] sm:$0xff]
      %v245 = vld [vmem:[%s1 + $0x270] sm:$0xff]
      %v246 = vld [vmem:[%s1 + $0x278] sm:$0xff]
      %v247 = vld [vmem:[%s1 + $0x280] sm:$0xff]
      %v248 = vld [vmem:[%s1 + $0x288] sm:$0xff]
      %v249 = vld [vmem:[%s1 + $0x290] sm:$0xff]
      %v250 = vld [vmem:[%s1 + $0x298] sm:$0xff]
      %v251 = vld [vmem:[%s1 + $0x2a0] sm:$0xff]
      %v252 = vld [vmem:[%s1 + $0x2a8] sm:$0xff]
      %v253 = vld [vmem:[%s1 + $0x2b0] sm:$0xff]
      %v254 = vld [vmem:[%s1 + $0x2b8] sm:$0xff]
      %v255 = vld [vmem:[%s1 + $0x2c0] sm:$0xff]
      %v256 = vld [vmem:[%s1 + $0x2c8] sm:$0xff]
      %v257 = vld [vmem:[%s1 + $0x2d0] sm:$0xff]
      %v258 = vld [vmem:[%s1 + $0x2d8] sm:$0xff]
      %v259 = vld [vmem:[%s1 + $0x2e0] sm:$0xff]
      %v260 = vld [vmem:[%s1 + $0x2e8] sm:$0xff]
      %v261 = vld [vmem:[%s1 + $0x2f0] sm:$0xff]
      %v262 = vld [vmem:[%s1 + $0x2f8] sm:$0xff]
      %v263 = vld [vmem:[%s1 + $0x300] sm:$0xff]
      %v264 = vld [vmem:[%s1 + $0x308] sm:$0xff]
      %v265 = vld [vmem:[%s1 + $0x310] sm:$0xff]
      %v266 = vld [vmem:[%s1 + $0x318] sm:$0xff]
      %v267 = vld [vmem:[%s1 + $0x320] sm:$0xff]
      %v268 = vld [vmem:[%s1 + $0x328] sm:$0xff]
      %v269 = vld [vmem:[%s1 + $0x330] sm:$0xff]
      %v270 = vld [vmem:[%s1 + $0x338] sm:$0xff]
      %v271 = vld [vmem:[%s1 + $0x340] sm:$0xff]
      %v272 = vld [vmem:[%s1 + $0x348] sm:$0xff]
      %v273 = vld [vmem:[%s1 + $0x350] sm:$0xff]
      %v274 = vld [vmem:[%s1 + $0x358] sm:$0xff]
      %v275 = vld [vmem:[%s1 + $0x360] sm:$0xff]
      %v276 = vld [vmem:[%s1 + $0x368] sm:$0xff]
      %v277 = vld [vmem:[%s1 + $0x370] sm:$0xff]
      %v278 = vld [vmem:[%s1 + $0x378] sm:$0xff]
      %v279 = vld [vmem:[%s1 + $0x380] sm:$0xff]
      %v280 = vld [vmem:[%s1 + $0x388] sm:$0xff]
      %v281 = vld [vmem:[%s1 + $0x390] sm:$0xff]
      %v282 = vld [vmem:[%s1 + $0x398] sm:$0xff]
      %v283 = vld [vmem:[%s1 + $0x3a0] sm:$0xff]
      %v284 = vld [vmem:[%s1 + $0x3a8] sm:$0xff]
      %v285 = vld [vmem:[%s1 + $0x3b0] sm:$0xff]
      %v286 = vld [vmem:[%s1 + $0x3b8] sm:$0xff]
      %v287 = vld [vmem:[%s1 + $0x3c0] sm:$0xff]
      %v288 = vld [vmem:[%s1 + $0x3c8] sm:$0xff]
      %v289 = vld [vmem:[%s1 + $0x3d0] sm:$0xff]
      %v290 = vld [vmem:[%s1 + $0x3d8] sm:$0xff]
      %v291 = vld [vmem:[%s1 + $0x3e0] sm:$0xff]
      %v292 = vld [vmem:[%s1 + $0x3e8] sm:$0xff]
      %v293 = vld [vmem:[%s1 + $0x3f0] sm:$0xff]
      %v294 = vld [vmem:[%s1 + $0x3f8] sm:$0xff]
      %v295 = vand.u32 %v168, 4294901760
      %296 = vmatprep.subr.mxu0 %v295
      %v297 = vand.u32 %v167, 4294901760
      %298 = vmatpush1.msra.mxu0 %v297
      %v299 = vand.u32 %v176, 4294901760
      %300 = vmatprep.subr.mxu0 %v299
      %v301 = vand.u32 %v175, 4294901760
      %302 = vmatpush1.msra.mxu0 %v301
      %v303 = vand.u32 %v184, 4294901760
      %304 = vmatprep.subr.mxu0 %v303
      %v305 = vand.u32 %v183, 4294901760
      %306 = vmatpush1.msra.mxu0 %v305
      %v307 = vand.u32 %v192, 4294901760
      %308 = vmatprep.subr.mxu0 %v307
      %v309 = vand.u32 %v191, 4294901760
      %310 = vmatpush1.msra.mxu0 %v309
      %v311 = vand.u32 %v200, 4294901760
      %312 = vmatprep.subr.mxu0 %v311
      %v313 = vand.u32 %v199, 4294901760
      %314 = vmatpush1.msra.mxu0 %v313
      %v315 = vand.u32 %v208, 4294901760
      %316 = vmatprep.subr.mxu0 %v315
      %v317 = vand.u32 %v207, 4294901760
      %318 = vmatpush1.msra.mxu0 %v317
      %v319 = vand.u32 %v216, 4294901760
      %320 = vmatprep.subr.mxu0 %v319
      %v321 = vand.u32 %v215, 4294901760
      %322 = vmatpush1.msra.mxu0 %v321
      %v323 = vand.u32 %v224, 4294901760
      %324 = vmatprep.subr.mxu0 %v323
      %v325 = vand.u32 %v223, 4294901760
      %326 = vmatpush1.msra.mxu0 %v325
      %v327 = vand.u32 %v232, 4294901760
      %328 = vmatprep.subr.mxu0 %v327
      %v329 = vand.u32 %v231, 4294901760
      %330 = vmatpush1.msra.mxu0 %v329
      %v331 = vand.u32 %v240, 4294901760
      %332 = vmatprep.subr.mxu0 %v331
      %v333 = vand.u32 %v239, 4294901760
      %334 = vmatpush1.msra.mxu0 %v333
      %v335 = vand.u32 %v248, 4294901760
      %336 = vmatprep.subr.mxu0 %v335
      %v337 = vand.u32 %v247, 4294901760
      %338 = vmatpush1.msra.mxu0 %v337
      %v339 = vand.u32 %v256, 4294901760
      %340 = vmatprep.subr.mxu0 %v339
      %v341 = vand.u32 %v255, 4294901760
      %342 = vmatpush1.msra.mxu0 %v341
      %v343 = vand.u32 %v264, 4294901760
      %344 = vmatprep.subr.mxu0 %v343
      %v345 = vand.u32 %v263, 4294901760
      %346 = vmatpush1.msra.mxu0 %v345
      %v347 = vand.u32 %v272, 4294901760
      %348 = vmatprep.subr.mxu0 %v347
      %v349 = vand.u32 %v271, 4294901760
      %350 = vmatpush1.msra.mxu0 %v349
      %v351 = vand.u32 %v280, 4294901760
      %352 = vmatprep.subr.mxu0 %v351
      %v353 = vand.u32 %v279, 4294901760
      %354 = vmatpush1.msra.mxu0 %v353
      %v355 = vand.u32 %v288, 4294901760
      %356 = vmatprep.subr.mxu0 %v355
      %v357 = vand.u32 %v287, 4294901760
      %358 = vmatpush1.msra.mxu0 %v357
      %359 = vmatprep.subr.mxu0 0.0
      %360 = vmatpush1.msra.mxu0 0.0
      %361 = vmatprep.subr.mxu0 0.0
      %362 = vmatpush1.msra.mxu0 0.0
      %363 = vmatprep.subr.mxu0 0.0
      %364 = vmatpush1.msra.mxu0 0.0
      %365 = vmatprep.subr.mxu0 0.0
      %366 = vmatpush1.msra.mxu0 0.0
      %367 = vmatprep.subr.mxu0 0.0
      %368 = vmatpush1.msra.mxu0 0.0
      %369 = vmatprep.subr.mxu0 0.0
      %370 = vmatpush1.msra.mxu0 0.0
      %371 = vmatprep.subr.mxu0 0.0
      %372 = vmatpush1.msra.mxu0 0.0
      %373 = vmatprep.subr.mxu0 0.0
      %374 = vmatpush1.msra.mxu0 0.0
      %375 = vmatprep.subr.mxu0 0.0
      %376 = vmatpush1.msra.mxu0 0.0
      %377 = vmatprep.subr.mxu0 0.0
      %378 = vmatpush1.msra.mxu0 0.0
      %379 = vmatprep.subr.mxu0 0.0
      %380 = vmatpush1.msra.mxu0 0.0
      %381 = vmatprep.subr.mxu0 0.0
      %382 = vmatpush1.msra.mxu0 0.0
      %383 = vmatprep.subr.mxu0 0.0
      %384 = vmatpush1.msra.mxu0 0.0
      %385 = vmatprep.subr.mxu0 0.0
      %386 = vmatpush1.msra.mxu0 0.0
      %387 = vmatprep.subr.mxu0 0.0
      %388 = vmatpush1.msra.mxu0 0.0
      %389 = vmatprep.subr.mxu0 0.0
      %390 = vmatpush1.msra.mxu0 0.0
      %391 = vmatprep.mubr.f32.mxu0 0.0
      %v392 = vand.u32 %v166, 4294901760
      %v393 = vsub.f32 %v166, %v392
      %v394 = vand.u32 %v393, 4294901760
      %v395 = vsub.f32 %v393, %v394
      %v396 = vand.u32 %v395, 4294901760
      %397 = vmatmul.mubr.f32.gmra.mrb[0].mxu0 %v396
      %v398 = vpop.f32.mrb[0].mxu0
      %v399 = vadd.f32 0.0, %v398
      %v400 = vpop.f32.mrb[0].mxu0
      %v401 = vadd.f32 0.0, %v400
      %402 = vdwg.mxu0
      %v403 = vand.u32 %v168, 4294901760
      %v404 = vsub.f32 %v168, %v403
      %v405 = vand.u32 %v404, 4294901760
      %v406 = vsub.f32 %v404, %v405
      %v407 = vand.u32 %v406, 4294901760
      %408 = vmatprep.subr.mxu0 %v407
      %v409 = vand.u32 %v167, 4294901760
      %v410 = vsub.f32 %v167, %v409
      %v411 = vand.u32 %v410, 4294901760
      %v412 = vsub.f32 %v410, %v411
      %v413 = vand.u32 %v412, 4294901760
      %414 = vmatpush1.msra.mxu0 %v413
      %v415 = vand.u32 %v176, 4294901760
      %v416 = vsub.f32 %v176, %v415
      %v417 = vand.u32 %v416, 4294901760
      %v418 = vsub.f32 %v416, %v417
      %v419 = vand.u32 %v418, 4294901760
      %420 = vmatprep.subr.mxu0 %v419
      %v421 = vand.u32 %v175, 4294901760
      %v422 = vsub.f32 %v175, %v421
      %v423 = vand.u32 %v422, 4294901760
      %v424 = vsub.f32 %v422, %v423
      %v425 = vand.u32 %v424, 4294901760
      %426 = vmatpush1.msra.mxu0 %v425
      %v427 = vand.u32 %v184, 4294901760
      %v428 = vsub.f32 %v184, %v427
      %v429 = vand.u32 %v428, 4294901760
      %v430 = vsub.f32 %v428, %v429
      %v431 = vand.u32 %v430, 4294901760
      %432 = vmatprep.subr.mxu0 %v431
      %v433 = vand.u32 %v183, 4294901760
      %v434 = vsub.f32 %v183, %v433
      %v435 = vand.u32 %v434, 4294901760
      %v436 = vsub.f32 %v434, %v435
      %v437 = vand.u32 %v436, 4294901760
      %438 = vmatpush1.msra.mxu0 %v437
      %v439 = vand.u32 %v192, 4294901760
      %v440 = vsub.f32 %v192, %v439
      %v441 = vand.u32 %v440, 4294901760
      %v442 = vsub.f32 %v440, %v441
      %v443 = vand.u32 %v442, 4294901760
      %444 = vmatprep.subr.mxu0 %v443
      %v445 = vand.u32 %v191, 4294901760
      %v446 = vsub.f32 %v191, %v445
      %v447 = vand.u32 %v446, 4294901760
      %v448 = vsub.f32 %v446, %v447
      %v449 = vand.u32 %v448, 4294901760
      %450 = vmatpush1.msra.mxu0 %v449
      %v451 = vand.u32 %v200, 4294901760
      %v452 = vsub.f32 %v200, %v451
      %v453 = vand.u32 %v452, 4294901760
      %v454 = vsub.f32 %v452, %v453
      %v455 = vand.u32 %v454, 4294901760
      %456 = vmatprep.subr.mxu0 %v455
      %v457 = vand.u32 %v199, 4294901760
      %v458 = vsub.f32 %v199, %v457
      %v459 = vand.u32 %v458, 4294901760
      %v460 = vsub.f32 %v458, %v459
      %v461 = vand.u32 %v460, 4294901760
      %462 = vmatpush1.msra.mxu0 %v461
      %v463 = vand.u32 %v208, 4294901760
      %v464 = vsub.f32 %v208, %v463
      %v465 = vand.u32 %v464, 4294901760
      %v466 = vsub.f32 %v464, %v465
      %v467 = vand.u32 %v466, 4294901760
      %468 = vmatprep.subr.mxu0 %v467
      %v469 = vand.u32 %v207, 4294901760
      %v470 = vsub.f32 %v207, %v469
      %v471 = vand.u32 %v470, 4294901760
      %v472 = vsub.f32 %v470, %v471
      %v473 = vand.u32 %v472, 4294901760
      %474 = vmatpush1.msra.mxu0 %v473
      %v475 = vand.u32 %v216, 4294901760
      %v476 = vsub.f32 %v216, %v475
      %v477 = vand.u32 %v476, 4294901760
      %v478 = vsub.f32 %v476, %v477
      %v479 = vand.u32 %v478, 4294901760
      %480 = vmatprep.subr.mxu0 %v479
      %v481 = vand.u32 %v215, 4294901760
      %v482 = vsub.f32 %v215, %v481
      %v483 = vand.u32 %v482, 4294901760
      %v484 = vsub.f32 %v482, %v483
      %v485 = vand.u32 %v484, 4294901760
      %486 = vmatpush1.msra.mxu0 %v485
      %v487 = vand.u32 %v224, 4294901760
      %v488 = vsub.f32 %v224, %v487
      %v489 = vand.u32 %v488, 4294901760
      %v490 = vsub.f32 %v488, %v489
      %v491 = vand.u32 %v490, 4294901760
      %492 = vmatprep.subr.mxu0 %v491
      %v493 = vand.u32 %v223, 4294901760
      %v494 = vsub.f32 %v223, %v493
      %v495 = vand.u32 %v494, 4294901760
      %v496 = vsub.f32 %v494, %v495
      %v497 = vand.u32 %v496, 4294901760
      %498 = vmatpush1.msra.mxu0 %v497
      %v499 = vand.u32 %v232, 4294901760
      %v500 = vsub.f32 %v232, %v499
      %v501 = vand.u32 %v500, 4294901760
      %v502 = vsub.f32 %v500, %v501
      %v503 = vand.u32 %v502, 4294901760
      %504 = vmatprep.subr.mxu0 %v503
      %v505 = vand.u32 %v231, 4294901760
      %v506 = vsub.f32 %v231, %v505
      %v507 = vand.u32 %v506, 4294901760
      %v508 = vsub.f32 %v506, %v507
      %v509 = vand.u32 %v508, 4294901760
      %510 = vmatpush1.msra.mxu0 %v509
      %v511 = vand.u32 %v240, 4294901760
      %v512 = vsub.f32 %v240, %v511
      %v513 = vand.u32 %v512, 4294901760
      %v514 = vsub.f32 %v512, %v513
      %v515 = vand.u32 %v514, 4294901760
      %516 = vmatprep.subr.mxu0 %v515
      %v517 = vand.u32 %v239, 4294901760
      %v518 = vsub.f32 %v239, %v517
      %v519 = vand.u32 %v518, 4294901760
      %v520 = vsub.f32 %v518, %v519
      %v521 = vand.u32 %v520, 4294901760
      %522 = vmatpush1.msra.mxu0 %v521
      %v523 = vand.u32 %v248, 4294901760
      %v524 = vsub.f32 %v248, %v523
      %v525 = vand.u32 %v524, 4294901760
      %v526 = vsub.f32 %v524, %v525
      %v527 = vand.u32 %v526, 4294901760
      %528 = vmatprep.subr.mxu0 %v527
      %v529 = vand.u32 %v247, 4294901760
      %v530 = vsub.f32 %v247, %v529
      %v531 = vand.u32 %v530, 4294901760
      %v532 = vsub.f32 %v530, %v531
      %v533 = vand.u32 %v532, 4294901760
      %534 = vmatpush1.msra.mxu0 %v533
      %v535 = vand.u32 %v256, 4294901760
      %v536 = vsub.f32 %v256, %v535
      %v537 = vand.u32 %v536, 4294901760
      %v538 = vsub.f32 %v536, %v537
      %v539 = vand.u32 %v538, 4294901760
      %540 = vmatprep.subr.mxu0 %v539
      %v541 = vand.u32 %v255, 4294901760
      %v542 = vsub.f32 %v255, %v541
      %v543 = vand.u32 %v542, 4294901760
      %v544 = vsub.f32 %v542, %v543
      %v545 = vand.u32 %v544, 4294901760
      %546 = vmatpush1.msra.mxu0 %v545
      %v547 = vand.u32 %v264, 4294901760
      %v548 = vsub.f32 %v264, %v547
      %v549 = vand.u32 %v548, 4294901760
      %v550 = vsub.f32 %v548, %v549
      %v551 = vand.u32 %v550, 4294901760
      %552 = vmatprep.subr.mxu0 %v551
      %v553 = vand.u32 %v263, 4294901760
      %v554 = vsub.f32 %v263, %v553
      %v555 = vand.u32 %v554, 4294901760
      %v556 = vsub.f32 %v554, %v555
      %v557 = vand.u32 %v556, 4294901760
      %558 = vmatpush1.msra.mxu0 %v557
      %v559 = vand.u32 %v272, 4294901760
      %v560 = vsub.f32 %v272, %v559
      %v561 = vand.u32 %v560, 4294901760
      %v562 = vsub.f32 %v560, %v561
      %v563 = vand.u32 %v562, 4294901760
      %564 = vmatprep.subr.mxu0 %v563
      %v565 = vand.u32 %v271, 4294901760
      %v566 = vsub.f32 %v271, %v565
      %v567 = vand.u32 %v566, 4294901760
      %v568 = vsub.f32 %v566, %v567
      %v569 = vand.u32 %v568, 4294901760
      %570 = vmatpush1.msra.mxu0 %v569
      %v571 = vand.u32 %v280, 4294901760
      %v572 = vsub.f32 %v280, %v571
      %v573 = vand.u32 %v572, 4294901760
      %v574 = vsub.f32 %v572, %v573
      %v575 = vand.u32 %v574, 4294901760
      %576 = vmatprep.subr.mxu0 %v575
      %v577 = vand.u32 %v279, 4294901760
      %v578 = vsub.f32 %v279, %v577
      %v579 = vand.u32 %v578, 4294901760
      %v580 = vsub.f32 %v578, %v579
      %v581 = vand.u32 %v580, 4294901760
      %582 = vmatpush1.msra.mxu0 %v581
      %v583 = vand.u32 %v288, 4294901760
      %v584 = vsub.f32 %v288, %v583
      %v585 = vand.u32 %v584, 4294901760
      %v586 = vsub.f32 %v584, %v585
      %v587 = vand.u32 %v586, 4294901760
      %588 = vmatprep.subr.mxu0 %v587
      %v589 = vand.u32 %v287, 4294901760
      %v590 = vsub.f32 %v287, %v589
      %v591 = vand.u32 %v590, 4294901760
      %v592 = vsub.f32 %v590, %v591
      %v593 = vand.u32 %v592, 4294901760
      %594 = vmatpush1.msra.mxu0 %v593
      %595 = vmatprep.subr.mxu0 0.0
      %596 = vmatpush1.msra.mxu0 0.0
      %597 = vmatprep.subr.mxu0 0.0
      %598 = vmatpush1.msra.mxu0 0.0
      %599 = vmatprep.subr.mxu0 0.0
      %600 = vmatpush1.msra.mxu0 0.0
      %601 = vmatprep.subr.mxu0 0.0
      %602 = vmatpush1.msra.mxu0 0.0
      %603 = vmatprep.subr.mxu0 0.0
      %604 = vmatpush1.msra.mxu0 0.0
      %605 = vmatprep.subr.mxu0 0.0
      %606 = vmatpush1.msra.mxu0 0.0
      %607 = vmatprep.subr.mxu0 0.0
      %608 = vmatpush1.msra.mxu0 0.0
      %609 = vmatprep.subr.mxu0 0.0
      %610 = vmatpush1.msra.mxu0 0.0
      %611 = vmatprep.subr.mxu0 0.0
      %612 = vmatpush1.msra.mxu0 0.0
      %613 = vmatprep.subr.mxu0 0.0
      %614 = vmatpush1.msra.mxu0 0.0
      %615 = vmatprep.subr.mxu0 0.0
      %616 = vmatpush1.msra.mxu0 0.0
      %617 = vmatprep.subr.mxu0 0.0
      %618 = vmatpush1.msra.mxu0 0.0
      %619 = vmatprep.subr.mxu0 0.0
      %620 = vmatpush1.msra.mxu0 0.0
      %621 = vmatprep.subr.mxu0 0.0
      %622 = vmatpush1.msra.mxu0 0.0
      %623 = vmatprep.subr.mxu0 0.0
      %624 = vmatpush1.msra.mxu0 0.0
      %625 = vmatprep.subr.mxu0 0.0
      %626 = vmatpush1.msra.mxu0 0.0
      %627 = vmatprep.mubr.f32.mxu0 0.0
      %v628 = vand.u32 %v166, 4294901760
      %629 = vmatmul.mubr.f32.gmra.mrb[0].mxu0 %v628
      %v630 = vpop.f32.mrb[0].mxu0
      %v631 = vadd.f32 %v399, %v630
      %v632 = vpop.f32.mrb[0].mxu0
      %v633 = vadd.f32 %v401, %v632
      %634 = vdwg.mxu0
      %v635 = vand.u32 %v168, 4294901760
      %v636 = vsub.f32 %v168, %v635
      %637 = vmatprep.subr.mxu0 %v636
      %v638 = vand.u32 %v167, 4294901760
      %v639 = vsub.f32 %v167, %v638
      %640 = vmatpush1.msra.mxu0 %v639
      %v641 = vand.u32 %v176, 4294901760
      %v642 = vsub.f32 %v176, %v641
      %643 = vmatprep.subr.mxu0 %v642
      %v644 = vand.u32 %v175, 4294901760
      %v645 = vsub.f32 %v175, %v644
      %646 = vmatpush1.msra.mxu0 %v645
      %v647 = vand.u32 %v184, 4294901760
      %v648 = vsub.f32 %v184, %v647
      %649 = vmatprep.subr.mxu0 %v648
      %v650 = vand.u32 %v183, 4294901760
      %v651 = vsub.f32 %v183, %v650
      %652 = vmatpush1.msra.mxu0 %v651
      %v653 = vand.u32 %v192, 4294901760
      %v654 = vsub.f32 %v192, %v653
      %655 = vmatprep.subr.mxu0 %v654
      %v656 = vand.u32 %v191, 4294901760
      %v657 = vsub.f32 %v191, %v656
      %658 = vmatpush1.msra.mxu0 %v657
      %v659 = vand.u32 %v200, 4294901760
      %v660 = vsub.f32 %v200, %v659
      %661 = vmatprep.subr.mxu0 %v660
      %v662 = vand.u32 %v199, 4294901760
      %v663 = vsub.f32 %v199, %v662
      %664 = vmatpush1.msra.mxu0 %v663
      %v665 = vand.u32 %v208, 4294901760
      %v666 = vsub.f32 %v208, %v665
      %667 = vmatprep.subr.mxu0 %v666
      %v668 = vand.u32 %v207, 4294901760
      %v669 = vsub.f32 %v207, %v668
      %670 = vmatpush1.msra.mxu0 %v669
      %v671 = vand.u32 %v216, 4294901760
      %v672 = vsub.f32 %v216, %v671
      %673 = vmatprep.subr.mxu0 %v672
      %v674 = vand.u32 %v215, 4294901760
      %v675 = vsub.f32 %v215, %v674
      %676 = vmatpush1.msra.mxu0 %v675
      %v677 = vand.u32 %v224, 4294901760
      %v678 = vsub.f32 %v224, %v677
      %679 = vmatprep.subr.mxu0 %v678
      %v680 = vand.u32 %v223, 4294901760
      %v681 = vsub.f32 %v223, %v680
      %682 = vmatpush1.msra.mxu0 %v681
      %v683 = vand.u32 %v232, 4294901760
      %v684 = vsub.f32 %v232, %v683
      %685 = vmatprep.subr.mxu0 %v684
      %v686 = vand.u32 %v231, 4294901760
      %v687 = vsub.f32 %v231, %v686
      %688 = vmatpush1.msra.mxu0 %v687
      %v689 = vand.u32 %v240, 4294901760
      %v690 = vsub.f32 %v240, %v689
      %691 = vmatprep.subr.mxu0 %v690
      %v692 = vand.u32 %v239, 4294901760
      %v693 = vsub.f32 %v239, %v692
      %694 = vmatpush1.msra.mxu0 %v693
      %v695 = vand.u32 %v248, 4294901760
      %v696 = vsub.f32 %v248, %v695
      %697 = vmatprep.subr.mxu0 %v696
      %v698 = vand.u32 %v247, 4294901760
      %v699 = vsub.f32 %v247, %v698
      %700 = vmatpush1.msra.mxu0 %v699
      %v701 = vand.u32 %v256, 4294901760
      %v702 = vsub.f32 %v256, %v701
      %703 = vmatprep.subr.mxu0 %v702
      %v704 = vand.u32 %v255, 4294901760
      %v705 = vsub.f32 %v255, %v704
      %706 = vmatpush1.msra.mxu0 %v705
      %v707 = vand.u32 %v264, 4294901760
      %v708 = vsub.f32 %v264, %v707
      %709 = vmatprep.subr.mxu0 %v708
      %v710 = vand.u32 %v263, 4294901760
      %v711 = vsub.f32 %v263, %v710
      %712 = vmatpush1.msra.mxu0 %v711
      %v713 = vand.u32 %v272, 4294901760
      %v714 = vsub.f32 %v272, %v713
      %715 = vmatprep.subr.mxu0 %v714
      %v716 = vand.u32 %v271, 4294901760
      %v717 = vsub.f32 %v271, %v716
      %718 = vmatpush1.msra.mxu0 %v717
      %v719 = vand.u32 %v280, 4294901760
      %v720 = vsub.f32 %v280, %v719
      %721 = vmatprep.subr.mxu0 %v720
      %v722 = vand.u32 %v279, 4294901760
      %v723 = vsub.f32 %v279, %v722
      %724 = vmatpush1.msra.mxu0 %v723
      %v725 = vand.u32 %v288, 4294901760
      %v726 = vsub.f32 %v288, %v725
      %727 = vmatprep.subr.mxu0 %v726
      %v728 = vand.u32 %v287, 4294901760
      %v729 = vsub.f32 %v287, %v728
      %730 = vmatpush1.msra.mxu0 %v729
      %731 = vmatprep.subr.mxu0 0.0
      %732 = vmatpush1.msra.mxu0 0.0
      %733 = vmatprep.subr.mxu0 0.0
      %734 = vmatpush1.msra.mxu0 0.0
      %735 = vmatprep.subr.mxu0 0.0
      %736 = vmatpush1.msra.mxu0 0.0
      %737 = vmatprep.subr.mxu0 0.0
      %738 = vmatpush1.msra.mxu0 0.0
      %739 = vmatprep.subr.mxu0 0.0
      %740 = vmatpush1.msra.mxu0 0.0
      %741 = vmatprep.subr.mxu0 0.0
      %742 = vmatpush1.msra.mxu0 0.0
      %743 = vmatprep.subr.mxu0 0.0
      %744 = vmatpush1.msra.mxu0 0.0
      %745 = vmatprep.subr.mxu0 0.0
      %746 = vmatpush1.msra.mxu0 0.0
      %747 = vmatprep.subr.mxu0 0.0
      %748 = vmatpush1.msra.mxu0 0.0
      %749 = vmatprep.subr.mxu0 0.0
      %750 = vmatpush1.msra.mxu0 0.0
      %751 = vmatprep.subr.mxu0 0.0
      %752 = vmatpush1.msra.mxu0 0.0
      %753 = vmatprep.subr.mxu0 0.0
      %754 = vmatpush1.msra.mxu0 0.0
      %755 = vmatprep.subr.mxu0 0.0
      %756 = vmatpush1.msra.mxu0 0.0
      %757 = vmatprep.subr.mxu0 0.0
      %758 = vmatpush1.msra.mxu0 0.0
      %759 = vmatprep.subr.mxu0 0.0
      %760 = vmatpush1.msra.mxu0 0.0
      %761 = vmatprep.subr.mxu0 0.0
      %762 = vmatpush1.msra.mxu0 0.0
      %763 = vmatprep.mubr.f32.mxu0 0.0
      %v764 = vand.u32 %v166, 4294901760
      %v765 = vsub.f32 %v166, %v764
      %766 = vmatmul.mubr.f32.gmra.mrb[0].mxu0 %v765
      %v767 = vpop.f32.mrb[0].mxu0
      %v768 = vadd.f32 %v631, %v767
      %v769 = vpop.f32.mrb[0].mxu0
      %v770 = vadd.f32 %v633, %v769
      %771 = vdwg.mxu0
      %v772 = vand.u32 %v168, 4294901760
      %773 = vmatprep.subr.mxu0 %v772
      %v774 = vand.u32 %v167, 4294901760
      %775 = vmatpush1.msra.mxu0 %v774
      %v776 = vand.u32 %v176, 4294901760
      %777 = vmatprep.subr.mxu0 %v776
      %v778 = vand.u32 %v175, 4294901760
      %779 = vmatpush1.msra.mxu0 %v778
      %v780 = vand.u32 %v184, 4294901760
      %781 = vmatprep.subr.mxu0 %v780
      %v782 = vand.u32 %v183, 4294901760
      %783 = vmatpush1.msra.mxu0 %v782
      %v784 = vand.u32 %v192, 4294901760
      %785 = vmatprep.subr.mxu0 %v784
      %v786 = vand.u32 %v191, 4294901760
      %787 = vmatpush1.msra.mxu0 %v786
      %v788 = vand.u32 %v200, 4294901760
      %789 = vmatprep.subr.mxu0 %v788
      %v790 = vand.u32 %v199, 4294901760
      %791 = vmatpush1.msra.mxu0 %v790
      %v792 = vand.u32 %v208, 4294901760
      %793 = vmatprep.subr.mxu0 %v792
      %v794 = vand.u32 %v207, 4294901760
      %795 = vmatpush1.msra.mxu0 %v794
      %v796 = vand.u32 %v216, 4294901760
      %797 = vmatprep.subr.mxu0 %v796
      %v798 = vand.u32 %v215, 4294901760
      %799 = vmatpush1.msra.mxu0 %v798
      %v800 = vand.u32 %v224, 4294901760
      %801 = vmatprep.subr.mxu0 %v800
      %v802 = vand.u32 %v223, 4294901760
      %803 = vmatpush1.msra.mxu0 %v802
      %v804 = vand.u32 %v232, 4294901760
      %805 = vmatprep.subr.mxu0 %v804
      %v806 = vand.u32 %v231, 4294901760
      %807 = vmatpush1.msra.mxu0 %v806
      %v808 = vand.u32 %v240, 4294901760
      %809 = vmatprep.subr.mxu0 %v808
      %v810 = vand.u32 %v239, 4294901760
      %811 = vmatpush1.msra.mxu0 %v810
      %v812 = vand.u32 %v248, 4294901760
      %813 = vmatprep.subr.mxu0 %v812
      %v814 = vand.u32 %v247, 4294901760
      %815 = vmatpush1.msra.mxu0 %v814
      %v816 = vand.u32 %v256, 4294901760
      %817 = vmatprep.subr.mxu0 %v816
      %v818 = vand.u32 %v255, 4294901760
      %819 = vmatpush1.msra.mxu0 %v818
      %v820 = vand.u32 %v264, 4294901760
      %821 = vmatprep.subr.mxu0 %v820
      %v822 = vand.u32 %v263, 4294901760
      %823 = vmatpush1.msra.mxu0 %v822
      %v824 = vand.u32 %v272, 4294901760
      %825 = vmatprep.subr.mxu0 %v824
      %v826 = vand.u32 %v271, 4294901760
      %827 = vmatpush1.msra.mxu0 %v826
      %v828 = vand.u32 %v280, 4294901760
      %829 = vmatprep.subr.mxu0 %v828
      %v830 = vand.u32 %v279, 4294901760
      %831 = vmatpush1.msra.mxu0 %v830
      %v832 = vand.u32 %v288, 4294901760
      %833 = vmatprep.subr.mxu0 %v832
      %v834 = vand.u32 %v287, 4294901760
      %835 = vmatpush1.msra.mxu0 %v834
      %836 = vmatprep.subr.mxu0 0.0
      %837 = vmatpush1.msra.mxu0 0.0
      %838 = vmatprep.subr.mxu0 0.0
      %839 = vmatpush1.msra.mxu0 0.0
      %840 = vmatprep.subr.mxu0 0.0
      %841 = vmatpush1.msra.mxu0 0.0
      %842 = vmatprep.subr.mxu0 0.0
      %843 = vmatpush1.msra.mxu0 0.0
      %844 = vmatprep.subr.mxu0 0.0
      %845 = vmatpush1.msra.mxu0 0.0
      %846 = vmatprep.subr.mxu0 0.0
      %847 = vmatpush1.msra.mxu0 0.0
      %848 = vmatprep.subr.mxu0 0.0
      %849 = vmatpush1.msra.mxu0 0.0
      %850 = vmatprep.subr.mxu0 0.0
      %851 = vmatpush1.msra.mxu0 0.0
      %852 = vmatprep.subr.mxu0 0.0
      %853 = vmatpush1.msra.mxu0 0.0
      %854 = vmatprep.subr.mxu0 0.0
      %855 = vmatpush1.msra.mxu0 0.0
      %856 = vmatprep.subr.mxu0 0.0
      %857 = vmatpush1.msra.mxu0 0.0
      %858 = vmatprep.subr.mxu0 0.0
      %859 = vmatpush1.msra.mxu0 0.0
      %860 = vmatprep.subr.mxu0 0.0
      %861 = vmatpush1.msra.mxu0 0.0
      %862 = vmatprep.subr.mxu0 0.0
      %863 = vmatpush1.msra.mxu0 0.0
      %864 = vmatprep.subr.mxu0 0.0
      %865 = vmatpush1.msra.mxu0 0.0
      %866 = vmatprep.subr.mxu0 0.0
      %867 = vmatpush1.msra.mxu0 0.0
      %868 = vmatprep.mubr.f32.mxu0 0.0
      %v869 = vand.u32 %v166, 4294901760
      %v870 = vsub.f32 %v166, %v869
      %v871 = vand.u32 %v870, 4294901760
      %872 = vmatmul.mubr.f32.gmra.mrb[0].mxu0 %v871
      %v873 = vpop.f32.mrb[0].mxu0
      %v874 = vadd.f32 %v768, %v873
      %v875 = vpop.f32.mrb[0].mxu0
      %v876 = vadd.f32 %v770, %v875
      %877 = vdwg.mxu0
      %v878 = vand.u32 %v168, 4294901760
      %v879 = vsub.f32 %v168, %v878
      %v880 = vand.u32 %v879, 4294901760
      %881 = vmatprep.subr.mxu0 %v880
      %v882 = vand.u32 %v167, 4294901760
      %v883 = vsub.f32 %v167, %v882
      %v884 = vand.u32 %v883, 4294901760
      %885 = vmatpush1.msra.mxu0 %v884
      %v886 = vand.u32 %v176, 4294901760
      %v887 = vsub.f32 %v176, %v886
      %v888 = vand.u32 %v887, 4294901760
      %889 = vmatprep.subr.mxu0 %v888
      %v890 = vand.u32 %v175, 4294901760
      %v891 = vsub.f32 %v175, %v890
      %v892 = vand.u32 %v891, 4294901760
      %893 = vmatpush1.msra.mxu0 %v892
      %v894 = vand.u32 %v184, 4294901760
      %v895 = vsub.f32 %v184, %v894
      %v896 = vand.u32 %v895, 4294901760
      %897 = vmatprep.subr.mxu0 %v896
      %v898 = vand.u32 %v183, 4294901760
      %v899 = vsub.f32 %v183, %v898
      %v900 = vand.u32 %v899, 4294901760
      %901 = vmatpush1.msra.mxu0 %v900
      %v902 = vand.u32 %v192, 4294901760
      %v903 = vsub.f32 %v192, %v902
      %v904 = vand.u32 %v903, 4294901760
      %905 = vmatprep.subr.mxu0 %v904
      %v906 = vand.u32 %v191, 4294901760
      %v907 = vsub.f32 %v191, %v906
      %v908 = vand.u32 %v907, 4294901760
      %909 = vmatpush1.msra.mxu0 %v908
      %v910 = vand.u32 %v200, 4294901760
      %v911 = vsub.f32 %v200, %v910
      %v912 = vand.u32 %v911, 4294901760
      %913 = vmatprep.subr.mxu0 %v912
      %v914 = vand.u32 %v199, 4294901760
      %v915 = vsub.f32 %v199, %v914
      %v916 = vand.u32 %v915, 4294901760
      %917 = vmatpush1.msra.mxu0 %v916
      %v918 = vand.u32 %v208, 4294901760
      %v919 = vsub.f32 %v208, %v918
      %v920 = vand.u32 %v919, 4294901760
      %921 = vmatprep.subr.mxu0 %v920
      %v922 = vand.u32 %v207, 4294901760
      %v923 = vsub.f32 %v207, %v922
      %v924 = vand.u32 %v923, 4294901760
      %925 = vmatpush1.msra.mxu0 %v924
      %v926 = vand.u32 %v216, 4294901760
      %v927 = vsub.f32 %v216, %v926
      %v928 = vand.u32 %v927, 4294901760
      %929 = vmatprep.subr.mxu0 %v928
      %v930 = vand.u32 %v215, 4294901760
      %v931 = vsub.f32 %v215, %v930
      %v932 = vand.u32 %v931, 4294901760
      %933 = vmatpush1.msra.mxu0 %v932
      %v934 = vand.u32 %v224, 4294901760
      %v935 = vsub.f32 %v224, %v934
      %v936 = vand.u32 %v935, 4294901760
      %937 = vmatprep.subr.mxu0 %v936
      %v938 = vand.u32 %v223, 4294901760
      %v939 = vsub.f32 %v223, %v938
      %v940 = vand.u32 %v939, 4294901760
      %941 = vmatpush1.msra.mxu0 %v940
      %v942 = vand.u32 %v232, 4294901760
      %v943 = vsub.f32 %v232, %v942
      %v944 = vand.u32 %v943, 4294901760
      %945 = vmatprep.subr.mxu0 %v944
      %v946 = vand.u32 %v231, 4294901760
      %v947 = vsub.f32 %v231, %v946
      %v948 = vand.u32 %v947, 4294901760
      %949 = vmatpush1.msra.mxu0 %v948
      %v950 = vand.u32 %v240, 4294901760
      %v951 = vsub.f32 %v240, %v950
      %v952 = vand.u32 %v951, 4294901760
      %953 = vmatprep.subr.mxu0 %v952
      %v954 = vand.u32 %v239, 4294901760
      %v955 = vsub.f32 %v239, %v954
      %v956 = vand.u32 %v955, 4294901760
      %957 = vmatpush1.msra.mxu0 %v956
      %v958 = vand.u32 %v248, 4294901760
      %v959 = vsub.f32 %v248, %v958
      %v960 = vand.u32 %v959, 4294901760
      %961 = vmatprep.subr.mxu0 %v960
      %v962 = vand.u32 %v247, 4294901760
      %v963 = vsub.f32 %v247, %v962
      %v964 = vand.u32 %v963, 4294901760
      %965 = vmatpush1.msra.mxu0 %v964
      %v966 = vand.u32 %v256, 4294901760
      %v967 = vsub.f32 %v256, %v966
      %v968 = vand.u32 %v967, 4294901760
      %969 = vmatprep.subr.mxu0 %v968
      %v970 = vand.u32 %v255, 4294901760
      %v971 = vsub.f32 %v255, %v970
      %v972 = vand.u32 %v971, 4294901760
      %973 = vmatpush1.msra.mxu0 %v972
      %v974 = vand.u32 %v264, 4294901760
      %v975 = vsub.f32 %v264, %v974
      %v976 = vand.u32 %v975, 4294901760
      %977 = vmatprep.subr.mxu0 %v976
      %v978 = vand.u32 %v263, 4294901760
      %v979 = vsub.f32 %v263, %v978
      %v980 = vand.u32 %v979, 4294901760
      %981 = vmatpush1.msra.mxu0 %v980
      %v982 = vand.u32 %v272, 4294901760
      %v983 = vsub.f32 %v272, %v982
      %v984 = vand.u32 %v983, 4294901760
      %985 = vmatprep.subr.mxu0 %v984
      %v986 = vand.u32 %v271, 4294901760
      %v987 = vsub.f32 %v271, %v986
      %v988 = vand.u32 %v987, 4294901760
      %989 = vmatpush1.msra.mxu0 %v988
      %v990 = vand.u32 %v280, 4294901760
      %v991 = vsub.f32 %v280, %v990
      %v992 = vand.u32 %v991, 4294901760
      %993 = vmatprep.subr.mxu0 %v992
      %v994 = vand.u32 %v279, 4294901760
      %v995 = vsub.f32 %v279, %v994
      %v996 = vand.u32 %v995, 4294901760
      %997 = vmatpush1.msra.mxu0 %v996
      %v998 = vand.u32 %v288, 4294901760
      %v999 = vsub.f32 %v288, %v998
      %v1000 = vand.u32 %v999, 4294901760
      %1001 = vmatprep.subr.mxu0 %v1000
      %v1002 = vand.u32 %v287, 4294901760
      %v1003 = vsub.f32 %v287, %v1002
      %v1004 = vand.u32 %v1003, 4294901760
      %1005 = vmatpush1.msra.mxu0 %v1004
      %1006 = vmatprep.subr.mxu0 0.0
      %1007 = vmatpush1.msra.mxu0 0.0
      %1008 = vmatprep.subr.mxu0 0.0
      %1009 = vmatpush1.msra.mxu0 0.0
      %1010 = vmatprep.subr.mxu0 0.0
      %1011 = vmatpush1.msra.mxu0 0.0
      %1012 = vmatprep.subr.mxu0 0.0
      %1013 = vmatpush1.msra.mxu0 0.0
      %1014 = vmatprep.subr.mxu0 0.0
      %1015 = vmatpush1.msra.mxu0 0.0
      %1016 = vmatprep.subr.mxu0 0.0
      %1017 = vmatpush1.msra.mxu0 0.0
      %1018 = vmatprep.subr.mxu0 0.0
      %1019 = vmatpush1.msra.mxu0 0.0
      %1020 = vmatprep.subr.mxu0 0.0
      %1021 = vmatpush1.msra.mxu0 0.0
      %1022 = vmatprep.subr.mxu0 0.0
      %1023 = vmatpush1.msra.mxu0 0.0
      %1024 = vmatprep.subr.mxu0 0.0
      %1025 = vmatpush1.msra.mxu0 0.0
      %1026 = vmatprep.subr.mxu0 0.0
      %1027 = vmatpush1.msra.mxu0 0.0
      %1028 = vmatprep.subr.mxu0 0.0
      %1029 = vmatpush1.msra.mxu0 0.0
      %1030 = vmatprep.subr.mxu0 0.0
      %1031 = vmatpush1.msra.mxu0 0.0
      %1032 = vmatprep.subr.mxu0 0.0
      %1033 = vmatpush1.msra.mxu0 0.0
      %1034 = vmatprep.subr.mxu0 0.0
      %1035 = vmatpush1.msra.mxu0 0.0
      %1036 = vmatprep.subr.mxu0 0.0
      %1037 = vmatpush1.msra.mxu0 0.0
      %1038 = vmatprep.mubr.f32.mxu0 0.0
      %v1039 = vand.u32 %v166, 4294901760
      %1040 = vmatmul.mubr.f32.gmra.mrb[0].mxu0 %v1039
      %v1041 = vpop.f32.mrb[0].mxu0
      %v1042 = vadd.f32 %v874, %v1041
      %v1043 = vpop.f32.mrb[0].mxu0
      %v1044 = vadd.f32 %v876, %v1043
      %1045 = vdwg.mxu0
      %v1046 = vand.u32 %v168, 4294901760
      %1047 = vmatprep.subr.mxu0 %v1046
      %v1048 = vand.u32 %v167, 4294901760
      %1049 = vmatpush1.msra.mxu0 %v1048
      %v1050 = vand.u32 %v176, 4294901760
      %1051 = vmatprep.subr.mxu0 %v1050
      %v1052 = vand.u32 %v175, 4294901760
      %1053 = vmatpush1.msra.mxu0 %v1052
      %v1054 = vand.u32 %v184, 4294901760
      %1055 = vmatprep.subr.mxu0 %v1054
      %v1056 = vand.u32 %v183, 4294901760
      %1057 = vmatpush1.msra.mxu0 %v1056
      %v1058 = vand.u32 %v192, 4294901760
      %1059 = vmatprep.subr.mxu0 %v1058
      %v1060 = vand.u32 %v191, 4294901760
      %1061 = vmatpush1.msra.mxu0 %v1060
      %v1062 = vand.u32 %v200, 4294901760
      %1063 = vmatprep.subr.mxu0 %v1062
      %v1064 = vand.u32 %v199, 4294901760
      %1065 = vmatpush1.msra.mxu0 %v1064
      %v1066 = vand.u32 %v208, 4294901760
      %1067 = vmatprep.subr.mxu0 %v1066
      %v1068 = vand.u32 %v207, 4294901760
      %1069 = vmatpush1.msra.mxu0 %v1068
      %v1070 = vand.u32 %v216, 4294901760
      %1071 = vmatprep.subr.mxu0 %v1070
      %v1072 = vand.u32 %v215, 4294901760
      %1073 = vmatpush1.msra.mxu0 %v1072
      %v1074 = vand.u32 %v224, 4294901760
      %1075 = vmatprep.subr.mxu0 %v1074
      %v1076 = vand.u32 %v223, 4294901760
      %1077 = vmatpush1.msra.mxu0 %v1076
      %v1078 = vand.u32 %v232, 4294901760
      %1079 = vmatprep.subr.mxu0 %v1078
      %v1080 = vand.u32 %v231, 4294901760
      %1081 = vmatpush1.msra.mxu0 %v1080
      %v1082 = vand.u32 %v240, 4294901760
      %1083 = vmatprep.subr.mxu0 %v1082
      %v1084 = vand.u32 %v239, 4294901760
      %1085 = vmatpush1.msra.mxu0 %v1084
      %v1086 = vand.u32 %v248, 4294901760
      %1087 = vmatprep.subr.mxu0 %v1086
      %v1088 = vand.u32 %v247, 4294901760
      %1089 = vmatpush1.msra.mxu0 %v1088
      %v1090 = vand.u32 %v256, 4294901760
      %1091 = vmatprep.subr.mxu0 %v1090
      %v1092 = vand.u32 %v255, 4294901760
      %1093 = vmatpush1.msra.mxu0 %v1092
      %v1094 = vand.u32 %v264, 4294901760
      %1095 = vmatprep.subr.mxu0 %v1094
      %v1096 = vand.u32 %v263, 4294901760
      %1097 = vmatpush1.msra.mxu0 %v1096
      %v1098 = vand.u32 %v272, 4294901760
      %1099 = vmatprep.subr.mxu0 %v1098
      %v1100 = vand.u32 %v271, 4294901760
      %1101 = vmatpush1.msra.mxu0 %v1100
      %v1102 = vand.u32 %v280, 4294901760
      %1103 = vmatprep.subr.mxu0 %v1102
      %v1104 = vand.u32 %v279, 4294901760
      %1105 = vmatpush1.msra.mxu0 %v1104
      %v1106 = vand.u32 %v288, 4294901760
      %1107 = vmatprep.subr.mxu0 %v1106
      %v1108 = vand.u32 %v287, 4294901760
      %1109 = vmatpush1.msra.mxu0 %v1108
      %1110 = vmatprep.subr.mxu0 0.0
      %1111 = vmatpush1.msra.mxu0 0.0
      %1112 = vmatprep.subr.mxu0 0.0
      %1113 = vmatpush1.msra.mxu0 0.0
      %1114 = vmatprep.subr.mxu0 0.0
      %1115 = vmatpush1.msra.mxu0 0.0
      %1116 = vmatprep.subr.mxu0 0.0
      %1117 = vmatpush1.msra.mxu0 0.0
      %1118 = vmatprep.subr.mxu0 0.0
      %1119 = vmatpush1.msra.mxu0 0.0
      %1120 = vmatprep.subr.mxu0 0.0
      %1121 = vmatpush1.msra.mxu0 0.0
      %1122 = vmatprep.subr.mxu0 0.0
      %1123 = vmatpush1.msra.mxu0 0.0
      %1124 = vmatprep.subr.mxu0 0.0
      %1125 = vmatpush1.msra.mxu0 0.0
      %1126 = vmatprep.subr.mxu0 0.0
      %1127 = vmatpush1.msra.mxu0 0.0
      %1128 = vmatprep.subr.mxu0 0.0
      %1129 = vmatpush1.msra.mxu0 0.0
      %1130 = vmatprep.subr.mxu0 0.0
      %1131 = vmatpush1.msra.mxu0 0.0
      %1132 = vmatprep.subr.mxu0 0.0
      %1133 = vmatpush1.msra.mxu0 0.0
      %1134 = vmatprep.subr.mxu0 0.0
      %1135 = vmatpush1.msra.mxu0 0.0
      %1136 = vmatprep.subr.mxu0 0.0
      %1137 = vmatpush1.msra.mxu0 0.0
      %1138 = vmatprep.subr.mxu0 0.0
      %1139 = vmatpush1.msra.mxu0 0.0
      %1140 = vmatprep.subr.mxu0 0.0
      %1141 = vmatpush1.msra.mxu0 0.0
      %1142 = vmatprep.mubr.f32.mxu0 0.0
      %v1143 = vand.u32 %v166, 4294901760
      %1144 = vmatmul.mubr.f32.gmra.mrb[0].mxu0 %v1143
      %v1145 = vpop.f32.mrb[0].mxu0
      %v1146 = vadd.f32 %v1042, %v1145
      %v1147 = vpop.f32.mrb[0].mxu0
      %v1148 = vadd.f32 %v1044, %v1147
      %1149 = vdwg.mxu0
      %v1150 = vand.u32 %v170, 4294901760
      %1151 = vmatprep.subr.mxu0 %v1150
      %v1152 = vand.u32 %v169, 4294901760
      %1153 = vmatpush1.msra.mxu0 %v1152
      %v1154 = vand.u32 %v178, 4294901760
      %1155 = vmatprep.subr.mxu0 %v1154
      %v1156 = vand.u32 %v177, 4294901760
      %1157 = vmatpush1.msra.mxu0 %v1156
      %v1158 = vand.u32 %v186, 4294901760
      %1159 = vmatprep.subr.mxu0 %v1158
      %v1160 = vand.u32 %v185, 4294901760
      %1161 = vmatpush1.msra.mxu0 %v1160
      %v1162 = vand.u32 %v194, 4294901760
      %1163 = vmatprep.subr.mxu0 %v1162
      %v1164 = vand.u32 %v193, 4294901760
      %1165 = vmatpush1.msra.mxu0 %v1164
      %v1166 = vand.u32 %v202, 4294901760
      %1167 = vmatprep.subr.mxu0 %v1166
      %v1168 = vand.u32 %v201, 4294901760
      %1169 = vmatpush1.msra.mxu0 %v1168
      %v1170 = vand.u32 %v210, 4294901760
      %1171 = vmatprep.subr.mxu0 %v1170
      %v1172 = vand.u32 %v209, 4294901760
      %1173 = vmatpush1.msra.mxu0 %v1172
      %v1174 = vand.u32 %v218, 4294901760
      %1175 = vmatprep.subr.mxu0 %v1174
      %v1176 = vand.u32 %v217, 4294901760
      %1177 = vmatpush1.msra.mxu0 %v1176
      %v1178 = vand.u32 %v226, 4294901760
      %1179 = vmatprep.subr.mxu0 %v1178
      %v1180 = vand.u32 %v225, 4294901760
      %1181 = vmatpush1.msra.mxu0 %v1180
      %v1182 = vand.u32 %v234, 4294901760
      %1183 = vmatprep.subr.mxu0 %v1182
      %v1184 = vand.u32 %v233, 4294901760
      %1185 = vmatpush1.msra.mxu0 %v1184
      %v1186 = vand.u32 %v242, 4294901760
      %1187 = vmatprep.subr.mxu0 %v1186
      %v1188 = vand.u32 %v241, 4294901760
      %1189 = vmatpush1.msra.mxu0 %v1188
      %v1190 = vand.u32 %v250, 4294901760
      %1191 = vmatprep.subr.mxu0 %v1190
      %v1192 = vand.u32 %v249, 4294901760
      %1193 = vmatpush1.msra.mxu0 %v1192
      %v1194 = vand.u32 %v258, 4294901760
      %1195 = vmatprep.subr.mxu0 %v1194
      %v1196 = vand.u32 %v257, 4294901760
      %1197 = vmatpush1.msra.mxu0 %v1196
      %v1198 = vand.u32 %v266, 4294901760
      %1199 = vmatprep.subr.mxu0 %v1198
      %v1200 = vand.u32 %v265, 4294901760
      %1201 = vmatpush1.msra.mxu0 %v1200
      %v1202 = vand.u32 %v274, 4294901760
      %1203 = vmatprep.subr.mxu0 %v1202
      %v1204 = vand.u32 %v273, 4294901760
      %1205 = vmatpush1.msra.mxu0 %v1204
      %v1206 = vand.u32 %v282, 4294901760
      %1207 = vmatprep.subr.mxu0 %v1206
      %v1208 = vand.u32 %v281, 4294901760
      %1209 = vmatpush1.msra.mxu0 %v1208
      %v1210 = vand.u32 %v290, 4294901760
      %1211 = vmatprep.subr.mxu0 %v1210
      %v1212 = vand.u32 %v289, 4294901760
      %1213 = vmatpush1.msra.mxu0 %v1212
      %1214 = vmatprep.subr.mxu0 0.0
      %1215 = vmatpush1.msra.mxu0 0.0
      %1216 = vmatprep.subr.mxu0 0.0
      %1217 = vmatpush1.msra.mxu0 0.0
      %1218 = vmatprep.subr.mxu0 0.0
      %1219 = vmatpush1.msra.mxu0 0.0
      %1220 = vmatprep.subr.mxu0 0.0
      %1221 = vmatpush1.msra.mxu0 0.0
      %1222 = vmatprep.subr.mxu0 0.0
      %1223 = vmatpush1.msra.mxu0 0.0
      %1224 = vmatprep.subr.mxu0 0.0
      %1225 = vmatpush1.msra.mxu0 0.0
      %1226 = vmatprep.subr.mxu0 0.0
      %1227 = vmatpush1.msra.mxu0 0.0
      %1228 = vmatprep.subr.mxu0 0.0
      %1229 = vmatpush1.msra.mxu0 0.0
      %1230 = vmatprep.subr.mxu0 0.0
      %1231 = vmatpush1.msra.mxu0 0.0
      %1232 = vmatprep.subr.mxu0 0.0
      %1233 = vmatpush1.msra.mxu0 0.0
      %1234 = vmatprep.subr.mxu0 0.0
      %1235 = vmatpush1.msra.mxu0 0.0
      %1236 = vmatprep.subr.mxu0 0.0
      %1237 = vmatpush1.msra.mxu0 0.0
      %1238 = vmatprep.subr.mxu0 0.0
      %1239 = vmatpush1.msra.mxu0 0.0
      %1240 = vmatprep.subr.mxu0 0.0
      %1241 = vmatpush1.msra.mxu0 0.0
      %1242 = vmatprep.subr.mxu0 0.0
      %1243 = vmatpush1.msra.mxu0 0.0
      %1244 = vmatprep.subr.mxu0 0.0
      %1245 = vmatpush1.msra.mxu0 0.0
      %1246 = vmatprep.mubr.f32.mxu0 0.0
      %v1247 = vand.u32 %v166, 4294901760
      %v1248 = vsub.f32 %v166, %v1247
      %v1249 = vand.u32 %v1248, 4294901760
      %v1250 = vsub.f32 %v1248, %v1249
      %v1251 = vand.u32 %v1250, 4294901760
      %1252 = vmatmul.mubr.f32.gmra.mrb[0].mxu0 %v1251
      %v1253 = vpop.f32.mrb[0].mxu0
      %v1254 = vadd.f32 0.0, %v1253
      %v1255 = vpop.f32.mrb[0].mxu0
      %v1256 = vadd.f32 0.0, %v1255
      %1257 = vdwg.mxu0
      %v1258 = vand.u32 %v170, 4294901760
      %v1259 = vsub.f32 %v170, %v1258
      %v1260 = vand.u32 %v1259, 4294901760
      %v1261 = vsub.f32 %v1259, %v1260
      %v1262 = vand.u32 %v1261, 4294901760
      %1263 = vmatprep.subr.mxu0 %v1262
      %v1264 = vand.u32 %v169, 4294901760
      %v1265 = vsub.f32 %v169, %v1264
      %v1266 = vand.u32 %v1265, 4294901760
      %v1267 = vsub.f32 %v1265, %v1266
      %v1268 = vand.u32 %v1267, 4294901760
      %1269 = vmatpush1.msra.mxu0 %v1268
      %v1270 = vand.u32 %v178, 4294901760
      %v1271 = vsub.f32 %v178, %v1270
      %v1272 = vand.u32 %v1271, 4294901760
      %v1273 = vsub.f32 %v1271, %v1272
      %v1274 = vand.u32 %v1273, 4294901760
      %1275 = vmatprep.subr.mxu0 %v1274
      %v1276 = vand.u32 %v177, 4294901760
      %v1277 = vsub.f32 %v177, %v1276
      %v1278 = vand.u32 %v1277, 4294901760
      %v1279 = vsub.f32 %v1277, %v1278
      %v1280 = vand.u32 %v1279, 4294901760
      %1281 = vmatpush1.msra.mxu0 %v1280
      %v1282 = vand.u32 %v186, 4294901760
      %v1283 = vsub.f32 %v186, %v1282
      %v1284 = vand.u32 %v1283, 4294901760
      %v1285 = vsub.f32 %v1283, %v1284
      %v1286 = vand.u32 %v1285, 4294901760
      %1287 = vmatprep.subr.mxu0 %v1286
      %v1288 = vand.u32 %v185, 4294901760
      %v1289 = vsub.f32 %v185, %v1288
      %v1290 = vand.u32 %v1289, 4294901760
      %v1291 = vsub.f32 %v1289, %v1290
      %v1292 = vand.u32 %v1291, 4294901760
      %1293 = vmatpush1.msra.mxu0 %v1292
      %v1294 = vand.u32 %v194, 4294901760
      %v1295 = vsub.f32 %v194, %v1294
      %v1296 = vand.u32 %v1295, 4294901760
      %v1297 = vsub.f32 %v1295, %v1296
      %v1298 = vand.u32 %v1297, 4294901760
      %1299 = vmatprep.subr.mxu0 %v1298
      %v1300 = vand.u32 %v193, 4294901760
      %v1301 = vsub.f32 %v193, %v1300
      %v1302 = vand.u32 %v1301, 4294901760
      %v1303 = vsub.f32 %v1301, %v1302
      %v1304 = vand.u32 %v1303, 4294901760
      %1305 = vmatpush1.msra.mxu0 %v1304
      %v1306 = vand.u32 %v202, 4294901760
      %v1307 = vsub.f32 %v202, %v1306
      %v1308 = vand.u32 %v1307, 4294901760
      %v1309 = vsub.f32 %v1307, %v1308
      %v1310 = vand.u32 %v1309, 4294901760
      %1311 = vmatprep.subr.mxu0 %v1310
      %v1312 = vand.u32 %v201, 4294901760
      %v1313 = vsub.f32 %v201, %v1312
      %v1314 = vand.u32 %v1313, 4294901760
      %v1315 = vsub.f32 %v1313, %v1314
      %v1316 = vand.u32 %v1315, 4294901760
      %1317 = vmatpush1.msra.mxu0 %v1316
      %v1318 = vand.u32 %v210, 4294901760
      %v1319 = vsub.f32 %v210, %v1318
      %v1320 = vand.u32 %v1319, 4294901760
      %v1321 = vsub.f32 %v1319, %v1320
      %v1322 = vand.u32 %v1321, 4294901760
      %1323 = vmatprep.subr.mxu0 %v1322
      %v1324 = vand.u32 %v209, 4294901760
      %v1325 = vsub.f32 %v209, %v1324
      %v1326 = vand.u32 %v1325, 4294901760
      %v1327 = vsub.f32 %v1325, %v1326
      %v1328 = vand.u32 %v1327, 4294901760
      %1329 = vmatpush1.msra.mxu0 %v1328
      %v1330 = vand.u32 %v218, 4294901760
      %v1331 = vsub.f32 %v218, %v1330
      %v1332 = vand.u32 %v1331, 4294901760
      %v1333 = vsub.f32 %v1331, %v1332
      %v1334 = vand.u32 %v1333, 4294901760
      %1335 = vmatprep.subr.mxu0 %v1334
      %v1336 = vand.u32 %v217, 4294901760
      %v1337 = vsub.f32 %v217, %v1336
      %v1338 = vand.u32 %v1337, 4294901760
      %v1339 = vsub.f32 %v1337, %v1338
      %v1340 = vand.u32 %v1339, 4294901760
      %1341 = vmatpush1.msra.mxu0 %v1340
      %v1342 = vand.u32 %v226, 4294901760
      %v1343 = vsub.f32 %v226, %v1342
      %v1344 = vand.u32 %v1343, 4294901760
      %v1345 = vsub.f32 %v1343, %v1344
      %v1346 = vand.u32 %v1345, 4294901760
      %1347 = vmatprep.subr.mxu0 %v1346
      %v1348 = vand.u32 %v225, 4294901760
      %v1349 = vsub.f32 %v225, %v1348
      %v1350 = vand.u32 %v1349, 4294901760
      %v1351 = vsub.f32 %v1349, %v1350
      %v1352 = vand.u32 %v1351, 4294901760
      %1353 = vmatpush1.msra.mxu0 %v1352
      %v1354 = vand.u32 %v234, 4294901760
      %v1355 = vsub.f32 %v234, %v1354
      %v1356 = vand.u32 %v1355, 4294901760
      %v1357 = vsub.f32 %v1355, %v1356
      %v1358 = vand.u32 %v1357, 4294901760
      %1359 = vmatprep.subr.mxu0 %v1358
      %v1360 = vand.u32 %v233, 4294901760
      %v1361 = vsub.f32 %v233, %v1360
      %v1362 = vand.u32 %v1361, 4294901760
      %v1363 = vsub.f32 %v1361, %v1362
      %v1364 = vand.u32 %v1363, 4294901760
      %1365 = vmatpush1.msra.mxu0 %v1364
      %v1366 = vand.u32 %v242, 4294901760
      %v1367 = vsub.f32 %v242, %v1366
      %v1368 = vand.u32 %v1367, 4294901760
      %v1369 = vsub.f32 %v1367, %v1368
      %v1370 = vand.u32 %v1369, 4294901760
      %1371 = vmatprep.subr.mxu0 %v1370
      %v1372 = vand.u32 %v241, 4294901760
      %v1373 = vsub.f32 %v241, %v1372
      %v1374 = vand.u32 %v1373, 4294901760
      %v1375 = vsub.f32 %v1373, %v1374
      %v1376 = vand.u32 %v1375, 4294901760
      %1377 = vmatpush1.msra.mxu0 %v1376
      %v1378 = vand.u32 %v250, 4294901760
      %v1379 = vsub.f32 %v250, %v1378
      %v1380 = vand.u32 %v1379, 4294901760
      %v1381 = vsub.f32 %v1379, %v1380
      %v1382 = vand.u32 %v1381, 4294901760
      %1383 = vmatprep.subr.mxu0 %v1382
      %v1384 = vand.u32 %v249, 4294901760
      %v1385 = vsub.f32 %v249, %v1384
      %v1386 = vand.u32 %v1385, 4294901760
      %v1387 = vsub.f32 %v1385, %v1386
      %v1388 = vand.u32 %v1387, 4294901760
      %1389 = vmatpush1.msra.mxu0 %v1388
      %v1390 = vand.u32 %v258, 4294901760
      %v1391 = vsub.f32 %v258, %v1390
      %v1392 = vand.u32 %v1391, 4294901760
      %v1393 = vsub.f32 %v1391, %v1392
      %v1394 = vand.u32 %v1393, 4294901760
      %1395 = vmatprep.subr.mxu0 %v1394
      %v1396 = vand.u32 %v257, 4294901760
      %v1397 = vsub.f32 %v257, %v1396
      %v1398 = vand.u32 %v1397, 4294901760
      %v1399 = vsub.f32 %v1397, %v1398
      %v1400 = vand.u32 %v1399, 4294901760
      %1401 = vmatpush1.msra.mxu0 %v1400
      %v1402 = vand.u32 %v266, 4294901760
      %v1403 = vsub.f32 %v266, %v1402
      %v1404 = vand.u32 %v1403, 4294901760
      %v1405 = vsub.f32 %v1403, %v1404
      %v1406 = vand.u32 %v1405, 4294901760
      %1407 = vmatprep.subr.mxu0 %v1406
      %v1408 = vand.u32 %v265, 4294901760
      %v1409 = vsub.f32 %v265, %v1408
      %v1410 = vand.u32 %v1409, 4294901760
      %v1411 = vsub.f32 %v1409, %v1410
      %v1412 = vand.u32 %v1411, 4294901760
      %1413 = vmatpush1.msra.mxu0 %v1412
      %v1414 = vand.u32 %v274, 4294901760
      %v1415 = vsub.f32 %v274, %v1414
      %v1416 = vand.u32 %v1415, 4294901760
      %v1417 = vsub.f32 %v1415, %v1416
      %v1418 = vand.u32 %v1417, 4294901760
      %1419 = vmatprep.subr.mxu0 %v1418
      %v1420 = vand.u32 %v273, 4294901760
      %v1421 = vsub.f32 %v273, %v1420
      %v1422 = vand.u32 %v1421, 4294901760
      %v1423 = vsub.f32 %v1421, %v1422
      %v1424 = vand.u32 %v1423, 4294901760
      %1425 = vmatpush1.msra.mxu0 %v1424
      %v1426 = vand.u32 %v282, 4294901760
      %v1427 = vsub.f32 %v282, %v1426
      %v1428 = vand.u32 %v1427, 4294901760
      %v1429 = vsub.f32 %v1427, %v1428
      %v1430 = vand.u32 %v1429, 4294901760
      %1431 = vmatprep.subr.mxu0 %v1430
      %v1432 = vand.u32 %v281, 4294901760
      %v1433 = vsub.f32 %v281, %v1432
      %v1434 = vand.u32 %v1433, 4294901760
      %v1435 = vsub.f32 %v1433, %v1434
      %v1436 = vand.u32 %v1435, 4294901760
      %1437 = vmatpush1.msra.mxu0 %v1436
      %v1438 = vand.u32 %v290, 4294901760
      %v1439 = vsub.f32 %v290, %v1438
      %v1440 = vand.u32 %v1439, 4294901760
      %v1441 = vsub.f32 %v1439, %v1440
      %v1442 = vand.u32 %v1441, 4294901760
      %1443 = vmatprep.subr.mxu0 %v1442
      %v1444 = vand.u32 %v289, 4294901760
      %v1445 = vsub.f32 %v289, %v1444
      %v1446 = vand.u32 %v1445, 4294901760
      %v1447 = vsub.f32 %v1445, %v1446
      %v1448 = vand.u32 %v1447, 4294901760
      %1449 = vmatpush1.msra.mxu0 %v1448
      %1450 = vmatprep.subr.mxu0 0.0
      %1451 = vmatpush1.msra.mxu0 0.0
      %1452 = vmatprep.subr.mxu0 0.0
      %1453 = vmatpush1.msra.mxu0 0.0
      %1454 = vmatprep.subr.mxu0 0.0
      %1455 = vmatpush1.msra.mxu0 0.0
      %1456 = vmatprep.subr.mxu0 0.0
      %1457 = vmatpush1.msra.mxu0 0.0
      %1458 = vmatprep.subr.mxu0 0.0
      %1459 = vmatpush1.msra.mxu0 0.0
      %1460 = vmatprep.subr.mxu0 0.0
      %1461 = vmatpush1.msra.mxu0 0.0
      %1462 = vmatprep.subr.mxu0 0.0
      %1463 = vmatpush1.msra.mxu0 0.0
      %1464 = vmatprep.subr.mxu0 0.0
      %1465 = vmatpush1.msra.mxu0 0.0
      %1466 = vmatprep.subr.mxu0 0.0
      %1467 = vmatpush1.msra.mxu0 0.0
      %1468 = vmatprep.subr.mxu0 0.0
      %1469 = vmatpush1.msra.mxu0 0.0
      %1470 = vmatprep.subr.mxu0 0.0
      %1471 = vmatpush1.msra.mxu0 0.0
      %1472 = vmatprep.subr.mxu0 0.0
      %1473 = vmatpush1.msra.mxu0 0.0
      %1474 = vmatprep.subr.mxu0 0.0
      %1475 = vmatpush1.msra.mxu0 0.0
      %1476 = vmatprep.subr.mxu0 0.0
      %1477 = vmatpush1.msra.mxu0 0.0
      %1478 = vmatprep.subr.mxu0 0.0
      %1479 = vmatpush1.msra.mxu0 0.0
      %1480 = vmatprep.subr.mxu0 0.0
      %1481 = vmatpush1.msra.mxu0 0.0
      %1482 = vmatprep.mubr.f32.mxu0 0.0
      %v1483 = vand.u32 %v166, 4294901760
      %1484 = vmatmul.mubr.f32.gmra.mrb[0].mxu0 %v1483
      %v1485 = vpop.f32.mrb[0].mxu0
      %v1486 = vadd.f32 %v1254, %v1485
      %v1487 = vpop.f32.mrb[0].mxu0
      %v1488 = vadd.f32 %v1256, %v1487
      %1489 = vdwg.mxu0
      %v1490 = vand.u32 %v170, 4294901760
      %v1491 = vsub.f32 %v170, %v1490
      %1492 = vmatprep.subr.mxu0 %v1491
      %v1493 = vand.u32 %v169, 4294901760
      %v1494 = vsub.f32 %v169, %v1493
      %1495 = vmatpush1.msra.mxu0 %v1494
      %v1496 = vand.u32 %v178, 4294901760
      %v1497 = vsub.f32 %v178, %v1496
      %1498 = vmatprep.subr.mxu0 %v1497
      %v1499 = vand.u32 %v177, 4294901760
      %v1500 = vsub.f32 %v177, %v1499
      %1501 = vmatpush1.msra.mxu0 %v1500
      %v1502 = vand.u32 %v186, 4294901760
      %v1503 = vsub.f32 %v186, %v1502
      %1504 = vmatprep.subr.mxu0 %v1503
      %v1505 = vand.u32 %v185, 4294901760
      %v1506 = vsub.f32 %v185, %v1505
      %1507 = vmatpush1.msra.mxu0 %v1506
      %v1508 = vand.u32 %v194, 4294901760
      %v1509 = vsub.f32 %v194, %v1508
      %1510 = vmatprep.subr.mxu0 %v1509
      %v1511 = vand.u32 %v193, 4294901760
      %v1512 = vsub.f32 %v193, %v1511
      %1513 = vmatpush1.msra.mxu0 %v1512
      %v1514 = vand.u32 %v202, 4294901760
      %v1515 = vsub.f32 %v202, %v1514
      %1516 = vmatprep.subr.mxu0 %v1515
      %v1517 = vand.u32 %v201, 4294901760
      %v1518 = vsub.f32 %v201, %v1517
      %1519 = vmatpush1.msra.mxu0 %v1518
      %v1520 = vand.u32 %v210, 4294901760
      %v1521 = vsub.f32 %v210, %v1520
      %1522 = vmatprep.subr.mxu0 %v1521
      %v1523 = vand.u32 %v209, 4294901760
      %v1524 = vsub.f32 %v209, %v1523
      %1525 = vmatpush1.msra.mxu0 %v1524
      %v1526 = vand.u32 %v218, 4294901760
      %v1527 = vsub.f32 %v218, %v1526
      %1528 = vmatprep.subr.mxu0 %v1527
      %v1529 = vand.u32 %v217, 4294901760
      %v1530 = vsub.f32 %v217, %v1529
      %1531 = vmatpush1.msra.mxu0 %v1530
      %v1532 = vand.u32 %v226, 4294901760
      %v1533 = vsub.f32 %v226, %v1532
      %1534 = vmatprep.subr.mxu0 %v1533
      %v1535 = vand.u32 %v225, 4294901760
      %v1536 = vsub.f32 %v225, %v1535
      %1537 = vmatpush1.msra.mxu0 %v1536
      %v1538 = vand.u32 %v234, 4294901760
      %v1539 = vsub.f32 %v234, %v1538
      %1540 = vmatprep.subr.mxu0 %v1539
      %v1541 = vand.u32 %v233, 4294901760
      %v1542 = vsub.f32 %v233, %v1541
      %1543 = vmatpush1.msra.mxu0 %v1542
      %v1544 = vand.u32 %v242, 4294901760
      %v1545 = vsub.f32 %v242, %v1544
      %1546 = vmatprep.subr.mxu0 %v1545
      %v1547 = vand.u32 %v241, 4294901760
      %v1548 = vsub.f32 %v241, %v1547
      %1549 = vmatpush1.msra.mxu0 %v1548
      %v1550 = vand.u32 %v250, 4294901760
      %v1551 = vsub.f32 %v250, %v1550
      %1552 = vmatprep.subr.mxu0 %v1551
      %v1553 = vand.u32 %v249, 4294901760
      %v1554 = vsub.f32 %v249, %v1553
      %1555 = vmatpush1.msra.mxu0 %v1554
      %v1556 = vand.u32 %v258, 4294901760
      %v1557 = vsub.f32 %v258, %v1556
      %1558 = vmatprep.subr.mxu0 %v1557
      %v1559 = vand.u32 %v257, 4294901760
      %v1560 = vsub.f32 %v257, %v1559
      %1561 = vmatpush1.msra.mxu0 %v1560
      %v1562 = vand.u32 %v266, 4294901760
      %v1563 = vsub.f32 %v266, %v1562
      %1564 = vmatprep.subr.mxu0 %v1563
      %v1565 = vand.u32 %v265, 4294901760
      %v1566 = vsub.f32 %v265, %v1565
      %1567 = vmatpush1.msra.mxu0 %v1566
      %v1568 = vand.u32 %v274, 4294901760
      %v1569 = vsub.f32 %v274, %v1568
      %1570 = vmatprep.subr.mxu0 %v1569
      %v1571 = vand.u32 %v273, 4294901760
      %v1572 = vsub.f32 %v273, %v1571
      %1573 = vmatpush1.msra.mxu0 %v1572
      %v1574 = vand.u32 %v282, 4294901760
      %v1575 = vsub.f32 %v282, %v1574
      %1576 = vmatprep.subr.mxu0 %v1575
      %v1577 = vand.u32 %v281, 4294901760
      %v1578 = vsub.f32 %v281, %v1577
      %1579 = vmatpush1.msra.mxu0 %v1578
      %v1580 = vand.u32 %v290, 4294901760
      %v1581 = vsub.f32 %v290, %v1580
      %1582 = vmatprep.subr.mxu0 %v1581
      %v1583 = vand.u32 %v289, 4294901760
      %v1584 = vsub.f32 %v289, %v1583
      %1585 = vmatpush1.msra.mxu0 %v1584
      %1586 = vmatprep.subr.mxu0 0.0
      %1587 = vmatpush1.msra.mxu0 0.0
      %1588 = vmatprep.subr.mxu0 0.0
      %1589 = vmatpush1.msra.mxu0 0.0
      %1590 = vmatprep.subr.mxu0 0.0
      %1591 = vmatpush1.msra.mxu0 0.0
      %1592 = vmatprep.subr.mxu0 0.0
      %1593 = vmatpush1.msra.mxu0 0.0
      %1594 = vmatprep.subr.mxu0 0.0
      %1595 = vmatpush1.msra.mxu0 0.0
      %1596 = vmatprep.subr.mxu0 0.0
      %1597 = vmatpush1.msra.mxu0 0.0
      %1598 = vmatprep.subr.mxu0 0.0
      %1599 = vmatpush1.msra.mxu0 0.0
      %1600 = vmatprep.subr.mxu0 0.0
      %1601 = vmatpush1.msra.mxu0 0.0
      %1602 = vmatprep.subr.mxu0 0.0
      %1603 = vmatpush1.msra.mxu0 0.0
      %1604 = vmatprep.subr.mxu0 0.0
      %1605 = vmatpush1.msra.mxu0 0.0
      %1606 = vmatprep.subr.mxu0 0.0
      %1607 = vmatpush1.msra.mxu0 0.0
      %1608 = vmatprep.subr.mxu0 0.0
      %1609 = vmatpush1.msra.mxu0 0.0
      %1610 = vmatprep.subr.mxu0 0.0
      %1611 = vmatpush1.msra.mxu0 0.0
      %1612 = vmatprep.subr.mxu0 0.0
      %1613 = vmatpush1.msra.mxu0 0.0
      %1614 = vmatprep.subr.mxu0 0.0
      %1615 = vmatpush1.msra.mxu0 0.0
      %1616 = vmatprep.subr.mxu0 0.0
      %1617 = vmatpush1.msra.mxu0 0.0
      %1618 = vmatprep.mubr.f32.mxu0 0.0
      %v1619 = vand.u32 %v166, 4294901760
      %v1620 = vsub.f32 %v166, %v1619
      %1621 = vmatmul.mubr.f32.gmra.mrb[0].mxu0 %v1620
      %v1622 = vpop.f32.mrb[0].mxu0
      %v1623 = vadd.f32 %v1486, %v1622
      %v1624 = vpop.f32.mrb[0].mxu0
      %v1625 = vadd.f32 %v1488, %v1624
      %1626 = vdwg.mxu0
      %v1627 = vand.u32 %v170, 4294901760
      %1628 = vmatprep.subr.mxu0 %v1627
      %v1629 = vand.u32 %v169, 4294901760
      %1630 = vmatpush1.msra.mxu0 %v1629
      %v1631 = vand.u32 %v178, 4294901760
      %1632 = vmatprep.subr.mxu0 %v1631
      %v1633 = vand.u32 %v177, 4294901760
      %1634 = vmatpush1.msra.mxu0 %v1633
      %v1635 = vand.u32 %v186, 4294901760
      %1636 = vmatprep.subr.mxu0 %v1635
      %v1637 = vand.u32 %v185, 4294901760
      %1638 = vmatpush1.msra.mxu0 %v1637
      %v1639 = vand.u32 %v194, 4294901760
      %1640 = vmatprep.subr.mxu0 %v1639
      %v1641 = vand.u32 %v193, 4294901760
      %1642 = vmatpush1.msra.mxu0 %v1641
      %v1643 = vand.u32 %v202, 4294901760
      %1644 = vmatprep.subr.mxu0 %v1643
      %v1645 = vand.u32 %v201, 4294901760
      %1646 = vmatpush1.msra.mxu0 %v1645
      %v1647 = vand.u32 %v210, 4294901760
      %1648 = vmatprep.subr.mxu0 %v1647
      %v1649 = vand.u32 %v209, 4294901760
      %1650 = vmatpush1.msra.mxu0 %v1649
      %v1651 = vand.u32 %v218, 4294901760
      %1652 = vmatprep.subr.mxu0 %v1651
      %v1653 = vand.u32 %v217, 4294901760
      %1654 = vmatpush1.msra.mxu0 %v1653
      %v1655 = vand.u32 %v226, 4294901760
      %1656 = vmatprep.subr.mxu0 %v1655
      %v1657 = vand.u32 %v225, 4294901760
      %1658 = vmatpush1.msra.mxu0 %v1657
      %v1659 = vand.u32 %v234, 4294901760
      %1660 = vmatprep.subr.mxu0 %v1659
      %v1661 = vand.u32 %v233, 4294901760
      %1662 = vmatpush1.msra.mxu0 %v1661
      %v1663 = vand.u32 %v242, 4294901760
      %1664 = vmatprep.subr.mxu0 %v1663
      %v1665 = vand.u32 %v241, 4294901760
      %1666 = vmatpush1.msra.mxu0 %v1665
      %v1667 = vand.u32 %v250, 4294901760
      %1668 = vmatprep.subr.mxu0 %v1667
      %v1669 = vand.u32 %v249, 4294901760
      %1670 = vmatpush1.msra.mxu0 %v1669
      %v1671 = vand.u32 %v258, 4294901760
      %1672 = vmatprep.subr.mxu0 %v1671
      %v1673 = vand.u32 %v257, 4294901760
      %1674 = vmatpush1.msra.mxu0 %v1673
      %v1675 = vand.u32 %v266, 4294901760
      %1676 = vmatprep.subr.mxu0 %v1675
      %v1677 = vand.u32 %v265, 4294901760
      %1678 = vmatpush1.msra.mxu0 %v1677
      %v1679 = vand.u32 %v274, 4294901760
      %1680 = vmatprep.subr.mxu0 %v1679
      %v1681 = vand.u32 %v273, 4294901760
      %1682 = vmatpush1.msra.mxu0 %v1681
      %v1683 = vand.u32 %v282, 4294901760
      %1684 = vmatprep.subr.mxu0 %v1683
      %v1685 = vand.u32 %v281, 4294901760
      %1686 = vmatpush1.msra.mxu0 %v1685
      %v1687 = vand.u32 %v290, 4294901760
      %1688 = vmatprep.subr.mxu0 %v1687
      %v1689 = vand.u32 %v289, 4294901760
      %1690 = vmatpush1.msra.mxu0 %v1689
      %1691 = vmatprep.subr.mxu0 0.0
      %1692 = vmatpush1.msra.mxu0 0.0
      %1693 = vmatprep.subr.mxu0 0.0
      %1694 = vmatpush1.msra.mxu0 0.0
      %1695 = vmatprep.subr.mxu0 0.0
      %1696 = vmatpush1.msra.mxu0 0.0
      %1697 = vmatprep.subr.mxu0 0.0
      %1698 = vmatpush1.msra.mxu0 0.0
      %1699 = vmatprep.subr.mxu0 0.0
      %1700 = vmatpush1.msra.mxu0 0.0
      %1701 = vmatprep.subr.mxu0 0.0
      %1702 = vmatpush1.msra.mxu0 0.0
      %1703 = vmatprep.subr.mxu0 0.0
      %1704 = vmatpush1.msra.mxu0 0.0
      %1705 = vmatprep.subr.mxu0 0.0
      %1706 = vmatpush1.msra.mxu0 0.0
      %1707 = vmatprep.subr.mxu0 0.0
      %1708 = vmatpush1.msra.mxu0 0.0
      %1709 = vmatprep.subr.mxu0 0.0
      %1710 = vmatpush1.msra.mxu0 0.0
      %1711 = vmatprep.subr.mxu0 0.0
      %1712 = vmatpush1.msra.mxu0 0.0
      %1713 = vmatprep.subr.mxu0 0.0
      %1714 = vmatpush1.msra.mxu0 0.0
      %1715 = vmatprep.subr.mxu0 0.0
      %1716 = vmatpush1.msra.mxu0 0.0
      %1717 = vmatprep.subr.mxu0 0.0
      %1718 = vmatpush1.msra.mxu0 0.0
      %1719 = vmatprep.subr.mxu0 0.0
      %1720 = vmatpush1.msra.mxu0 0.0
      %1721 = vmatprep.subr.mxu0 0.0
      %1722 = vmatpush1.msra.mxu0 0.0
      %1723 = vmatprep.mubr.f32.mxu0 0.0
      %v1724 = vand.u32 %v166, 4294901760
      %v1725 = vsub.f32 %v166, %v1724
      %v1726 = vand.u32 %v1725, 4294901760
      %1727 = vmatmul.mubr.f32.gmra.mrb[0].mxu0 %v1726
      %v1728 = vpop.f32.mrb[0].mxu0
      %v1729 = vadd.f32 %v1623, %v1728
      %v1730 = vpop.f32.mrb[0].mxu0
      %v1731 = vadd.f32 %v1625, %v1730
      %1732 = vdwg.mxu0
      %v1733 = vand.u32 %v170, 4294901760
      %v1734 = vsub.f32 %v170, %v1733
      %v1735 = vand.u32 %v1734, 4294901760
      %1736 = vmatprep.subr.mxu0 %v1735
      %v1737 = vand.u32 %v169, 4294901760
      %v1738 = vsub.f32 %v169, %v1737
      %v1739 = vand.u32 %v1738, 4294901760
      %1740 = vmatpush1.msra.mxu0 %v1739
      %v1741 = vand.u32 %v178, 4294901760
      %v1742 = vsub.f32 %v178, %v1741
      %v1743 = vand.u32 %v1742, 4294901760
      %1744 = vmatprep.subr.mxu0 %v1743
      %v1745 = vand.u32 %v177, 4294901760
      %v1746 = vsub.f32 %v177, %v1745
      %v1747 = vand.u32 %v1746, 4294901760
      %1748 = vmatpush1.msra.mxu0 %v1747
      %v1749 = vand.u32 %v186, 4294901760
      %v1750 = vsub.f32 %v186, %v1749
      %v1751 = vand.u32 %v1750, 4294901760
      %1752 = vmatprep.subr.mxu0 %v1751
      %v1753 = vand.u32 %v185, 4294901760
      %v1754 = vsub.f32 %v185, %v1753
      %v1755 = vand.u32 %v1754, 4294901760
      %1756 = vmatpush1.msra.mxu0 %v1755
      %v1757 = vand.u32 %v194, 4294901760
      %v1758 = vsub.f32 %v194, %v1757
      %v1759 = vand.u32 %v1758, 4294901760
      %1760 = vmatprep.subr.mxu0 %v1759
      %v1761 = vand.u32 %v193, 4294901760
      %v1762 = vsub.f32 %v193, %v1761
      %v1763 = vand.u32 %v1762, 4294901760
      %1764 = vmatpush1.msra.mxu0 %v1763
      %v1765 = vand.u32 %v202, 4294901760
      %v1766 = vsub.f32 %v202, %v1765
      %v1767 = vand.u32 %v1766, 4294901760
      %1768 = vmatprep.subr.mxu0 %v1767
      %v1769 = vand.u32 %v201, 4294901760
      %v1770 = vsub.f32 %v201, %v1769
      %v1771 = vand.u32 %v1770, 4294901760
      %1772 = vmatpush1.msra.mxu0 %v1771
      %v1773 = vand.u32 %v210, 4294901760
      %v1774 = vsub.f32 %v210, %v1773
      %v1775 = vand.u32 %v1774, 4294901760
      %1776 = vmatprep.subr.mxu0 %v1775
      %v1777 = vand.u32 %v209, 4294901760
      %v1778 = vsub.f32 %v209, %v1777
      %v1779 = vand.u32 %v1778, 4294901760
      %1780 = vmatpush1.msra.mxu0 %v1779
      %v1781 = vand.u32 %v218, 4294901760
      %v1782 = vsub.f32 %v218, %v1781
      %v1783 = vand.u32 %v1782, 4294901760
      %1784 = vmatprep.subr.mxu0 %v1783
      %v1785 = vand.u32 %v217, 4294901760
      %v1786 = vsub.f32 %v217, %v1785
      %v1787 = vand.u32 %v1786, 4294901760
      %1788 = vmatpush1.msra.mxu0 %v1787
      %v1789 = vand.u32 %v226, 4294901760
      %v1790 = vsub.f32 %v226, %v1789
      %v1791 = vand.u32 %v1790, 4294901760
      %1792 = vmatprep.subr.mxu0 %v1791
      %v1793 = vand.u32 %v225, 4294901760
      %v1794 = vsub.f32 %v225, %v1793
      %v1795 = vand.u32 %v1794, 4294901760
      %1796 = vmatpush1.msra.mxu0 %v1795
      %v1797 = vand.u32 %v234, 4294901760
      %v1798 = vsub.f32 %v234, %v1797
      %v1799 = vand.u32 %v1798, 4294901760
      %1800 = vmatprep.subr.mxu0 %v1799
      %v1801 = vand.u32 %v233, 4294901760
      %v1802 = vsub.f32 %v233, %v1801
      %v1803 = vand.u32 %v1802, 4294901760
      %1804 = vmatpush1.msra.mxu0 %v1803
      %v1805 = vand.u32 %v242, 4294901760
      %v1806 = vsub.f32 %v242, %v1805
      %v1807 = vand.u32 %v1806, 4294901760
      %1808 = vmatprep.subr.mxu0 %v1807
      %v1809 = vand.u32 %v241, 4294901760
      %v1810 = vsub.f32 %v241, %v1809
      %v1811 = vand.u32 %v1810, 4294901760
      %1812 = vmatpush1.msra.mxu0 %v1811
      %v1813 = vand.u32 %v250, 4294901760
      %v1814 = vsub.f32 %v250, %v1813
      %v1815 = vand.u32 %v1814, 4294901760
      %1816 = vmatprep.subr.mxu0 %v1815
      %v1817 = vand.u32 %v249, 4294901760
      %v1818 = vsub.f32 %v249, %v1817
      %v1819 = vand.u32 %v1818, 4294901760
      %1820 = vmatpush1.msra.mxu0 %v1819
      %v1821 = vand.u32 %v258, 4294901760
      %v1822 = vsub.f32 %v258, %v1821
      %v1823 = vand.u32 %v1822, 4294901760
      %1824 = vmatprep.subr.mxu0 %v1823
      %v1825 = vand.u32 %v257, 4294901760
      %v1826 = vsub.f32 %v257, %v1825
      %v1827 = vand.u32 %v1826, 4294901760
      %1828 = vmatpush1.msra.mxu0 %v1827
      %v1829 = vand.u32 %v266, 4294901760
      %v1830 = vsub.f32 %v266, %v1829
      %v1831 = vand.u32 %v1830, 4294901760
      %1832 = vmatprep.subr.mxu0 %v1831
      %v1833 = vand.u32 %v265, 4294901760
      %v1834 = vsub.f32 %v265, %v1833
      %v1835 = vand.u32 %v1834, 4294901760
      %1836 = vmatpush1.msra.mxu0 %v1835
      %v1837 = vand.u32 %v274, 4294901760
      %v1838 = vsub.f32 %v274, %v1837
      %v1839 = vand.u32 %v1838, 4294901760
      %1840 = vmatprep.subr.mxu0 %v1839
      %v1841 = vand.u32 %v273, 4294901760
      %v1842 = vsub.f32 %v273, %v1841
      %v1843 = vand.u32 %v1842, 4294901760
      %1844 = vmatpush1.msra.mxu0 %v1843
      %v1845 = vand.u32 %v282, 4294901760
      %v1846 = vsub.f32 %v282, %v1845
      %v1847 = vand.u32 %v1846, 4294901760
      %1848 = vmatprep.subr.mxu0 %v1847
      %v1849 = vand.u32 %v281, 4294901760
      %v1850 = vsub.f32 %v281, %v1849
      %v1851 = vand.u32 %v1850, 4294901760
      %1852 = vmatpush1.msra.mxu0 %v1851
      %v1853 = vand.u32 %v290, 4294901760
      %v1854 = vsub.f32 %v290, %v1853
      %v1855 = vand.u32 %v1854, 4294901760
      %1856 = vmatprep.subr.mxu0 %v1855
      %v1857 = vand.u32 %v289, 4294901760
      %v1858 = vsub.f32 %v289, %v1857
      %v1859 = vand.u32 %v1858, 4294901760
      %1860 = vmatpush1.msra.mxu0 %v1859
      %1861 = vmatprep.subr.mxu0 0.0
      %1862 = vmatpush1.msra.mxu0 0.0
      %1863 = vmatprep.subr.mxu0 0.0
      %1864 = vmatpush1.msra.mxu0 0.0
      %1865 = vmatprep.subr.mxu0 0.0
      %1866 = vmatpush1.msra.mxu0 0.0
      %1867 = vmatprep.subr.mxu0 0.0
      %1868 = vmatpush1.msra.mxu0 0.0
      %1869 = vmatprep.subr.mxu0 0.0
      %1870 = vmatpush1.msra.mxu0 0.0
      %1871 = vmatprep.subr.mxu0 0.0
      %1872 = vmatpush1.msra.mxu0 0.0
      %1873 = vmatprep.subr.mxu0 0.0
      %1874 = vmatpush1.msra.mxu0 0.0
      %1875 = vmatprep.subr.mxu0 0.0
      %1876 = vmatpush1.msra.mxu0 0.0
      %1877 = vmatprep.subr.mxu0 0.0
      %1878 = vmatpush1.msra.mxu0 0.0
      %1879 = vmatprep.subr.mxu0 0.0
      %1880 = vmatpush1.msra.mxu0 0.0
      %1881 = vmatprep.subr.mxu0 0.0
      %1882 = vmatpush1.msra.mxu0 0.0
      %1883 = vmatprep.subr.mxu0 0.0
      %1884 = vmatpush1.msra.mxu0 0.0
      %1885 = vmatprep.subr.mxu0 0.0
      %1886 = vmatpush1.msra.mxu0 0.0
      %1887 = vmatprep.subr.mxu0 0.0
      %1888 = vmatpush1.msra.mxu0 0.0
      %1889 = vmatprep.subr.mxu0 0.0
      %1890 = vmatpush1.msra.mxu0 0.0
      %1891 = vmatprep.subr.mxu0 0.0
      %1892 = vmatpush1.msra.mxu0 0.0
      %1893 = vmatprep.mubr.f32.mxu0 0.0
      %v1894 = vand.u32 %v166, 4294901760
      %1895 = vmatmul.mubr.f32.gmra.mrb[0].mxu0 %v1894
      %v1896 = vpop.f32.mrb[0].mxu0
      %v1897 = vadd.f32 %v1729, %v1896
      %v1898 = vpop.f32.mrb[0].mxu0
      %v1899 = vadd.f32 %v1731, %v1898
      %1900 = vdwg.mxu0
      %v1901 = vand.u32 %v170, 4294901760
      %1902 = vmatprep.subr.mxu0 %v1901
      %v1903 = vand.u32 %v169, 4294901760
      %1904 = vmatpush1.msra.mxu0 %v1903
      %v1905 = vand.u32 %v178, 4294901760
      %1906 = vmatprep.subr.mxu0 %v1905
      %v1907 = vand.u32 %v177, 4294901760
      %1908 = vmatpush1.msra.mxu0 %v1907
      %v1909 = vand.u32 %v186, 4294901760
      %1910 = vmatprep.subr.mxu0 %v1909
      %v1911 = vand.u32 %v185, 4294901760
      %1912 = vmatpush1.msra.mxu0 %v1911
      %v1913 = vand.u32 %v194, 4294901760
      %1914 = vmatprep.subr.mxu0 %v1913
      %v1915 = vand.u32 %v193, 4294901760
      %1916 = vmatpush1.msra.mxu0 %v1915
      %v1917 = vand.u32 %v202, 4294901760
      %1918 = vmatprep.subr.mxu0 %v1917
      %v1919 = vand.u32 %v201, 4294901760
      %1920 = vmatpush1.msra.mxu0 %v1919
      %v1921 = vand.u32 %v210, 4294901760
      %1922 = vmatprep.subr.mxu0 %v1921
      %v1923 = vand.u32 %v209, 4294901760
      %1924 = vmatpush1.msra.mxu0 %v1923
      %v1925 = vand.u32 %v218, 4294901760
      %1926 = vmatprep.subr.mxu0 %v1925
      %v1927 = vand.u32 %v217, 4294901760
      %1928 = vmatpush1.msra.mxu0 %v1927
      %v1929 = vand.u32 %v226, 4294901760
      %1930 = vmatprep.subr.mxu0 %v1929
      %v1931 = vand.u32 %v225, 4294901760
      %1932 = vmatpush1.msra.mxu0 %v1931
      %v1933 = vand.u32 %v234, 4294901760
      %1934 = vmatprep.subr.mxu0 %v1933
      %v1935 = vand.u32 %v233, 4294901760
      %1936 = vmatpush1.msra.mxu0 %v1935
      %v1937 = vand.u32 %v242, 4294901760
      %1938 = vmatprep.subr.mxu0 %v1937
      %v1939 = vand.u32 %v241, 4294901760
      %1940 = vmatpush1.msra.mxu0 %v1939
      %v1941 = vand.u32 %v250, 4294901760
      %1942 = vmatprep.subr.mxu0 %v1941
      %v1943 = vand.u32 %v249, 4294901760
      %1944 = vmatpush1.msra.mxu0 %v1943
      %v1945 = vand.u32 %v258, 4294901760
      %1946 = vmatprep.subr.mxu0 %v1945
      %v1947 = vand.u32 %v257, 4294901760
      %1948 = vmatpush1.msra.mxu0 %v1947
      %v1949 = vand.u32 %v266, 4294901760
      %1950 = vmatprep.subr.mxu0 %v1949
      %v1951 = vand.u32 %v265, 4294901760
      %1952 = vmatpush1.msra.mxu0 %v1951
      %v1953 = vand.u32 %v274, 4294901760
      %1954 = vmatprep.subr.mxu0 %v1953
      %v1955 = vand.u32 %v273, 4294901760
      %1956 = vmatpush1.msra.mxu0 %v1955
      %v1957 = vand.u32 %v282, 4294901760
      %1958 = vmatprep.subr.mxu0 %v1957
      %v1959 = vand.u32 %v281, 4294901760
      %1960 = vmatpush1.msra.mxu0 %v1959
      %v1961 = vand.u32 %v290, 4294901760
      %1962 = vmatprep.subr.mxu0 %v1961
      %v1963 = vand.u32 %v289, 4294901760
      %1964 = vmatpush1.msra.mxu0 %v1963
      %1965 = vmatprep.subr.mxu0 0.0
      %1966 = vmatpush1.msra.mxu0 0.0
      %1967 = vmatprep.subr.mxu0 0.0
      %1968 = vmatpush1.msra.mxu0 0.0
      %1969 = vmatprep.subr.mxu0 0.0
      %1970 = vmatpush1.msra.mxu0 0.0
      %1971 = vmatprep.subr.mxu0 0.0
      %1972 = vmatpush1.msra.mxu0 0.0
      %1973 = vmatprep.subr.mxu0 0.0
      %1974 = vmatpush1.msra.mxu0 0.0
      %1975 = vmatprep.subr.mxu0 0.0
      %1976 = vmatpush1.msra.mxu0 0.0
      %1977 = vmatprep.subr.mxu0 0.0
      %1978 = vmatpush1.msra.mxu0 0.0
      %1979 = vmatprep.subr.mxu0 0.0
      %1980 = vmatpush1.msra.mxu0 0.0
      %1981 = vmatprep.subr.mxu0 0.0
      %1982 = vmatpush1.msra.mxu0 0.0
      %1983 = vmatprep.subr.mxu0 0.0
      %1984 = vmatpush1.msra.mxu0 0.0
      %1985 = vmatprep.subr.mxu0 0.0
      %1986 = vmatpush1.msra.mxu0 0.0
      %1987 = vmatprep.subr.mxu0 0.0
      %1988 = vmatpush1.msra.mxu0 0.0
      %1989 = vmatprep.subr.mxu0 0.0
      %1990 = vmatpush1.msra.mxu0 0.0
      %1991 = vmatprep.subr.mxu0 0.0
      %1992 = vmatpush1.msra.mxu0 0.0
      %1993 = vmatprep.subr.mxu0 0.0
      %1994 = vmatpush1.msra.mxu0 0.0
      %1995 = vmatprep.subr.mxu0 0.0
      %1996 = vmatpush1.msra.mxu0 0.0
      %1997 = vmatprep.mubr.f32.mxu0 0.0
      %v1998 = vand.u32 %v166, 4294901760
      %1999 = vmatmul.mubr.f32.gmra.mrb[0].mxu0 %v1998
      %v2000 = vpop.f32.mrb[0].mxu0
      %v2001 = vadd.f32 %v1897, %v2000
      %v2002 = vpop.f32.mrb[0].mxu0
      %v2003 = vadd.f32 %v1899, %v2002
      %2004 = vdwg.mxu0
      %v2005 = vand.u32 %v172, 4294901760
      %2006 = vmatprep.subr.mxu0 %v2005
      %v2007 = vand.u32 %v171, 4294901760
      %2008 = vmatpush1.msra.mxu0 %v2007
      %v2009 = vand.u32 %v180, 4294901760
      %2010 = vmatprep.subr.mxu0 %v2009
      %v2011 = vand.u32 %v179, 4294901760
      %2012 = vmatpush1.msra.mxu0 %v2011
      %v2013 = vand.u32 %v188, 4294901760
      %2014 = vmatprep.subr.mxu0 %v2013
      %v2015 = vand.u32 %v187, 4294901760
      %2016 = vmatpush1.msra.mxu0 %v2015
      %v2017 = vand.u32 %v196, 4294901760
      %2018 = vmatprep.subr.mxu0 %v2017
      %v2019 = vand.u32 %v195, 4294901760
      %2020 = vmatpush1.msra.mxu0 %v2019
      %v2021 = vand.u32 %v204, 4294901760
      %2022 = vmatprep.subr.mxu0 %v2021
      %v2023 = vand.u32 %v203, 4294901760
      %2024 = vmatpush1.msra.mxu0 %v2023
      %v2025 = vand.u32 %v212, 4294901760
      %2026 = vmatprep.subr.mxu0 %v2025
      %v2027 = vand.u32 %v211, 4294901760
      %2028 = vmatpush1.msra.mxu0 %v2027
      %v2029 = vand.u32 %v220, 4294901760
      %2030 = vmatprep.subr.mxu0 %v2029
      %v2031 = vand.u32 %v219, 4294901760
      %2032 = vmatpush1.msra.mxu0 %v2031
      %v2033 = vand.u32 %v228, 4294901760
      %2034 = vmatprep.subr.mxu0 %v2033
      %v2035 = vand.u32 %v227, 4294901760
      %2036 = vmatpush1.msra.mxu0 %v2035
      %v2037 = vand.u32 %v236, 4294901760
      %2038 = vmatprep.subr.mxu0 %v2037
      %v2039 = vand.u32 %v235, 4294901760
      %2040 = vmatpush1.msra.mxu0 %v2039
      %v2041 = vand.u32 %v244, 4294901760
      %2042 = vmatprep.subr.mxu0 %v2041
      %v2043 = vand.u32 %v243, 4294901760
      %2044 = vmatpush1.msra.mxu0 %v2043
      %v2045 = vand.u32 %v252, 4294901760
      %2046 = vmatprep.subr.mxu0 %v2045
      %v2047 = vand.u32 %v251, 4294901760
      %2048 = vmatpush1.msra.mxu0 %v2047
      %v2049 = vand.u32 %v260, 4294901760
      %2050 = vmatprep.subr.mxu0 %v2049
      %v2051 = vand.u32 %v259, 4294901760
      %2052 = vmatpush1.msra.mxu0 %v2051
      %v2053 = vand.u32 %v268, 4294901760
      %2054 = vmatprep.subr.mxu0 %v2053
      %v2055 = vand.u32 %v267, 4294901760
      %2056 = vmatpush1.msra.mxu0 %v2055
      %v2057 = vand.u32 %v276, 4294901760
      %2058 = vmatprep.subr.mxu0 %v2057
      %v2059 = vand.u32 %v275, 4294901760
      %2060 = vmatpush1.msra.mxu0 %v2059
      %v2061 = vand.u32 %v284, 4294901760
      %2062 = vmatprep.subr.mxu0 %v2061
      %v2063 = vand.u32 %v283, 4294901760
      %2064 = vmatpush1.msra.mxu0 %v2063
      %v2065 = vand.u32 %v292, 4294901760
      %2066 = vmatprep.subr.mxu0 %v2065
      %v2067 = vand.u32 %v291, 4294901760
      %2068 = vmatpush1.msra.mxu0 %v2067
      %2069 = vmatprep.subr.mxu0 0.0
      %2070 = vmatpush1.msra.mxu0 0.0
      %2071 = vmatprep.subr.mxu0 0.0
      %2072 = vmatpush1.msra.mxu0 0.0
      %2073 = vmatprep.subr.mxu0 0.0
      %2074 = vmatpush1.msra.mxu0 0.0
      %2075 = vmatprep.subr.mxu0 0.0
      %2076 = vmatpush1.msra.mxu0 0.0
      %2077 = vmatprep.subr.mxu0 0.0
      %2078 = vmatpush1.msra.mxu0 0.0
      %2079 = vmatprep.subr.mxu0 0.0
      %2080 = vmatpush1.msra.mxu0 0.0
      %2081 = vmatprep.subr.mxu0 0.0
      %2082 = vmatpush1.msra.mxu0 0.0
      %2083 = vmatprep.subr.mxu0 0.0
      %2084 = vmatpush1.msra.mxu0 0.0
      %2085 = vmatprep.subr.mxu0 0.0
      %2086 = vmatpush1.msra.mxu0 0.0
      %2087 = vmatprep.subr.mxu0 0.0
      %2088 = vmatpush1.msra.mxu0 0.0
      %2089 = vmatprep.subr.mxu0 0.0
      %2090 = vmatpush1.msra.mxu0 0.0
      %2091 = vmatprep.subr.mxu0 0.0
      %2092 = vmatpush1.msra.mxu0 0.0
      %2093 = vmatprep.subr.mxu0 0.0
      %2094 = vmatpush1.msra.mxu0 0.0
      %2095 = vmatprep.subr.mxu0 0.0
      %2096 = vmatpush1.msra.mxu0 0.0
      %2097 = vmatprep.subr.mxu0 0.0
      %2098 = vmatpush1.msra.mxu0 0.0
      %2099 = vmatprep.subr.mxu0 0.0
      %2100 = vmatpush1.msra.mxu0 0.0
      %2101 = vmatprep.mubr.f32.mxu0 0.0
      %v2102 = vand.u32 %v166, 4294901760
      %v2103 = vsub.f32 %v166, %v2102
      %v2104 = vand.u32 %v2103, 4294901760
      %v2105 = vsub.f32 %v2103, %v2104
      %v2106 = vand.u32 %v2105, 4294901760
      %2107 = vmatmul.mubr.f32.gmra.mrb[0].mxu0 %v2106
      %v2108 = vpop.f32.mrb[0].mxu0
      %v2109 = vadd.f32 0.0, %v2108
      %v2110 = vpop.f32.mrb[0].mxu0
      %v2111 = vadd.f32 0.0, %v2110
      %2112 = vdwg.mxu0
      %v2113 = vand.u32 %v172, 4294901760
      %v2114 = vsub.f32 %v172, %v2113
      %v2115 = vand.u32 %v2114, 4294901760
      %v2116 = vsub.f32 %v2114, %v2115
      %v2117 = vand.u32 %v2116, 4294901760
      %2118 = vmatprep.subr.mxu0 %v2117
      %v2119 = vand.u32 %v171, 4294901760
      %v2120 = vsub.f32 %v171, %v2119
      %v2121 = vand.u32 %v2120, 4294901760
      %v2122 = vsub.f32 %v2120, %v2121
      %v2123 = vand.u32 %v2122, 4294901760
      %2124 = vmatpush1.msra.mxu0 %v2123
      %v2125 = vand.u32 %v180, 4294901760
      %v2126 = vsub.f32 %v180, %v2125
      %v2127 = vand.u32 %v2126, 4294901760
      %v2128 = vsub.f32 %v2126, %v2127
      %v2129 = vand.u32 %v2128, 4294901760
      %2130 = vmatprep.subr.mxu0 %v2129
      %v2131 = vand.u32 %v179, 4294901760
      %v2132 = vsub.f32 %v179, %v2131
      %v2133 = vand.u32 %v2132, 4294901760
      %v2134 = vsub.f32 %v2132, %v2133
      %v2135 = vand.u32 %v2134, 4294901760
      %2136 = vmatpush1.msra.mxu0 %v2135
      %v2137 = vand.u32 %v188, 4294901760
      %v2138 = vsub.f32 %v188, %v2137
      %v2139 = vand.u32 %v2138, 4294901760
      %v2140 = vsub.f32 %v2138, %v2139
      %v2141 = vand.u32 %v2140, 4294901760
      %2142 = vmatprep.subr.mxu0 %v2141
      %v2143 = vand.u32 %v187, 4294901760
      %v2144 = vsub.f32 %v187, %v2143
      %v2145 = vand.u32 %v2144, 4294901760
      %v2146 = vsub.f32 %v2144, %v2145
      %v2147 = vand.u32 %v2146, 4294901760
      %2148 = vmatpush1.msra.mxu0 %v2147
      %v2149 = vand.u32 %v196, 4294901760
      %v2150 = vsub.f32 %v196, %v2149
      %v2151 = vand.u32 %v2150, 4294901760
      %v2152 = vsub.f32 %v2150, %v2151
      %v2153 = vand.u32 %v2152, 4294901760
      %2154 = vmatprep.subr.mxu0 %v2153
      %v2155 = vand.u32 %v195, 4294901760
      %v2156 = vsub.f32 %v195, %v2155
      %v2157 = vand.u32 %v2156, 4294901760
      %v2158 = vsub.f32 %v2156, %v2157
      %v2159 = vand.u32 %v2158, 4294901760
      %2160 = vmatpush1.msra.mxu0 %v2159
      %v2161 = vand.u32 %v204, 4294901760
      %v2162 = vsub.f32 %v204, %v2161
      %v2163 = vand.u32 %v2162, 4294901760
      %v2164 = vsub.f32 %v2162, %v2163
      %v2165 = vand.u32 %v2164, 4294901760
      %2166 = vmatprep.subr.mxu0 %v2165
      %v2167 = vand.u32 %v203, 4294901760
      %v2168 = vsub.f32 %v203, %v2167
      %v2169 = vand.u32 %v2168, 4294901760
      %v2170 = vsub.f32 %v2168, %v2169
      %v2171 = vand.u32 %v2170, 4294901760
      %2172 = vmatpush1.msra.mxu0 %v2171
      %v2173 = vand.u32 %v212, 4294901760
      %v2174 = vsub.f32 %v212, %v2173
      %v2175 = vand.u32 %v2174, 4294901760
      %v2176 = vsub.f32 %v2174, %v2175
      %v2177 = vand.u32 %v2176, 4294901760
      %2178 = vmatprep.subr.mxu0 %v2177
      %v2179 = vand.u32 %v211, 4294901760
      %v2180 = vsub.f32 %v211, %v2179
      %v2181 = vand.u32 %v2180, 4294901760
      %v2182 = vsub.f32 %v2180, %v2181
      %v2183 = vand.u32 %v2182, 4294901760
      %2184 = vmatpush1.msra.mxu0 %v2183
      %v2185 = vand.u32 %v220, 4294901760
      %v2186 = vsub.f32 %v220, %v2185
      %v2187 = vand.u32 %v2186, 4294901760
      %v2188 = vsub.f32 %v2186, %v2187
      %v2189 = vand.u32 %v2188, 4294901760
      %2190 = vmatprep.subr.mxu0 %v2189
      %v2191 = vand.u32 %v219, 4294901760
      %v2192 = vsub.f32 %v219, %v2191
      %v2193 = vand.u32 %v2192, 4294901760
      %v2194 = vsub.f32 %v2192, %v2193
      %v2195 = vand.u32 %v2194, 4294901760
      %2196 = vmatpush1.msra.mxu0 %v2195
      %v2197 = vand.u32 %v228, 4294901760
      %v2198 = vsub.f32 %v228, %v2197
      %v2199 = vand.u32 %v2198, 4294901760
      %v2200 = vsub.f32 %v2198, %v2199
      %v2201 = vand.u32 %v2200, 4294901760
      %2202 = vmatprep.subr.mxu0 %v2201
      %v2203 = vand.u32 %v227, 4294901760
      %v2204 = vsub.f32 %v227, %v2203
      %v2205 = vand.u32 %v2204, 4294901760
      %v2206 = vsub.f32 %v2204, %v2205
      %v2207 = vand.u32 %v2206, 4294901760
      %2208 = vmatpush1.msra.mxu0 %v2207
      %v2209 = vand.u32 %v236, 4294901760
      %v2210 = vsub.f32 %v236, %v2209
      %v2211 = vand.u32 %v2210, 4294901760
      %v2212 = vsub.f32 %v2210, %v2211
      %v2213 = vand.u32 %v2212, 4294901760
      %2214 = vmatprep.subr.mxu0 %v2213
      %v2215 = vand.u32 %v235, 4294901760
      %v2216 = vsub.f32 %v235, %v2215
      %v2217 = vand.u32 %v2216, 4294901760
      %v2218 = vsub.f32 %v2216, %v2217
      %v2219 = vand.u32 %v2218, 4294901760
      %2220 = vmatpush1.msra.mxu0 %v2219
      %v2221 = vand.u32 %v244, 4294901760
      %v2222 = vsub.f32 %v244, %v2221
      %v2223 = vand.u32 %v2222, 4294901760
      %v2224 = vsub.f32 %v2222, %v2223
      %v2225 = vand.u32 %v2224, 4294901760
      %2226 = vmatprep.subr.mxu0 %v2225
      %v2227 = vand.u32 %v243, 4294901760
      %v2228 = vsub.f32 %v243, %v2227
      %v2229 = vand.u32 %v2228, 4294901760
      %v2230 = vsub.f32 %v2228, %v2229
      %v2231 = vand.u32 %v2230, 4294901760
      %2232 = vmatpush1.msra.mxu0 %v2231
      %v2233 = vand.u32 %v252, 4294901760
      %v2234 = vsub.f32 %v252, %v2233
      %v2235 = vand.u32 %v2234, 4294901760
      %v2236 = vsub.f32 %v2234, %v2235
      %v2237 = vand.u32 %v2236, 4294901760
      %2238 = vmatprep.subr.mxu0 %v2237
      %v2239 = vand.u32 %v251, 4294901760
      %v2240 = vsub.f32 %v251, %v2239
      %v2241 = vand.u32 %v2240, 4294901760
      %v2242 = vsub.f32 %v2240, %v2241
      %v2243 = vand.u32 %v2242, 4294901760
      %2244 = vmatpush1.msra.mxu0 %v2243
      %v2245 = vand.u32 %v260, 4294901760
      %v2246 = vsub.f32 %v260, %v2245
      %v2247 = vand.u32 %v2246, 4294901760
      %v2248 = vsub.f32 %v2246, %v2247
      %v2249 = vand.u32 %v2248, 4294901760
      %2250 = vmatprep.subr.mxu0 %v2249
      %v2251 = vand.u32 %v259, 4294901760
      %v2252 = vsub.f32 %v259, %v2251
      %v2253 = vand.u32 %v2252, 4294901760
      %v2254 = vsub.f32 %v2252, %v2253
      %v2255 = vand.u32 %v2254, 4294901760
      %2256 = vmatpush1.msra.mxu0 %v2255
      %v2257 = vand.u32 %v268, 4294901760
      %v2258 = vsub.f32 %v268, %v2257
      %v2259 = vand.u32 %v2258, 4294901760
      %v2260 = vsub.f32 %v2258, %v2259
      %v2261 = vand.u32 %v2260, 4294901760
      %2262 = vmatprep.subr.mxu0 %v2261
      %v2263 = vand.u32 %v267, 4294901760
      %v2264 = vsub.f32 %v267, %v2263
      %v2265 = vand.u32 %v2264, 4294901760
      %v2266 = vsub.f32 %v2264, %v2265
      %v2267 = vand.u32 %v2266, 4294901760
      %2268 = vmatpush1.msra.mxu0 %v2267
      %v2269 = vand.u32 %v276, 4294901760
      %v2270 = vsub.f32 %v276, %v2269
      %v2271 = vand.u32 %v2270, 4294901760
      %v2272 = vsub.f32 %v2270, %v2271
      %v2273 = vand.u32 %v2272, 4294901760
      %2274 = vmatprep.subr.mxu0 %v2273
      %v2275 = vand.u32 %v275, 4294901760
      %v2276 = vsub.f32 %v275, %v2275
      %v2277 = vand.u32 %v2276, 4294901760
      %v2278 = vsub.f32 %v2276, %v2277
      %v2279 = vand.u32 %v2278, 4294901760
      %2280 = vmatpush1.msra.mxu0 %v2279
      %v2281 = vand.u32 %v284, 4294901760
      %v2282 = vsub.f32 %v284, %v2281
      %v2283 = vand.u32 %v2282, 4294901760
      %v2284 = vsub.f32 %v2282, %v2283
      %v2285 = vand.u32 %v2284, 4294901760
      %2286 = vmatprep.subr.mxu0 %v2285
      %v2287 = vand.u32 %v283, 4294901760
      %v2288 = vsub.f32 %v283, %v2287
      %v2289 = vand.u32 %v2288, 4294901760
      %v2290 = vsub.f32 %v2288, %v2289
      %v2291 = vand.u32 %v2290, 4294901760
      %2292 = vmatpush1.msra.mxu0 %v2291
      %v2293 = vand.u32 %v292, 4294901760
      %v2294 = vsub.f32 %v292, %v2293
      %v2295 = vand.u32 %v2294, 4294901760
      %v2296 = vsub.f32 %v2294, %v2295
      %v2297 = vand.u32 %v2296, 4294901760
      %2298 = vmatprep.subr.mxu0 %v2297
      %v2299 = vand.u32 %v291, 4294901760
      %v2300 = vsub.f32 %v291, %v2299
      %v2301 = vand.u32 %v2300, 4294901760
      %v2302 = vsub.f32 %v2300, %v2301
      %v2303 = vand.u32 %v2302, 4294901760
      %2304 = vmatpush1.msra.mxu0 %v2303
      %2305 = vmatprep.subr.mxu0 0.0
      %2306 = vmatpush1.msra.mxu0 0.0
      %2307 = vmatprep.subr.mxu0 0.0
      %2308 = vmatpush1.msra.mxu0 0.0
      %2309 = vmatprep.subr.mxu0 0.0
      %2310 = vmatpush1.msra.mxu0 0.0
      %2311 = vmatprep.subr.mxu0 0.0
      %2312 = vmatpush1.msra.mxu0 0.0
      %2313 = vmatprep.subr.mxu0 0.0
      %2314 = vmatpush1.msra.mxu0 0.0
      %2315 = vmatprep.subr.mxu0 0.0
      %2316 = vmatpush1.msra.mxu0 0.0
      %2317 = vmatprep.subr.mxu0 0.0
      %2318 = vmatpush1.msra.mxu0 0.0
      %2319 = vmatprep.subr.mxu0 0.0
      %2320 = vmatpush1.msra.mxu0 0.0
      %2321 = vmatprep.subr.mxu0 0.0
      %2322 = vmatpush1.msra.mxu0 0.0
      %2323 = vmatprep.subr.mxu0 0.0
      %2324 = vmatpush1.msra.mxu0 0.0
      %2325 = vmatprep.subr.mxu0 0.0
      %2326 = vmatpush1.msra.mxu0 0.0
      %2327 = vmatprep.subr.mxu0 0.0
      %2328 = vmatpush1.msra.mxu0 0.0
      %2329 = vmatprep.subr.mxu0 0.0
      %2330 = vmatpush1.msra.mxu0 0.0
      %2331 = vmatprep.subr.mxu0 0.0
      %2332 = vmatpush1.msra.mxu0 0.0
      %2333 = vmatprep.subr.mxu0 0.0
      %2334 = vmatpush1.msra.mxu0 0.0
      %2335 = vmatprep.subr.mxu0 0.0
      %2336 = vmatpush1.msra.mxu0 0.0
      %2337 = vmatprep.mubr.f32.mxu0 0.0
      %v2338 = vand.u32 %v166, 4294901760
      %2339 = vmatmul.mubr.f32.gmra.mrb[0].mxu0 %v2338
      %v2340 = vpop.f32.mrb[0].mxu0
      %v2341 = vadd.f32 %v2109, %v2340
      %v2342 = vpop.f32.mrb[0].mxu0
      %v2343 = vadd.f32 %v2111, %v2342
      %2344 = vdwg.mxu0
      %v2345 = vand.u32 %v172, 4294901760
      %v2346 = vsub.f32 %v172, %v2345
      %2347 = vmatprep.subr.mxu0 %v2346
      %v2348 = vand.u32 %v171, 4294901760
      %v2349 = vsub.f32 %v171, %v2348
      %2350 = vmatpush1.msra.mxu0 %v2349
      %v2351 = vand.u32 %v180, 4294901760
      %v2352 = vsub.f32 %v180, %v2351
      %2353 = vmatprep.subr.mxu0 %v2352
      %v2354 = vand.u32 %v179, 4294901760
      %v2355 = vsub.f32 %v179, %v2354
      %2356 = vmatpush1.msra.mxu0 %v2355
      %v2357 = vand.u32 %v188, 4294901760
      %v2358 = vsub.f32 %v188, %v2357
      %2359 = vmatprep.subr.mxu0 %v2358
      %v2360 = vand.u32 %v187, 4294901760
      %v2361 = vsub.f32 %v187, %v2360
      %2362 = vmatpush1.msra.mxu0 %v2361
      %v2363 = vand.u32 %v196, 4294901760
      %v2364 = vsub.f32 %v196, %v2363
      %2365 = vmatprep.subr.mxu0 %v2364
      %v2366 = vand.u32 %v195, 4294901760
      %v2367 = vsub.f32 %v195, %v2366
      %2368 = vmatpush1.msra.mxu0 %v2367
      %v2369 = vand.u32 %v204, 4294901760
      %v2370 = vsub.f32 %v204, %v2369
      %2371 = vmatprep.subr.mxu0 %v2370
      %v2372 = vand.u32 %v203, 4294901760
      %v2373 = vsub.f32 %v203, %v2372
      %2374 = vmatpush1.msra.mxu0 %v2373
      %v2375 = vand.u32 %v212, 4294901760
      %v2376 = vsub.f32 %v212, %v2375
      %2377 = vmatprep.subr.mxu0 %v2376
      %v2378 = vand.u32 %v211, 4294901760
      %v2379 = vsub.f32 %v211, %v2378
      %2380 = vmatpush1.msra.mxu0 %v2379
      %v2381 = vand.u32 %v220, 4294901760
      %v2382 = vsub.f32 %v220, %v2381
      %2383 = vmatprep.subr.mxu0 %v2382
      %v2384 = vand.u32 %v219, 4294901760
      %v2385 = vsub.f32 %v219, %v2384
      %2386 = vmatpush1.msra.mxu0 %v2385
      %v2387 = vand.u32 %v228, 4294901760
      %v2388 = vsub.f32 %v228, %v2387
      %2389 = vmatprep.subr.mxu0 %v2388
      %v2390 = vand.u32 %v227, 4294901760
      %v2391 = vsub.f32 %v227, %v2390
      %2392 = vmatpush1.msra.mxu0 %v2391
      %v2393 = vand.u32 %v236, 4294901760
      %v2394 = vsub.f32 %v236, %v2393
      %2395 = vmatprep.subr.mxu0 %v2394
      %v2396 = vand.u32 %v235, 4294901760
      %v2397 = vsub.f32 %v235, %v2396
      %2398 = vmatpush1.msra.mxu0 %v2397
      %v2399 = vand.u32 %v244, 4294901760
      %v2400 = vsub.f32 %v244, %v2399
      %2401 = vmatprep.subr.mxu0 %v2400
      %v2402 = vand.u32 %v243, 4294901760
      %v2403 = vsub.f32 %v243, %v2402
      %2404 = vmatpush1.msra.mxu0 %v2403
      %v2405 = vand.u32 %v252, 4294901760
      %v2406 = vsub.f32 %v252, %v2405
      %2407 = vmatprep.subr.mxu0 %v2406
      %v2408 = vand.u32 %v251, 4294901760
      %v2409 = vsub.f32 %v251, %v2408
      %2410 = vmatpush1.msra.mxu0 %v2409
      %v2411 = vand.u32 %v260, 4294901760
      %v2412 = vsub.f32 %v260, %v2411
      %2413 = vmatprep.subr.mxu0 %v2412
      %v2414 = vand.u32 %v259, 4294901760
      %v2415 = vsub.f32 %v259, %v2414
      %2416 = vmatpush1.msra.mxu0 %v2415
      %v2417 = vand.u32 %v268, 4294901760
      %v2418 = vsub.f32 %v268, %v2417
      %2419 = vmatprep.subr.mxu0 %v2418
      %v2420 = vand.u32 %v267, 4294901760
      %v2421 = vsub.f32 %v267, %v2420
      %2422 = vmatpush1.msra.mxu0 %v2421
      %v2423 = vand.u32 %v276, 4294901760
      %v2424 = vsub.f32 %v276, %v2423
      %2425 = vmatprep.subr.mxu0 %v2424
      %v2426 = vand.u32 %v275, 4294901760
      %v2427 = vsub.f32 %v275, %v2426
      %2428 = vmatpush1.msra.mxu0 %v2427
      %v2429 = vand.u32 %v284, 4294901760
      %v2430 = vsub.f32 %v284, %v2429
      %2431 = vmatprep.subr.mxu0 %v2430
      %v2432 = vand.u32 %v283, 4294901760
      %v2433 = vsub.f32 %v283, %v2432
      %2434 = vmatpush1.msra.mxu0 %v2433
      %v2435 = vand.u32 %v292, 4294901760
      %v2436 = vsub.f32 %v292, %v2435
      %2437 = vmatprep.subr.mxu0 %v2436
      %v2438 = vand.u32 %v291, 4294901760
      %v2439 = vsub.f32 %v291, %v2438
      %2440 = vmatpush1.msra.mxu0 %v2439
      %2441 = vmatprep.subr.mxu0 0.0
      %2442 = vmatpush1.msra.mxu0 0.0
      %2443 = vmatprep.subr.mxu0 0.0
      %2444 = vmatpush1.msra.mxu0 0.0
      %2445 = vmatprep.subr.mxu0 0.0
      %2446 = vmatpush1.msra.mxu0 0.0
      %2447 = vmatprep.subr.mxu0 0.0
      %2448 = vmatpush1.msra.mxu0 0.0
      %2449 = vmatprep.subr.mxu0 0.0
      %2450 = vmatpush1.msra.mxu0 0.0
      %2451 = vmatprep.subr.mxu0 0.0
      %2452 = vmatpush1.msra.mxu0 0.0
      %2453 = vmatprep.subr.mxu0 0.0
      %2454 = vmatpush1.msra.mxu0 0.0
      %2455 = vmatprep.subr.mxu0 0.0
      %2456 = vmatpush1.msra.mxu0 0.0
      %2457 = vmatprep.subr.mxu0 0.0
      %2458 = vmatpush1.msra.mxu0 0.0
      %2459 = vmatprep.subr.mxu0 0.0
      %2460 = vmatpush1.msra.mxu0 0.0
      %2461 = vmatprep.subr.mxu0 0.0
      %2462 = vmatpush1.msra.mxu0 0.0
      %2463 = vmatprep.subr.mxu0 0.0
      %2464 = vmatpush1.msra.mxu0 0.0
      %2465 = vmatprep.subr.mxu0 0.0
      %2466 = vmatpush1.msra.mxu0 0.0
      %2467 = vmatprep.subr.mxu0 0.0
      %2468 = vmatpush1.msra.mxu0 0.0
      %2469 = vmatprep.subr.mxu0 0.0
      %2470 = vmatpush1.msra.mxu0 0.0
      %2471 = vmatprep.subr.mxu0 0.0
      %2472 = vmatpush1.msra.mxu0 0.0
      %2473 = vmatprep.mubr.f32.mxu0 0.0
      %v2474 = vand.u32 %v166, 4294901760
      %v2475 = vsub.f32 %v166, %v2474
      %2476 = vmatmul.mubr.f32.gmra.mrb[0].mxu0 %v2475
      %v2477 = vpop.f32.mrb[0].mxu0
      %v2478 = vadd.f32 %v2341, %v2477
      %v2479 = vpop.f32.mrb[0].mxu0
      %v2480 = vadd.f32 %v2343, %v2479
      %2481 = vdwg.mxu0
      %v2482 = vand.u32 %v172, 4294901760
      %2483 = vmatprep.subr.mxu0 %v2482
      %v2484 = vand.u32 %v171, 4294901760
      %2485 = vmatpush1.msra.mxu0 %v2484
      %v2486 = vand.u32 %v180, 4294901760
      %2487 = vmatprep.subr.mxu0 %v2486
      %v2488 = vand.u32 %v179, 4294901760
      %2489 = vmatpush1.msra.mxu0 %v2488
      %v2490 = vand.u32 %v188, 4294901760
      %2491 = vmatprep.subr.mxu0 %v2490
      %v2492 = vand.u32 %v187, 4294901760
      %2493 = vmatpush1.msra.mxu0 %v2492
      %v2494 = vand.u32 %v196, 4294901760
      %2495 = vmatprep.subr.mxu0 %v2494
      %v2496 = vand.u32 %v195, 4294901760
      %2497 = vmatpush1.msra.mxu0 %v2496
      %v2498 = vand.u32 %v204, 4294901760
      %2499 = vmatprep.subr.mxu0 %v2498
      %v2500 = vand.u32 %v203, 4294901760
      %2501 = vmatpush1.msra.mxu0 %v2500
      %v2502 = vand.u32 %v212, 4294901760
      %2503 = vmatprep.subr.mxu0 %v2502
      %v2504 = vand.u32 %v211, 4294901760
      %2505 = vmatpush1.msra.mxu0 %v2504
      %v2506 = vand.u32 %v220, 4294901760
      %2507 = vmatprep.subr.mxu0 %v2506
      %v2508 = vand.u32 %v219, 4294901760
      %2509 = vmatpush1.msra.mxu0 %v2508
      %v2510 = vand.u32 %v228, 4294901760
      %2511 = vmatprep.subr.mxu0 %v2510
      %v2512 = vand.u32 %v227, 4294901760
      %2513 = vmatpush1.msra.mxu0 %v2512
      %v2514 = vand.u32 %v236, 4294901760
      %2515 = vmatprep.subr.mxu0 %v2514
      %v2516 = vand.u32 %v235, 4294901760
      %2517 = vmatpush1.msra.mxu0 %v2516
      %v2518 = vand.u32 %v244, 4294901760
      %2519 = vmatprep.subr.mxu0 %v2518
      %v2520 = vand.u32 %v243, 4294901760
      %2521 = vmatpush1.msra.mxu0 %v2520
      %v2522 = vand.u32 %v252, 4294901760
      %2523 = vmatprep.subr.mxu0 %v2522
      %v2524 = vand.u32 %v251, 4294901760
      %2525 = vmatpush1.msra.mxu0 %v2524
      %v2526 = vand.u32 %v260, 4294901760
      %2527 = vmatprep.subr.mxu0 %v2526
      %v2528 = vand.u32 %v259, 4294901760
      %2529 = vmatpush1.msra.mxu0 %v2528
      %v2530 = vand.u32 %v268, 4294901760
      %2531 = vmatprep.subr.mxu0 %v2530
      %v2532 = vand.u32 %v267, 4294901760
      %2533 = vmatpush1.msra.mxu0 %v2532
      %v2534 = vand.u32 %v276, 4294901760
      %2535 = vmatprep.subr.mxu0 %v2534
      %v2536 = vand.u32 %v275, 4294901760
      %2537 = vmatpush1.msra.mxu0 %v2536
      %v2538 = vand.u32 %v284, 4294901760
      %2539 = vmatprep.subr.mxu0 %v2538
      %v2540 = vand.u32 %v283, 4294901760
      %2541 = vmatpush1.msra.mxu0 %v2540
      %v2542 = vand.u32 %v292, 4294901760
      %2543 = vmatprep.subr.mxu0 %v2542
      %v2544 = vand.u32 %v291, 4294901760
      %2545 = vmatpush1.msra.mxu0 %v2544
      %2546 = vmatprep.subr.mxu0 0.0
      %2547 = vmatpush1.msra.mxu0 0.0
      %2548 = vmatprep.subr.mxu0 0.0
      %2549 = vmatpush1.msra.mxu0 0.0
      %2550 = vmatprep.subr.mxu0 0.0
      %2551 = vmatpush1.msra.mxu0 0.0
      %2552 = vmatprep.subr.mxu0 0.0
      %2553 = vmatpush1.msra.mxu0 0.0
      %2554 = vmatprep.subr.mxu0 0.0
      %2555 = vmatpush1.msra.mxu0 0.0
      %2556 = vmatprep.subr.mxu0 0.0
      %2557 = vmatpush1.msra.mxu0 0.0
      %2558 = vmatprep.subr.mxu0 0.0
      %2559 = vmatpush1.msra.mxu0 0.0
      %2560 = vmatprep.subr.mxu0 0.0
      %2561 = vmatpush1.msra.mxu0 0.0
      %2562 = vmatprep.subr.mxu0 0.0
      %2563 = vmatpush1.msra.mxu0 0.0
      %2564 = vmatprep.subr.mxu0 0.0
      %2565 = vmatpush1.msra.mxu0 0.0
      %2566 = vmatprep.subr.mxu0 0.0
      %2567 = vmatpush1.msra.mxu0 0.0
      %2568 = vmatprep.subr.mxu0 0.0
      %2569 = vmatpush1.msra.mxu0 0.0
      %2570 = vmatprep.subr.mxu0 0.0
      %2571 = vmatpush1.msra.mxu0 0.0
      %2572 = vmatprep.subr.mxu0 0.0
      %2573 = vmatpush1.msra.mxu0 0.0
      %2574 = vmatprep.subr.mxu0 0.0
      %2575 = vmatpush1.msra.mxu0 0.0
      %2576 = vmatprep.subr.mxu0 0.0
      %2577 = vmatpush1.msra.mxu0 0.0
      %2578 = vmatprep.mubr.f32.mxu0 0.0
      %v2579 = vand.u32 %v166, 4294901760
      %v2580 = vsub.f32 %v166, %v2579
      %v2581 = vand.u32 %v2580, 4294901760
      %2582 = vmatmul.mubr.f32.gmra.mrb[0].mxu0 %v2581
      %v2583 = vpop.f32.mrb[0].mxu0
      %v2584 = vadd.f32 %v2478, %v2583
      %v2585 = vpop.f32.mrb[0].mxu0
      %v2586 = vadd.f32 %v2480, %v2585
      %2587 = vdwg.mxu0
      %v2588 = vand.u32 %v172, 4294901760
      %v2589 = vsub.f32 %v172, %v2588
      %v2590 = vand.u32 %v2589, 4294901760
      %2591 = vmatprep.subr.mxu0 %v2590
      %v2592 = vand.u32 %v171, 4294901760
      %v2593 = vsub.f32 %v171, %v2592
      %v2594 = vand.u32 %v2593, 4294901760
      %2595 = vmatpush1.msra.mxu0 %v2594
      %v2596 = vand.u32 %v180, 4294901760
      %v2597 = vsub.f32 %v180, %v2596
      %v2598 = vand.u32 %v2597, 4294901760
      %2599 = vmatprep.subr.mxu0 %v2598
      %v2600 = vand.u32 %v179, 4294901760
      %v2601 = vsub.f32 %v179, %v2600
      %v2602 = vand.u32 %v2601, 4294901760
      %2603 = vmatpush1.msra.mxu0 %v2602
      %v2604 = vand.u32 %v188, 4294901760
      %v2605 = vsub.f32 %v188, %v2604
      %v2606 = vand.u32 %v2605, 4294901760
      %2607 = vmatprep.subr.mxu0 %v2606
      %v2608 = vand.u32 %v187, 4294901760
      %v2609 = vsub.f32 %v187, %v2608
      %v2610 = vand.u32 %v2609, 4294901760
      %2611 = vmatpush1.msra.mxu0 %v2610
      %v2612 = vand.u32 %v196, 4294901760
      %v2613 = vsub.f32 %v196, %v2612
      %v2614 = vand.u32 %v2613, 4294901760
      %2615 = vmatprep.subr.mxu0 %v2614
      %v2616 = vand.u32 %v195, 4294901760
      %v2617 = vsub.f32 %v195, %v2616
      %v2618 = vand.u32 %v2617, 4294901760
      %2619 = vmatpush1.msra.mxu0 %v2618
      %v2620 = vand.u32 %v204, 4294901760
      %v2621 = vsub.f32 %v204, %v2620
      %v2622 = vand.u32 %v2621, 4294901760
      %2623 = vmatprep.subr.mxu0 %v2622
      %v2624 = vand.u32 %v203, 4294901760
      %v2625 = vsub.f32 %v203, %v2624
      %v2626 = vand.u32 %v2625, 4294901760
      %2627 = vmatpush1.msra.mxu0 %v2626
      %v2628 = vand.u32 %v212, 4294901760
      %v2629 = vsub.f32 %v212, %v2628
      %v2630 = vand.u32 %v2629, 4294901760
      %2631 = vmatprep.subr.mxu0 %v2630
      %v2632 = vand.u32 %v211, 4294901760
      %v2633 = vsub.f32 %v211, %v2632
      %v2634 = vand.u32 %v2633, 4294901760
      %2635 = vmatpush1.msra.mxu0 %v2634
      %v2636 = vand.u32 %v220, 4294901760
      %v2637 = vsub.f32 %v220, %v2636
      %v2638 = vand.u32 %v2637, 4294901760
      %2639 = vmatprep.subr.mxu0 %v2638
      %v2640 = vand.u32 %v219, 4294901760
      %v2641 = vsub.f32 %v219, %v2640
      %v2642 = vand.u32 %v2641, 4294901760
      %2643 = vmatpush1.msra.mxu0 %v2642
      %v2644 = vand.u32 %v228, 4294901760
      %v2645 = vsub.f32 %v228, %v2644
      %v2646 = vand.u32 %v2645, 4294901760
      %2647 = vmatprep.subr.mxu0 %v2646
      %v2648 = vand.u32 %v227, 4294901760
      %v2649 = vsub.f32 %v227, %v2648
      %v2650 = vand.u32 %v2649, 4294901760
      %2651 = vmatpush1.msra.mxu0 %v2650
      %v2652 = vand.u32 %v236, 4294901760
      %v2653 = vsub.f32 %v236, %v2652
      %v2654 = vand.u32 %v2653, 4294901760
      %2655 = vmatprep.subr.mxu0 %v2654
      %v2656 = vand.u32 %v235, 4294901760
      %v2657 = vsub.f32 %v235, %v2656
      %v2658 = vand.u32 %v2657, 4294901760
      %2659 = vmatpush1.msra.mxu0 %v2658
      %v2660 = vand.u32 %v244, 4294901760
      %v2661 = vsub.f32 %v244, %v2660
      %v2662 = vand.u32 %v2661, 4294901760
      %2663 = vmatprep.subr.mxu0 %v2662
      %v2664 = vand.u32 %v243, 4294901760
      %v2665 = vsub.f32 %v243, %v2664
      %v2666 = vand.u32 %v2665, 4294901760
      %2667 = vmatpush1.msra.mxu0 %v2666
      %v2668 = vand.u32 %v252, 4294901760
      %v2669 = vsub.f32 %v252, %v2668
      %v2670 = vand.u32 %v2669, 4294901760
      %2671 = vmatprep.subr.mxu0 %v2670
      %v2672 = vand.u32 %v251, 4294901760
      %v2673 = vsub.f32 %v251, %v2672
      %v2674 = vand.u32 %v2673, 4294901760
      %2675 = vmatpush1.msra.mxu0 %v2674
      %v2676 = vand.u32 %v260, 4294901760
      %v2677 = vsub.f32 %v260, %v2676
      %v2678 = vand.u32 %v2677, 4294901760
      %2679 = vmatprep.subr.mxu0 %v2678
      %v2680 = vand.u32 %v259, 4294901760
      %v2681 = vsub.f32 %v259, %v2680
      %v2682 = vand.u32 %v2681, 4294901760
      %2683 = vmatpush1.msra.mxu0 %v2682
      %v2684 = vand.u32 %v268, 4294901760
      %v2685 = vsub.f32 %v268, %v2684
      %v2686 = vand.u32 %v2685, 4294901760
      %2687 = vmatprep.subr.mxu0 %v2686
      %v2688 = vand.u32 %v267, 4294901760
      %v2689 = vsub.f32 %v267, %v2688
      %v2690 = vand.u32 %v2689, 4294901760
      %2691 = vmatpush1.msra.mxu0 %v2690
      %v2692 = vand.u32 %v276, 4294901760
      %v2693 = vsub.f32 %v276, %v2692
      %v2694 = vand.u32 %v2693, 4294901760
      %2695 = vmatprep.subr.mxu0 %v2694
      %v2696 = vand.u32 %v275, 4294901760
      %v2697 = vsub.f32 %v275, %v2696
      %v2698 = vand.u32 %v2697, 4294901760
      %2699 = vmatpush1.msra.mxu0 %v2698
      %v2700 = vand.u32 %v284, 4294901760
      %v2701 = vsub.f32 %v284, %v2700
      %v2702 = vand.u32 %v2701, 4294901760
      %2703 = vmatprep.subr.mxu0 %v2702
      %v2704 = vand.u32 %v283, 4294901760
      %v2705 = vsub.f32 %v283, %v2704
      %v2706 = vand.u32 %v2705, 4294901760
      %2707 = vmatpush1.msra.mxu0 %v2706
      %v2708 = vand.u32 %v292, 4294901760
      %v2709 = vsub.f32 %v292, %v2708
      %v2710 = vand.u32 %v2709, 4294901760
      %2711 = vmatprep.subr.mxu0 %v2710
      %v2712 = vand.u32 %v291, 4294901760
      %v2713 = vsub.f32 %v291, %v2712
      %v2714 = vand.u32 %v2713, 4294901760
      %2715 = vmatpush1.msra.mxu0 %v2714
      %2716 = vmatprep.subr.mxu0 0.0
      %2717 = vmatpush1.msra.mxu0 0.0
      %2718 = vmatprep.subr.mxu0 0.0
      %2719 = vmatpush1.msra.mxu0 0.0
      %2720 = vmatprep.subr.mxu0 0.0
      %2721 = vmatpush1.msra.mxu0 0.0
      %2722 = vmatprep.subr.mxu0 0.0
      %2723 = vmatpush1.msra.mxu0 0.0
      %2724 = vmatprep.subr.mxu0 0.0
      %2725 = vmatpush1.msra.mxu0 0.0
      %2726 = vmatprep.subr.mxu0 0.0
      %2727 = vmatpush1.msra.mxu0 0.0
      %2728 = vmatprep.subr.mxu0 0.0
      %2729 = vmatpush1.msra.mxu0 0.0
      %2730 = vmatprep.subr.mxu0 0.0
      %2731 = vmatpush1.msra.mxu0 0.0
      %2732 = vmatprep.subr.mxu0 0.0
      %2733 = vmatpush1.msra.mxu0 0.0
      %2734 = vmatprep.subr.mxu0 0.0
      %2735 = vmatpush1.msra.mxu0 0.0
      %2736 = vmatprep.subr.mxu0 0.0
      %2737 = vmatpush1.msra.mxu0 0.0
      %2738 = vmatprep.subr.mxu0 0.0
      %2739 = vmatpush1.msra.mxu0 0.0
      %2740 = vmatprep.subr.mxu0 0.0
      %2741 = vmatpush1.msra.mxu0 0.0
      %2742 = vmatprep.subr.mxu0 0.0
      %2743 = vmatpush1.msra.mxu0 0.0
      %2744 = vmatprep.subr.mxu0 0.0
      %2745 = vmatpush1.msra.mxu0 0.0
      %2746 = vmatprep.subr.mxu0 0.0
      %2747 = vmatpush1.msra.mxu0 0.0
      %2748 = vmatprep.mubr.f32.mxu0 0.0
      %v2749 = vand.u32 %v166, 4294901760
      %2750 = vmatmul.mubr.f32.gmra.mrb[0].mxu0 %v2749
      %v2751 = vpop.f32.mrb[0].mxu0
      %v2752 = vadd.f32 %v2584, %v2751
      %v2753 = vpop.f32.mrb[0].mxu0
      %v2754 = vadd.f32 %v2586, %v2753
      %2755 = vdwg.mxu0
      %v2756 = vand.u32 %v172, 4294901760
      %2757 = vmatprep.subr.mxu0 %v2756
      %v2758 = vand.u32 %v171, 4294901760
      %2759 = vmatpush1.msra.mxu0 %v2758
      %v2760 = vand.u32 %v180, 4294901760
      %2761 = vmatprep.subr.mxu0 %v2760
      %v2762 = vand.u32 %v179, 4294901760
      %2763 = vmatpush1.msra.mxu0 %v2762
      %v2764 = vand.u32 %v188, 4294901760
      %2765 = vmatprep.subr.mxu0 %v2764
      %v2766 = vand.u32 %v187, 4294901760
      %2767 = vmatpush1.msra.mxu0 %v2766
      %v2768 = vand.u32 %v196, 4294901760
      %2769 = vmatprep.subr.mxu0 %v2768
      %v2770 = vand.u32 %v195, 4294901760
      %2771 = vmatpush1.msra.mxu0 %v2770
      %v2772 = vand.u32 %v204, 4294901760
      %2773 = vmatprep.subr.mxu0 %v2772
      %v2774 = vand.u32 %v203, 4294901760
      %2775 = vmatpush1.msra.mxu0 %v2774
      %v2776 = vand.u32 %v212, 4294901760
      %2777 = vmatprep.subr.mxu0 %v2776
      %v2778 = vand.u32 %v211, 4294901760
      %2779 = vmatpush1.msra.mxu0 %v2778
      %v2780 = vand.u32 %v220, 4294901760
      %2781 = vmatprep.subr.mxu0 %v2780
      %v2782 = vand.u32 %v219, 4294901760
      %2783 = vmatpush1.msra.mxu0 %v2782
      %v2784 = vand.u32 %v228, 4294901760
      %2785 = vmatprep.subr.mxu0 %v2784
      %v2786 = vand.u32 %v227, 4294901760
      %2787 = vmatpush1.msra.mxu0 %v2786
      %v2788 = vand.u32 %v236, 4294901760
      %2789 = vmatprep.subr.mxu0 %v2788
      %v2790 = vand.u32 %v235, 4294901760
      %2791 = vmatpush1.msra.mxu0 %v2790
      %v2792 = vand.u32 %v244, 4294901760
      %2793 = vmatprep.subr.mxu0 %v2792
      %v2794 = vand.u32 %v243, 4294901760
      %2795 = vmatpush1.msra.mxu0 %v2794
      %v2796 = vand.u32 %v252, 4294901760
      %2797 = vmatprep.subr.mxu0 %v2796
      %v2798 = vand.u32 %v251, 4294901760
      %2799 = vmatpush1.msra.mxu0 %v2798
      %v2800 = vand.u32 %v260, 4294901760
      %2801 = vmatprep.subr.mxu0 %v2800
      %v2802 = vand.u32 %v259, 4294901760
      %2803 = vmatpush1.msra.mxu0 %v2802
      %v2804 = vand.u32 %v268, 4294901760
      %2805 = vmatprep.subr.mxu0 %v2804
      %v2806 = vand.u32 %v267, 4294901760
      %2807 = vmatpush1.msra.mxu0 %v2806
      %v2808 = vand.u32 %v276, 4294901760
      %2809 = vmatprep.subr.mxu0 %v2808
      %v2810 = vand.u32 %v275, 4294901760
      %2811 = vmatpush1.msra.mxu0 %v2810
      %v2812 = vand.u32 %v284, 4294901760
      %2813 = vmatprep.subr.mxu0 %v2812
      %v2814 = vand.u32 %v283, 4294901760
      %2815 = vmatpush1.msra.mxu0 %v2814
      %v2816 = vand.u32 %v292, 4294901760
      %2817 = vmatprep.subr.mxu0 %v2816
      %v2818 = vand.u32 %v291, 4294901760
      %2819 = vmatpush1.msra.mxu0 %v2818
      %2820 = vmatprep.subr.mxu0 0.0
      %2821 = vmatpush1.msra.mxu0 0.0
      %2822 = vmatprep.subr.mxu0 0.0
      %2823 = vmatpush1.msra.mxu0 0.0
      %2824 = vmatprep.subr.mxu0 0.0
      %2825 = vmatpush1.msra.mxu0 0.0
      %2826 = vmatprep.subr.mxu0 0.0
      %2827 = vmatpush1.msra.mxu0 0.0
      %2828 = vmatprep.subr.mxu0 0.0
      %2829 = vmatpush1.msra.mxu0 0.0
      %2830 = vmatprep.subr.mxu0 0.0
      %2831 = vmatpush1.msra.mxu0 0.0
      %2832 = vmatprep.subr.mxu0 0.0
      %2833 = vmatpush1.msra.mxu0 0.0
      %2834 = vmatprep.subr.mxu0 0.0
      %2835 = vmatpush1.msra.mxu0 0.0
      %2836 = vmatprep.subr.mxu0 0.0
      %2837 = vmatpush1.msra.mxu0 0.0
      %2838 = vmatprep.subr.mxu0 0.0
      %2839 = vmatpush1.msra.mxu0 0.0
      %2840 = vmatprep.subr.mxu0 0.0
      %2841 = vmatpush1.msra.mxu0 0.0
      %2842 = vmatprep.subr.mxu0 0.0
      %2843 = vmatpush1.msra.mxu0 0.0
      %2844 = vmatprep.subr.mxu0 0.0
      %2845 = vmatpush1.msra.mxu0 0.0
      %2846 = vmatprep.subr.mxu0 0.0
      %2847 = vmatpush1.msra.mxu0 0.0
      %2848 = vmatprep.subr.mxu0 0.0
      %2849 = vmatpush1.msra.mxu0 0.0
      %2850 = vmatprep.subr.mxu0 0.0
      %2851 = vmatpush1.msra.mxu0 0.0
      %2852 = vmatprep.mubr.f32.mxu0 0.0
      %v2853 = vand.u32 %v166, 4294901760
      %2854 = vmatmul.mubr.f32.gmra.mrb[0].mxu0 %v2853
      %v2855 = vpop.f32.mrb[0].mxu0
      %v2856 = vadd.f32 %v2752, %v2855
      %v2857 = vpop.f32.mrb[0].mxu0
      %v2858 = vadd.f32 %v2754, %v2857
      %2859 = vdwg.mxu0
      %v2860 = vand.u32 %v174, 4294901760
      %2861 = vmatprep.subr.mxu0 %v2860
      %v2862 = vand.u32 %v173, 4294901760
      %2863 = vmatpush1.msra.mxu0 %v2862
      %v2864 = vand.u32 %v182, 4294901760
      %2865 = vmatprep.subr.mxu0 %v2864
      %v2866 = vand.u32 %v181, 4294901760
      %2867 = vmatpush1.msra.mxu0 %v2866
      %v2868 = vand.u32 %v190, 4294901760
      %2869 = vmatprep.subr.mxu0 %v2868
      %v2870 = vand.u32 %v189, 4294901760
      %2871 = vmatpush1.msra.mxu0 %v2870
      %v2872 = vand.u32 %v198, 4294901760
      %2873 = vmatprep.subr.mxu0 %v2872
      %v2874 = vand.u32 %v197, 4294901760
      %2875 = vmatpush1.msra.mxu0 %v2874
      %v2876 = vand.u32 %v206, 4294901760
      %2877 = vmatprep.subr.mxu0 %v2876
      %v2878 = vand.u32 %v205, 4294901760
      %2879 = vmatpush1.msra.mxu0 %v2878
      %v2880 = vand.u32 %v214, 4294901760
      %2881 = vmatprep.subr.mxu0 %v2880
      %v2882 = vand.u32 %v213, 4294901760
      %2883 = vmatpush1.msra.mxu0 %v2882
      %v2884 = vand.u32 %v222, 4294901760
      %2885 = vmatprep.subr.mxu0 %v2884
      %v2886 = vand.u32 %v221, 4294901760
      %2887 = vmatpush1.msra.mxu0 %v2886
      %v2888 = vand.u32 %v230, 4294901760
      %2889 = vmatprep.subr.mxu0 %v2888
      %v2890 = vand.u32 %v229, 4294901760
      %2891 = vmatpush1.msra.mxu0 %v2890
      %v2892 = vand.u32 %v238, 4294901760
      %2893 = vmatprep.subr.mxu0 %v2892
      %v2894 = vand.u32 %v237, 4294901760
      %2895 = vmatpush1.msra.mxu0 %v2894
      %v2896 = vand.u32 %v246, 4294901760
      %2897 = vmatprep.subr.mxu0 %v2896
      %v2898 = vand.u32 %v245, 4294901760
      %2899 = vmatpush1.msra.mxu0 %v2898
      %v2900 = vand.u32 %v254, 4294901760
      %2901 = vmatprep.subr.mxu0 %v2900
      %v2902 = vand.u32 %v253, 4294901760
      %2903 = vmatpush1.msra.mxu0 %v2902
      %v2904 = vand.u32 %v262, 4294901760
      %2905 = vmatprep.subr.mxu0 %v2904
      %v2906 = vand.u32 %v261, 4294901760
      %2907 = vmatpush1.msra.mxu0 %v2906
      %v2908 = vand.u32 %v270, 4294901760
      %2909 = vmatprep.subr.mxu0 %v2908
      %v2910 = vand.u32 %v269, 4294901760
      %2911 = vmatpush1.msra.mxu0 %v2910
      %v2912 = vand.u32 %v278, 4294901760
      %2913 = vmatprep.subr.mxu0 %v2912
      %v2914 = vand.u32 %v277, 4294901760
      %2915 = vmatpush1.msra.mxu0 %v2914
      %v2916 = vand.u32 %v286, 4294901760
      %2917 = vmatprep.subr.mxu0 %v2916
      %v2918 = vand.u32 %v285, 4294901760
      %2919 = vmatpush1.msra.mxu0 %v2918
      %v2920 = vand.u32 %v294, 4294901760
      %2921 = vmatprep.subr.mxu0 %v2920
      %v2922 = vand.u32 %v293, 4294901760
      %2923 = vmatpush1.msra.mxu0 %v2922
      %2924 = vmatprep.subr.mxu0 0.0
      %2925 = vmatpush1.msra.mxu0 0.0
      %2926 = vmatprep.subr.mxu0 0.0
      %2927 = vmatpush1.msra.mxu0 0.0
      %2928 = vmatprep.subr.mxu0 0.0
      %2929 = vmatpush1.msra.mxu0 0.0
      %2930 = vmatprep.subr.mxu0 0.0
      %2931 = vmatpush1.msra.mxu0 0.0
      %2932 = vmatprep.subr.mxu0 0.0
      %2933 = vmatpush1.msra.mxu0 0.0
      %2934 = vmatprep.subr.mxu0 0.0
      %2935 = vmatpush1.msra.mxu0 0.0
      %2936 = vmatprep.subr.mxu0 0.0
      %2937 = vmatpush1.msra.mxu0 0.0
      %2938 = vmatprep.subr.mxu0 0.0
      %2939 = vmatpush1.msra.mxu0 0.0
      %2940 = vmatprep.subr.mxu0 0.0
      %2941 = vmatpush1.msra.mxu0 0.0
      %2942 = vmatprep.subr.mxu0 0.0
      %2943 = vmatpush1.msra.mxu0 0.0
      %2944 = vmatprep.subr.mxu0 0.0
      %2945 = vmatpush1.msra.mxu0 0.0
      %2946 = vmatprep.subr.mxu0 0.0
      %2947 = vmatpush1.msra.mxu0 0.0
      %2948 = vmatprep.subr.mxu0 0.0
      %2949 = vmatpush1.msra.mxu0 0.0
      %2950 = vmatprep.subr.mxu0 0.0
      %2951 = vmatpush1.msra.mxu0 0.0
      %2952 = vmatprep.subr.mxu0 0.0
      %2953 = vmatpush1.msra.mxu0 0.0
      %2954 = vmatprep.subr.mxu0 0.0
      %2955 = vmatpush1.msra.mxu0 0.0
      %2956 = vmatprep.mubr.f32.mxu0 0.0
      %v2957 = vand.u32 %v166, 4294901760
      %v2958 = vsub.f32 %v166, %v2957
      %v2959 = vand.u32 %v2958, 4294901760
      %v2960 = vsub.f32 %v2958, %v2959
      %v2961 = vand.u32 %v2960, 4294901760
      %2962 = vmatmul.mubr.f32.gmra.mrb[0].mxu0 %v2961
      %v2963 = vpop.f32.mrb[0].mxu0
      %v2964 = vadd.f32 0.0, %v2963
      %v2965 = vpop.f32.mrb[0].mxu0
      %v2966 = vadd.f32 0.0, %v2965
      %2967 = vdwg.mxu0
      %v2968 = vand.u32 %v174, 4294901760
      %v2969 = vsub.f32 %v174, %v2968
      %v2970 = vand.u32 %v2969, 4294901760
      %v2971 = vsub.f32 %v2969, %v2970
      %v2972 = vand.u32 %v2971, 4294901760
      %2973 = vmatprep.subr.mxu0 %v2972
      %v2974 = vand.u32 %v173, 4294901760
      %v2975 = vsub.f32 %v173, %v2974
      %v2976 = vand.u32 %v2975, 4294901760
      %v2977 = vsub.f32 %v2975, %v2976
      %v2978 = vand.u32 %v2977, 4294901760
      %2979 = vmatpush1.msra.mxu0 %v2978
      %v2980 = vand.u32 %v182, 4294901760
      %v2981 = vsub.f32 %v182, %v2980
      %v2982 = vand.u32 %v2981, 4294901760
      %v2983 = vsub.f32 %v2981, %v2982
      %v2984 = vand.u32 %v2983, 4294901760
      %2985 = vmatprep.subr.mxu0 %v2984
      %v2986 = vand.u32 %v181, 4294901760
      %v2987 = vsub.f32 %v181, %v2986
      %v2988 = vand.u32 %v2987, 4294901760
      %v2989 = vsub.f32 %v2987, %v2988
      %v2990 = vand.u32 %v2989, 4294901760
      %2991 = vmatpush1.msra.mxu0 %v2990
      %v2992 = vand.u32 %v190, 4294901760
      %v2993 = vsub.f32 %v190, %v2992
      %v2994 = vand.u32 %v2993, 4294901760
      %v2995 = vsub.f32 %v2993, %v2994
      %v2996 = vand.u32 %v2995, 4294901760
      %2997 = vmatprep.subr.mxu0 %v2996
      %v2998 = vand.u32 %v189, 4294901760
      %v2999 = vsub.f32 %v189, %v2998
      %v3000 = vand.u32 %v2999, 4294901760
      %v3001 = vsub.f32 %v2999, %v3000
      %v3002 = vand.u32 %v3001, 4294901760
      %3003 = vmatpush1.msra.mxu0 %v3002
      %v3004 = vand.u32 %v198, 4294901760
      %v3005 = vsub.f32 %v198, %v3004
      %v3006 = vand.u32 %v3005, 4294901760
      %v3007 = vsub.f32 %v3005, %v3006
      %v3008 = vand.u32 %v3007, 4294901760
      %3009 = vmatprep.subr.mxu0 %v3008
      %v3010 = vand.u32 %v197, 4294901760
      %v3011 = vsub.f32 %v197, %v3010
      %v3012 = vand.u32 %v3011, 4294901760
      %v3013 = vsub.f32 %v3011, %v3012
      %v3014 = vand.u32 %v3013, 4294901760
      %3015 = vmatpush1.msra.mxu0 %v3014
      %v3016 = vand.u32 %v206, 4294901760
      %v3017 = vsub.f32 %v206, %v3016
      %v3018 = vand.u32 %v3017, 4294901760
      %v3019 = vsub.f32 %v3017, %v3018
      %v3020 = vand.u32 %v3019, 4294901760
      %3021 = vmatprep.subr.mxu0 %v3020
      %v3022 = vand.u32 %v205, 4294901760
      %v3023 = vsub.f32 %v205, %v3022
      %v3024 = vand.u32 %v3023, 4294901760
      %v3025 = vsub.f32 %v3023, %v3024
      %v3026 = vand.u32 %v3025, 4294901760
      %3027 = vmatpush1.msra.mxu0 %v3026
      %v3028 = vand.u32 %v214, 4294901760
      %v3029 = vsub.f32 %v214, %v3028
      %v3030 = vand.u32 %v3029, 4294901760
      %v3031 = vsub.f32 %v3029, %v3030
      %v3032 = vand.u32 %v3031, 4294901760
      %3033 = vmatprep.subr.mxu0 %v3032
      %v3034 = vand.u32 %v213, 4294901760
      %v3035 = vsub.f32 %v213, %v3034
      %v3036 = vand.u32 %v3035, 4294901760
      %v3037 = vsub.f32 %v3035, %v3036
      %v3038 = vand.u32 %v3037, 4294901760
      %3039 = vmatpush1.msra.mxu0 %v3038
      %v3040 = vand.u32 %v222, 4294901760
      %v3041 = vsub.f32 %v222, %v3040
      %v3042 = vand.u32 %v3041, 4294901760
      %v3043 = vsub.f32 %v3041, %v3042
      %v3044 = vand.u32 %v3043, 4294901760
      %3045 = vmatprep.subr.mxu0 %v3044
      %v3046 = vand.u32 %v221, 4294901760
      %v3047 = vsub.f32 %v221, %v3046
      %v3048 = vand.u32 %v3047, 4294901760
      %v3049 = vsub.f32 %v3047, %v3048
      %v3050 = vand.u32 %v3049, 4294901760
      %3051 = vmatpush1.msra.mxu0 %v3050
      %v3052 = vand.u32 %v230, 4294901760
      %v3053 = vsub.f32 %v230, %v3052
      %v3054 = vand.u32 %v3053, 4294901760
      %v3055 = vsub.f32 %v3053, %v3054
      %v3056 = vand.u32 %v3055, 4294901760
      %3057 = vmatprep.subr.mxu0 %v3056
      %v3058 = vand.u32 %v229, 4294901760
      %v3059 = vsub.f32 %v229, %v3058
      %v3060 = vand.u32 %v3059, 4294901760
      %v3061 = vsub.f32 %v3059, %v3060
      %v3062 = vand.u32 %v3061, 4294901760
      %3063 = vmatpush1.msra.mxu0 %v3062
      %v3064 = vand.u32 %v238, 4294901760
      %v3065 = vsub.f32 %v238, %v3064
      %v3066 = vand.u32 %v3065, 4294901760
      %v3067 = vsub.f32 %v3065, %v3066
      %v3068 = vand.u32 %v3067, 4294901760
      %3069 = vmatprep.subr.mxu0 %v3068
      %v3070 = vand.u32 %v237, 4294901760
      %v3071 = vsub.f32 %v237, %v3070
      %v3072 = vand.u32 %v3071, 4294901760
      %v3073 = vsub.f32 %v3071, %v3072
      %v3074 = vand.u32 %v3073, 4294901760
      %3075 = vmatpush1.msra.mxu0 %v3074
      %v3076 = vand.u32 %v246, 4294901760
      %v3077 = vsub.f32 %v246, %v3076
      %v3078 = vand.u32 %v3077, 4294901760
      %v3079 = vsub.f32 %v3077, %v3078
      %v3080 = vand.u32 %v3079, 4294901760
      %3081 = vmatprep.subr.mxu0 %v3080
      %v3082 = vand.u32 %v245, 4294901760
      %v3083 = vsub.f32 %v245, %v3082
      %v3084 = vand.u32 %v3083, 4294901760
      %v3085 = vsub.f32 %v3083, %v3084
      %v3086 = vand.u32 %v3085, 4294901760
      %3087 = vmatpush1.msra.mxu0 %v3086
      %v3088 = vand.u32 %v254, 4294901760
      %v3089 = vsub.f32 %v254, %v3088
      %v3090 = vand.u32 %v3089, 4294901760
      %v3091 = vsub.f32 %v3089, %v3090
      %v3092 = vand.u32 %v3091, 4294901760
      %3093 = vmatprep.subr.mxu0 %v3092
      %v3094 = vand.u32 %v253, 4294901760
      %v3095 = vsub.f32 %v253, %v3094
      %v3096 = vand.u32 %v3095, 4294901760
      %v3097 = vsub.f32 %v3095, %v3096
      %v3098 = vand.u32 %v3097, 4294901760
      %3099 = vmatpush1.msra.mxu0 %v3098
      %v3100 = vand.u32 %v262, 4294901760
      %v3101 = vsub.f32 %v262, %v3100
      %v3102 = vand.u32 %v3101, 4294901760
      %v3103 = vsub.f32 %v3101, %v3102
      %v3104 = vand.u32 %v3103, 4294901760
      %3105 = vmatprep.subr.mxu0 %v3104
      %v3106 = vand.u32 %v261, 4294901760
      %v3107 = vsub.f32 %v261, %v3106
      %v3108 = vand.u32 %v3107, 4294901760
      %v3109 = vsub.f32 %v3107, %v3108
      %v3110 = vand.u32 %v3109, 4294901760
      %3111 = vmatpush1.msra.mxu0 %v3110
      %v3112 = vand.u32 %v270, 4294901760
      %v3113 = vsub.f32 %v270, %v3112
      %v3114 = vand.u32 %v3113, 4294901760
      %v3115 = vsub.f32 %v3113, %v3114
      %v3116 = vand.u32 %v3115, 4294901760
      %3117 = vmatprep.subr.mxu0 %v3116
      %v3118 = vand.u32 %v269, 4294901760
      %v3119 = vsub.f32 %v269, %v3118
      %v3120 = vand.u32 %v3119, 4294901760
      %v3121 = vsub.f32 %v3119, %v3120
      %v3122 = vand.u32 %v3121, 4294901760
      %3123 = vmatpush1.msra.mxu0 %v3122
      %v3124 = vand.u32 %v278, 4294901760
      %v3125 = vsub.f32 %v278, %v3124
      %v3126 = vand.u32 %v3125, 4294901760
      %v3127 = vsub.f32 %v3125, %v3126
      %v3128 = vand.u32 %v3127, 4294901760
      %3129 = vmatprep.subr.mxu0 %v3128
      %v3130 = vand.u32 %v277, 4294901760
      %v3131 = vsub.f32 %v277, %v3130
      %v3132 = vand.u32 %v3131, 4294901760
      %v3133 = vsub.f32 %v3131, %v3132
      %v3134 = vand.u32 %v3133, 4294901760
      %3135 = vmatpush1.msra.mxu0 %v3134
      %v3136 = vand.u32 %v286, 4294901760
      %v3137 = vsub.f32 %v286, %v3136
      %v3138 = vand.u32 %v3137, 4294901760
      %v3139 = vsub.f32 %v3137, %v3138
      %v3140 = vand.u32 %v3139, 4294901760
      %3141 = vmatprep.subr.mxu0 %v3140
      %v3142 = vand.u32 %v285, 4294901760
      %v3143 = vsub.f32 %v285, %v3142
      %v3144 = vand.u32 %v3143, 4294901760
      %v3145 = vsub.f32 %v3143, %v3144
      %v3146 = vand.u32 %v3145, 4294901760
      %3147 = vmatpush1.msra.mxu0 %v3146
      %v3148 = vand.u32 %v294, 4294901760
      %v3149 = vsub.f32 %v294, %v3148
      %v3150 = vand.u32 %v3149, 4294901760
      %v3151 = vsub.f32 %v3149, %v3150
      %v3152 = vand.u32 %v3151, 4294901760
      %3153 = vmatprep.subr.mxu0 %v3152
      %v3154 = vand.u32 %v293, 4294901760
      %v3155 = vsub.f32 %v293, %v3154
      %v3156 = vand.u32 %v3155, 4294901760
      %v3157 = vsub.f32 %v3155, %v3156
      %v3158 = vand.u32 %v3157, 4294901760
      %3159 = vmatpush1.msra.mxu0 %v3158
      %3160 = vmatprep.subr.mxu0 0.0
      %3161 = vmatpush1.msra.mxu0 0.0
      %3162 = vmatprep.subr.mxu0 0.0
      %3163 = vmatpush1.msra.mxu0 0.0
      %3164 = vmatprep.subr.mxu0 0.0
      %3165 = vmatpush1.msra.mxu0 0.0
      %3166 = vmatprep.subr.mxu0 0.0
      %3167 = vmatpush1.msra.mxu0 0.0
      %3168 = vmatprep.subr.mxu0 0.0
      %3169 = vmatpush1.msra.mxu0 0.0
      %3170 = vmatprep.subr.mxu0 0.0
      %3171 = vmatpush1.msra.mxu0 0.0
      %3172 = vmatprep.subr.mxu0 0.0
      %3173 = vmatpush1.msra.mxu0 0.0
      %3174 = vmatprep.subr.mxu0 0.0
      %3175 = vmatpush1.msra.mxu0 0.0
      %3176 = vmatprep.subr.mxu0 0.0
      %3177 = vmatpush1.msra.mxu0 0.0
      %3178 = vmatprep.subr.mxu0 0.0
      %3179 = vmatpush1.msra.mxu0 0.0
      %3180 = vmatprep.subr.mxu0 0.0
      %3181 = vmatpush1.msra.mxu0 0.0
      %3182 = vmatprep.subr.mxu0 0.0
      %3183 = vmatpush1.msra.mxu0 0.0
      %3184 = vmatprep.subr.mxu0 0.0
      %3185 = vmatpush1.msra.mxu0 0.0
      %3186 = vmatprep.subr.mxu0 0.0
      %3187 = vmatpush1.msra.mxu0 0.0
      %3188 = vmatprep.subr.mxu0 0.0
      %3189 = vmatpush1.msra.mxu0 0.0
      %3190 = vmatprep.subr.mxu0 0.0
      %3191 = vmatpush1.msra.mxu0 0.0
      %3192 = vmatprep.mubr.f32.mxu0 0.0
      %v3193 = vand.u32 %v166, 4294901760
      %3194 = vmatmul.mubr.f32.gmra.mrb[0].mxu0 %v3193
      %v3195 = vpop.f32.mrb[0].mxu0
      %v3196 = vadd.f32 %v2964, %v3195
      %v3197 = vpop.f32.mrb[0].mxu0
      %v3198 = vadd.f32 %v2966, %v3197
      %3199 = vdwg.mxu0
      %v3200 = vand.u32 %v174, 4294901760
      %v3201 = vsub.f32 %v174, %v3200
      %3202 = vmatprep.subr.mxu0 %v3201
      %v3203 = vand.u32 %v173, 4294901760
      %v3204 = vsub.f32 %v173, %v3203
      %3205 = vmatpush1.msra.mxu0 %v3204
      %v3206 = vand.u32 %v182, 4294901760
      %v3207 = vsub.f32 %v182, %v3206
      %3208 = vmatprep.subr.mxu0 %v3207
      %v3209 = vand.u32 %v181, 4294901760
      %v3210 = vsub.f32 %v181, %v3209
      %3211 = vmatpush1.msra.mxu0 %v3210
      %v3212 = vand.u32 %v190, 4294901760
      %v3213 = vsub.f32 %v190, %v3212
      %3214 = vmatprep.subr.mxu0 %v3213
      %v3215 = vand.u32 %v189, 4294901760
      %v3216 = vsub.f32 %v189, %v3215
      %3217 = vmatpush1.msra.mxu0 %v3216
      %v3218 = vand.u32 %v198, 4294901760
      %v3219 = vsub.f32 %v198, %v3218
      %3220 = vmatprep.subr.mxu0 %v3219
      %v3221 = vand.u32 %v197, 4294901760
      %v3222 = vsub.f32 %v197, %v3221
      %3223 = vmatpush1.msra.mxu0 %v3222
      %v3224 = vand.u32 %v206, 4294901760
      %v3225 = vsub.f32 %v206, %v3224
      %3226 = vmatprep.subr.mxu0 %v3225
      %v3227 = vand.u32 %v205, 4294901760
      %v3228 = vsub.f32 %v205, %v3227
      %3229 = vmatpush1.msra.mxu0 %v3228
      %v3230 = vand.u32 %v214, 4294901760
      %v3231 = vsub.f32 %v214, %v3230
      %3232 = vmatprep.subr.mxu0 %v3231
      %v3233 = vand.u32 %v213, 4294901760
      %v3234 = vsub.f32 %v213, %v3233
      %3235 = vmatpush1.msra.mxu0 %v3234
      %v3236 = vand.u32 %v222, 4294901760
      %v3237 = vsub.f32 %v222, %v3236
      %3238 = vmatprep.subr.mxu0 %v3237
      %v3239 = vand.u32 %v221, 4294901760
      %v3240 = vsub.f32 %v221, %v3239
      %3241 = vmatpush1.msra.mxu0 %v3240
      %v3242 = vand.u32 %v230, 4294901760
      %v3243 = vsub.f32 %v230, %v3242
      %3244 = vmatprep.subr.mxu0 %v3243
      %v3245 = vand.u32 %v229, 4294901760
      %v3246 = vsub.f32 %v229, %v3245
      %3247 = vmatpush1.msra.mxu0 %v3246
      %v3248 = vand.u32 %v238, 4294901760
      %v3249 = vsub.f32 %v238, %v3248
      %3250 = vmatprep.subr.mxu0 %v3249
      %v3251 = vand.u32 %v237, 4294901760
      %v3252 = vsub.f32 %v237, %v3251
      %3253 = vmatpush1.msra.mxu0 %v3252
      %v3254 = vand.u32 %v246, 4294901760
      %v3255 = vsub.f32 %v246, %v3254
      %3256 = vmatprep.subr.mxu0 %v3255
      %v3257 = vand.u32 %v245, 4294901760
      %v3258 = vsub.f32 %v245, %v3257
      %3259 = vmatpush1.msra.mxu0 %v3258
      %v3260 = vand.u32 %v254, 4294901760
      %v3261 = vsub.f32 %v254, %v3260
      %3262 = vmatprep.subr.mxu0 %v3261
      %v3263 = vand.u32 %v253, 4294901760
      %v3264 = vsub.f32 %v253, %v3263
      %3265 = vmatpush1.msra.mxu0 %v3264
      %v3266 = vand.u32 %v262, 4294901760
      %v3267 = vsub.f32 %v262, %v3266
      %3268 = vmatprep.subr.mxu0 %v3267
      %v3269 = vand.u32 %v261, 4294901760
      %v3270 = vsub.f32 %v261, %v3269
      %3271 = vmatpush1.msra.mxu0 %v3270
      %v3272 = vand.u32 %v270, 4294901760
      %v3273 = vsub.f32 %v270, %v3272
      %3274 = vmatprep.subr.mxu0 %v3273
      %v3275 = vand.u32 %v269, 4294901760
      %v3276 = vsub.f32 %v269, %v3275
      %3277 = vmatpush1.msra.mxu0 %v3276
      %v3278 = vand.u32 %v278, 4294901760
      %v3279 = vsub.f32 %v278, %v3278
      %3280 = vmatprep.subr.mxu0 %v3279
      %v3281 = vand.u32 %v277, 4294901760
      %v3282 = vsub.f32 %v277, %v3281
      %3283 = vmatpush1.msra.mxu0 %v3282
      %v3284 = vand.u32 %v286, 4294901760
      %v3285 = vsub.f32 %v286, %v3284
      %3286 = vmatprep.subr.mxu0 %v3285
      %v3287 = vand.u32 %v285, 4294901760
      %v3288 = vsub.f32 %v285, %v3287
      %3289 = vmatpush1.msra.mxu0 %v3288
      %v3290 = vand.u32 %v294, 4294901760
      %v3291 = vsub.f32 %v294, %v3290
      %3292 = vmatprep.subr.mxu0 %v3291
      %v3293 = vand.u32 %v293, 4294901760
      %v3294 = vsub.f32 %v293, %v3293
      %3295 = vmatpush1.msra.mxu0 %v3294
      %3296 = vmatprep.subr.mxu0 0.0
      %3297 = vmatpush1.msra.mxu0 0.0
      %3298 = vmatprep.subr.mxu0 0.0
      %3299 = vmatpush1.msra.mxu0 0.0
      %3300 = vmatprep.subr.mxu0 0.0
      %3301 = vmatpush1.msra.mxu0 0.0
      %3302 = vmatprep.subr.mxu0 0.0
      %3303 = vmatpush1.msra.mxu0 0.0
      %3304 = vmatprep.subr.mxu0 0.0
      %3305 = vmatpush1.msra.mxu0 0.0
      %3306 = vmatprep.subr.mxu0 0.0
      %3307 = vmatpush1.msra.mxu0 0.0
      %3308 = vmatprep.subr.mxu0 0.0
      %3309 = vmatpush1.msra.mxu0 0.0
      %3310 = vmatprep.subr.mxu0 0.0
      %3311 = vmatpush1.msra.mxu0 0.0
      %3312 = vmatprep.subr.mxu0 0.0
      %3313 = vmatpush1.msra.mxu0 0.0
      %3314 = vmatprep.subr.mxu0 0.0
      %3315 = vmatpush1.msra.mxu0 0.0
      %3316 = vmatprep.subr.mxu0 0.0
      %3317 = vmatpush1.msra.mxu0 0.0
      %3318 = vmatprep.subr.mxu0 0.0
      %3319 = vmatpush1.msra.mxu0 0.0
      %3320 = vmatprep.subr.mxu0 0.0
      %3321 = vmatpush1.msra.mxu0 0.0
      %3322 = vmatprep.subr.mxu0 0.0
      %3323 = vmatpush1.msra.mxu0 0.0
      %3324 = vmatprep.subr.mxu0 0.0
      %3325 = vmatpush1.msra.mxu0 0.0
      %3326 = vmatprep.subr.mxu0 0.0
      %3327 = vmatpush1.msra.mxu0 0.0
      %3328 = vmatprep.mubr.f32.mxu0 0.0
      %v3329 = vand.u32 %v166, 4294901760
      %v3330 = vsub.f32 %v166, %v3329
      %3331 = vmatmul.mubr.f32.gmra.mrb[0].mxu0 %v3330
      %v3332 = vpop.f32.mrb[0].mxu0
      %v3333 = vadd.f32 %v3196, %v3332
      %v3334 = vpop.f32.mrb[0].mxu0
      %v3335 = vadd.f32 %v3198, %v3334
      %3336 = vdwg.mxu0
      %v3337 = vand.u32 %v174, 4294901760
      %3338 = vmatprep.subr.mxu0 %v3337
      %v3339 = vand.u32 %v173, 4294901760
      %3340 = vmatpush1.msra.mxu0 %v3339
      %v3341 = vand.u32 %v182, 4294901760
      %3342 = vmatprep.subr.mxu0 %v3341
      %v3343 = vand.u32 %v181, 4294901760
      %3344 = vmatpush1.msra.mxu0 %v3343
      %v3345 = vand.u32 %v190, 4294901760
      %3346 = vmatprep.subr.mxu0 %v3345
      %v3347 = vand.u32 %v189, 4294901760
      %3348 = vmatpush1.msra.mxu0 %v3347
      %v3349 = vand.u32 %v198, 4294901760
      %3350 = vmatprep.subr.mxu0 %v3349
      %v3351 = vand.u32 %v197, 4294901760
      %3352 = vmatpush1.msra.mxu0 %v3351
      %v3353 = vand.u32 %v206, 4294901760
      %3354 = vmatprep.subr.mxu0 %v3353
      %v3355 = vand.u32 %v205, 4294901760
      %3356 = vmatpush1.msra.mxu0 %v3355
      %v3357 = vand.u32 %v214, 4294901760
      %3358 = vmatprep.subr.mxu0 %v3357
      %v3359 = vand.u32 %v213, 4294901760
      %3360 = vmatpush1.msra.mxu0 %v3359
      %v3361 = vand.u32 %v222, 4294901760
      %3362 = vmatprep.subr.mxu0 %v3361
      %v3363 = vand.u32 %v221, 4294901760
      %3364 = vmatpush1.msra.mxu0 %v3363
      %v3365 = vand.u32 %v230, 4294901760
      %3366 = vmatprep.subr.mxu0 %v3365
      %v3367 = vand.u32 %v229, 4294901760
      %3368 = vmatpush1.msra.mxu0 %v3367
      %v3369 = vand.u32 %v238, 4294901760
      %3370 = vmatprep.subr.mxu0 %v3369
      %v3371 = vand.u32 %v237, 4294901760
      %3372 = vmatpush1.msra.mxu0 %v3371
      %v3373 = vand.u32 %v246, 4294901760
      %3374 = vmatprep.subr.mxu0 %v3373
      %v3375 = vand.u32 %v245, 4294901760
      %3376 = vmatpush1.msra.mxu0 %v3375
      %v3377 = vand.u32 %v254, 4294901760
      %3378 = vmatprep.subr.mxu0 %v3377
      %v3379 = vand.u32 %v253, 4294901760
      %3380 = vmatpush1.msra.mxu0 %v3379
      %v3381 = vand.u32 %v262, 4294901760
      %3382 = vmatprep.subr.mxu0 %v3381
      %v3383 = vand.u32 %v261, 4294901760
      %3384 = vmatpush1.msra.mxu0 %v3383
      %v3385 = vand.u32 %v270, 4294901760
      %3386 = vmatprep.subr.mxu0 %v3385
      %v3387 = vand.u32 %v269, 4294901760
      %3388 = vmatpush1.msra.mxu0 %v3387
      %v3389 = vand.u32 %v278, 4294901760
      %3390 = vmatprep.subr.mxu0 %v3389
      %v3391 = vand.u32 %v277, 4294901760
      %3392 = vmatpush1.msra.mxu0 %v3391
      %v3393 = vand.u32 %v286, 4294901760
      %3394 = vmatprep.subr.mxu0 %v3393
      %v3395 = vand.u32 %v285, 4294901760
      %3396 = vmatpush1.msra.mxu0 %v3395
      %v3397 = vand.u32 %v294, 4294901760
      %3398 = vmatprep.subr.mxu0 %v3397
      %v3399 = vand.u32 %v293, 4294901760
      %3400 = vmatpush1.msra.mxu0 %v3399
      %3401 = vmatprep.subr.mxu0 0.0
      %3402 = vmatpush1.msra.mxu0 0.0
      %3403 = vmatprep.subr.mxu0 0.0
      %3404 = vmatpush1.msra.mxu0 0.0
      %3405 = vmatprep.subr.mxu0 0.0
      %3406 = vmatpush1.msra.mxu0 0.0
      %3407 = vmatprep.subr.mxu0 0.0
      %3408 = vmatpush1.msra.mxu0 0.0
      %3409 = vmatprep.subr.mxu0 0.0
      %3410 = vmatpush1.msra.mxu0 0.0
      %3411 = vmatprep.subr.mxu0 0.0
      %3412 = vmatpush1.msra.mxu0 0.0
      %3413 = vmatprep.subr.mxu0 0.0
      %3414 = vmatpush1.msra.mxu0 0.0
      %3415 = vmatprep.subr.mxu0 0.0
      %3416 = vmatpush1.msra.mxu0 0.0
      %3417 = vmatprep.subr.mxu0 0.0
      %3418 = vmatpush1.msra.mxu0 0.0
      %3419 = vmatprep.subr.mxu0 0.0
      %3420 = vmatpush1.msra.mxu0 0.0
      %3421 = vmatprep.subr.mxu0 0.0
      %3422 = vmatpush1.msra.mxu0 0.0
      %3423 = vmatprep.subr.mxu0 0.0
      %3424 = vmatpush1.msra.mxu0 0.0
      %3425 = vmatprep.subr.mxu0 0.0
      %3426 = vmatpush1.msra.mxu0 0.0
      %3427 = vmatprep.subr.mxu0 0.0
      %3428 = vmatpush1.msra.mxu0 0.0
      %3429 = vmatprep.subr.mxu0 0.0
      %3430 = vmatpush1.msra.mxu0 0.0
      %3431 = vmatprep.subr.mxu0 0.0
      %3432 = vmatpush1.msra.mxu0 0.0
      %3433 = vmatprep.mubr.f32.mxu0 0.0
      %v3434 = vand.u32 %v166, 4294901760
      %v3435 = vsub.f32 %v166, %v3434
      %v3436 = vand.u32 %v3435, 4294901760
      %3437 = vmatmul.mubr.f32.gmra.mrb[0].mxu0 %v3436
      %v3438 = vpop.f32.mrb[0].mxu0
      %v3439 = vadd.f32 %v3333, %v3438
      %v3440 = vpop.f32.mrb[0].mxu0
      %v3441 = vadd.f32 %v3335, %v3440
      %3442 = vdwg.mxu0
      %v3443 = vand.u32 %v174, 4294901760
      %v3444 = vsub.f32 %v174, %v3443
      %v3445 = vand.u32 %v3444, 4294901760
      %3446 = vmatprep.subr.mxu0 %v3445
      %v3447 = vand.u32 %v173, 4294901760
      %v3448 = vsub.f32 %v173, %v3447
      %v3449 = vand.u32 %v3448, 4294901760
      %3450 = vmatpush1.msra.mxu0 %v3449
      %v3451 = vand.u32 %v182, 4294901760
      %v3452 = vsub.f32 %v182, %v3451
      %v3453 = vand.u32 %v3452, 4294901760
      %3454 = vmatprep.subr.mxu0 %v3453
      %v3455 = vand.u32 %v181, 4294901760
      %v3456 = vsub.f32 %v181, %v3455
      %v3457 = vand.u32 %v3456, 4294901760
      %3458 = vmatpush1.msra.mxu0 %v3457
      %v3459 = vand.u32 %v190, 4294901760
      %v3460 = vsub.f32 %v190, %v3459
      %v3461 = vand.u32 %v3460, 4294901760
      %3462 = vmatprep.subr.mxu0 %v3461
      %v3463 = vand.u32 %v189, 4294901760
      %v3464 = vsub.f32 %v189, %v3463
      %v3465 = vand.u32 %v3464, 4294901760
      %3466 = vmatpush1.msra.mxu0 %v3465
      %v3467 = vand.u32 %v198, 4294901760
      %v3468 = vsub.f32 %v198, %v3467
      %v3469 = vand.u32 %v3468, 4294901760
      %3470 = vmatprep.subr.mxu0 %v3469
      %v3471 = vand.u32 %v197, 4294901760
      %v3472 = vsub.f32 %v197, %v3471
      %v3473 = vand.u32 %v3472, 4294901760
      %3474 = vmatpush1.msra.mxu0 %v3473
      %v3475 = vand.u32 %v206, 4294901760
      %v3476 = vsub.f32 %v206, %v3475
      %v3477 = vand.u32 %v3476, 4294901760
      %3478 = vmatprep.subr.mxu0 %v3477
      %v3479 = vand.u32 %v205, 4294901760
      %v3480 = vsub.f32 %v205, %v3479
      %v3481 = vand.u32 %v3480, 4294901760
      %3482 = vmatpush1.msra.mxu0 %v3481
      %v3483 = vand.u32 %v214, 4294901760
      %v3484 = vsub.f32 %v214, %v3483
      %v3485 = vand.u32 %v3484, 4294901760
      %3486 = vmatprep.subr.mxu0 %v3485
      %v3487 = vand.u32 %v213, 4294901760
      %v3488 = vsub.f32 %v213, %v3487
      %v3489 = vand.u32 %v3488, 4294901760
      %3490 = vmatpush1.msra.mxu0 %v3489
      %v3491 = vand.u32 %v222, 4294901760
      %v3492 = vsub.f32 %v222, %v3491
      %v3493 = vand.u32 %v3492, 4294901760
      %3494 = vmatprep.subr.mxu0 %v3493
      %v3495 = vand.u32 %v221, 4294901760
      %v3496 = vsub.f32 %v221, %v3495
      %v3497 = vand.u32 %v3496, 4294901760
      %3498 = vmatpush1.msra.mxu0 %v3497
      %v3499 = vand.u32 %v230, 4294901760
      %v3500 = vsub.f32 %v230, %v3499
      %v3501 = vand.u32 %v3500, 4294901760
      %3502 = vmatprep.subr.mxu0 %v3501
      %v3503 = vand.u32 %v229, 4294901760
      %v3504 = vsub.f32 %v229, %v3503
      %v3505 = vand.u32 %v3504, 4294901760
      %3506 = vmatpush1.msra.mxu0 %v3505
      %v3507 = vand.u32 %v238, 4294901760
      %v3508 = vsub.f32 %v238, %v3507
      %v3509 = vand.u32 %v3508, 4294901760
      %3510 = vmatprep.subr.mxu0 %v3509
      %v3511 = vand.u32 %v237, 4294901760
      %v3512 = vsub.f32 %v237, %v3511
      %v3513 = vand.u32 %v3512, 4294901760
      %3514 = vmatpush1.msra.mxu0 %v3513
      %v3515 = vand.u32 %v246, 4294901760
      %v3516 = vsub.f32 %v246, %v3515
      %v3517 = vand.u32 %v3516, 4294901760
      %3518 = vmatprep.subr.mxu0 %v3517
      %v3519 = vand.u32 %v245, 4294901760
      %v3520 = vsub.f32 %v245, %v3519
      %v3521 = vand.u32 %v3520, 4294901760
      %3522 = vmatpush1.msra.mxu0 %v3521
      %v3523 = vand.u32 %v254, 4294901760
      %v3524 = vsub.f32 %v254, %v3523
      %v3525 = vand.u32 %v3524, 4294901760
      %3526 = vmatprep.subr.mxu0 %v3525
      %v3527 = vand.u32 %v253, 4294901760
      %v3528 = vsub.f32 %v253, %v3527
      %v3529 = vand.u32 %v3528, 4294901760
      %3530 = vmatpush1.msra.mxu0 %v3529
      %v3531 = vand.u32 %v262, 4294901760
      %v3532 = vsub.f32 %v262, %v3531
      %v3533 = vand.u32 %v3532, 4294901760
      %3534 = vmatprep.subr.mxu0 %v3533
      %v3535 = vand.u32 %v261, 4294901760
      %v3536 = vsub.f32 %v261, %v3535
      %v3537 = vand.u32 %v3536, 4294901760
      %3538 = vmatpush1.msra.mxu0 %v3537
      %v3539 = vand.u32 %v270, 4294901760
      %v3540 = vsub.f32 %v270, %v3539
      %v3541 = vand.u32 %v3540, 4294901760
      %3542 = vmatprep.subr.mxu0 %v3541
      %v3543 = vand.u32 %v269, 4294901760
      %v3544 = vsub.f32 %v269, %v3543
      %v3545 = vand.u32 %v3544, 4294901760
      %3546 = vmatpush1.msra.mxu0 %v3545
      %v3547 = vand.u32 %v278, 4294901760
      %v3548 = vsub.f32 %v278, %v3547
      %v3549 = vand.u32 %v3548, 4294901760
      %3550 = vmatprep.subr.mxu0 %v3549
      %v3551 = vand.u32 %v277, 4294901760
      %v3552 = vsub.f32 %v277, %v3551
      %v3553 = vand.u32 %v3552, 4294901760
      %3554 = vmatpush1.msra.mxu0 %v3553
      %v3555 = vand.u32 %v286, 4294901760
      %v3556 = vsub.f32 %v286, %v3555
      %v3557 = vand.u32 %v3556, 4294901760
      %3558 = vmatprep.subr.mxu0 %v3557
      %v3559 = vand.u32 %v285, 4294901760
      %v3560 = vsub.f32 %v285, %v3559
      %v3561 = vand.u32 %v3560, 4294901760
      %3562 = vmatpush1.msra.mxu0 %v3561
      %v3563 = vand.u32 %v294, 4294901760
      %v3564 = vsub.f32 %v294, %v3563
      %v3565 = vand.u32 %v3564, 4294901760
      %3566 = vmatprep.subr.mxu0 %v3565
      %v3567 = vand.u32 %v293, 4294901760
      %v3568 = vsub.f32 %v293, %v3567
      %v3569 = vand.u32 %v3568, 4294901760
      %3570 = vmatpush1.msra.mxu0 %v3569
      %3571 = vmatprep.subr.mxu0 0.0
      %3572 = vmatpush1.msra.mxu0 0.0
      %3573 = vmatprep.subr.mxu0 0.0
      %3574 = vmatpush1.msra.mxu0 0.0
      %3575 = vmatprep.subr.mxu0 0.0
      %3576 = vmatpush1.msra.mxu0 0.0
      %3577 = vmatprep.subr.mxu0 0.0
      %3578 = vmatpush1.msra.mxu0 0.0
      %3579 = vmatprep.subr.mxu0 0.0
      %3580 = vmatpush1.msra.mxu0 0.0
      %3581 = vmatprep.subr.mxu0 0.0
      %3582 = vmatpush1.msra.mxu0 0.0
      %3583 = vmatprep.subr.mxu0 0.0
      %3584 = vmatpush1.msra.mxu0 0.0
      %3585 = vmatprep.subr.mxu0 0.0
      %3586 = vmatpush1.msra.mxu0 0.0
      %3587 = vmatprep.subr.mxu0 0.0
      %3588 = vmatpush1.msra.mxu0 0.0
      %3589 = vmatprep.subr.mxu0 0.0
      %3590 = vmatpush1.msra.mxu0 0.0
      %3591 = vmatprep.subr.mxu0 0.0
      %3592 = vmatpush1.msra.mxu0 0.0
      %3593 = vmatprep.subr.mxu0 0.0
      %3594 = vmatpush1.msra.mxu0 0.0
      %3595 = vmatprep.subr.mxu0 0.0
      %3596 = vmatpush1.msra.mxu0 0.0
      %3597 = vmatprep.subr.mxu0 0.0
      %3598 = vmatpush1.msra.mxu0 0.0
      %3599 = vmatprep.subr.mxu0 0.0
      %3600 = vmatpush1.msra.mxu0 0.0
      %3601 = vmatprep.subr.mxu0 0.0
      %3602 = vmatpush1.msra.mxu0 0.0
      %3603 = vmatprep.mubr.f32.mxu0 0.0
      %v3604 = vand.u32 %v166, 4294901760
      %3605 = vmatmul.mubr.f32.gmra.mrb[0].mxu0 %v3604
      %v3606 = vpop.f32.mrb[0].mxu0
      %v3607 = vadd.f32 %v3439, %v3606
      %v3608 = vpop.f32.mrb[0].mxu0
      %v3609 = vadd.f32 %v3441, %v3608
      %3610 = vdwg.mxu0
      %v3611 = vand.u32 %v174, 4294901760
      %3612 = vmatprep.subr.mxu0 %v3611
      %v3613 = vand.u32 %v173, 4294901760
      %3614 = vmatpush1.msra.mxu0 %v3613
      %v3615 = vand.u32 %v182, 4294901760
      %3616 = vmatprep.subr.mxu0 %v3615
      %v3617 = vand.u32 %v181, 4294901760
      %3618 = vmatpush1.msra.mxu0 %v3617
      %v3619 = vand.u32 %v190, 4294901760
      %3620 = vmatprep.subr.mxu0 %v3619
      %v3621 = vand.u32 %v189, 4294901760
      %3622 = vmatpush1.msra.mxu0 %v3621
      %v3623 = vand.u32 %v198, 4294901760
      %3624 = vmatprep.subr.mxu0 %v3623
      %v3625 = vand.u32 %v197, 4294901760
      %3626 = vmatpush1.msra.mxu0 %v3625
      %v3627 = vand.u32 %v206, 4294901760
      %3628 = vmatprep.subr.mxu0 %v3627
      %v3629 = vand.u32 %v205, 4294901760
      %3630 = vmatpush1.msra.mxu0 %v3629
      %v3631 = vand.u32 %v214, 4294901760
      %3632 = vmatprep.subr.mxu0 %v3631
      %v3633 = vand.u32 %v213, 4294901760
      %3634 = vmatpush1.msra.mxu0 %v3633
      %v3635 = vand.u32 %v222, 4294901760
      %3636 = vmatprep.subr.mxu0 %v3635
      %v3637 = vand.u32 %v221, 4294901760
      %3638 = vmatpush1.msra.mxu0 %v3637
      %v3639 = vand.u32 %v230, 4294901760
      %3640 = vmatprep.subr.mxu0 %v3639
      %v3641 = vand.u32 %v229, 4294901760
      %3642 = vmatpush1.msra.mxu0 %v3641
      %v3643 = vand.u32 %v238, 4294901760
      %3644 = vmatprep.subr.mxu0 %v3643
      %v3645 = vand.u32 %v237, 4294901760
      %3646 = vmatpush1.msra.mxu0 %v3645
      %v3647 = vand.u32 %v246, 4294901760
      %3648 = vmatprep.subr.mxu0 %v3647
      %v3649 = vand.u32 %v245, 4294901760
      %3650 = vmatpush1.msra.mxu0 %v3649
      %v3651 = vand.u32 %v254, 4294901760
      %3652 = vmatprep.subr.mxu0 %v3651
      %v3653 = vand.u32 %v253, 4294901760
      %3654 = vmatpush1.msra.mxu0 %v3653
      %v3655 = vand.u32 %v262, 4294901760
      %3656 = vmatprep.subr.mxu0 %v3655
      %v3657 = vand.u32 %v261, 4294901760
      %3658 = vmatpush1.msra.mxu0 %v3657
      %v3659 = vand.u32 %v270, 4294901760
      %3660 = vmatprep.subr.mxu0 %v3659
      %v3661 = vand.u32 %v269, 4294901760
      %3662 = vmatpush1.msra.mxu0 %v3661
      %v3663 = vand.u32 %v278, 4294901760
      %3664 = vmatprep.subr.mxu0 %v3663
      %v3665 = vand.u32 %v277, 4294901760
      %3666 = vmatpush1.msra.mxu0 %v3665
      %v3667 = vand.u32 %v286, 4294901760
      %3668 = vmatprep.subr.mxu0 %v3667
      %v3669 = vand.u32 %v285, 4294901760
      %3670 = vmatpush1.msra.mxu0 %v3669
      %v3671 = vand.u32 %v294, 4294901760
      %3672 = vmatprep.subr.mxu0 %v3671
      %v3673 = vand.u32 %v293, 4294901760
      %3674 = vmatpush1.msra.mxu0 %v3673
      %3675 = vmatprep.subr.mxu0 0.0
      %3676 = vmatpush1.msra.mxu0 0.0
      %3677 = vmatprep.subr.mxu0 0.0
      %3678 = vmatpush1.msra.mxu0 0.0
      %3679 = vmatprep.subr.mxu0 0.0
      %3680 = vmatpush1.msra.mxu0 0.0
      %3681 = vmatprep.subr.mxu0 0.0
      %3682 = vmatpush1.msra.mxu0 0.0
      %3683 = vmatprep.subr.mxu0 0.0
      %3684 = vmatpush1.msra.mxu0 0.0
      %3685 = vmatprep.subr.mxu0 0.0
      %3686 = vmatpush1.msra.mxu0 0.0
      %3687 = vmatprep.subr.mxu0 0.0
      %3688 = vmatpush1.msra.mxu0 0.0
      %3689 = vmatprep.subr.mxu0 0.0
      %3690 = vmatpush1.msra.mxu0 0.0
      %3691 = vmatprep.subr.mxu0 0.0
      %3692 = vmatpush1.msra.mxu0 0.0
      %3693 = vmatprep.subr.mxu0 0.0
      %3694 = vmatpush1.msra.mxu0 0.0
      %3695 = vmatprep.subr.mxu0 0.0
      %3696 = vmatpush1.msra.mxu0 0.0
      %3697 = vmatprep.subr.mxu0 0.0
      %3698 = vmatpush1.msra.mxu0 0.0
      %3699 = vmatprep.subr.mxu0 0.0
      %3700 = vmatpush1.msra.mxu0 0.0
      %3701 = vmatprep.subr.mxu0 0.0
      %3702 = vmatpush1.msra.mxu0 0.0
      %3703 = vmatprep.subr.mxu0 0.0
      %3704 = vmatpush1.msra.mxu0 0.0
      %3705 = vmatprep.subr.mxu0 0.0
      %3706 = vmatpush1.msra.mxu0 0.0
      %3707 = vmatprep.mubr.f32.mxu0 0.0
      %v3708 = vand.u32 %v166, 4294901760
      %3709 = vmatmul.mubr.f32.gmra.mrb[0].mxu0 %v3708
      %v3710 = vpop.f32.mrb[0].mxu0
      %v3711 = vadd.f32 %v3607, %v3710
      %v3712 = vpop.f32.mrb[0].mxu0
      %v3713 = vadd.f32 %v3609, %v3712
      %3714 = vdwg.mxu0
      %v3715 = vmul.f32 %v1146, 0.5
      %v3716 = vmul.f32 %v1148, 0.5
      %v3717 = vmul.f32 %v2001, 0.5
      %v3718 = vmul.f32 %v2003, 0.5
      %v3719 = vmul.f32 %v2856, 0.5
      %v3720 = vmul.f32 %v2858, 0.5
      %v3721 = vmul.f32 %v3711, 0.5
      %v3722 = vmul.f32 %v3713, 0.5
      %v3723 = vmul.f32 %v1146, 0.70710677
      %v3724 = vmul.f32 %v1148, 0.70710677
      %v3725 = vmul.f32 %v2001, 0.70710677
      %v3726 = vmul.f32 %v2003, 0.70710677
      %v3727 = vmul.f32 %v2856, 0.70710677
      %v3728 = vmul.f32 %v2858, 0.70710677
      %v3729 = vmul.f32 %v3711, 0.70710677
      %v3730 = vmul.f32 %v3713, 0.70710677
      %v3731 = verf.f32.pop %v3723
      %v3732 = verf.f32.pop %v3724
      %v3733 = verf.f32.pop %v3725
      %v3734 = verf.f32.pop %v3726
      %v3735 = verf.f32.pop %v3727
      %v3736 = verf.f32.pop %v3728
      %v3737 = verf.f32.pop %v3729
      %v3738 = verf.f32.pop %v3730
      %v3739 = vadd.f32 %v3731, 1.0
      %v3740 = vadd.f32 %v3732, 1.0
      %v3741 = vadd.f32 %v3733, 1.0
      %v3742 = vadd.f32 %v3734, 1.0
      %v3743 = vadd.f32 %v3735, 1.0
      %v3744 = vadd.f32 %v3736, 1.0
      %v3745 = vadd.f32 %v3737, 1.0
      %v3746 = vadd.f32 %v3738, 1.0
      %v3747 = vmul.f32 %v3715, %v3739
      %v3748 = vmul.f32 %v3716, %v3740
      %v3749 = vmul.f32 %v3717, %v3741
      %v3750 = vmul.f32 %v3718, %v3742
      %v3751 = vmul.f32 %v3719, %v3743
      %v3752 = vmul.f32 %v3720, %v3744
      %v3753 = vmul.f32 %v3721, %v3745
      %v3754 = vmul.f32 %v3722, %v3746
      %v3755 = vld [vmem:[%s2] sm:$0xff]
      %v3756 = vld [vmem:[%s2 + $0x8] sm:$0xff]
      %v3757 = vld [vmem:[%s2 + $0x10] sm:$0xff]
      %v3758 = vld [vmem:[%s2 + $0x18] sm:$0xff]
      %v3759 = vld [vmem:[%s2 + $0x20] sm:$0xff]
      %v3760 = vld [vmem:[%s2 + $0x28] sm:$0xff]
      %v3761 = vld [vmem:[%s2 + $0x30] sm:$0xff]
      %v3762 = vld [vmem:[%s2 + $0x38] sm:$0xff]
      %v3763 = vld [vmem:[%s2 + $0x40] sm:$0xff]
      %v3764 = vld [vmem:[%s2 + $0x48] sm:$0xff]
      %v3765 = vld [vmem:[%s2 + $0x50] sm:$0xff]
      %v3766 = vld [vmem:[%s2 + $0x58] sm:$0xff]
      %v3767 = vld [vmem:[%s2 + $0x60] sm:$0xff]
      %v3768 = vld [vmem:[%s2 + $0x68] sm:$0xff]
      %v3769 = vld [vmem:[%s2 + $0x70] sm:$0xff]
      %v3770 = vld [vmem:[%s2 + $0x78] sm:$0xff]
      %v3771 = vld [vmem:[%s2 + $0x80] sm:$0xff]
      %v3772 = vld [vmem:[%s2 + $0x88] sm:$0xff]
      %v3773 = vld [vmem:[%s2 + $0x90] sm:$0xff]
      %v3774 = vld [vmem:[%s2 + $0x98] sm:$0xff]
      %v3775 = vld [vmem:[%s2 + $0xa0] sm:$0xff]
      %v3776 = vld [vmem:[%s2 + $0xa8] sm:$0xff]
      %v3777 = vld [vmem:[%s2 + $0xb0] sm:$0xff]
      %v3778 = vld [vmem:[%s2 + $0xb8] sm:$0xff]
      %v3779 = vld [vmem:[%s2 + $0xc0] sm:$0xff]
      %v3780 = vld [vmem:[%s2 + $0xc8] sm:$0xff]
      %v3781 = vld [vmem:[%s2 + $0xd0] sm:$0xff]
      %v3782 = vld [vmem:[%s2 + $0xd8] sm:$0xff]
      %v3783 = vld [vmem:[%s2 + $0xe0] sm:$0xff]
      %v3784 = vld [vmem:[%s2 + $0xe8] sm:$0xff]
      %v3785 = vld [vmem:[%s2 + $0xf0] sm:$0xff]
      %v3786 = vld [vmem:[%s2 + $0xf8] sm:$0xff]
      %v3787 = vld [vmem:[%s2 + $0x100] sm:$0xff]
      %v3788 = vld [vmem:[%s2 + $0x108] sm:$0xff]
      %v3789 = vld [vmem:[%s2 + $0x110] sm:$0xff]
      %v3790 = vld [vmem:[%s2 + $0x118] sm:$0xff]
      %v3791 = vld [vmem:[%s2 + $0x120] sm:$0xff]
      %v3792 = vld [vmem:[%s2 + $0x128] sm:$0xff]
      %v3793 = vld [vmem:[%s2 + $0x130] sm:$0xff]
      %v3794 = vld [vmem:[%s2 + $0x138] sm:$0xff]
      %v3795 = vld [vmem:[%s2 + $0x140] sm:$0xff]
      %v3796 = vld [vmem:[%s2 + $0x148] sm:$0xff]
      %v3797 = vld [vmem:[%s2 + $0x150] sm:$0xff]
      %v3798 = vld [vmem:[%s2 + $0x158] sm:$0xff]
      %v3799 = vld [vmem:[%s2 + $0x160] sm:$0xff]
      %v3800 = vld [vmem:[%s2 + $0x168] sm:$0xff]
      %v3801 = vld [vmem:[%s2 + $0x170] sm:$0xff]
      %v3802 = vld [vmem:[%s2 + $0x178] sm:$0xff]
      %v3803 = vld [vmem:[%s2 + $0x180] sm:$0xff]
      %v3804 = vld [vmem:[%s2 + $0x188] sm:$0xff]
      %v3805 = vld [vmem:[%s2 + $0x190] sm:$0xff]
      %v3806 = vld [vmem:[%s2 + $0x198] sm:$0xff]
      %v3807 = vld [vmem:[%s2 + $0x1a0] sm:$0xff]
      %v3808 = vld [vmem:[%s2 + $0x1a8] sm:$0xff]
      %v3809 = vld [vmem:[%s2 + $0x1b0] sm:$0xff]
      %v3810 = vld [vmem:[%s2 + $0x1b8] sm:$0xff]
      %v3811 = vld [vmem:[%s2 + $0x1c0] sm:$0xff]
      %v3812 = vld [vmem:[%s2 + $0x1c8] sm:$0xff]
      %v3813 = vld [vmem:[%s2 + $0x1d0] sm:$0xff]
      %v3814 = vld [vmem:[%s2 + $0x1d8] sm:$0xff]
      %v3815 = vld [vmem:[%s2 + $0x1e0] sm:$0xff]
      %v3816 = vld [vmem:[%s2 + $0x1e8] sm:$0xff]
      %v3817 = vld [vmem:[%s2 + $0x1f0] sm:$0xff]
      %v3818 = vld [vmem:[%s2 + $0x1f8] sm:$0xff]
      %v3819 = vld [vmem:[%s2 + $0x200] sm:$0xff]
      %v3820 = vld [vmem:[%s2 + $0x208] sm:$0xff]
      %v3821 = vld [vmem:[%s2 + $0x210] sm:$0xff]
      %v3822 = vld [vmem:[%s2 + $0x218] sm:$0xff]
      %v3823 = vld [vmem:[%s2 + $0x220] sm:$0xff]
      %v3824 = vld [vmem:[%s2 + $0x228] sm:$0xff]
      %v3825 = vld [vmem:[%s2 + $0x230] sm:$0xff]
      %v3826 = vld [vmem:[%s2 + $0x238] sm:$0xff]
      %v3827 = vld [vmem:[%s2 + $0x240] sm:$0xff]
      %v3828 = vld [vmem:[%s2 + $0x248] sm:$0xff]
      %v3829 = vld [vmem:[%s2 + $0x250] sm:$0xff]
      %v3830 = vld [vmem:[%s2 + $0x258] sm:$0xff]
      %v3831 = vld [vmem:[%s2 + $0x260] sm:$0xff]
      %v3832 = vld [vmem:[%s2 + $0x268] sm:$0xff]
      %v3833 = vld [vmem:[%s2 + $0x270] sm:$0xff]
      %v3834 = vld [vmem:[%s2 + $0x278] sm:$0xff]
      %v3835 = vld [vmem:[%s2 + $0x280] sm:$0xff]
      %v3836 = vld [vmem:[%s2 + $0x288] sm:$0xff]
      %v3837 = vld [vmem:[%s2 + $0x290] sm:$0xff]
      %v3838 = vld [vmem:[%s2 + $0x298] sm:$0xff]
      %v3839 = vld [vmem:[%s2 + $0x2a0] sm:$0xff]
      %v3840 = vld [vmem:[%s2 + $0x2a8] sm:$0xff]
      %v3841 = vld [vmem:[%s2 + $0x2b0] sm:$0xff]
      %v3842 = vld [vmem:[%s2 + $0x2b8] sm:$0xff]
      %v3843 = vld [vmem:[%s2 + $0x2c0] sm:$0xff]
      %v3844 = vld [vmem:[%s2 + $0x2c8] sm:$0xff]
      %v3845 = vld [vmem:[%s2 + $0x2d0] sm:$0xff]
      %v3846 = vld [vmem:[%s2 + $0x2d8] sm:$0xff]
      %v3847 = vld [vmem:[%s2 + $0x2e0] sm:$0xff]
      %v3848 = vld [vmem:[%s2 + $0x2e8] sm:$0xff]
      %v3849 = vld [vmem:[%s2 + $0x2f0] sm:$0xff]
      %v3850 = vld [vmem:[%s2 + $0x2f8] sm:$0xff]
      %v3851 = vld [vmem:[%s2 + $0x300] sm:$0xff]
      %v3852 = vld [vmem:[%s2 + $0x308] sm:$0xff]
      %v3853 = vld [vmem:[%s2 + $0x310] sm:$0xff]
      %v3854 = vld [vmem:[%s2 + $0x318] sm:$0xff]
      %v3855 = vld [vmem:[%s2 + $0x320] sm:$0xff]
      %v3856 = vld [vmem:[%s2 + $0x328] sm:$0xff]
      %v3857 = vld [vmem:[%s2 + $0x330] sm:$0xff]
      %v3858 = vld [vmem:[%s2 + $0x338] sm:$0xff]
      %v3859 = vld [vmem:[%s2 + $0x340] sm:$0xff]
      %v3860 = vld [vmem:[%s2 + $0x348] sm:$0xff]
      %v3861 = vld [vmem:[%s2 + $0x350] sm:$0xff]
      %v3862 = vld [vmem:[%s2 + $0x358] sm:$0xff]
      %v3863 = vld [vmem:[%s2 + $0x360] sm:$0xff]
      %v3864 = vld [vmem:[%s2 + $0x368] sm:$0xff]
      %v3865 = vld [vmem:[%s2 + $0x370] sm:$0xff]
      %v3866 = vld [vmem:[%s2 + $0x378] sm:$0xff]
      %v3867 = vld [vmem:[%s2 + $0x380] sm:$0xff]
      %v3868 = vld [vmem:[%s2 + $0x388] sm:$0xff]
      %v3869 = vld [vmem:[%s2 + $0x390] sm:$0xff]
      %v3870 = vld [vmem:[%s2 + $0x398] sm:$0xff]
      %v3871 = vld [vmem:[%s2 + $0x3a0] sm:$0xff]
      %v3872 = vld [vmem:[%s2 + $0x3a8] sm:$0xff]
      %v3873 = vld [vmem:[%s2 + $0x3b0] sm:$0xff]
      %v3874 = vld [vmem:[%s2 + $0x3b8] sm:$0xff]
      %v3875 = vld [vmem:[%s2 + $0x3c0] sm:$0xff]
      %v3876 = vld [vmem:[%s2 + $0x3c8] sm:$0xff]
      %v3877 = vld [vmem:[%s2 + $0x3d0] sm:$0xff]
      %v3878 = vld [vmem:[%s2 + $0x3d8] sm:$0xff]
      %v3879 = vld [vmem:[%s2 + $0x3e0] sm:$0xff]
      %v3880 = vld [vmem:[%s2 + $0x3e8] sm:$0xff]
      %v3881 = vld [vmem:[%s2 + $0x3f0] sm:$0xff]
      %v3882 = vld [vmem:[%s2 + $0x3f8] sm:$0xff]
      %3883 = vmatprep.subr.mxu0 0.0
      %v3884 = vand.u32 %v3755, 4294901760
      %3885 = vmatpush1.msra.mxu0 %v3884
      %3886 = vmatprep.subr.mxu0 0.0
      %v3887 = vand.u32 %v3756, 4294901760
      %3888 = vmatpush1.msra.mxu0 %v3887
      %3889 = vmatprep.subr.mxu0 0.0
      %v3890 = vand.u32 %v3757, 4294901760
      %3891 = vmatpush1.msra.mxu0 %v3890
      %3892 = vmatprep.subr.mxu0 0.0
      %v3893 = vand.u32 %v3758, 4294901760
      %3894 = vmatpush1.msra.mxu0 %v3893
      %3895 = vmatprep.subr.mxu0 0.0
      %v3896 = vand.u32 %v3759, 4294901760
      %3897 = vmatpush1.msra.mxu0 %v3896
      %3898 = vmatprep.subr.mxu0 0.0
      %v3899 = vand.u32 %v3760, 4294901760
      %3900 = vmatpush1.msra.mxu0 %v3899
      %3901 = vmatprep.subr.mxu0 0.0
      %v3902 = vand.u32 %v3761, 4294901760
      %3903 = vmatpush1.msra.mxu0 %v3902
      %3904 = vmatprep.subr.mxu0 0.0
      %v3905 = vand.u32 %v3762, 4294901760
      %3906 = vmatpush1.msra.mxu0 %v3905
      %3907 = vmatprep.subr.mxu0 0.0
      %v3908 = vand.u32 %v3763, 4294901760
      %3909 = vmatpush1.msra.mxu0 %v3908
      %3910 = vmatprep.subr.mxu0 0.0
      %v3911 = vand.u32 %v3764, 4294901760
      %3912 = vmatpush1.msra.mxu0 %v3911
      %3913 = vmatprep.subr.mxu0 0.0
      %v3914 = vand.u32 %v3765, 4294901760
      %3915 = vmatpush1.msra.mxu0 %v3914
      %3916 = vmatprep.subr.mxu0 0.0
      %v3917 = vand.u32 %v3766, 4294901760
      %3918 = vmatpush1.msra.mxu0 %v3917
      %3919 = vmatprep.subr.mxu0 0.0
      %v3920 = vand.u32 %v3767, 4294901760
      %3921 = vmatpush1.msra.mxu0 %v3920
      %3922 = vmatprep.subr.mxu0 0.0
      %v3923 = vand.u32 %v3768, 4294901760
      %3924 = vmatpush1.msra.mxu0 %v3923
      %3925 = vmatprep.subr.mxu0 0.0
      %v3926 = vand.u32 %v3769, 4294901760
      %3927 = vmatpush1.msra.mxu0 %v3926
      %3928 = vmatprep.subr.mxu0 0.0
      %v3929 = vand.u32 %v3770, 4294901760
      %3930 = vmatpush1.msra.mxu0 %v3929
      %3931 = vmatprep.subr.mxu0 0.0
      %v3932 = vand.u32 %v3771, 4294901760
      %3933 = vmatpush1.msra.mxu0 %v3932
      %3934 = vmatprep.subr.mxu0 0.0
      %v3935 = vand.u32 %v3772, 4294901760
      %3936 = vmatpush1.msra.mxu0 %v3935
      %3937 = vmatprep.subr.mxu0 0.0
      %v3938 = vand.u32 %v3773, 4294901760
      %3939 = vmatpush1.msra.mxu0 %v3938
      %3940 = vmatprep.subr.mxu0 0.0
      %v3941 = vand.u32 %v3774, 4294901760
      %3942 = vmatpush1.msra.mxu0 %v3941
      %3943 = vmatprep.subr.mxu0 0.0
      %v3944 = vand.u32 %v3775, 4294901760
      %3945 = vmatpush1.msra.mxu0 %v3944
      %3946 = vmatprep.subr.mxu0 0.0
      %v3947 = vand.u32 %v3776, 4294901760
      %3948 = vmatpush1.msra.mxu0 %v3947
      %3949 = vmatprep.subr.mxu0 0.0
      %v3950 = vand.u32 %v3777, 4294901760
      %3951 = vmatpush1.msra.mxu0 %v3950
      %3952 = vmatprep.subr.mxu0 0.0
      %v3953 = vand.u32 %v3778, 4294901760
      %3954 = vmatpush1.msra.mxu0 %v3953
      %3955 = vmatprep.subr.mxu0 0.0
      %v3956 = vand.u32 %v3779, 4294901760
      %3957 = vmatpush1.msra.mxu0 %v3956
      %3958 = vmatprep.subr.mxu0 0.0
      %v3959 = vand.u32 %v3780, 4294901760
      %3960 = vmatpush1.msra.mxu0 %v3959
      %3961 = vmatprep.subr.mxu0 0.0
      %v3962 = vand.u32 %v3781, 4294901760
      %3963 = vmatpush1.msra.mxu0 %v3962
      %3964 = vmatprep.subr.mxu0 0.0
      %v3965 = vand.u32 %v3782, 4294901760
      %3966 = vmatpush1.msra.mxu0 %v3965
      %3967 = vmatprep.subr.mxu0 0.0
      %v3968 = vand.u32 %v3783, 4294901760
      %3969 = vmatpush1.msra.mxu0 %v3968
      %3970 = vmatprep.subr.mxu0 0.0
      %v3971 = vand.u32 %v3784, 4294901760
      %3972 = vmatpush1.msra.mxu0 %v3971
      %3973 = vmatprep.subr.mxu0 0.0
      %v3974 = vand.u32 %v3785, 4294901760
      %3975 = vmatpush1.msra.mxu0 %v3974
      %3976 = vmatprep.subr.mxu0 0.0
      %v3977 = vand.u32 %v3786, 4294901760
      %3978 = vmatpush1.msra.mxu0 %v3977
      %v3979 = vand.u32 %v3748, 4294901760
      %v3980 = vsub.f32 %v3748, %v3979
      %v3981 = vand.u32 %v3980, 4294901760
      %v3982 = vsub.f32 %v3980, %v3981
      %v3983 = vand.u32 %v3982, 4294901760
      %3984 = vmatprep.mubr.f32.mxu0 %v3983
      %v3985 = vand.u32 %v3747, 4294901760
      %v3986 = vsub.f32 %v3747, %v3985
      %v3987 = vand.u32 %v3986, 4294901760
      %v3988 = vsub.f32 %v3986, %v3987
      %v3989 = vand.u32 %v3988, 4294901760
      %3990 = vmatmul.mubr.f32.gmra.mrb[0].mxu0 %v3989
      %v3991 = vpop.f32.mrb[0].mxu0
      %v3992 = vadd.f32 0.0, %v3991
      %v3993 = vpop.f32.mrb[0].mxu0
      %3994 = vdwg.mxu0
      %3995 = vmatprep.subr.mxu0 0.0
      %v3996 = vand.u32 %v3755, 4294901760
      %v3997 = vsub.f32 %v3755, %v3996
      %v3998 = vand.u32 %v3997, 4294901760
      %v3999 = vsub.f32 %v3997, %v3998
      %v4000 = vand.u32 %v3999, 4294901760
      %4001 = vmatpush1.msra.mxu0 %v4000
      %4002 = vmatprep.subr.mxu0 0.0
      %v4003 = vand.u32 %v3756, 4294901760
      %v4004 = vsub.f32 %v3756, %v4003
      %v4005 = vand.u32 %v4004, 4294901760
      %v4006 = vsub.f32 %v4004, %v4005
      %v4007 = vand.u32 %v4006, 4294901760
      %4008 = vmatpush1.msra.mxu0 %v4007
      %4009 = vmatprep.subr.mxu0 0.0
      %v4010 = vand.u32 %v3757, 4294901760
      %v4011 = vsub.f32 %v3757, %v4010
      %v4012 = vand.u32 %v4011, 4294901760
      %v4013 = vsub.f32 %v4011, %v4012
      %v4014 = vand.u32 %v4013, 4294901760
      %4015 = vmatpush1.msra.mxu0 %v4014
      %4016 = vmatprep.subr.mxu0 0.0
      %v4017 = vand.u32 %v3758, 4294901760
      %v4018 = vsub.f32 %v3758, %v4017
      %v4019 = vand.u32 %v4018, 4294901760
      %v4020 = vsub.f32 %v4018, %v4019
      %v4021 = vand.u32 %v4020, 4294901760
      %4022 = vmatpush1.msra.mxu0 %v4021
      %4023 = vmatprep.subr.mxu0 0.0
      %v4024 = vand.u32 %v3759, 4294901760
      %v4025 = vsub.f32 %v3759, %v4024
      %v4026 = vand.u32 %v4025, 4294901760
      %v4027 = vsub.f32 %v4025, %v4026
      %v4028 = vand.u32 %v4027, 4294901760
      %4029 = vmatpush1.msra.mxu0 %v4028
      %4030 = vmatprep.subr.mxu0 0.0
      %v4031 = vand.u32 %v3760, 4294901760
      %v4032 = vsub.f32 %v3760, %v4031
      %v4033 = vand.u32 %v4032, 4294901760
      %v4034 = vsub.f32 %v4032, %v4033
      %v4035 = vand.u32 %v4034, 4294901760
      %4036 = vmatpush1.msra.mxu0 %v4035
      %4037 = vmatprep.subr.mxu0 0.0
      %v4038 = vand.u32 %v3761, 4294901760
      %v4039 = vsub.f32 %v3761, %v4038
      %v4040 = vand.u32 %v4039, 4294901760
      %v4041 = vsub.f32 %v4039, %v4040
      %v4042 = vand.u32 %v4041, 4294901760
      %4043 = vmatpush1.msra.mxu0 %v4042
      %4044 = vmatprep.subr.mxu0 0.0
      %v4045 = vand.u32 %v3762, 4294901760
      %v4046 = vsub.f32 %v3762, %v4045
      %v4047 = vand.u32 %v4046, 4294901760
      %v4048 = vsub.f32 %v4046, %v4047
      %v4049 = vand.u32 %v4048, 4294901760
      %4050 = vmatpush1.msra.mxu0 %v4049
      %4051 = vmatprep.subr.mxu0 0.0
      %v4052 = vand.u32 %v3763, 4294901760
      %v4053 = vsub.f32 %v3763, %v4052
      %v4054 = vand.u32 %v4053, 4294901760
      %v4055 = vsub.f32 %v4053, %v4054
      %v4056 = vand.u32 %v4055, 4294901760
      %4057 = vmatpush1.msra.mxu0 %v4056
      %4058 = vmatprep.subr.mxu0 0.0
      %v4059 = vand.u32 %v3764, 4294901760
      %v4060 = vsub.f32 %v3764, %v4059
      %v4061 = vand.u32 %v4060, 4294901760
      %v4062 = vsub.f32 %v4060, %v4061
      %v4063 = vand.u32 %v4062, 4294901760
      %4064 = vmatpush1.msra.mxu0 %v4063
      %4065 = vmatprep.subr.mxu0 0.0
      %v4066 = vand.u32 %v3765, 4294901760
      %v4067 = vsub.f32 %v3765, %v4066
      %v4068 = vand.u32 %v4067, 4294901760
      %v4069 = vsub.f32 %v4067, %v4068
      %v4070 = vand.u32 %v4069, 4294901760
      %4071 = vmatpush1.msra.mxu0 %v4070
      %4072 = vmatprep.subr.mxu0 0.0
      %v4073 = vand.u32 %v3766, 4294901760
      %v4074 = vsub.f32 %v3766, %v4073
      %v4075 = vand.u32 %v4074, 4294901760
      %v4076 = vsub.f32 %v4074, %v4075
      %v4077 = vand.u32 %v4076, 4294901760
      %4078 = vmatpush1.msra.mxu0 %v4077
      %4079 = vmatprep.subr.mxu0 0.0
      %v4080 = vand.u32 %v3767, 4294901760
      %v4081 = vsub.f32 %v3767, %v4080
      %v4082 = vand.u32 %v4081, 4294901760
      %v4083 = vsub.f32 %v4081, %v4082
      %v4084 = vand.u32 %v4083, 4294901760
      %4085 = vmatpush1.msra.mxu0 %v4084
      %4086 = vmatprep.subr.mxu0 0.0
      %v4087 = vand.u32 %v3768, 4294901760
      %v4088 = vsub.f32 %v3768, %v4087
      %v4089 = vand.u32 %v4088, 4294901760
      %v4090 = vsub.f32 %v4088, %v4089
      %v4091 = vand.u32 %v4090, 4294901760
      %4092 = vmatpush1.msra.mxu0 %v4091
      %4093 = vmatprep.subr.mxu0 0.0
      %v4094 = vand.u32 %v3769, 4294901760
      %v4095 = vsub.f32 %v3769, %v4094
      %v4096 = vand.u32 %v4095, 4294901760
      %v4097 = vsub.f32 %v4095, %v4096
      %v4098 = vand.u32 %v4097, 4294901760
      %4099 = vmatpush1.msra.mxu0 %v4098
      %4100 = vmatprep.subr.mxu0 0.0
      %v4101 = vand.u32 %v3770, 4294901760
      %v4102 = vsub.f32 %v3770, %v4101
      %v4103 = vand.u32 %v4102, 4294901760
      %v4104 = vsub.f32 %v4102, %v4103
      %v4105 = vand.u32 %v4104, 4294901760
      %4106 = vmatpush1.msra.mxu0 %v4105
      %4107 = vmatprep.subr.mxu0 0.0
      %v4108 = vand.u32 %v3771, 4294901760
      %v4109 = vsub.f32 %v3771, %v4108
      %v4110 = vand.u32 %v4109, 4294901760
      %v4111 = vsub.f32 %v4109, %v4110
      %v4112 = vand.u32 %v4111, 4294901760
      %4113 = vmatpush1.msra.mxu0 %v4112
      %4114 = vmatprep.subr.mxu0 0.0
      %v4115 = vand.u32 %v3772, 4294901760
      %v4116 = vsub.f32 %v3772, %v4115
      %v4117 = vand.u32 %v4116, 4294901760
      %v4118 = vsub.f32 %v4116, %v4117
      %v4119 = vand.u32 %v4118, 4294901760
      %4120 = vmatpush1.msra.mxu0 %v4119
      %4121 = vmatprep.subr.mxu0 0.0
      %v4122 = vand.u32 %v3773, 4294901760
      %v4123 = vsub.f32 %v3773, %v4122
      %v4124 = vand.u32 %v4123, 4294901760
      %v4125 = vsub.f32 %v4123, %v4124
      %v4126 = vand.u32 %v4125, 4294901760
      %4127 = vmatpush1.msra.mxu0 %v4126
      %4128 = vmatprep.subr.mxu0 0.0
      %v4129 = vand.u32 %v3774, 4294901760
      %v4130 = vsub.f32 %v3774, %v4129
      %v4131 = vand.u32 %v4130, 4294901760
      %v4132 = vsub.f32 %v4130, %v4131
      %v4133 = vand.u32 %v4132, 4294901760
      %4134 = vmatpush1.msra.mxu0 %v4133
      %4135 = vmatprep.subr.mxu0 0.0
      %v4136 = vand.u32 %v3775, 4294901760
      %v4137 = vsub.f32 %v3775, %v4136
      %v4138 = vand.u32 %v4137, 4294901760
      %v4139 = vsub.f32 %v4137, %v4138
      %v4140 = vand.u32 %v4139, 4294901760
      %4141 = vmatpush1.msra.mxu0 %v4140
      %4142 = vmatprep.subr.mxu0 0.0
      %v4143 = vand.u32 %v3776, 4294901760
      %v4144 = vsub.f32 %v3776, %v4143
      %v4145 = vand.u32 %v4144, 4294901760
      %v4146 = vsub.f32 %v4144, %v4145
      %v4147 = vand.u32 %v4146, 4294901760
      %4148 = vmatpush1.msra.mxu0 %v4147
      %4149 = vmatprep.subr.mxu0 0.0
      %v4150 = vand.u32 %v3777, 4294901760
      %v4151 = vsub.f32 %v3777, %v4150
      %v4152 = vand.u32 %v4151, 4294901760
      %v4153 = vsub.f32 %v4151, %v4152
      %v4154 = vand.u32 %v4153, 4294901760
      %4155 = vmatpush1.msra.mxu0 %v4154
      %4156 = vmatprep.subr.mxu0 0.0
      %v4157 = vand.u32 %v3778, 4294901760
      %v4158 = vsub.f32 %v3778, %v4157
      %v4159 = vand.u32 %v4158, 4294901760
      %v4160 = vsub.f32 %v4158, %v4159
      %v4161 = vand.u32 %v4160, 4294901760
      %4162 = vmatpush1.msra.mxu0 %v4161
      %4163 = vmatprep.subr.mxu0 0.0
      %v4164 = vand.u32 %v3779, 4294901760
      %v4165 = vsub.f32 %v3779, %v4164
      %v4166 = vand.u32 %v4165, 4294901760
      %v4167 = vsub.f32 %v4165, %v4166
      %v4168 = vand.u32 %v4167, 4294901760
      %4169 = vmatpush1.msra.mxu0 %v4168
      %4170 = vmatprep.subr.mxu0 0.0
      %v4171 = vand.u32 %v3780, 4294901760
      %v4172 = vsub.f32 %v3780, %v4171
      %v4173 = vand.u32 %v4172, 4294901760
      %v4174 = vsub.f32 %v4172, %v4173
      %v4175 = vand.u32 %v4174, 4294901760
      %4176 = vmatpush1.msra.mxu0 %v4175
      %4177 = vmatprep.subr.mxu0 0.0
      %v4178 = vand.u32 %v3781, 4294901760
      %v4179 = vsub.f32 %v3781, %v4178
      %v4180 = vand.u32 %v4179, 4294901760
      %v4181 = vsub.f32 %v4179, %v4180
      %v4182 = vand.u32 %v4181, 4294901760
      %4183 = vmatpush1.msra.mxu0 %v4182
      %4184 = vmatprep.subr.mxu0 0.0
      %v4185 = vand.u32 %v3782, 4294901760
      %v4186 = vsub.f32 %v3782, %v4185
      %v4187 = vand.u32 %v4186, 4294901760
      %v4188 = vsub.f32 %v4186, %v4187
      %v4189 = vand.u32 %v4188, 4294901760
      %4190 = vmatpush1.msra.mxu0 %v4189
      %4191 = vmatprep.subr.mxu0 0.0
      %v4192 = vand.u32 %v3783, 4294901760
      %v4193 = vsub.f32 %v3783, %v4192
      %v4194 = vand.u32 %v4193, 4294901760
      %v4195 = vsub.f32 %v4193, %v4194
      %v4196 = vand.u32 %v4195, 4294901760
      %4197 = vmatpush1.msra.mxu0 %v4196
      %4198 = vmatprep.subr.mxu0 0.0
      %v4199 = vand.u32 %v3784, 4294901760
      %v4200 = vsub.f32 %v3784, %v4199
      %v4201 = vand.u32 %v4200, 4294901760
      %v4202 = vsub.f32 %v4200, %v4201
      %v4203 = vand.u32 %v4202, 4294901760
      %4204 = vmatpush1.msra.mxu0 %v4203
      %4205 = vmatprep.subr.mxu0 0.0
      %v4206 = vand.u32 %v3785, 4294901760
      %v4207 = vsub.f32 %v3785, %v4206
      %v4208 = vand.u32 %v4207, 4294901760
      %v4209 = vsub.f32 %v4207, %v4208
      %v4210 = vand.u32 %v4209, 4294901760
      %4211 = vmatpush1.msra.mxu0 %v4210
      %4212 = vmatprep.subr.mxu0 0.0
      %v4213 = vand.u32 %v3786, 4294901760
      %v4214 = vsub.f32 %v3786, %v4213
      %v4215 = vand.u32 %v4214, 4294901760
      %v4216 = vsub.f32 %v4214, %v4215
      %v4217 = vand.u32 %v4216, 4294901760
      %4218 = vmatpush1.msra.mxu0 %v4217
      %v4219 = vand.u32 %v3748, 4294901760
      %4220 = vmatprep.mubr.f32.mxu0 %v4219
      %v4221 = vand.u32 %v3747, 4294901760
      %4222 = vmatmul.mubr.f32.gmra.mrb[0].mxu0 %v4221
      %v4223 = vpop.f32.mrb[0].mxu0
      %v4224 = vadd.f32 %v3992, %v4223
      %v4225 = vpop.f32.mrb[0].mxu0
      %4226 = vdwg.mxu0
      %4227 = vmatprep.subr.mxu0 0.0
      %v4228 = vand.u32 %v3755, 4294901760
      %v4229 = vsub.f32 %v3755, %v4228
      %4230 = vmatpush1.msra.mxu0 %v4229
      %4231 = vmatprep.subr.mxu0 0.0
      %v4232 = vand.u32 %v3756, 4294901760
      %v4233 = vsub.f32 %v3756, %v4232
      %4234 = vmatpush1.msra.mxu0 %v4233
      %4235 = vmatprep.subr.mxu0 0.0
      %v4236 = vand.u32 %v3757, 4294901760
      %v4237 = vsub.f32 %v3757, %v4236
      %4238 = vmatpush1.msra.mxu0 %v4237
      %4239 = vmatprep.subr.mxu0 0.0
      %v4240 = vand.u32 %v3758, 4294901760
      %v4241 = vsub.f32 %v3758, %v4240
      %4242 = vmatpush1.msra.mxu0 %v4241
      %4243 = vmatprep.subr.mxu0 0.0
      %v4244 = vand.u32 %v3759, 4294901760
      %v4245 = vsub.f32 %v3759, %v4244
      %4246 = vmatpush1.msra.mxu0 %v4245
      %4247 = vmatprep.subr.mxu0 0.0
      %v4248 = vand.u32 %v3760, 4294901760
      %v4249 = vsub.f32 %v3760, %v4248
      %4250 = vmatpush1.msra.mxu0 %v4249
      %4251 = vmatprep.subr.mxu0 0.0
      %v4252 = vand.u32 %v3761, 4294901760
      %v4253 = vsub.f32 %v3761, %v4252
      %4254 = vmatpush1.msra.mxu0 %v4253
      %4255 = vmatprep.subr.mxu0 0.0
      %v4256 = vand.u32 %v3762, 4294901760
      %v4257 = vsub.f32 %v3762, %v4256
      %4258 = vmatpush1.msra.mxu0 %v4257
      %4259 = vmatprep.subr.mxu0 0.0
      %v4260 = vand.u32 %v3763, 4294901760
      %v4261 = vsub.f32 %v3763, %v4260
      %4262 = vmatpush1.msra.mxu0 %v4261
      %4263 = vmatprep.subr.mxu0 0.0
      %v4264 = vand.u32 %v3764, 4294901760
      %v4265 = vsub.f32 %v3764, %v4264
      %4266 = vmatpush1.msra.mxu0 %v4265
      %4267 = vmatprep.subr.mxu0 0.0
      %v4268 = vand.u32 %v3765, 4294901760
      %v4269 = vsub.f32 %v3765, %v4268
      %4270 = vmatpush1.msra.mxu0 %v4269
      %4271 = vmatprep.subr.mxu0 0.0
      %v4272 = vand.u32 %v3766, 4294901760
      %v4273 = vsub.f32 %v3766, %v4272
      %4274 = vmatpush1.msra.mxu0 %v4273
      %4275 = vmatprep.subr.mxu0 0.0
      %v4276 = vand.u32 %v3767, 4294901760
      %v4277 = vsub.f32 %v3767, %v4276
      %4278 = vmatpush1.msra.mxu0 %v4277
      %4279 = vmatprep.subr.mxu0 0.0
      %v4280 = vand.u32 %v3768, 4294901760
      %v4281 = vsub.f32 %v3768, %v4280
      %4282 = vmatpush1.msra.mxu0 %v4281
      %4283 = vmatprep.subr.mxu0 0.0
      %v4284 = vand.u32 %v3769, 4294901760
      %v4285 = vsub.f32 %v3769, %v4284
      %4286 = vmatpush1.msra.mxu0 %v4285
      %4287 = vmatprep.subr.mxu0 0.0
      %v4288 = vand.u32 %v3770, 4294901760
      %v4289 = vsub.f32 %v3770, %v4288
      %4290 = vmatpush1.msra.mxu0 %v4289
      %4291 = vmatprep.subr.mxu0 0.0
      %v4292 = vand.u32 %v3771, 4294901760
      %v4293 = vsub.f32 %v3771, %v4292
      %4294 = vmatpush1.msra.mxu0 %v4293
      %4295 = vmatprep.subr.mxu0 0.0
      %v4296 = vand.u32 %v3772, 4294901760
      %v4297 = vsub.f32 %v3772, %v4296
      %4298 = vmatpush1.msra.mxu0 %v4297
      %4299 = vmatprep.subr.mxu0 0.0
      %v4300 = vand.u32 %v3773, 4294901760
      %v4301 = vsub.f32 %v3773, %v4300
      %4302 = vmatpush1.msra.mxu0 %v4301
      %4303 = vmatprep.subr.mxu0 0.0
      %v4304 = vand.u32 %v3774, 4294901760
      %v4305 = vsub.f32 %v3774, %v4304
      %4306 = vmatpush1.msra.mxu0 %v4305
      %4307 = vmatprep.subr.mxu0 0.0
      %v4308 = vand.u32 %v3775, 4294901760
      %v4309 = vsub.f32 %v3775, %v4308
      %4310 = vmatpush1.msra.mxu0 %v4309
      %4311 = vmatprep.subr.mxu0 0.0
      %v4312 = vand.u32 %v3776, 4294901760
      %v4313 = vsub.f32 %v3776, %v4312
      %4314 = vmatpush1.msra.mxu0 %v4313
      %4315 = vmatprep.subr.mxu0 0.0
      %v4316 = vand.u32 %v3777, 4294901760
      %v4317 = vsub.f32 %v3777, %v4316
      %4318 = vmatpush1.msra.mxu0 %v4317
      %4319 = vmatprep.subr.mxu0 0.0
      %v4320 = vand.u32 %v3778, 4294901760
      %v4321 = vsub.f32 %v3778, %v4320
      %4322 = vmatpush1.msra.mxu0 %v4321
      %4323 = vmatprep.subr.mxu0 0.0
      %v4324 = vand.u32 %v3779, 4294901760
      %v4325 = vsub.f32 %v3779, %v4324
      %4326 = vmatpush1.msra.mxu0 %v4325
      %4327 = vmatprep.subr.mxu0 0.0
      %v4328 = vand.u32 %v3780, 4294901760
      %v4329 = vsub.f32 %v3780, %v4328
      %4330 = vmatpush1.msra.mxu0 %v4329
      %4331 = vmatprep.subr.mxu0 0.0
      %v4332 = vand.u32 %v3781, 4294901760
      %v4333 = vsub.f32 %v3781, %v4332
      %4334 = vmatpush1.msra.mxu0 %v4333
      %4335 = vmatprep.subr.mxu0 0.0
      %v4336 = vand.u32 %v3782, 4294901760
      %v4337 = vsub.f32 %v3782, %v4336
      %4338 = vmatpush1.msra.mxu0 %v4337
      %4339 = vmatprep.subr.mxu0 0.0
      %v4340 = vand.u32 %v3783, 4294901760
      %v4341 = vsub.f32 %v3783, %v4340
      %4342 = vmatpush1.msra.mxu0 %v4341
      %4343 = vmatprep.subr.mxu0 0.0
      %v4344 = vand.u32 %v3784, 4294901760
      %v4345 = vsub.f32 %v3784, %v4344
      %4346 = vmatpush1.msra.mxu0 %v4345
      %4347 = vmatprep.subr.mxu0 0.0
      %v4348 = vand.u32 %v3785, 4294901760
      %v4349 = vsub.f32 %v3785, %v4348
      %4350 = vmatpush1.msra.mxu0 %v4349
      %4351 = vmatprep.subr.mxu0 0.0
      %v4352 = vand.u32 %v3786, 4294901760
      %v4353 = vsub.f32 %v3786, %v4352
      %4354 = vmatpush1.msra.mxu0 %v4353
      %v4355 = vand.u32 %v3748, 4294901760
      %v4356 = vsub.f32 %v3748, %v4355
      %4357 = vmatprep.mubr.f32.mxu0 %v4356
      %v4358 = vand.u32 %v3747, 4294901760
      %v4359 = vsub.f32 %v3747, %v4358
      %4360 = vmatmul.mubr.f32.gmra.mrb[0].mxu0 %v4359
      %v4361 = vpop.f32.mrb[0].mxu0
      %v4362 = vadd.f32 %v4224, %v4361
      %v4363 = vpop.f32.mrb[0].mxu0
      %4364 = vdwg.mxu0
      %4365 = vmatprep.subr.mxu0 0.0
      %v4366 = vand.u32 %v3755, 4294901760
      %4367 = vmatpush1.msra.mxu0 %v4366
      %4368 = vmatprep.subr.mxu0 0.0
      %v4369 = vand.u32 %v3756, 4294901760
      %4370 = vmatpush1.msra.mxu0 %v4369
      %4371 = vmatprep.subr.mxu0 0.0
      %v4372 = vand.u32 %v3757, 4294901760
      %4373 = vmatpush1.msra.mxu0 %v4372
      %4374 = vmatprep.subr.mxu0 0.0
      %v4375 = vand.u32 %v3758, 4294901760
      %4376 = vmatpush1.msra.mxu0 %v4375
      %4377 = vmatprep.subr.mxu0 0.0
      %v4378 = vand.u32 %v3759, 4294901760
      %4379 = vmatpush1.msra.mxu0 %v4378
      %4380 = vmatprep.subr.mxu0 0.0
      %v4381 = vand.u32 %v3760, 4294901760
      %4382 = vmatpush1.msra.mxu0 %v4381
      %4383 = vmatprep.subr.mxu0 0.0
      %v4384 = vand.u32 %v3761, 4294901760
      %4385 = vmatpush1.msra.mxu0 %v4384
      %4386 = vmatprep.subr.mxu0 0.0
      %v4387 = vand.u32 %v3762, 4294901760
      %4388 = vmatpush1.msra.mxu0 %v4387
      %4389 = vmatprep.subr.mxu0 0.0
      %v4390 = vand.u32 %v3763, 4294901760
      %4391 = vmatpush1.msra.mxu0 %v4390
      %4392 = vmatprep.subr.mxu0 0.0
      %v4393 = vand.u32 %v3764, 4294901760
      %4394 = vmatpush1.msra.mxu0 %v4393
      %4395 = vmatprep.subr.mxu0 0.0
      %v4396 = vand.u32 %v3765, 4294901760
      %4397 = vmatpush1.msra.mxu0 %v4396
      %4398 = vmatprep.subr.mxu0 0.0
      %v4399 = vand.u32 %v3766, 4294901760
      %4400 = vmatpush1.msra.mxu0 %v4399
      %4401 = vmatprep.subr.mxu0 0.0
      %v4402 = vand.u32 %v3767, 4294901760
      %4403 = vmatpush1.msra.mxu0 %v4402
      %4404 = vmatprep.subr.mxu0 0.0
      %v4405 = vand.u32 %v3768, 4294901760
      %4406 = vmatpush1.msra.mxu0 %v4405
      %4407 = vmatprep.subr.mxu0 0.0
      %v4408 = vand.u32 %v3769, 4294901760
      %4409 = vmatpush1.msra.mxu0 %v4408
      %4410 = vmatprep.subr.mxu0 0.0
      %v4411 = vand.u32 %v3770, 4294901760
      %4412 = vmatpush1.msra.mxu0 %v4411
      %4413 = vmatprep.subr.mxu0 0.0
      %v4414 = vand.u32 %v3771, 4294901760
      %4415 = vmatpush1.msra.mxu0 %v4414
      %4416 = vmatprep.subr.mxu0 0.0
      %v4417 = vand.u32 %v3772, 4294901760
      %4418 = vmatpush1.msra.mxu0 %v4417
      %4419 = vmatprep.subr.mxu0 0.0
      %v4420 = vand.u32 %v3773, 4294901760
      %4421 = vmatpush1.msra.mxu0 %v4420
      %4422 = vmatprep.subr.mxu0 0.0
      %v4423 = vand.u32 %v3774, 4294901760
      %4424 = vmatpush1.msra.mxu0 %v4423
      %4425 = vmatprep.subr.mxu0 0.0
      %v4426 = vand.u32 %v3775, 4294901760
      %4427 = vmatpush1.msra.mxu0 %v4426
      %4428 = vmatprep.subr.mxu0 0.0
      %v4429 = vand.u32 %v3776, 4294901760
      %4430 = vmatpush1.msra.mxu0 %v4429
      %4431 = vmatprep.subr.mxu0 0.0
      %v4432 = vand.u32 %v3777, 4294901760
      %4433 = vmatpush1.msra.mxu0 %v4432
      %4434 = vmatprep.subr.mxu0 0.0
      %v4435 = vand.u32 %v3778, 4294901760
      %4436 = vmatpush1.msra.mxu0 %v4435
      %4437 = vmatprep.subr.mxu0 0.0
      %v4438 = vand.u32 %v3779, 4294901760
      %4439 = vmatpush1.msra.mxu0 %v4438
      %4440 = vmatprep.subr.mxu0 0.0
      %v4441 = vand.u32 %v3780, 4294901760
      %4442 = vmatpush1.msra.mxu0 %v4441
      %4443 = vmatprep.subr.mxu0 0.0
      %v4444 = vand.u32 %v3781, 4294901760
      %4445 = vmatpush1.msra.mxu0 %v4444
      %4446 = vmatprep.subr.mxu0 0.0
      %v4447 = vand.u32 %v3782, 4294901760
      %4448 = vmatpush1.msra.mxu0 %v4447
      %4449 = vmatprep.subr.mxu0 0.0
      %v4450 = vand.u32 %v3783, 4294901760
      %4451 = vmatpush1.msra.mxu0 %v4450
      %4452 = vmatprep.subr.mxu0 0.0
      %v4453 = vand.u32 %v3784, 4294901760
      %4454 = vmatpush1.msra.mxu0 %v4453
      %4455 = vmatprep.subr.mxu0 0.0
      %v4456 = vand.u32 %v3785, 4294901760
      %4457 = vmatpush1.msra.mxu0 %v4456
      %4458 = vmatprep.subr.mxu0 0.0
      %v4459 = vand.u32 %v3786, 4294901760
      %4460 = vmatpush1.msra.mxu0 %v4459
      %v4461 = vand.u32 %v3748, 4294901760
      %v4462 = vsub.f32 %v3748, %v4461
      %v4463 = vand.u32 %v4462, 4294901760
      %4464 = vmatprep.mubr.f32.mxu0 %v4463
      %v4465 = vand.u32 %v3747, 4294901760
      %v4466 = vsub.f32 %v3747, %v4465
      %v4467 = vand.u32 %v4466, 4294901760
      %4468 = vmatmul.mubr.f32.gmra.mrb[0].mxu0 %v4467
      %v4469 = vpop.f32.mrb[0].mxu0
      %v4470 = vadd.f32 %v4362, %v4469
      %v4471 = vpop.f32.mrb[0].mxu0
      %4472 = vdwg.mxu0
      %4473 = vmatprep.subr.mxu0 0.0
      %v4474 = vand.u32 %v3755, 4294901760
      %v4475 = vsub.f32 %v3755, %v4474
      %v4476 = vand.u32 %v4475, 4294901760
      %4477 = vmatpush1.msra.mxu0 %v4476
      %4478 = vmatprep.subr.mxu0 0.0
      %v4479 = vand.u32 %v3756, 4294901760
      %v4480 = vsub.f32 %v3756, %v4479
      %v4481 = vand.u32 %v4480, 4294901760
      %4482 = vmatpush1.msra.mxu0 %v4481
      %4483 = vmatprep.subr.mxu0 0.0
      %v4484 = vand.u32 %v3757, 4294901760
      %v4485 = vsub.f32 %v3757, %v4484
      %v4486 = vand.u32 %v4485, 4294901760
      %4487 = vmatpush1.msra.mxu0 %v4486
      %4488 = vmatprep.subr.mxu0 0.0
      %v4489 = vand.u32 %v3758, 4294901760
      %v4490 = vsub.f32 %v3758, %v4489
      %v4491 = vand.u32 %v4490, 4294901760
      %4492 = vmatpush1.msra.mxu0 %v4491
      %4493 = vmatprep.subr.mxu0 0.0
      %v4494 = vand.u32 %v3759, 4294901760
      %v4495 = vsub.f32 %v3759, %v4494
      %v4496 = vand.u32 %v4495, 4294901760
      %4497 = vmatpush1.msra.mxu0 %v4496
      %4498 = vmatprep.subr.mxu0 0.0
      %v4499 = vand.u32 %v3760, 4294901760
      %v4500 = vsub.f32 %v3760, %v4499
      %v4501 = vand.u32 %v4500, 4294901760
      %4502 = vmatpush1.msra.mxu0 %v4501
      %4503 = vmatprep.subr.mxu0 0.0
      %v4504 = vand.u32 %v3761, 4294901760
      %v4505 = vsub.f32 %v3761, %v4504
      %v4506 = vand.u32 %v4505, 4294901760
      %4507 = vmatpush1.msra.mxu0 %v4506
      %4508 = vmatprep.subr.mxu0 0.0
      %v4509 = vand.u32 %v3762, 4294901760
      %v4510 = vsub.f32 %v3762, %v4509
      %v4511 = vand.u32 %v4510, 4294901760
      %4512 = vmatpush1.msra.mxu0 %v4511
      %4513 = vmatprep.subr.mxu0 0.0
      %v4514 = vand.u32 %v3763, 4294901760
      %v4515 = vsub.f32 %v3763, %v4514
      %v4516 = vand.u32 %v4515, 4294901760
      %4517 = vmatpush1.msra.mxu0 %v4516
      %4518 = vmatprep.subr.mxu0 0.0
      %v4519 = vand.u32 %v3764, 4294901760
      %v4520 = vsub.f32 %v3764, %v4519
      %v4521 = vand.u32 %v4520, 4294901760
      %4522 = vmatpush1.msra.mxu0 %v4521
      %4523 = vmatprep.subr.mxu0 0.0
      %v4524 = vand.u32 %v3765, 4294901760
      %v4525 = vsub.f32 %v3765, %v4524
      %v4526 = vand.u32 %v4525, 4294901760
      %4527 = vmatpush1.msra.mxu0 %v4526
      %4528 = vmatprep.subr.mxu0 0.0
      %v4529 = vand.u32 %v3766, 4294901760
      %v4530 = vsub.f32 %v3766, %v4529
      %v4531 = vand.u32 %v4530, 4294901760
      %4532 = vmatpush1.msra.mxu0 %v4531
      %4533 = vmatprep.subr.mxu0 0.0
      %v4534 = vand.u32 %v3767, 4294901760
      %v4535 = vsub.f32 %v3767, %v4534
      %v4536 = vand.u32 %v4535, 4294901760
      %4537 = vmatpush1.msra.mxu0 %v4536
      %4538 = vmatprep.subr.mxu0 0.0
      %v4539 = vand.u32 %v3768, 4294901760
      %v4540 = vsub.f32 %v3768, %v4539
      %v4541 = vand.u32 %v4540, 4294901760
      %4542 = vmatpush1.msra.mxu0 %v4541
      %4543 = vmatprep.subr.mxu0 0.0
      %v4544 = vand.u32 %v3769, 4294901760
      %v4545 = vsub.f32 %v3769, %v4544
      %v4546 = vand.u32 %v4545, 4294901760
      %4547 = vmatpush1.msra.mxu0 %v4546
      %4548 = vmatprep.subr.mxu0 0.0
      %v4549 = vand.u32 %v3770, 4294901760
      %v4550 = vsub.f32 %v3770, %v4549
      %v4551 = vand.u32 %v4550, 4294901760
      %4552 = vmatpush1.msra.mxu0 %v4551
      %4553 = vmatprep.subr.mxu0 0.0
      %v4554 = vand.u32 %v3771, 4294901760
      %v4555 = vsub.f32 %v3771, %v4554
      %v4556 = vand.u32 %v4555, 4294901760
      %4557 = vmatpush1.msra.mxu0 %v4556
      %4558 = vmatprep.subr.mxu0 0.0
      %v4559 = vand.u32 %v3772, 4294901760
      %v4560 = vsub.f32 %v3772, %v4559
      %v4561 = vand.u32 %v4560, 4294901760
      %4562 = vmatpush1.msra.mxu0 %v4561
      %4563 = vmatprep.subr.mxu0 0.0
      %v4564 = vand.u32 %v3773, 4294901760
      %v4565 = vsub.f32 %v3773, %v4564
      %v4566 = vand.u32 %v4565, 4294901760
      %4567 = vmatpush1.msra.mxu0 %v4566
      %4568 = vmatprep.subr.mxu0 0.0
      %v4569 = vand.u32 %v3774, 4294901760
      %v4570 = vsub.f32 %v3774, %v4569
      %v4571 = vand.u32 %v4570, 4294901760
      %4572 = vmatpush1.msra.mxu0 %v4571
      %4573 = vmatprep.subr.mxu0 0.0
      %v4574 = vand.u32 %v3775, 4294901760
      %v4575 = vsub.f32 %v3775, %v4574
      %v4576 = vand.u32 %v4575, 4294901760
      %4577 = vmatpush1.msra.mxu0 %v4576
      %4578 = vmatprep.subr.mxu0 0.0
      %v4579 = vand.u32 %v3776, 4294901760
      %v4580 = vsub.f32 %v3776, %v4579
      %v4581 = vand.u32 %v4580, 4294901760
      %4582 = vmatpush1.msra.mxu0 %v4581
      %4583 = vmatprep.subr.mxu0 0.0
      %v4584 = vand.u32 %v3777, 4294901760
      %v4585 = vsub.f32 %v3777, %v4584
      %v4586 = vand.u32 %v4585, 4294901760
      %4587 = vmatpush1.msra.mxu0 %v4586
      %4588 = vmatprep.subr.mxu0 0.0
      %v4589 = vand.u32 %v3778, 4294901760
      %v4590 = vsub.f32 %v3778, %v4589
      %v4591 = vand.u32 %v4590, 4294901760
      %4592 = vmatpush1.msra.mxu0 %v4591
      %4593 = vmatprep.subr.mxu0 0.0
      %v4594 = vand.u32 %v3779, 4294901760
      %v4595 = vsub.f32 %v3779, %v4594
      %v4596 = vand.u32 %v4595, 4294901760
      %4597 = vmatpush1.msra.mxu0 %v4596
      %4598 = vmatprep.subr.mxu0 0.0
      %v4599 = vand.u32 %v3780, 4294901760
      %v4600 = vsub.f32 %v3780, %v4599
      %v4601 = vand.u32 %v4600, 4294901760
      %4602 = vmatpush1.msra.mxu0 %v4601
      %4603 = vmatprep.subr.mxu0 0.0
      %v4604 = vand.u32 %v3781, 4294901760
      %v4605 = vsub.f32 %v3781, %v4604
      %v4606 = vand.u32 %v4605, 4294901760
      %4607 = vmatpush1.msra.mxu0 %v4606
      %4608 = vmatprep.subr.mxu0 0.0
      %v4609 = vand.u32 %v3782, 4294901760
      %v4610 = vsub.f32 %v3782, %v4609
      %v4611 = vand.u32 %v4610, 4294901760
      %4612 = vmatpush1.msra.mxu0 %v4611
      %4613 = vmatprep.subr.mxu0 0.0
      %v4614 = vand.u32 %v3783, 4294901760
      %v4615 = vsub.f32 %v3783, %v4614
      %v4616 = vand.u32 %v4615, 4294901760
      %4617 = vmatpush1.msra.mxu0 %v4616
      %4618 = vmatprep.subr.mxu0 0.0
      %v4619 = vand.u32 %v3784, 4294901760
      %v4620 = vsub.f32 %v3784, %v4619
      %v4621 = vand.u32 %v4620, 4294901760
      %4622 = vmatpush1.msra.mxu0 %v4621
      %4623 = vmatprep.subr.mxu0 0.0
      %v4624 = vand.u32 %v3785, 4294901760
      %v4625 = vsub.f32 %v3785, %v4624
      %v4626 = vand.u32 %v4625, 4294901760
      %4627 = vmatpush1.msra.mxu0 %v4626
      %4628 = vmatprep.subr.mxu0 0.0
      %v4629 = vand.u32 %v3786, 4294901760
      %v4630 = vsub.f32 %v3786, %v4629
      %v4631 = vand.u32 %v4630, 4294901760
      %4632 = vmatpush1.msra.mxu0 %v4631
      %v4633 = vand.u32 %v3748, 4294901760
      %4634 = vmatprep.mubr.f32.mxu0 %v4633
      %v4635 = vand.u32 %v3747, 4294901760
      %4636 = vmatmul.mubr.f32.gmra.mrb[0].mxu0 %v4635
      %v4637 = vpop.f32.mrb[0].mxu0
      %v4638 = vadd.f32 %v4470, %v4637
      %v4639 = vpop.f32.mrb[0].mxu0
      %4640 = vdwg.mxu0
      %4641 = vmatprep.subr.mxu0 0.0
      %v4642 = vand.u32 %v3755, 4294901760
      %4643 = vmatpush1.msra.mxu0 %v4642
      %4644 = vmatprep.subr.mxu0 0.0
      %v4645 = vand.u32 %v3756, 4294901760
      %4646 = vmatpush1.msra.mxu0 %v4645
      %4647 = vmatprep.subr.mxu0 0.0
      %v4648 = vand.u32 %v3757, 4294901760
      %4649 = vmatpush1.msra.mxu0 %v4648
      %4650 = vmatprep.subr.mxu0 0.0
      %v4651 = vand.u32 %v3758, 4294901760
      %4652 = vmatpush1.msra.mxu0 %v4651
      %4653 = vmatprep.subr.mxu0 0.0
      %v4654 = vand.u32 %v3759, 4294901760
      %4655 = vmatpush1.msra.mxu0 %v4654
      %4656 = vmatprep.subr.mxu0 0.0
      %v4657 = vand.u32 %v3760, 4294901760
      %4658 = vmatpush1.msra.mxu0 %v4657
      %4659 = vmatprep.subr.mxu0 0.0
      %v4660 = vand.u32 %v3761, 4294901760
      %4661 = vmatpush1.msra.mxu0 %v4660
      %4662 = vmatprep.subr.mxu0 0.0
      %v4663 = vand.u32 %v3762, 4294901760
      %4664 = vmatpush1.msra.mxu0 %v4663
      %4665 = vmatprep.subr.mxu0 0.0
      %v4666 = vand.u32 %v3763, 4294901760
      %4667 = vmatpush1.msra.mxu0 %v4666
      %4668 = vmatprep.subr.mxu0 0.0
      %v4669 = vand.u32 %v3764, 4294901760
      %4670 = vmatpush1.msra.mxu0 %v4669
      %4671 = vmatprep.subr.mxu0 0.0
      %v4672 = vand.u32 %v3765, 4294901760
      %4673 = vmatpush1.msra.mxu0 %v4672
      %4674 = vmatprep.subr.mxu0 0.0
      %v4675 = vand.u32 %v3766, 4294901760
      %4676 = vmatpush1.msra.mxu0 %v4675
      %4677 = vmatprep.subr.mxu0 0.0
      %v4678 = vand.u32 %v3767, 4294901760
      %4679 = vmatpush1.msra.mxu0 %v4678
      %4680 = vmatprep.subr.mxu0 0.0
      %v4681 = vand.u32 %v3768, 4294901760
      %4682 = vmatpush1.msra.mxu0 %v4681
      %4683 = vmatprep.subr.mxu0 0.0
      %v4684 = vand.u32 %v3769, 4294901760
      %4685 = vmatpush1.msra.mxu0 %v4684
      %4686 = vmatprep.subr.mxu0 0.0
      %v4687 = vand.u32 %v3770, 4294901760
      %4688 = vmatpush1.msra.mxu0 %v4687
      %4689 = vmatprep.subr.mxu0 0.0
      %v4690 = vand.u32 %v3771, 4294901760
      %4691 = vmatpush1.msra.mxu0 %v4690
      %4692 = vmatprep.subr.mxu0 0.0
      %v4693 = vand.u32 %v3772, 4294901760
      %4694 = vmatpush1.msra.mxu0 %v4693
      %4695 = vmatprep.subr.mxu0 0.0
      %v4696 = vand.u32 %v3773, 4294901760
      %4697 = vmatpush1.msra.mxu0 %v4696
      %4698 = vmatprep.subr.mxu0 0.0
      %v4699 = vand.u32 %v3774, 4294901760
      %4700 = vmatpush1.msra.mxu0 %v4699
      %4701 = vmatprep.subr.mxu0 0.0
      %v4702 = vand.u32 %v3775, 4294901760
      %4703 = vmatpush1.msra.mxu0 %v4702
      %4704 = vmatprep.subr.mxu0 0.0
      %v4705 = vand.u32 %v3776, 4294901760
      %4706 = vmatpush1.msra.mxu0 %v4705
      %4707 = vmatprep.subr.mxu0 0.0
      %v4708 = vand.u32 %v3777, 4294901760
      %4709 = vmatpush1.msra.mxu0 %v4708
      %4710 = vmatprep.subr.mxu0 0.0
      %v4711 = vand.u32 %v3778, 4294901760
      %4712 = vmatpush1.msra.mxu0 %v4711
      %4713 = vmatprep.subr.mxu0 0.0
      %v4714 = vand.u32 %v3779, 4294901760
      %4715 = vmatpush1.msra.mxu0 %v4714
      %4716 = vmatprep.subr.mxu0 0.0
      %v4717 = vand.u32 %v3780, 4294901760
      %4718 = vmatpush1.msra.mxu0 %v4717
      %4719 = vmatprep.subr.mxu0 0.0
      %v4720 = vand.u32 %v3781, 4294901760
      %4721 = vmatpush1.msra.mxu0 %v4720
      %4722 = vmatprep.subr.mxu0 0.0
      %v4723 = vand.u32 %v3782, 4294901760
      %4724 = vmatpush1.msra.mxu0 %v4723
      %4725 = vmatprep.subr.mxu0 0.0
      %v4726 = vand.u32 %v3783, 4294901760
      %4727 = vmatpush1.msra.mxu0 %v4726
      %4728 = vmatprep.subr.mxu0 0.0
      %v4729 = vand.u32 %v3784, 4294901760
      %4730 = vmatpush1.msra.mxu0 %v4729
      %4731 = vmatprep.subr.mxu0 0.0
      %v4732 = vand.u32 %v3785, 4294901760
      %4733 = vmatpush1.msra.mxu0 %v4732
      %4734 = vmatprep.subr.mxu0 0.0
      %v4735 = vand.u32 %v3786, 4294901760
      %4736 = vmatpush1.msra.mxu0 %v4735
      %v4737 = vand.u32 %v3748, 4294901760
      %4738 = vmatprep.mubr.f32.mxu0 %v4737
      %v4739 = vand.u32 %v3747, 4294901760
      %4740 = vmatmul.mubr.f32.gmra.mrb[0].mxu0 %v4739
      %v4741 = vpop.f32.mrb[0].mxu0
      %v4742 = vadd.f32 %v4638, %v4741
      %v4743 = vpop.f32.mrb[0].mxu0
      %4744 = vdwg.mxu0
      %4745 = vmatprep.subr.mxu0 0.0
      %v4746 = vand.u32 %v3787, 4294901760
      %4747 = vmatpush1.msra.mxu0 %v4746
      %4748 = vmatprep.subr.mxu0 0.0
      %v4749 = vand.u32 %v3788, 4294901760
      %4750 = vmatpush1.msra.mxu0 %v4749
      %4751 = vmatprep.subr.mxu0 0.0
      %v4752 = vand.u32 %v3789, 4294901760
      %4753 = vmatpush1.msra.mxu0 %v4752
      %4754 = vmatprep.subr.mxu0 0.0
      %v4755 = vand.u32 %v3790, 4294901760
      %4756 = vmatpush1.msra.mxu0 %v4755
      %4757 = vmatprep.subr.mxu0 0.0
      %v4758 = vand.u32 %v3791, 4294901760
      %4759 = vmatpush1.msra.mxu0 %v4758
      %4760 = vmatprep.subr.mxu0 0.0
      %v4761 = vand.u32 %v3792, 4294901760
      %4762 = vmatpush1.msra.mxu0 %v4761
      %4763 = vmatprep.subr.mxu0 0.0
      %v4764 = vand.u32 %v3793, 4294901760
      %4765 = vmatpush1.msra.mxu0 %v4764
      %4766 = vmatprep.subr.mxu0 0.0
      %v4767 = vand.u32 %v3794, 4294901760
      %4768 = vmatpush1.msra.mxu0 %v4767
      %4769 = vmatprep.subr.mxu0 0.0
      %v4770 = vand.u32 %v3795, 4294901760
      %4771 = vmatpush1.msra.mxu0 %v4770
      %4772 = vmatprep.subr.mxu0 0.0
      %v4773 = vand.u32 %v3796, 4294901760
      %4774 = vmatpush1.msra.mxu0 %v4773
      %4775 = vmatprep.subr.mxu0 0.0
      %v4776 = vand.u32 %v3797, 4294901760
      %4777 = vmatpush1.msra.mxu0 %v4776
      %4778 = vmatprep.subr.mxu0 0.0
      %v4779 = vand.u32 %v3798, 4294901760
      %4780 = vmatpush1.msra.mxu0 %v4779
      %4781 = vmatprep.subr.mxu0 0.0
      %v4782 = vand.u32 %v3799, 4294901760
      %4783 = vmatpush1.msra.mxu0 %v4782
      %4784 = vmatprep.subr.mxu0 0.0
      %v4785 = vand.u32 %v3800, 4294901760
      %4786 = vmatpush1.msra.mxu0 %v4785
      %4787 = vmatprep.subr.mxu0 0.0
      %v4788 = vand.u32 %v3801, 4294901760
      %4789 = vmatpush1.msra.mxu0 %v4788
      %4790 = vmatprep.subr.mxu0 0.0
      %v4791 = vand.u32 %v3802, 4294901760
      %4792 = vmatpush1.msra.mxu0 %v4791
      %4793 = vmatprep.subr.mxu0 0.0
      %v4794 = vand.u32 %v3803, 4294901760
      %4795 = vmatpush1.msra.mxu0 %v4794
      %4796 = vmatprep.subr.mxu0 0.0
      %v4797 = vand.u32 %v3804, 4294901760
      %4798 = vmatpush1.msra.mxu0 %v4797
      %4799 = vmatprep.subr.mxu0 0.0
      %v4800 = vand.u32 %v3805, 4294901760
      %4801 = vmatpush1.msra.mxu0 %v4800
      %4802 = vmatprep.subr.mxu0 0.0
      %v4803 = vand.u32 %v3806, 4294901760
      %4804 = vmatpush1.msra.mxu0 %v4803
      %4805 = vmatprep.subr.mxu0 0.0
      %v4806 = vand.u32 %v3807, 4294901760
      %4807 = vmatpush1.msra.mxu0 %v4806
      %4808 = vmatprep.subr.mxu0 0.0
      %v4809 = vand.u32 %v3808, 4294901760
      %4810 = vmatpush1.msra.mxu0 %v4809
      %4811 = vmatprep.subr.mxu0 0.0
      %v4812 = vand.u32 %v3809, 4294901760
      %4813 = vmatpush1.msra.mxu0 %v4812
      %4814 = vmatprep.subr.mxu0 0.0
      %v4815 = vand.u32 %v3810, 4294901760
      %4816 = vmatpush1.msra.mxu0 %v4815
      %4817 = vmatprep.subr.mxu0 0.0
      %v4818 = vand.u32 %v3811, 4294901760
      %4819 = vmatpush1.msra.mxu0 %v4818
      %4820 = vmatprep.subr.mxu0 0.0
      %v4821 = vand.u32 %v3812, 4294901760
      %4822 = vmatpush1.msra.mxu0 %v4821
      %4823 = vmatprep.subr.mxu0 0.0
      %v4824 = vand.u32 %v3813, 4294901760
      %4825 = vmatpush1.msra.mxu0 %v4824
      %4826 = vmatprep.subr.mxu0 0.0
      %v4827 = vand.u32 %v3814, 4294901760
      %4828 = vmatpush1.msra.mxu0 %v4827
      %4829 = vmatprep.subr.mxu0 0.0
      %v4830 = vand.u32 %v3815, 4294901760
      %4831 = vmatpush1.msra.mxu0 %v4830
      %4832 = vmatprep.subr.mxu0 0.0
      %v4833 = vand.u32 %v3816, 4294901760
      %4834 = vmatpush1.msra.mxu0 %v4833
      %4835 = vmatprep.subr.mxu0 0.0
      %v4836 = vand.u32 %v3817, 4294901760
      %4837 = vmatpush1.msra.mxu0 %v4836
      %4838 = vmatprep.subr.mxu0 0.0
      %v4839 = vand.u32 %v3818, 4294901760
      %4840 = vmatpush1.msra.mxu0 %v4839
      %v4841 = vand.u32 %v3750, 4294901760
      %v4842 = vsub.f32 %v3750, %v4841
      %v4843 = vand.u32 %v4842, 4294901760
      %v4844 = vsub.f32 %v4842, %v4843
      %v4845 = vand.u32 %v4844, 4294901760
      %4846 = vmatprep.mubr.f32.mxu0 %v4845
      %v4847 = vand.u32 %v3749, 4294901760
      %v4848 = vsub.f32 %v3749, %v4847
      %v4849 = vand.u32 %v4848, 4294901760
      %v4850 = vsub.f32 %v4848, %v4849
      %v4851 = vand.u32 %v4850, 4294901760
      %4852 = vmatmul.mubr.f32.gmra.mrb[0].mxu0 %v4851
      %v4853 = vpop.f32.mrb[0].mxu0
      %v4854 = vadd.f32 %v4742, %v4853
      %v4855 = vpop.f32.mrb[0].mxu0
      %4856 = vdwg.mxu0
      %4857 = vmatprep.subr.mxu0 0.0
      %v4858 = vand.u32 %v3787, 4294901760
      %v4859 = vsub.f32 %v3787, %v4858
      %v4860 = vand.u32 %v4859, 4294901760
      %v4861 = vsub.f32 %v4859, %v4860
      %v4862 = vand.u32 %v4861, 4294901760
      %4863 = vmatpush1.msra.mxu0 %v4862
      %4864 = vmatprep.subr.mxu0 0.0
      %v4865 = vand.u32 %v3788, 4294901760
      %v4866 = vsub.f32 %v3788, %v4865
      %v4867 = vand.u32 %v4866, 4294901760
      %v4868 = vsub.f32 %v4866, %v4867
      %v4869 = vand.u32 %v4868, 4294901760
      %4870 = vmatpush1.msra.mxu0 %v4869
      %4871 = vmatprep.subr.mxu0 0.0
      %v4872 = vand.u32 %v3789, 4294901760
      %v4873 = vsub.f32 %v3789, %v4872
      %v4874 = vand.u32 %v4873, 4294901760
      %v4875 = vsub.f32 %v4873, %v4874
      %v4876 = vand.u32 %v4875, 4294901760
      %4877 = vmatpush1.msra.mxu0 %v4876
      %4878 = vmatprep.subr.mxu0 0.0
      %v4879 = vand.u32 %v3790, 4294901760
      %v4880 = vsub.f32 %v3790, %v4879
      %v4881 = vand.u32 %v4880, 4294901760
      %v4882 = vsub.f32 %v4880, %v4881
      %v4883 = vand.u32 %v4882, 4294901760
      %4884 = vmatpush1.msra.mxu0 %v4883
      %4885 = vmatprep.subr.mxu0 0.0
      %v4886 = vand.u32 %v3791, 4294901760
      %v4887 = vsub.f32 %v3791, %v4886
      %v4888 = vand.u32 %v4887, 4294901760
      %v4889 = vsub.f32 %v4887, %v4888
      %v4890 = vand.u32 %v4889, 4294901760
      %4891 = vmatpush1.msra.mxu0 %v4890
      %4892 = vmatprep.subr.mxu0 0.0
      %v4893 = vand.u32 %v3792, 4294901760
      %v4894 = vsub.f32 %v3792, %v4893
      %v4895 = vand.u32 %v4894, 4294901760
      %v4896 = vsub.f32 %v4894, %v4895
      %v4897 = vand.u32 %v4896, 4294901760
      %4898 = vmatpush1.msra.mxu0 %v4897
      %4899 = vmatprep.subr.mxu0 0.0
      %v4900 = vand.u32 %v3793, 4294901760
      %v4901 = vsub.f32 %v3793, %v4900
      %v4902 = vand.u32 %v4901, 4294901760
      %v4903 = vsub.f32 %v4901, %v4902
      %v4904 = vand.u32 %v4903, 4294901760
      %4905 = vmatpush1.msra.mxu0 %v4904
      %4906 = vmatprep.subr.mxu0 0.0
      %v4907 = vand.u32 %v3794, 4294901760
      %v4908 = vsub.f32 %v3794, %v4907
      %v4909 = vand.u32 %v4908, 4294901760
      %v4910 = vsub.f32 %v4908, %v4909
      %v4911 = vand.u32 %v4910, 4294901760
      %4912 = vmatpush1.msra.mxu0 %v4911
      %4913 = vmatprep.subr.mxu0 0.0
      %v4914 = vand.u32 %v3795, 4294901760
      %v4915 = vsub.f32 %v3795, %v4914
      %v4916 = vand.u32 %v4915, 4294901760
      %v4917 = vsub.f32 %v4915, %v4916
      %v4918 = vand.u32 %v4917, 4294901760
      %4919 = vmatpush1.msra.mxu0 %v4918
      %4920 = vmatprep.subr.mxu0 0.0
      %v4921 = vand.u32 %v3796, 4294901760
      %v4922 = vsub.f32 %v3796, %v4921
      %v4923 = vand.u32 %v4922, 4294901760
      %v4924 = vsub.f32 %v4922, %v4923
      %v4925 = vand.u32 %v4924, 4294901760
      %4926 = vmatpush1.msra.mxu0 %v4925
      %4927 = vmatprep.subr.mxu0 0.0
      %v4928 = vand.u32 %v3797, 4294901760
      %v4929 = vsub.f32 %v3797, %v4928
      %v4930 = vand.u32 %v4929, 4294901760
      %v4931 = vsub.f32 %v4929, %v4930
      %v4932 = vand.u32 %v4931, 4294901760
      %4933 = vmatpush1.msra.mxu0 %v4932
      %4934 = vmatprep.subr.mxu0 0.0
      %v4935 = vand.u32 %v3798, 4294901760
      %v4936 = vsub.f32 %v3798, %v4935
      %v4937 = vand.u32 %v4936, 4294901760
      %v4938 = vsub.f32 %v4936, %v4937
      %v4939 = vand.u32 %v4938, 4294901760
      %4940 = vmatpush1.msra.mxu0 %v4939
      %4941 = vmatprep.subr.mxu0 0.0
      %v4942 = vand.u32 %v3799, 4294901760
      %v4943 = vsub.f32 %v3799, %v4942
      %v4944 = vand.u32 %v4943, 4294901760
      %v4945 = vsub.f32 %v4943, %v4944
      %v4946 = vand.u32 %v4945, 4294901760
      %4947 = vmatpush1.msra.mxu0 %v4946
      %4948 = vmatprep.subr.mxu0 0.0
      %v4949 = vand.u32 %v3800, 4294901760
      %v4950 = vsub.f32 %v3800, %v4949
      %v4951 = vand.u32 %v4950, 4294901760
      %v4952 = vsub.f32 %v4950, %v4951
      %v4953 = vand.u32 %v4952, 4294901760
      %4954 = vmatpush1.msra.mxu0 %v4953
      %4955 = vmatprep.subr.mxu0 0.0
      %v4956 = vand.u32 %v3801, 4294901760
      %v4957 = vsub.f32 %v3801, %v4956
      %v4958 = vand.u32 %v4957, 4294901760
      %v4959 = vsub.f32 %v4957, %v4958
      %v4960 = vand.u32 %v4959, 4294901760
      %4961 = vmatpush1.msra.mxu0 %v4960
      %4962 = vmatprep.subr.mxu0 0.0
      %v4963 = vand.u32 %v3802, 4294901760
      %v4964 = vsub.f32 %v3802, %v4963
      %v4965 = vand.u32 %v4964, 4294901760
      %v4966 = vsub.f32 %v4964, %v4965
      %v4967 = vand.u32 %v4966, 4294901760
      %4968 = vmatpush1.msra.mxu0 %v4967
      %4969 = vmatprep.subr.mxu0 0.0
      %v4970 = vand.u32 %v3803, 4294901760
      %v4971 = vsub.f32 %v3803, %v4970
      %v4972 = vand.u32 %v4971, 4294901760
      %v4973 = vsub.f32 %v4971, %v4972
      %v4974 = vand.u32 %v4973, 4294901760
      %4975 = vmatpush1.msra.mxu0 %v4974
      %4976 = vmatprep.subr.mxu0 0.0
      %v4977 = vand.u32 %v3804, 4294901760
      %v4978 = vsub.f32 %v3804, %v4977
      %v4979 = vand.u32 %v4978, 4294901760
      %v4980 = vsub.f32 %v4978, %v4979
      %v4981 = vand.u32 %v4980, 4294901760
      %4982 = vmatpush1.msra.mxu0 %v4981
      %4983 = vmatprep.subr.mxu0 0.0
      %v4984 = vand.u32 %v3805, 4294901760
      %v4985 = vsub.f32 %v3805, %v4984
      %v4986 = vand.u32 %v4985, 4294901760
      %v4987 = vsub.f32 %v4985, %v4986
      %v4988 = vand.u32 %v4987, 4294901760
      %4989 = vmatpush1.msra.mxu0 %v4988
      %4990 = vmatprep.subr.mxu0 0.0
      %v4991 = vand.u32 %v3806, 4294901760
      %v4992 = vsub.f32 %v3806, %v4991
      %v4993 = vand.u32 %v4992, 4294901760
      %v4994 = vsub.f32 %v4992, %v4993
      %v4995 = vand.u32 %v4994, 4294901760
      %4996 = vmatpush1.msra.mxu0 %v4995
      %4997 = vmatprep.subr.mxu0 0.0
      %v4998 = vand.u32 %v3807, 4294901760
      %v4999 = vsub.f32 %v3807, %v4998
      %v5000 = vand.u32 %v4999, 4294901760
      %v5001 = vsub.f32 %v4999, %v5000
      %v5002 = vand.u32 %v5001, 4294901760
      %5003 = vmatpush1.msra.mxu0 %v5002
      %5004 = vmatprep.subr.mxu0 0.0
      %v5005 = vand.u32 %v3808, 4294901760
      %v5006 = vsub.f32 %v3808, %v5005
      %v5007 = vand.u32 %v5006, 4294901760
      %v5008 = vsub.f32 %v5006, %v5007
      %v5009 = vand.u32 %v5008, 4294901760
      %5010 = vmatpush1.msra.mxu0 %v5009
      %5011 = vmatprep.subr.mxu0 0.0
      %v5012 = vand.u32 %v3809, 4294901760
      %v5013 = vsub.f32 %v3809, %v5012
      %v5014 = vand.u32 %v5013, 4294901760
      %v5015 = vsub.f32 %v5013, %v5014
      %v5016 = vand.u32 %v5015, 4294901760
      %5017 = vmatpush1.msra.mxu0 %v5016
      %5018 = vmatprep.subr.mxu0 0.0
      %v5019 = vand.u32 %v3810, 4294901760
      %v5020 = vsub.f32 %v3810, %v5019
      %v5021 = vand.u32 %v5020, 4294901760
      %v5022 = vsub.f32 %v5020, %v5021
      %v5023 = vand.u32 %v5022, 4294901760
      %5024 = vmatpush1.msra.mxu0 %v5023
      %5025 = vmatprep.subr.mxu0 0.0
      %v5026 = vand.u32 %v3811, 4294901760
      %v5027 = vsub.f32 %v3811, %v5026
      %v5028 = vand.u32 %v5027, 4294901760
      %v5029 = vsub.f32 %v5027, %v5028
      %v5030 = vand.u32 %v5029, 4294901760
      %5031 = vmatpush1.msra.mxu0 %v5030
      %5032 = vmatprep.subr.mxu0 0.0
      %v5033 = vand.u32 %v3812, 4294901760
      %v5034 = vsub.f32 %v3812, %v5033
      %v5035 = vand.u32 %v5034, 4294901760
      %v5036 = vsub.f32 %v5034, %v5035
      %v5037 = vand.u32 %v5036, 4294901760
      %5038 = vmatpush1.msra.mxu0 %v5037
      %5039 = vmatprep.subr.mxu0 0.0
      %v5040 = vand.u32 %v3813, 4294901760
      %v5041 = vsub.f32 %v3813, %v5040
      %v5042 = vand.u32 %v5041, 4294901760
      %v5043 = vsub.f32 %v5041, %v5042
      %v5044 = vand.u32 %v5043, 4294901760
      %5045 = vmatpush1.msra.mxu0 %v5044
      %5046 = vmatprep.subr.mxu0 0.0
      %v5047 = vand.u32 %v3814, 4294901760
      %v5048 = vsub.f32 %v3814, %v5047
      %v5049 = vand.u32 %v5048, 4294901760
      %v5050 = vsub.f32 %v5048, %v5049
      %v5051 = vand.u32 %v5050, 4294901760
      %5052 = vmatpush1.msra.mxu0 %v5051
      %5053 = vmatprep.subr.mxu0 0.0
      %v5054 = vand.u32 %v3815, 4294901760
      %v5055 = vsub.f32 %v3815, %v5054
      %v5056 = vand.u32 %v5055, 4294901760
      %v5057 = vsub.f32 %v5055, %v5056
      %v5058 = vand.u32 %v5057, 4294901760
      %5059 = vmatpush1.msra.mxu0 %v5058
      %5060 = vmatprep.subr.mxu0 0.0
      %v5061 = vand.u32 %v3816, 4294901760
      %v5062 = vsub.f32 %v3816, %v5061
      %v5063 = vand.u32 %v5062, 4294901760
      %v5064 = vsub.f32 %v5062, %v5063
      %v5065 = vand.u32 %v5064, 4294901760
      %5066 = vmatpush1.msra.mxu0 %v5065
      %5067 = vmatprep.subr.mxu0 0.0
      %v5068 = vand.u32 %v3817, 4294901760
      %v5069 = vsub.f32 %v3817, %v5068
      %v5070 = vand.u32 %v5069, 4294901760
      %v5071 = vsub.f32 %v5069, %v5070
      %v5072 = vand.u32 %v5071, 4294901760
      %5073 = vmatpush1.msra.mxu0 %v5072
      %5074 = vmatprep.subr.mxu0 0.0
      %v5075 = vand.u32 %v3818, 4294901760
      %v5076 = vsub.f32 %v3818, %v5075
      %v5077 = vand.u32 %v5076, 4294901760
      %v5078 = vsub.f32 %v5076, %v5077
      %v5079 = vand.u32 %v5078, 4294901760
      %5080 = vmatpush1.msra.mxu0 %v5079
      %v5081 = vand.u32 %v3750, 4294901760
      %5082 = vmatprep.mubr.f32.mxu0 %v5081
      %v5083 = vand.u32 %v3749, 4294901760
      %5084 = vmatmul.mubr.f32.gmra.mrb[0].mxu0 %v5083
      %v5085 = vpop.f32.mrb[0].mxu0
      %v5086 = vadd.f32 %v4854, %v5085
      %v5087 = vpop.f32.mrb[0].mxu0
      %5088 = vdwg.mxu0
      %5089 = vmatprep.subr.mxu0 0.0
      %v5090 = vand.u32 %v3787, 4294901760
      %v5091 = vsub.f32 %v3787, %v5090
      %5092 = vmatpush1.msra.mxu0 %v5091
      %5093 = vmatprep.subr.mxu0 0.0
      %v5094 = vand.u32 %v3788, 4294901760
      %v5095 = vsub.f32 %v3788, %v5094
      %5096 = vmatpush1.msra.mxu0 %v5095
      %5097 = vmatprep.subr.mxu0 0.0
      %v5098 = vand.u32 %v3789, 4294901760
      %v5099 = vsub.f32 %v3789, %v5098
      %5100 = vmatpush1.msra.mxu0 %v5099
      %5101 = vmatprep.subr.mxu0 0.0
      %v5102 = vand.u32 %v3790, 4294901760
      %v5103 = vsub.f32 %v3790, %v5102
      %5104 = vmatpush1.msra.mxu0 %v5103
      %5105 = vmatprep.subr.mxu0 0.0
      %v5106 = vand.u32 %v3791, 4294901760
      %v5107 = vsub.f32 %v3791, %v5106
      %5108 = vmatpush1.msra.mxu0 %v5107
      %5109 = vmatprep.subr.mxu0 0.0
      %v5110 = vand.u32 %v3792, 4294901760
      %v5111 = vsub.f32 %v3792, %v5110
      %5112 = vmatpush1.msra.mxu0 %v5111
      %5113 = vmatprep.subr.mxu0 0.0
      %v5114 = vand.u32 %v3793, 4294901760
      %v5115 = vsub.f32 %v3793, %v5114
      %5116 = vmatpush1.msra.mxu0 %v5115
      %5117 = vmatprep.subr.mxu0 0.0
      %v5118 = vand.u32 %v3794, 4294901760
      %v5119 = vsub.f32 %v3794, %v5118
      %5120 = vmatpush1.msra.mxu0 %v5119
      %5121 = vmatprep.subr.mxu0 0.0
      %v5122 = vand.u32 %v3795, 4294901760
      %v5123 = vsub.f32 %v3795, %v5122
      %5124 = vmatpush1.msra.mxu0 %v5123
      %5125 = vmatprep.subr.mxu0 0.0
      %v5126 = vand.u32 %v3796, 4294901760
      %v5127 = vsub.f32 %v3796, %v5126
      %5128 = vmatpush1.msra.mxu0 %v5127
      %5129 = vmatprep.subr.mxu0 0.0
      %v5130 = vand.u32 %v3797, 4294901760
      %v5131 = vsub.f32 %v3797, %v5130
      %5132 = vmatpush1.msra.mxu0 %v5131
      %5133 = vmatprep.subr.mxu0 0.0
      %v5134 = vand.u32 %v3798, 4294901760
      %v5135 = vsub.f32 %v3798, %v5134
      %5136 = vmatpush1.msra.mxu0 %v5135
      %5137 = vmatprep.subr.mxu0 0.0
      %v5138 = vand.u32 %v3799, 4294901760
      %v5139 = vsub.f32 %v3799, %v5138
      %5140 = vmatpush1.msra.mxu0 %v5139
      %5141 = vmatprep.subr.mxu0 0.0
      %v5142 = vand.u32 %v3800, 4294901760
      %v5143 = vsub.f32 %v3800, %v5142
      %5144 = vmatpush1.msra.mxu0 %v5143
      %5145 = vmatprep.subr.mxu0 0.0
      %v5146 = vand.u32 %v3801, 4294901760
      %v5147 = vsub.f32 %v3801, %v5146
      %5148 = vmatpush1.msra.mxu0 %v5147
      %5149 = vmatprep.subr.mxu0 0.0
      %v5150 = vand.u32 %v3802, 4294901760
      %v5151 = vsub.f32 %v3802, %v5150
      %5152 = vmatpush1.msra.mxu0 %v5151
      %5153 = vmatprep.subr.mxu0 0.0
      %v5154 = vand.u32 %v3803, 4294901760
      %v5155 = vsub.f32 %v3803, %v5154
      %5156 = vmatpush1.msra.mxu0 %v5155
      %5157 = vmatprep.subr.mxu0 0.0
      %v5158 = vand.u32 %v3804, 4294901760
      %v5159 = vsub.f32 %v3804, %v5158
      %5160 = vmatpush1.msra.mxu0 %v5159
      %5161 = vmatprep.subr.mxu0 0.0
      %v5162 = vand.u32 %v3805, 4294901760
      %v5163 = vsub.f32 %v3805, %v5162
      %5164 = vmatpush1.msra.mxu0 %v5163
      %5165 = vmatprep.subr.mxu0 0.0
      %v5166 = vand.u32 %v3806, 4294901760
      %v5167 = vsub.f32 %v3806, %v5166
      %5168 = vmatpush1.msra.mxu0 %v5167
      %5169 = vmatprep.subr.mxu0 0.0
      %v5170 = vand.u32 %v3807, 4294901760
      %v5171 = vsub.f32 %v3807, %v5170
      %5172 = vmatpush1.msra.mxu0 %v5171
      %5173 = vmatprep.subr.mxu0 0.0
      %v5174 = vand.u32 %v3808, 4294901760
      %v5175 = vsub.f32 %v3808, %v5174
      %5176 = vmatpush1.msra.mxu0 %v5175
      %5177 = vmatprep.subr.mxu0 0.0
      %v5178 = vand.u32 %v3809, 4294901760
      %v5179 = vsub.f32 %v3809, %v5178
      %5180 = vmatpush1.msra.mxu0 %v5179
      %5181 = vmatprep.subr.mxu0 0.0
      %v5182 = vand.u32 %v3810, 4294901760
      %v5183 = vsub.f32 %v3810, %v5182
      %5184 = vmatpush1.msra.mxu0 %v5183
      %5185 = vmatprep.subr.mxu0 0.0
      %v5186 = vand.u32 %v3811, 4294901760
      %v5187 = vsub.f32 %v3811, %v5186
      %5188 = vmatpush1.msra.mxu0 %v5187
      %5189 = vmatprep.subr.mxu0 0.0
      %v5190 = vand.u32 %v3812, 4294901760
      %v5191 = vsub.f32 %v3812, %v5190
      %5192 = vmatpush1.msra.mxu0 %v5191
      %5193 = vmatprep.subr.mxu0 0.0
      %v5194 = vand.u32 %v3813, 4294901760
      %v5195 = vsub.f32 %v3813, %v5194
      %5196 = vmatpush1.msra.mxu0 %v5195
      %5197 = vmatprep.subr.mxu0 0.0
      %v5198 = vand.u32 %v3814, 4294901760
      %v5199 = vsub.f32 %v3814, %v5198
      %5200 = vmatpush1.msra.mxu0 %v5199
      %5201 = vmatprep.subr.mxu0 0.0
      %v5202 = vand.u32 %v3815, 4294901760
      %v5203 = vsub.f32 %v3815, %v5202
      %5204 = vmatpush1.msra.mxu0 %v5203
      %5205 = vmatprep.subr.mxu0 0.0
      %v5206 = vand.u32 %v3816, 4294901760
      %v5207 = vsub.f32 %v3816, %v5206
      %5208 = vmatpush1.msra.mxu0 %v5207
      %5209 = vmatprep.subr.mxu0 0.0
      %v5210 = vand.u32 %v3817, 4294901760
      %v5211 = vsub.f32 %v3817, %v5210
      %5212 = vmatpush1.msra.mxu0 %v5211
      %5213 = vmatprep.subr.mxu0 0.0
      %v5214 = vand.u32 %v3818, 4294901760
      %v5215 = vsub.f32 %v3818, %v5214
      %5216 = vmatpush1.msra.mxu0 %v5215
      %v5217 = vand.u32 %v3750, 4294901760
      %v5218 = vsub.f32 %v3750, %v5217
      %5219 = vmatprep.mubr.f32.mxu0 %v5218
      %v5220 = vand.u32 %v3749, 4294901760
      %v5221 = vsub.f32 %v3749, %v5220
      %5222 = vmatmul.mubr.f32.gmra.mrb[0].mxu0 %v5221
      %v5223 = vpop.f32.mrb[0].mxu0
      %v5224 = vadd.f32 %v5086, %v5223
      %v5225 = vpop.f32.mrb[0].mxu0
      %5226 = vdwg.mxu0
      %5227 = vmatprep.subr.mxu0 0.0
      %v5228 = vand.u32 %v3787, 4294901760
      %5229 = vmatpush1.msra.mxu0 %v5228
      %5230 = vmatprep.subr.mxu0 0.0
      %v5231 = vand.u32 %v3788, 4294901760
      %5232 = vmatpush1.msra.mxu0 %v5231
      %5233 = vmatprep.subr.mxu0 0.0
      %v5234 = vand.u32 %v3789, 4294901760
      %5235 = vmatpush1.msra.mxu0 %v5234
      %5236 = vmatprep.subr.mxu0 0.0
      %v5237 = vand.u32 %v3790, 4294901760
      %5238 = vmatpush1.msra.mxu0 %v5237
      %5239 = vmatprep.subr.mxu0 0.0
      %v5240 = vand.u32 %v3791, 4294901760
      %5241 = vmatpush1.msra.mxu0 %v5240
      %5242 = vmatprep.subr.mxu0 0.0
      %v5243 = vand.u32 %v3792, 4294901760
      %5244 = vmatpush1.msra.mxu0 %v5243
      %5245 = vmatprep.subr.mxu0 0.0
      %v5246 = vand.u32 %v3793, 4294901760
      %5247 = vmatpush1.msra.mxu0 %v5246
      %5248 = vmatprep.subr.mxu0 0.0
      %v5249 = vand.u32 %v3794, 4294901760
      %5250 = vmatpush1.msra.mxu0 %v5249
      %5251 = vmatprep.subr.mxu0 0.0
      %v5252 = vand.u32 %v3795, 4294901760
      %5253 = vmatpush1.msra.mxu0 %v5252
      %5254 = vmatprep.subr.mxu0 0.0
      %v5255 = vand.u32 %v3796, 4294901760
      %5256 = vmatpush1.msra.mxu0 %v5255
      %5257 = vmatprep.subr.mxu0 0.0
      %v5258 = vand.u32 %v3797, 4294901760
      %5259 = vmatpush1.msra.mxu0 %v5258
      %5260 = vmatprep.subr.mxu0 0.0
      %v5261 = vand.u32 %v3798, 4294901760
      %5262 = vmatpush1.msra.mxu0 %v5261
      %5263 = vmatprep.subr.mxu0 0.0
      %v5264 = vand.u32 %v3799, 4294901760
      %5265 = vmatpush1.msra.mxu0 %v5264
      %5266 = vmatprep.subr.mxu0 0.0
      %v5267 = vand.u32 %v3800, 4294901760
      %5268 = vmatpush1.msra.mxu0 %v5267
      %5269 = vmatprep.subr.mxu0 0.0
      %v5270 = vand.u32 %v3801, 4294901760
      %5271 = vmatpush1.msra.mxu0 %v5270
      %5272 = vmatprep.subr.mxu0 0.0
      %v5273 = vand.u32 %v3802, 4294901760
      %5274 = vmatpush1.msra.mxu0 %v5273
      %5275 = vmatprep.subr.mxu0 0.0
      %v5276 = vand.u32 %v3803, 4294901760
      %5277 = vmatpush1.msra.mxu0 %v5276
      %5278 = vmatprep.subr.mxu0 0.0
      %v5279 = vand.u32 %v3804, 4294901760
      %5280 = vmatpush1.msra.mxu0 %v5279
      %5281 = vmatprep.subr.mxu0 0.0
      %v5282 = vand.u32 %v3805, 4294901760
      %5283 = vmatpush1.msra.mxu0 %v5282
      %5284 = vmatprep.subr.mxu0 0.0
      %v5285 = vand.u32 %v3806, 4294901760
      %5286 = vmatpush1.msra.mxu0 %v5285
      %5287 = vmatprep.subr.mxu0 0.0
      %v5288 = vand.u32 %v3807, 4294901760
      %5289 = vmatpush1.msra.mxu0 %v5288
      %5290 = vmatprep.subr.mxu0 0.0
      %v5291 = vand.u32 %v3808, 4294901760
      %5292 = vmatpush1.msra.mxu0 %v5291
      %5293 = vmatprep.subr.mxu0 0.0
      %v5294 = vand.u32 %v3809, 4294901760
      %5295 = vmatpush1.msra.mxu0 %v5294
      %5296 = vmatprep.subr.mxu0 0.0
      %v5297 = vand.u32 %v3810, 4294901760
      %5298 = vmatpush1.msra.mxu0 %v5297
      %5299 = vmatprep.subr.mxu0 0.0
      %v5300 = vand.u32 %v3811, 4294901760
      %5301 = vmatpush1.msra.mxu0 %v5300
      %5302 = vmatprep.subr.mxu0 0.0
      %v5303 = vand.u32 %v3812, 4294901760
      %5304 = vmatpush1.msra.mxu0 %v5303
      %5305 = vmatprep.subr.mxu0 0.0
      %v5306 = vand.u32 %v3813, 4294901760
      %5307 = vmatpush1.msra.mxu0 %v5306
      %5308 = vmatprep.subr.mxu0 0.0
      %v5309 = vand.u32 %v3814, 4294901760
      %5310 = vmatpush1.msra.mxu0 %v5309
      %5311 = vmatprep.subr.mxu0 0.0
      %v5312 = vand.u32 %v3815, 4294901760
      %5313 = vmatpush1.msra.mxu0 %v5312
      %5314 = vmatprep.subr.mxu0 0.0
      %v5315 = vand.u32 %v3816, 4294901760
      %5316 = vmatpush1.msra.mxu0 %v5315
      %5317 = vmatprep.subr.mxu0 0.0
      %v5318 = vand.u32 %v3817, 4294901760
      %5319 = vmatpush1.msra.mxu0 %v5318
      %5320 = vmatprep.subr.mxu0 0.0
      %v5321 = vand.u32 %v3818, 4294901760
      %5322 = vmatpush1.msra.mxu0 %v5321
      %v5323 = vand.u32 %v3750, 4294901760
      %v5324 = vsub.f32 %v3750, %v5323
      %v5325 = vand.u32 %v5324, 4294901760
      %5326 = vmatprep.mubr.f32.mxu0 %v5325
      %v5327 = vand.u32 %v3749, 4294901760
      %v5328 = vsub.f32 %v3749, %v5327
      %v5329 = vand.u32 %v5328, 4294901760
      %5330 = vmatmul.mubr.f32.gmra.mrb[0].mxu0 %v5329
      %v5331 = vpop.f32.mrb[0].mxu0
      %v5332 = vadd.f32 %v5224, %v5331
      %v5333 = vpop.f32.mrb[0].mxu0
      %5334 = vdwg.mxu0
      %5335 = vmatprep.subr.mxu0 0.0
      %v5336 = vand.u32 %v3787, 4294901760
      %v5337 = vsub.f32 %v3787, %v5336
      %v5338 = vand.u32 %v5337, 4294901760
      %5339 = vmatpush1.msra.mxu0 %v5338
      %5340 = vmatprep.subr.mxu0 0.0
      %v5341 = vand.u32 %v3788, 4294901760
      %v5342 = vsub.f32 %v3788, %v5341
      %v5343 = vand.u32 %v5342, 4294901760
      %5344 = vmatpush1.msra.mxu0 %v5343
      %5345 = vmatprep.subr.mxu0 0.0
      %v5346 = vand.u32 %v3789, 4294901760
      %v5347 = vsub.f32 %v3789, %v5346
      %v5348 = vand.u32 %v5347, 4294901760
      %5349 = vmatpush1.msra.mxu0 %v5348
      %5350 = vmatprep.subr.mxu0 0.0
      %v5351 = vand.u32 %v3790, 4294901760
      %v5352 = vsub.f32 %v3790, %v5351
      %v5353 = vand.u32 %v5352, 4294901760
      %5354 = vmatpush1.msra.mxu0 %v5353
      %5355 = vmatprep.subr.mxu0 0.0
      %v5356 = vand.u32 %v3791, 4294901760
      %v5357 = vsub.f32 %v3791, %v5356
      %v5358 = vand.u32 %v5357, 4294901760
      %5359 = vmatpush1.msra.mxu0 %v5358
      %5360 = vmatprep.subr.mxu0 0.0
      %v5361 = vand.u32 %v3792, 4294901760
      %v5362 = vsub.f32 %v3792, %v5361
      %v5363 = vand.u32 %v5362, 4294901760
      %5364 = vmatpush1.msra.mxu0 %v5363
      %5365 = vmatprep.subr.mxu0 0.0
      %v5366 = vand.u32 %v3793, 4294901760
      %v5367 = vsub.f32 %v3793, %v5366
      %v5368 = vand.u32 %v5367, 4294901760
      %5369 = vmatpush1.msra.mxu0 %v5368
      %5370 = vmatprep.subr.mxu0 0.0
      %v5371 = vand.u32 %v3794, 4294901760
      %v5372 = vsub.f32 %v3794, %v5371
      %v5373 = vand.u32 %v5372, 4294901760
      %5374 = vmatpush1.msra.mxu0 %v5373
      %5375 = vmatprep.subr.mxu0 0.0
      %v5376 = vand.u32 %v3795, 4294901760
      %v5377 = vsub.f32 %v3795, %v5376
      %v5378 = vand.u32 %v5377, 4294901760
      %5379 = vmatpush1.msra.mxu0 %v5378
      %5380 = vmatprep.subr.mxu0 0.0
      %v5381 = vand.u32 %v3796, 4294901760
      %v5382 = vsub.f32 %v3796, %v5381
      %v5383 = vand.u32 %v5382, 4294901760
      %5384 = vmatpush1.msra.mxu0 %v5383
      %5385 = vmatprep.subr.mxu0 0.0
      %v5386 = vand.u32 %v3797, 4294901760
      %v5387 = vsub.f32 %v3797, %v5386
      %v5388 = vand.u32 %v5387, 4294901760
      %5389 = vmatpush1.msra.mxu0 %v5388
      %5390 = vmatprep.subr.mxu0 0.0
      %v5391 = vand.u32 %v3798, 4294901760
      %v5392 = vsub.f32 %v3798, %v5391
      %v5393 = vand.u32 %v5392, 4294901760
      %5394 = vmatpush1.msra.mxu0 %v5393
      %5395 = vmatprep.subr.mxu0 0.0
      %v5396 = vand.u32 %v3799, 4294901760
      %v5397 = vsub.f32 %v3799, %v5396
      %v5398 = vand.u32 %v5397, 4294901760
      %5399 = vmatpush1.msra.mxu0 %v5398
      %5400 = vmatprep.subr.mxu0 0.0
      %v5401 = vand.u32 %v3800, 4294901760
      %v5402 = vsub.f32 %v3800, %v5401
      %v5403 = vand.u32 %v5402, 4294901760
      %5404 = vmatpush1.msra.mxu0 %v5403
      %5405 = vmatprep.subr.mxu0 0.0
      %v5406 = vand.u32 %v3801, 4294901760
      %v5407 = vsub.f32 %v3801, %v5406
      %v5408 = vand.u32 %v5407, 4294901760
      %5409 = vmatpush1.msra.mxu0 %v5408
      %5410 = vmatprep.subr.mxu0 0.0
      %v5411 = vand.u32 %v3802, 4294901760
      %v5412 = vsub.f32 %v3802, %v5411
      %v5413 = vand.u32 %v5412, 4294901760
      %5414 = vmatpush1.msra.mxu0 %v5413
      %5415 = vmatprep.subr.mxu0 0.0
      %v5416 = vand.u32 %v3803, 4294901760
      %v5417 = vsub.f32 %v3803, %v5416
      %v5418 = vand.u32 %v5417, 4294901760
      %5419 = vmatpush1.msra.mxu0 %v5418
      %5420 = vmatprep.subr.mxu0 0.0
      %v5421 = vand.u32 %v3804, 4294901760
      %v5422 = vsub.f32 %v3804, %v5421
      %v5423 = vand.u32 %v5422, 4294901760
      %5424 = vmatpush1.msra.mxu0 %v5423
      %5425 = vmatprep.subr.mxu0 0.0
      %v5426 = vand.u32 %v3805, 4294901760
      %v5427 = vsub.f32 %v3805, %v5426
      %v5428 = vand.u32 %v5427, 4294901760
      %5429 = vmatpush1.msra.mxu0 %v5428
      %5430 = vmatprep.subr.mxu0 0.0
      %v5431 = vand.u32 %v3806, 4294901760
      %v5432 = vsub.f32 %v3806, %v5431
      %v5433 = vand.u32 %v5432, 4294901760
      %5434 = vmatpush1.msra.mxu0 %v5433
      %5435 = vmatprep.subr.mxu0 0.0
      %v5436 = vand.u32 %v3807, 4294901760
      %v5437 = vsub.f32 %v3807, %v5436
      %v5438 = vand.u32 %v5437, 4294901760
      %5439 = vmatpush1.msra.mxu0 %v5438
      %5440 = vmatprep.subr.mxu0 0.0
      %v5441 = vand.u32 %v3808, 4294901760
      %v5442 = vsub.f32 %v3808, %v5441
      %v5443 = vand.u32 %v5442, 4294901760
      %5444 = vmatpush1.msra.mxu0 %v5443
      %5445 = vmatprep.subr.mxu0 0.0
      %v5446 = vand.u32 %v3809, 4294901760
      %v5447 = vsub.f32 %v3809, %v5446
      %v5448 = vand.u32 %v5447, 4294901760
      %5449 = vmatpush1.msra.mxu0 %v5448
      %5450 = vmatprep.subr.mxu0 0.0
      %v5451 = vand.u32 %v3810, 4294901760
      %v5452 = vsub.f32 %v3810, %v5451
      %v5453 = vand.u32 %v5452, 4294901760
      %5454 = vmatpush1.msra.mxu0 %v5453
      %5455 = vmatprep.subr.mxu0 0.0
      %v5456 = vand.u32 %v3811, 4294901760
      %v5457 = vsub.f32 %v3811, %v5456
      %v5458 = vand.u32 %v5457, 4294901760
      %5459 = vmatpush1.msra.mxu0 %v5458
      %5460 = vmatprep.subr.mxu0 0.0
      %v5461 = vand.u32 %v3812, 4294901760
      %v5462 = vsub.f32 %v3812, %v5461
      %v5463 = vand.u32 %v5462, 4294901760
      %5464 = vmatpush1.msra.mxu0 %v5463
      %5465 = vmatprep.subr.mxu0 0.0
      %v5466 = vand.u32 %v3813, 4294901760
      %v5467 = vsub.f32 %v3813, %v5466
      %v5468 = vand.u32 %v5467, 4294901760
      %5469 = vmatpush1.msra.mxu0 %v5468
      %5470 = vmatprep.subr.mxu0 0.0
      %v5471 = vand.u32 %v3814, 4294901760
      %v5472 = vsub.f32 %v3814, %v5471
      %v5473 = vand.u32 %v5472, 4294901760
      %5474 = vmatpush1.msra.mxu0 %v5473
      %5475 = vmatprep.subr.mxu0 0.0
      %v5476 = vand.u32 %v3815, 4294901760
      %v5477 = vsub.f32 %v3815, %v5476
      %v5478 = vand.u32 %v5477, 4294901760
      %5479 = vmatpush1.msra.mxu0 %v5478
      %5480 = vmatprep.subr.mxu0 0.0
      %v5481 = vand.u32 %v3816, 4294901760
      %v5482 = vsub.f32 %v3816, %v5481
      %v5483 = vand.u32 %v5482, 4294901760
      %5484 = vmatpush1.msra.mxu0 %v5483
      %5485 = vmatprep.subr.mxu0 0.0
      %v5486 = vand.u32 %v3817, 4294901760
      %v5487 = vsub.f32 %v3817, %v5486
      %v5488 = vand.u32 %v5487, 4294901760
      %5489 = vmatpush1.msra.mxu0 %v5488
      %5490 = vmatprep.subr.mxu0 0.0
      %v5491 = vand.u32 %v3818, 4294901760
      %v5492 = vsub.f32 %v3818, %v5491
      %v5493 = vand.u32 %v5492, 4294901760
      %5494 = vmatpush1.msra.mxu0 %v5493
      %v5495 = vand.u32 %v3750, 4294901760
      %5496 = vmatprep.mubr.f32.mxu0 %v5495
      %v5497 = vand.u32 %v3749, 4294901760
      %5498 = vmatmul.mubr.f32.gmra.mrb[0].mxu0 %v5497
      %v5499 = vpop.f32.mrb[0].mxu0
      %v5500 = vadd.f32 %v5332, %v5499
      %v5501 = vpop.f32.mrb[0].mxu0
      %5502 = vdwg.mxu0
      %5503 = vmatprep.subr.mxu0 0.0
      %v5504 = vand.u32 %v3787, 4294901760
      %5505 = vmatpush1.msra.mxu0 %v5504
      %5506 = vmatprep.subr.mxu0 0.0
      %v5507 = vand.u32 %v3788, 4294901760
      %5508 = vmatpush1.msra.mxu0 %v5507
      %5509 = vmatprep.subr.mxu0 0.0
      %v5510 = vand.u32 %v3789, 4294901760
      %5511 = vmatpush1.msra.mxu0 %v5510
      %5512 = vmatprep.subr.mxu0 0.0
      %v5513 = vand.u32 %v3790, 4294901760
      %5514 = vmatpush1.msra.mxu0 %v5513
      %5515 = vmatprep.subr.mxu0 0.0
      %v5516 = vand.u32 %v3791, 4294901760
      %5517 = vmatpush1.msra.mxu0 %v5516
      %5518 = vmatprep.subr.mxu0 0.0
      %v5519 = vand.u32 %v3792, 4294901760
      %5520 = vmatpush1.msra.mxu0 %v5519
      %5521 = vmatprep.subr.mxu0 0.0
      %v5522 = vand.u32 %v3793, 4294901760
      %5523 = vmatpush1.msra.mxu0 %v5522
      %5524 = vmatprep.subr.mxu0 0.0
      %v5525 = vand.u32 %v3794, 4294901760
      %5526 = vmatpush1.msra.mxu0 %v5525
      %5527 = vmatprep.subr.mxu0 0.0
      %v5528 = vand.u32 %v3795, 4294901760
      %5529 = vmatpush1.msra.mxu0 %v5528
      %5530 = vmatprep.subr.mxu0 0.0
      %v5531 = vand.u32 %v3796, 4294901760
      %5532 = vmatpush1.msra.mxu0 %v5531
      %5533 = vmatprep.subr.mxu0 0.0
      %v5534 = vand.u32 %v3797, 4294901760
      %5535 = vmatpush1.msra.mxu0 %v5534
      %5536 = vmatprep.subr.mxu0 0.0
      %v5537 = vand.u32 %v3798, 4294901760
      %5538 = vmatpush1.msra.mxu0 %v5537
      %5539 = vmatprep.subr.mxu0 0.0
      %v5540 = vand.u32 %v3799, 4294901760
      %5541 = vmatpush1.msra.mxu0 %v5540
      %5542 = vmatprep.subr.mxu0 0.0
      %v5543 = vand.u32 %v3800, 4294901760
      %5544 = vmatpush1.msra.mxu0 %v5543
      %5545 = vmatprep.subr.mxu0 0.0
      %v5546 = vand.u32 %v3801, 4294901760
      %5547 = vmatpush1.msra.mxu0 %v5546
      %5548 = vmatprep.subr.mxu0 0.0
      %v5549 = vand.u32 %v3802, 4294901760
      %5550 = vmatpush1.msra.mxu0 %v5549
      %5551 = vmatprep.subr.mxu0 0.0
      %v5552 = vand.u32 %v3803, 4294901760
      %5553 = vmatpush1.msra.mxu0 %v5552
      %5554 = vmatprep.subr.mxu0 0.0
      %v5555 = vand.u32 %v3804, 4294901760
      %5556 = vmatpush1.msra.mxu0 %v5555
      %5557 = vmatprep.subr.mxu0 0.0
      %v5558 = vand.u32 %v3805, 4294901760
      %5559 = vmatpush1.msra.mxu0 %v5558
      %5560 = vmatprep.subr.mxu0 0.0
      %v5561 = vand.u32 %v3806, 4294901760
      %5562 = vmatpush1.msra.mxu0 %v5561
      %5563 = vmatprep.subr.mxu0 0.0
      %v5564 = vand.u32 %v3807, 4294901760
      %5565 = vmatpush1.msra.mxu0 %v5564
      %5566 = vmatprep.subr.mxu0 0.0
      %v5567 = vand.u32 %v3808, 4294901760
      %5568 = vmatpush1.msra.mxu0 %v5567
      %5569 = vmatprep.subr.mxu0 0.0
      %v5570 = vand.u32 %v3809, 4294901760
      %5571 = vmatpush1.msra.mxu0 %v5570
      %5572 = vmatprep.subr.mxu0 0.0
      %v5573 = vand.u32 %v3810, 4294901760
      %5574 = vmatpush1.msra.mxu0 %v5573
      %5575 = vmatprep.subr.mxu0 0.0
      %v5576 = vand.u32 %v3811, 4294901760
      %5577 = vmatpush1.msra.mxu0 %v5576
      %5578 = vmatprep.subr.mxu0 0.0
      %v5579 = vand.u32 %v3812, 4294901760
      %5580 = vmatpush1.msra.mxu0 %v5579
      %5581 = vmatprep.subr.mxu0 0.0
      %v5582 = vand.u32 %v3813, 4294901760
      %5583 = vmatpush1.msra.mxu0 %v5582
      %5584 = vmatprep.subr.mxu0 0.0
      %v5585 = vand.u32 %v3814, 4294901760
      %5586 = vmatpush1.msra.mxu0 %v5585
      %5587 = vmatprep.subr.mxu0 0.0
      %v5588 = vand.u32 %v3815, 4294901760
      %5589 = vmatpush1.msra.mxu0 %v5588
      %5590 = vmatprep.subr.mxu0 0.0
      %v5591 = vand.u32 %v3816, 4294901760
      %5592 = vmatpush1.msra.mxu0 %v5591
      %5593 = vmatprep.subr.mxu0 0.0
      %v5594 = vand.u32 %v3817, 4294901760
      %5595 = vmatpush1.msra.mxu0 %v5594
      %5596 = vmatprep.subr.mxu0 0.0
      %v5597 = vand.u32 %v3818, 4294901760
      %5598 = vmatpush1.msra.mxu0 %v5597
      %v5599 = vand.u32 %v3750, 4294901760
      %5600 = vmatprep.mubr.f32.mxu0 %v5599
      %v5601 = vand.u32 %v3749, 4294901760
      %5602 = vmatmul.mubr.f32.gmra.mrb[0].mxu0 %v5601
      %v5603 = vpop.f32.mrb[0].mxu0
      %v5604 = vadd.f32 %v5500, %v5603
      %v5605 = vpop.f32.mrb[0].mxu0
      %5606 = vdwg.mxu0
      %5607 = vmatprep.subr.mxu0 0.0
      %v5608 = vand.u32 %v3819, 4294901760
      %5609 = vmatpush1.msra.mxu0 %v5608
      %5610 = vmatprep.subr.mxu0 0.0
      %v5611 = vand.u32 %v3820, 4294901760
      %5612 = vmatpush1.msra.mxu0 %v5611
      %5613 = vmatprep.subr.mxu0 0.0
      %v5614 = vand.u32 %v3821, 4294901760
      %5615 = vmatpush1.msra.mxu0 %v5614
      %5616 = vmatprep.subr.mxu0 0.0
      %v5617 = vand.u32 %v3822, 4294901760
      %5618 = vmatpush1.msra.mxu0 %v5617
      %5619 = vmatprep.subr.mxu0 0.0
      %v5620 = vand.u32 %v3823, 4294901760
      %5621 = vmatpush1.msra.mxu0 %v5620
      %5622 = vmatprep.subr.mxu0 0.0
      %v5623 = vand.u32 %v3824, 4294901760
      %5624 = vmatpush1.msra.mxu0 %v5623
      %5625 = vmatprep.subr.mxu0 0.0
      %v5626 = vand.u32 %v3825, 4294901760
      %5627 = vmatpush1.msra.mxu0 %v5626
      %5628 = vmatprep.subr.mxu0 0.0
      %v5629 = vand.u32 %v3826, 4294901760
      %5630 = vmatpush1.msra.mxu0 %v5629
      %5631 = vmatprep.subr.mxu0 0.0
      %v5632 = vand.u32 %v3827, 4294901760
      %5633 = vmatpush1.msra.mxu0 %v5632
      %5634 = vmatprep.subr.mxu0 0.0
      %v5635 = vand.u32 %v3828, 4294901760
      %5636 = vmatpush1.msra.mxu0 %v5635
      %5637 = vmatprep.subr.mxu0 0.0
      %v5638 = vand.u32 %v3829, 4294901760
      %5639 = vmatpush1.msra.mxu0 %v5638
      %5640 = vmatprep.subr.mxu0 0.0
      %v5641 = vand.u32 %v3830, 4294901760
      %5642 = vmatpush1.msra.mxu0 %v5641
      %5643 = vmatprep.subr.mxu0 0.0
      %v5644 = vand.u32 %v3831, 4294901760
      %5645 = vmatpush1.msra.mxu0 %v5644
      %5646 = vmatprep.subr.mxu0 0.0
      %v5647 = vand.u32 %v3832, 4294901760
      %5648 = vmatpush1.msra.mxu0 %v5647
      %5649 = vmatprep.subr.mxu0 0.0
      %v5650 = vand.u32 %v3833, 4294901760
      %5651 = vmatpush1.msra.mxu0 %v5650
      %5652 = vmatprep.subr.mxu0 0.0
      %v5653 = vand.u32 %v3834, 4294901760
      %5654 = vmatpush1.msra.mxu0 %v5653
      %5655 = vmatprep.subr.mxu0 0.0
      %v5656 = vand.u32 %v3835, 4294901760
      %5657 = vmatpush1.msra.mxu0 %v5656
      %5658 = vmatprep.subr.mxu0 0.0
      %v5659 = vand.u32 %v3836, 4294901760
      %5660 = vmatpush1.msra.mxu0 %v5659
      %5661 = vmatprep.subr.mxu0 0.0
      %v5662 = vand.u32 %v3837, 4294901760
      %5663 = vmatpush1.msra.mxu0 %v5662
      %5664 = vmatprep.subr.mxu0 0.0
      %v5665 = vand.u32 %v3838, 4294901760
      %5666 = vmatpush1.msra.mxu0 %v5665
      %5667 = vmatprep.subr.mxu0 0.0
      %v5668 = vand.u32 %v3839, 4294901760
      %5669 = vmatpush1.msra.mxu0 %v5668
      %5670 = vmatprep.subr.mxu0 0.0
      %v5671 = vand.u32 %v3840, 4294901760
      %5672 = vmatpush1.msra.mxu0 %v5671
      %5673 = vmatprep.subr.mxu0 0.0
      %v5674 = vand.u32 %v3841, 4294901760
      %5675 = vmatpush1.msra.mxu0 %v5674
      %5676 = vmatprep.subr.mxu0 0.0
      %v5677 = vand.u32 %v3842, 4294901760
      %5678 = vmatpush1.msra.mxu0 %v5677
      %5679 = vmatprep.subr.mxu0 0.0
      %v5680 = vand.u32 %v3843, 4294901760
      %5681 = vmatpush1.msra.mxu0 %v5680
      %5682 = vmatprep.subr.mxu0 0.0
      %v5683 = vand.u32 %v3844, 4294901760
      %5684 = vmatpush1.msra.mxu0 %v5683
      %5685 = vmatprep.subr.mxu0 0.0
      %v5686 = vand.u32 %v3845, 4294901760
      %5687 = vmatpush1.msra.mxu0 %v5686
      %5688 = vmatprep.subr.mxu0 0.0
      %v5689 = vand.u32 %v3846, 4294901760
      %5690 = vmatpush1.msra.mxu0 %v5689
      %5691 = vmatprep.subr.mxu0 0.0
      %v5692 = vand.u32 %v3847, 4294901760
      %5693 = vmatpush1.msra.mxu0 %v5692
      %5694 = vmatprep.subr.mxu0 0.0
      %v5695 = vand.u32 %v3848, 4294901760
      %5696 = vmatpush1.msra.mxu0 %v5695
      %5697 = vmatprep.subr.mxu0 0.0
      %v5698 = vand.u32 %v3849, 4294901760
      %5699 = vmatpush1.msra.mxu0 %v5698
      %5700 = vmatprep.subr.mxu0 0.0
      %v5701 = vand.u32 %v3850, 4294901760
      %5702 = vmatpush1.msra.mxu0 %v5701
      %v5703 = vand.u32 %v3752, 4294901760
      %v5704 = vsub.f32 %v3752, %v5703
      %v5705 = vand.u32 %v5704, 4294901760
      %v5706 = vsub.f32 %v5704, %v5705
      %v5707 = vand.u32 %v5706, 4294901760
      %5708 = vmatprep.mubr.f32.mxu0 %v5707
      %v5709 = vand.u32 %v3751, 4294901760
      %v5710 = vsub.f32 %v3751, %v5709
      %v5711 = vand.u32 %v5710, 4294901760
      %v5712 = vsub.f32 %v5710, %v5711
      %v5713 = vand.u32 %v5712, 4294901760
      %5714 = vmatmul.mubr.f32.gmra.mrb[0].mxu0 %v5713
      %v5715 = vpop.f32.mrb[0].mxu0
      %v5716 = vadd.f32 %v5604, %v5715
      %v5717 = vpop.f32.mrb[0].mxu0
      %5718 = vdwg.mxu0
      %5719 = vmatprep.subr.mxu0 0.0
      %v5720 = vand.u32 %v3819, 4294901760
      %v5721 = vsub.f32 %v3819, %v5720
      %v5722 = vand.u32 %v5721, 4294901760
      %v5723 = vsub.f32 %v5721, %v5722
      %v5724 = vand.u32 %v5723, 4294901760
      %5725 = vmatpush1.msra.mxu0 %v5724
      %5726 = vmatprep.subr.mxu0 0.0
      %v5727 = vand.u32 %v3820, 4294901760
      %v5728 = vsub.f32 %v3820, %v5727
      %v5729 = vand.u32 %v5728, 4294901760
      %v5730 = vsub.f32 %v5728, %v5729
      %v5731 = vand.u32 %v5730, 4294901760
      %5732 = vmatpush1.msra.mxu0 %v5731
      %5733 = vmatprep.subr.mxu0 0.0
      %v5734 = vand.u32 %v3821, 4294901760
      %v5735 = vsub.f32 %v3821, %v5734
      %v5736 = vand.u32 %v5735, 4294901760
      %v5737 = vsub.f32 %v5735, %v5736
      %v5738 = vand.u32 %v5737, 4294901760
      %5739 = vmatpush1.msra.mxu0 %v5738
      %5740 = vmatprep.subr.mxu0 0.0
      %v5741 = vand.u32 %v3822, 4294901760
      %v5742 = vsub.f32 %v3822, %v5741
      %v5743 = vand.u32 %v5742, 4294901760
      %v5744 = vsub.f32 %v5742, %v5743
      %v5745 = vand.u32 %v5744, 4294901760
      %5746 = vmatpush1.msra.mxu0 %v5745
      %5747 = vmatprep.subr.mxu0 0.0
      %v5748 = vand.u32 %v3823, 4294901760
      %v5749 = vsub.f32 %v3823, %v5748
      %v5750 = vand.u32 %v5749, 4294901760
      %v5751 = vsub.f32 %v5749, %v5750
      %v5752 = vand.u32 %v5751, 4294901760
      %5753 = vmatpush1.msra.mxu0 %v5752
      %5754 = vmatprep.subr.mxu0 0.0
      %v5755 = vand.u32 %v3824, 4294901760
      %v5756 = vsub.f32 %v3824, %v5755
      %v5757 = vand.u32 %v5756, 4294901760
      %v5758 = vsub.f32 %v5756, %v5757
      %v5759 = vand.u32 %v5758, 4294901760
      %5760 = vmatpush1.msra.mxu0 %v5759
      %5761 = vmatprep.subr.mxu0 0.0
      %v5762 = vand.u32 %v3825, 4294901760
      %v5763 = vsub.f32 %v3825, %v5762
      %v5764 = vand.u32 %v5763, 4294901760
      %v5765 = vsub.f32 %v5763, %v5764
      %v5766 = vand.u32 %v5765, 4294901760
      %5767 = vmatpush1.msra.mxu0 %v5766
      %5768 = vmatprep.subr.mxu0 0.0
      %v5769 = vand.u32 %v3826, 4294901760
      %v5770 = vsub.f32 %v3826, %v5769
      %v5771 = vand.u32 %v5770, 4294901760
      %v5772 = vsub.f32 %v5770, %v5771
      %v5773 = vand.u32 %v5772, 4294901760
      %5774 = vmatpush1.msra.mxu0 %v5773
      %5775 = vmatprep.subr.mxu0 0.0
      %v5776 = vand.u32 %v3827, 4294901760
      %v5777 = vsub.f32 %v3827, %v5776
      %v5778 = vand.u32 %v5777, 4294901760
      %v5779 = vsub.f32 %v5777, %v5778
      %v5780 = vand.u32 %v5779, 4294901760
      %5781 = vmatpush1.msra.mxu0 %v5780
      %5782 = vmatprep.subr.mxu0 0.0
      %v5783 = vand.u32 %v3828, 4294901760
      %v5784 = vsub.f32 %v3828, %v5783
      %v5785 = vand.u32 %v5784, 4294901760
      %v5786 = vsub.f32 %v5784, %v5785
      %v5787 = vand.u32 %v5786, 4294901760
      %5788 = vmatpush1.msra.mxu0 %v5787
      %5789 = vmatprep.subr.mxu0 0.0
      %v5790 = vand.u32 %v3829, 4294901760
      %v5791 = vsub.f32 %v3829, %v5790
      %v5792 = vand.u32 %v5791, 4294901760
      %v5793 = vsub.f32 %v5791, %v5792
      %v5794 = vand.u32 %v5793, 4294901760
      %5795 = vmatpush1.msra.mxu0 %v5794
      %5796 = vmatprep.subr.mxu0 0.0
      %v5797 = vand.u32 %v3830, 4294901760
      %v5798 = vsub.f32 %v3830, %v5797
      %v5799 = vand.u32 %v5798, 4294901760
      %v5800 = vsub.f32 %v5798, %v5799
      %v5801 = vand.u32 %v5800, 4294901760
      %5802 = vmatpush1.msra.mxu0 %v5801
      %5803 = vmatprep.subr.mxu0 0.0
      %v5804 = vand.u32 %v3831, 4294901760
      %v5805 = vsub.f32 %v3831, %v5804
      %v5806 = vand.u32 %v5805, 4294901760
      %v5807 = vsub.f32 %v5805, %v5806
      %v5808 = vand.u32 %v5807, 4294901760
      %5809 = vmatpush1.msra.mxu0 %v5808
      %5810 = vmatprep.subr.mxu0 0.0
      %v5811 = vand.u32 %v3832, 4294901760
      %v5812 = vsub.f32 %v3832, %v5811
      %v5813 = vand.u32 %v5812, 4294901760
      %v5814 = vsub.f32 %v5812, %v5813
      %v5815 = vand.u32 %v5814, 4294901760
      %5816 = vmatpush1.msra.mxu0 %v5815
      %5817 = vmatprep.subr.mxu0 0.0
      %v5818 = vand.u32 %v3833, 4294901760
      %v5819 = vsub.f32 %v3833, %v5818
      %v5820 = vand.u32 %v5819, 4294901760
      %v5821 = vsub.f32 %v5819, %v5820
      %v5822 = vand.u32 %v5821, 4294901760
      %5823 = vmatpush1.msra.mxu0 %v5822
      %5824 = vmatprep.subr.mxu0 0.0
      %v5825 = vand.u32 %v3834, 4294901760
      %v5826 = vsub.f32 %v3834, %v5825
      %v5827 = vand.u32 %v5826, 4294901760
      %v5828 = vsub.f32 %v5826, %v5827
      %v5829 = vand.u32 %v5828, 4294901760
      %5830 = vmatpush1.msra.mxu0 %v5829
      %5831 = vmatprep.subr.mxu0 0.0
      %v5832 = vand.u32 %v3835, 4294901760
      %v5833 = vsub.f32 %v3835, %v5832
      %v5834 = vand.u32 %v5833, 4294901760
      %v5835 = vsub.f32 %v5833, %v5834
      %v5836 = vand.u32 %v5835, 4294901760
      %5837 = vmatpush1.msra.mxu0 %v5836
      %5838 = vmatprep.subr.mxu0 0.0
      %v5839 = vand.u32 %v3836, 4294901760
      %v5840 = vsub.f32 %v3836, %v5839
      %v5841 = vand.u32 %v5840, 4294901760
      %v5842 = vsub.f32 %v5840, %v5841
      %v5843 = vand.u32 %v5842, 4294901760
      %5844 = vmatpush1.msra.mxu0 %v5843
      %5845 = vmatprep.subr.mxu0 0.0
      %v5846 = vand.u32 %v3837, 4294901760
      %v5847 = vsub.f32 %v3837, %v5846
      %v5848 = vand.u32 %v5847, 4294901760
      %v5849 = vsub.f32 %v5847, %v5848
      %v5850 = vand.u32 %v5849, 4294901760
      %5851 = vmatpush1.msra.mxu0 %v5850
      %5852 = vmatprep.subr.mxu0 0.0
      %v5853 = vand.u32 %v3838, 4294901760
      %v5854 = vsub.f32 %v3838, %v5853
      %v5855 = vand.u32 %v5854, 4294901760
      %v5856 = vsub.f32 %v5854, %v5855
      %v5857 = vand.u32 %v5856, 4294901760
      %5858 = vmatpush1.msra.mxu0 %v5857
      %5859 = vmatprep.subr.mxu0 0.0
      %v5860 = vand.u32 %v3839, 4294901760
      %v5861 = vsub.f32 %v3839, %v5860
      %v5862 = vand.u32 %v5861, 4294901760
      %v5863 = vsub.f32 %v5861, %v5862
      %v5864 = vand.u32 %v5863, 4294901760
      %5865 = vmatpush1.msra.mxu0 %v5864
      %5866 = vmatprep.subr.mxu0 0.0
      %v5867 = vand.u32 %v3840, 4294901760
      %v5868 = vsub.f32 %v3840, %v5867
      %v5869 = vand.u32 %v5868, 4294901760
      %v5870 = vsub.f32 %v5868, %v5869
      %v5871 = vand.u32 %v5870, 4294901760
      %5872 = vmatpush1.msra.mxu0 %v5871
      %5873 = vmatprep.subr.mxu0 0.0
      %v5874 = vand.u32 %v3841, 4294901760
      %v5875 = vsub.f32 %v3841, %v5874
      %v5876 = vand.u32 %v5875, 4294901760
      %v5877 = vsub.f32 %v5875, %v5876
      %v5878 = vand.u32 %v5877, 4294901760
      %5879 = vmatpush1.msra.mxu0 %v5878
      %5880 = vmatprep.subr.mxu0 0.0
      %v5881 = vand.u32 %v3842, 4294901760
      %v5882 = vsub.f32 %v3842, %v5881
      %v5883 = vand.u32 %v5882, 4294901760
      %v5884 = vsub.f32 %v5882, %v5883
      %v5885 = vand.u32 %v5884, 4294901760
      %5886 = vmatpush1.msra.mxu0 %v5885
      %5887 = vmatprep.subr.mxu0 0.0
      %v5888 = vand.u32 %v3843, 4294901760
      %v5889 = vsub.f32 %v3843, %v5888
      %v5890 = vand.u32 %v5889, 4294901760
      %v5891 = vsub.f32 %v5889, %v5890
      %v5892 = vand.u32 %v5891, 4294901760
      %5893 = vmatpush1.msra.mxu0 %v5892
      %5894 = vmatprep.subr.mxu0 0.0
      %v5895 = vand.u32 %v3844, 4294901760
      %v5896 = vsub.f32 %v3844, %v5895
      %v5897 = vand.u32 %v5896, 4294901760
      %v5898 = vsub.f32 %v5896, %v5897
      %v5899 = vand.u32 %v5898, 4294901760
      %5900 = vmatpush1.msra.mxu0 %v5899
      %5901 = vmatprep.subr.mxu0 0.0
      %v5902 = vand.u32 %v3845, 4294901760
      %v5903 = vsub.f32 %v3845, %v5902
      %v5904 = vand.u32 %v5903, 4294901760
      %v5905 = vsub.f32 %v5903, %v5904
      %v5906 = vand.u32 %v5905, 4294901760
      %5907 = vmatpush1.msra.mxu0 %v5906
      %5908 = vmatprep.subr.mxu0 0.0
      %v5909 = vand.u32 %v3846, 4294901760
      %v5910 = vsub.f32 %v3846, %v5909
      %v5911 = vand.u32 %v5910, 4294901760
      %v5912 = vsub.f32 %v5910, %v5911
      %v5913 = vand.u32 %v5912, 4294901760
      %5914 = vmatpush1.msra.mxu0 %v5913
      %5915 = vmatprep.subr.mxu0 0.0
      %v5916 = vand.u32 %v3847, 4294901760
      %v5917 = vsub.f32 %v3847, %v5916
      %v5918 = vand.u32 %v5917, 4294901760
      %v5919 = vsub.f32 %v5917, %v5918
      %v5920 = vand.u32 %v5919, 4294901760
      %5921 = vmatpush1.msra.mxu0 %v5920
      %5922 = vmatprep.subr.mxu0 0.0
      %v5923 = vand.u32 %v3848, 4294901760
      %v5924 = vsub.f32 %v3848, %v5923
      %v5925 = vand.u32 %v5924, 4294901760
      %v5926 = vsub.f32 %v5924, %v5925
      %v5927 = vand.u32 %v5926, 4294901760
      %5928 = vmatpush1.msra.mxu0 %v5927
      %5929 = vmatprep.subr.mxu0 0.0
      %v5930 = vand.u32 %v3849, 4294901760
      %v5931 = vsub.f32 %v3849, %v5930
      %v5932 = vand.u32 %v5931, 4294901760
      %v5933 = vsub.f32 %v5931, %v5932
      %v5934 = vand.u32 %v5933, 4294901760
      %5935 = vmatpush1.msra.mxu0 %v5934
      %5936 = vmatprep.subr.mxu0 0.0
      %v5937 = vand.u32 %v3850, 4294901760
      %v5938 = vsub.f32 %v3850, %v5937
      %v5939 = vand.u32 %v5938, 4294901760
      %v5940 = vsub.f32 %v5938, %v5939
      %v5941 = vand.u32 %v5940, 4294901760
      %5942 = vmatpush1.msra.mxu0 %v5941
      %v5943 = vand.u32 %v3752, 4294901760
      %5944 = vmatprep.mubr.f32.mxu0 %v5943
      %v5945 = vand.u32 %v3751, 4294901760
      %5946 = vmatmul.mubr.f32.gmra.mrb[0].mxu0 %v5945
      %v5947 = vpop.f32.mrb[0].mxu0
      %v5948 = vadd.f32 %v5716, %v5947
      %v5949 = vpop.f32.mrb[0].mxu0
      %5950 = vdwg.mxu0
      %5951 = vmatprep.subr.mxu0 0.0
      %v5952 = vand.u32 %v3819, 4294901760
      %v5953 = vsub.f32 %v3819, %v5952
      %5954 = vmatpush1.msra.mxu0 %v5953
      %5955 = vmatprep.subr.mxu0 0.0
      %v5956 = vand.u32 %v3820, 4294901760
      %v5957 = vsub.f32 %v3820, %v5956
      %5958 = vmatpush1.msra.mxu0 %v5957
      %5959 = vmatprep.subr.mxu0 0.0
      %v5960 = vand.u32 %v3821, 4294901760
      %v5961 = vsub.f32 %v3821, %v5960
      %5962 = vmatpush1.msra.mxu0 %v5961
      %5963 = vmatprep.subr.mxu0 0.0
      %v5964 = vand.u32 %v3822, 4294901760
      %v5965 = vsub.f32 %v3822, %v5964
      %5966 = vmatpush1.msra.mxu0 %v5965
      %5967 = vmatprep.subr.mxu0 0.0
      %v5968 = vand.u32 %v3823, 4294901760
      %v5969 = vsub.f32 %v3823, %v5968
      %5970 = vmatpush1.msra.mxu0 %v5969
      %5971 = vmatprep.subr.mxu0 0.0
      %v5972 = vand.u32 %v3824, 4294901760
      %v5973 = vsub.f32 %v3824, %v5972
      %5974 = vmatpush1.msra.mxu0 %v5973
      %5975 = vmatprep.subr.mxu0 0.0
      %v5976 = vand.u32 %v3825, 4294901760
      %v5977 = vsub.f32 %v3825, %v5976
      %5978 = vmatpush1.msra.mxu0 %v5977
      %5979 = vmatprep.subr.mxu0 0.0
      %v5980 = vand.u32 %v3826, 4294901760
      %v5981 = vsub.f32 %v3826, %v5980
      %5982 = vmatpush1.msra.mxu0 %v5981
      %5983 = vmatprep.subr.mxu0 0.0
      %v5984 = vand.u32 %v3827, 4294901760
      %v5985 = vsub.f32 %v3827, %v5984
      %5986 = vmatpush1.msra.mxu0 %v5985
      %5987 = vmatprep.subr.mxu0 0.0
      %v5988 = vand.u32 %v3828, 4294901760
      %v5989 = vsub.f32 %v3828, %v5988
      %5990 = vmatpush1.msra.mxu0 %v5989
      %5991 = vmatprep.subr.mxu0 0.0
      %v5992 = vand.u32 %v3829, 4294901760
      %v5993 = vsub.f32 %v3829, %v5992
      %5994 = vmatpush1.msra.mxu0 %v5993
      %5995 = vmatprep.subr.mxu0 0.0
      %v5996 = vand.u32 %v3830, 4294901760
      %v5997 = vsub.f32 %v3830, %v5996
      %5998 = vmatpush1.msra.mxu0 %v5997
      %5999 = vmatprep.subr.mxu0 0.0
      %v6000 = vand.u32 %v3831, 4294901760
      %v6001 = vsub.f32 %v3831, %v6000
      %6002 = vmatpush1.msra.mxu0 %v6001
      %6003 = vmatprep.subr.mxu0 0.0
      %v6004 = vand.u32 %v3832, 4294901760
      %v6005 = vsub.f32 %v3832, %v6004
      %6006 = vmatpush1.msra.mxu0 %v6005
      %6007 = vmatprep.subr.mxu0 0.0
      %v6008 = vand.u32 %v3833, 4294901760
      %v6009 = vsub.f32 %v3833, %v6008
      %6010 = vmatpush1.msra.mxu0 %v6009
      %6011 = vmatprep.subr.mxu0 0.0
      %v6012 = vand.u32 %v3834, 4294901760
      %v6013 = vsub.f32 %v3834, %v6012
      %6014 = vmatpush1.msra.mxu0 %v6013
      %6015 = vmatprep.subr.mxu0 0.0
      %v6016 = vand.u32 %v3835, 4294901760
      %v6017 = vsub.f32 %v3835, %v6016
      %6018 = vmatpush1.msra.mxu0 %v6017
      %6019 = vmatprep.subr.mxu0 0.0
      %v6020 = vand.u32 %v3836, 4294901760
      %v6021 = vsub.f32 %v3836, %v6020
      %6022 = vmatpush1.msra.mxu0 %v6021
      %6023 = vmatprep.subr.mxu0 0.0
      %v6024 = vand.u32 %v3837, 4294901760
      %v6025 = vsub.f32 %v3837, %v6024
      %6026 = vmatpush1.msra.mxu0 %v6025
      %6027 = vmatprep.subr.mxu0 0.0
      %v6028 = vand.u32 %v3838, 4294901760
      %v6029 = vsub.f32 %v3838, %v6028
      %6030 = vmatpush1.msra.mxu0 %v6029
      %6031 = vmatprep.subr.mxu0 0.0
      %v6032 = vand.u32 %v3839, 4294901760
      %v6033 = vsub.f32 %v3839, %v6032
      %6034 = vmatpush1.msra.mxu0 %v6033
      %6035 = vmatprep.subr.mxu0 0.0
      %v6036 = vand.u32 %v3840, 4294901760
      %v6037 = vsub.f32 %v3840, %v6036
      %6038 = vmatpush1.msra.mxu0 %v6037
      %6039 = vmatprep.subr.mxu0 0.0
      %v6040 = vand.u32 %v3841, 4294901760
      %v6041 = vsub.f32 %v3841, %v6040
      %6042 = vmatpush1.msra.mxu0 %v6041
      %6043 = vmatprep.subr.mxu0 0.0
      %v6044 = vand.u32 %v3842, 4294901760
      %v6045 = vsub.f32 %v3842, %v6044
      %6046 = vmatpush1.msra.mxu0 %v6045
      %6047 = vmatprep.subr.mxu0 0.0
      %v6048 = vand.u32 %v3843, 4294901760
      %v6049 = vsub.f32 %v3843, %v6048
      %6050 = vmatpush1.msra.mxu0 %v6049
      %6051 = vmatprep.subr.mxu0 0.0
      %v6052 = vand.u32 %v3844, 4294901760
      %v6053 = vsub.f32 %v3844, %v6052
      %6054 = vmatpush1.msra.mxu0 %v6053
      %6055 = vmatprep.subr.mxu0 0.0
      %v6056 = vand.u32 %v3845, 4294901760
      %v6057 = vsub.f32 %v3845, %v6056
      %6058 = vmatpush1.msra.mxu0 %v6057
      %6059 = vmatprep.subr.mxu0 0.0
      %v6060 = vand.u32 %v3846, 4294901760
      %v6061 = vsub.f32 %v3846, %v6060
      %6062 = vmatpush1.msra.mxu0 %v6061
      %6063 = vmatprep.subr.mxu0 0.0
      %v6064 = vand.u32 %v3847, 4294901760
      %v6065 = vsub.f32 %v3847, %v6064
      %6066 = vmatpush1.msra.mxu0 %v6065
      %6067 = vmatprep.subr.mxu0 0.0
      %v6068 = vand.u32 %v3848, 4294901760
      %v6069 = vsub.f32 %v3848, %v6068
      %6070 = vmatpush1.msra.mxu0 %v6069
      %6071 = vmatprep.subr.mxu0 0.0
      %v6072 = vand.u32 %v3849, 4294901760
      %v6073 = vsub.f32 %v3849, %v6072
      %6074 = vmatpush1.msra.mxu0 %v6073
      %6075 = vmatprep.subr.mxu0 0.0
      %v6076 = vand.u32 %v3850, 4294901760
      %v6077 = vsub.f32 %v3850, %v6076
      %6078 = vmatpush1.msra.mxu0 %v6077
      %v6079 = vand.u32 %v3752, 4294901760
      %v6080 = vsub.f32 %v3752, %v6079
      %6081 = vmatprep.mubr.f32.mxu0 %v6080
      %v6082 = vand.u32 %v3751, 4294901760
      %v6083 = vsub.f32 %v3751, %v6082
      %6084 = vmatmul.mubr.f32.gmra.mrb[0].mxu0 %v6083
      %v6085 = vpop.f32.mrb[0].mxu0
      %v6086 = vadd.f32 %v5948, %v6085
      %v6087 = vpop.f32.mrb[0].mxu0
      %6088 = vdwg.mxu0
      %6089 = vmatprep.subr.mxu0 0.0
      %v6090 = vand.u32 %v3819, 4294901760
      %6091 = vmatpush1.msra.mxu0 %v6090
      %6092 = vmatprep.subr.mxu0 0.0
      %v6093 = vand.u32 %v3820, 4294901760
      %6094 = vmatpush1.msra.mxu0 %v6093
      %6095 = vmatprep.subr.mxu0 0.0
      %v6096 = vand.u32 %v3821, 4294901760
      %6097 = vmatpush1.msra.mxu0 %v6096
      %6098 = vmatprep.subr.mxu0 0.0
      %v6099 = vand.u32 %v3822, 4294901760
      %6100 = vmatpush1.msra.mxu0 %v6099
      %6101 = vmatprep.subr.mxu0 0.0
      %v6102 = vand.u32 %v3823, 4294901760
      %6103 = vmatpush1.msra.mxu0 %v6102
      %6104 = vmatprep.subr.mxu0 0.0
      %v6105 = vand.u32 %v3824, 4294901760
      %6106 = vmatpush1.msra.mxu0 %v6105
      %6107 = vmatprep.subr.mxu0 0.0
      %v6108 = vand.u32 %v3825, 4294901760
      %6109 = vmatpush1.msra.mxu0 %v6108
      %6110 = vmatprep.subr.mxu0 0.0
      %v6111 = vand.u32 %v3826, 4294901760
      %6112 = vmatpush1.msra.mxu0 %v6111
      %6113 = vmatprep.subr.mxu0 0.0
      %v6114 = vand.u32 %v3827, 4294901760
      %6115 = vmatpush1.msra.mxu0 %v6114
      %6116 = vmatprep.subr.mxu0 0.0
      %v6117 = vand.u32 %v3828, 4294901760
      %6118 = vmatpush1.msra.mxu0 %v6117
      %6119 = vmatprep.subr.mxu0 0.0
      %v6120 = vand.u32 %v3829, 4294901760
      %6121 = vmatpush1.msra.mxu0 %v6120
      %6122 = vmatprep.subr.mxu0 0.0
      %v6123 = vand.u32 %v3830, 4294901760
      %6124 = vmatpush1.msra.mxu0 %v6123
      %6125 = vmatprep.subr.mxu0 0.0
      %v6126 = vand.u32 %v3831, 4294901760
      %6127 = vmatpush1.msra.mxu0 %v6126
      %6128 = vmatprep.subr.mxu0 0.0
      %v6129 = vand.u32 %v3832, 4294901760
      %6130 = vmatpush1.msra.mxu0 %v6129
      %6131 = vmatprep.subr.mxu0 0.0
      %v6132 = vand.u32 %v3833, 4294901760
      %6133 = vmatpush1.msra.mxu0 %v6132
      %6134 = vmatprep.subr.mxu0 0.0
      %v6135 = vand.u32 %v3834, 4294901760
      %6136 = vmatpush1.msra.mxu0 %v6135
      %6137 = vmatprep.subr.mxu0 0.0
      %v6138 = vand.u32 %v3835, 4294901760
      %6139 = vmatpush1.msra.mxu0 %v6138
      %6140 = vmatprep.subr.mxu0 0.0
      %v6141 = vand.u32 %v3836, 4294901760
      %6142 = vmatpush1.msra.mxu0 %v6141
      %6143 = vmatprep.subr.mxu0 0.0
      %v6144 = vand.u32 %v3837, 4294901760
      %6145 = vmatpush1.msra.mxu0 %v6144
      %6146 = vmatprep.subr.mxu0 0.0
      %v6147 = vand.u32 %v3838, 4294901760
      %6148 = vmatpush1.msra.mxu0 %v6147
      %6149 = vmatprep.subr.mxu0 0.0
      %v6150 = vand.u32 %v3839, 4294901760
      %6151 = vmatpush1.msra.mxu0 %v6150
      %6152 = vmatprep.subr.mxu0 0.0
      %v6153 = vand.u32 %v3840, 4294901760
      %6154 = vmatpush1.msra.mxu0 %v6153
      %6155 = vmatprep.subr.mxu0 0.0
      %v6156 = vand.u32 %v3841, 4294901760
      %6157 = vmatpush1.msra.mxu0 %v6156
      %6158 = vmatprep.subr.mxu0 0.0
      %v6159 = vand.u32 %v3842, 4294901760
      %6160 = vmatpush1.msra.mxu0 %v6159
      %6161 = vmatprep.subr.mxu0 0.0
      %v6162 = vand.u32 %v3843, 4294901760
      %6163 = vmatpush1.msra.mxu0 %v6162
      %6164 = vmatprep.subr.mxu0 0.0
      %v6165 = vand.u32 %v3844, 4294901760
      %6166 = vmatpush1.msra.mxu0 %v6165
      %6167 = vmatprep.subr.mxu0 0.0
      %v6168 = vand.u32 %v3845, 4294901760
      %6169 = vmatpush1.msra.mxu0 %v6168
      %6170 = vmatprep.subr.mxu0 0.0
      %v6171 = vand.u32 %v3846, 4294901760
      %6172 = vmatpush1.msra.mxu0 %v6171
      %6173 = vmatprep.subr.mxu0 0.0
      %v6174 = vand.u32 %v3847, 4294901760
      %6175 = vmatpush1.msra.mxu0 %v6174
      %6176 = vmatprep.subr.mxu0 0.0
      %v6177 = vand.u32 %v3848, 4294901760
      %6178 = vmatpush1.msra.mxu0 %v6177
      %6179 = vmatprep.subr.mxu0 0.0
      %v6180 = vand.u32 %v3849, 4294901760
      %6181 = vmatpush1.msra.mxu0 %v6180
      %6182 = vmatprep.subr.mxu0 0.0
      %v6183 = vand.u32 %v3850, 4294901760
      %6184 = vmatpush1.msra.mxu0 %v6183
      %v6185 = vand.u32 %v3752, 4294901760
      %v6186 = vsub.f32 %v3752, %v6185
      %v6187 = vand.u32 %v6186, 4294901760
      %6188 = vmatprep.mubr.f32.mxu0 %v6187
      %v6189 = vand.u32 %v3751, 4294901760
      %v6190 = vsub.f32 %v3751, %v6189
      %v6191 = vand.u32 %v6190, 4294901760
      %6192 = vmatmul.mubr.f32.gmra.mrb[0].mxu0 %v6191
      %v6193 = vpop.f32.mrb[0].mxu0
      %v6194 = vadd.f32 %v6086, %v6193
      %v6195 = vpop.f32.mrb[0].mxu0
      %6196 = vdwg.mxu0
      %6197 = vmatprep.subr.mxu0 0.0
      %v6198 = vand.u32 %v3819, 4294901760
      %v6199 = vsub.f32 %v3819, %v6198
      %v6200 = vand.u32 %v6199, 4294901760
      %6201 = vmatpush1.msra.mxu0 %v6200
      %6202 = vmatprep.subr.mxu0 0.0
      %v6203 = vand.u32 %v3820, 4294901760
      %v6204 = vsub.f32 %v3820, %v6203
      %v6205 = vand.u32 %v6204, 4294901760
      %6206 = vmatpush1.msra.mxu0 %v6205
      %6207 = vmatprep.subr.mxu0 0.0
      %v6208 = vand.u32 %v3821, 4294901760
      %v6209 = vsub.f32 %v3821, %v6208
      %v6210 = vand.u32 %v6209, 4294901760
      %6211 = vmatpush1.msra.mxu0 %v6210
      %6212 = vmatprep.subr.mxu0 0.0
      %v6213 = vand.u32 %v3822, 4294901760
      %v6214 = vsub.f32 %v3822, %v6213
      %v6215 = vand.u32 %v6214, 4294901760
      %6216 = vmatpush1.msra.mxu0 %v6215
      %6217 = vmatprep.subr.mxu0 0.0
      %v6218 = vand.u32 %v3823, 4294901760
      %v6219 = vsub.f32 %v3823, %v6218
      %v6220 = vand.u32 %v6219, 4294901760
      %6221 = vmatpush1.msra.mxu0 %v6220
      %6222 = vmatprep.subr.mxu0 0.0
      %v6223 = vand.u32 %v3824, 4294901760
      %v6224 = vsub.f32 %v3824, %v6223
      %v6225 = vand.u32 %v6224, 4294901760
      %6226 = vmatpush1.msra.mxu0 %v6225
      %6227 = vmatprep.subr.mxu0 0.0
      %v6228 = vand.u32 %v3825, 4294901760
      %v6229 = vsub.f32 %v3825, %v6228
      %v6230 = vand.u32 %v6229, 4294901760
      %6231 = vmatpush1.msra.mxu0 %v6230
      %6232 = vmatprep.subr.mxu0 0.0
      %v6233 = vand.u32 %v3826, 4294901760
      %v6234 = vsub.f32 %v3826, %v6233
      %v6235 = vand.u32 %v6234, 4294901760
      %6236 = vmatpush1.msra.mxu0 %v6235
      %6237 = vmatprep.subr.mxu0 0.0
      %v6238 = vand.u32 %v3827, 4294901760
      %v6239 = vsub.f32 %v3827, %v6238
      %v6240 = vand.u32 %v6239, 4294901760
      %6241 = vmatpush1.msra.mxu0 %v6240
      %6242 = vmatprep.subr.mxu0 0.0
      %v6243 = vand.u32 %v3828, 4294901760
      %v6244 = vsub.f32 %v3828, %v6243
      %v6245 = vand.u32 %v6244, 4294901760
      %6246 = vmatpush1.msra.mxu0 %v6245
      %6247 = vmatprep.subr.mxu0 0.0
      %v6248 = vand.u32 %v3829, 4294901760
      %v6249 = vsub.f32 %v3829, %v6248
      %v6250 = vand.u32 %v6249, 4294901760
      %6251 = vmatpush1.msra.mxu0 %v6250
      %6252 = vmatprep.subr.mxu0 0.0
      %v6253 = vand.u32 %v3830, 4294901760
      %v6254 = vsub.f32 %v3830, %v6253
      %v6255 = vand.u32 %v6254, 4294901760
      %6256 = vmatpush1.msra.mxu0 %v6255
      %6257 = vmatprep.subr.mxu0 0.0
      %v6258 = vand.u32 %v3831, 4294901760
      %v6259 = vsub.f32 %v3831, %v6258
      %v6260 = vand.u32 %v6259, 4294901760
      %6261 = vmatpush1.msra.mxu0 %v6260
      %6262 = vmatprep.subr.mxu0 0.0
      %v6263 = vand.u32 %v3832, 4294901760
      %v6264 = vsub.f32 %v3832, %v6263
      %v6265 = vand.u32 %v6264, 4294901760
      %6266 = vmatpush1.msra.mxu0 %v6265
      %6267 = vmatprep.subr.mxu0 0.0
      %v6268 = vand.u32 %v3833, 4294901760
      %v6269 = vsub.f32 %v3833, %v6268
      %v6270 = vand.u32 %v6269, 4294901760
      %6271 = vmatpush1.msra.mxu0 %v6270
      %6272 = vmatprep.subr.mxu0 0.0
      %v6273 = vand.u32 %v3834, 4294901760
      %v6274 = vsub.f32 %v3834, %v6273
      %v6275 = vand.u32 %v6274, 4294901760
      %6276 = vmatpush1.msra.mxu0 %v6275
      %6277 = vmatprep.subr.mxu0 0.0
      %v6278 = vand.u32 %v3835, 4294901760
      %v6279 = vsub.f32 %v3835, %v6278
      %v6280 = vand.u32 %v6279, 4294901760
      %6281 = vmatpush1.msra.mxu0 %v6280
      %6282 = vmatprep.subr.mxu0 0.0
      %v6283 = vand.u32 %v3836, 4294901760
      %v6284 = vsub.f32 %v3836, %v6283
      %v6285 = vand.u32 %v6284, 4294901760
      %6286 = vmatpush1.msra.mxu0 %v6285
      %6287 = vmatprep.subr.mxu0 0.0
      %v6288 = vand.u32 %v3837, 4294901760
      %v6289 = vsub.f32 %v3837, %v6288
      %v6290 = vand.u32 %v6289, 4294901760
      %6291 = vmatpush1.msra.mxu0 %v6290
      %6292 = vmatprep.subr.mxu0 0.0
      %v6293 = vand.u32 %v3838, 4294901760
      %v6294 = vsub.f32 %v3838, %v6293
      %v6295 = vand.u32 %v6294, 4294901760
      %6296 = vmatpush1.msra.mxu0 %v6295
      %6297 = vmatprep.subr.mxu0 0.0
      %v6298 = vand.u32 %v3839, 4294901760
      %v6299 = vsub.f32 %v3839, %v6298
      %v6300 = vand.u32 %v6299, 4294901760
      %6301 = vmatpush1.msra.mxu0 %v6300
      %6302 = vmatprep.subr.mxu0 0.0
      %v6303 = vand.u32 %v3840, 4294901760
      %v6304 = vsub.f32 %v3840, %v6303
      %v6305 = vand.u32 %v6304, 4294901760
      %6306 = vmatpush1.msra.mxu0 %v6305
      %6307 = vmatprep.subr.mxu0 0.0
      %v6308 = vand.u32 %v3841, 4294901760
      %v6309 = vsub.f32 %v3841, %v6308
      %v6310 = vand.u32 %v6309, 4294901760
      %6311 = vmatpush1.msra.mxu0 %v6310
      %6312 = vmatprep.subr.mxu0 0.0
      %v6313 = vand.u32 %v3842, 4294901760
      %v6314 = vsub.f32 %v3842, %v6313
      %v6315 = vand.u32 %v6314, 4294901760
      %6316 = vmatpush1.msra.mxu0 %v6315
      %6317 = vmatprep.subr.mxu0 0.0
      %v6318 = vand.u32 %v3843, 4294901760
      %v6319 = vsub.f32 %v3843, %v6318
      %v6320 = vand.u32 %v6319, 4294901760
      %6321 = vmatpush1.msra.mxu0 %v6320
      %6322 = vmatprep.subr.mxu0 0.0
      %v6323 = vand.u32 %v3844, 4294901760
      %v6324 = vsub.f32 %v3844, %v6323
      %v6325 = vand.u32 %v6324, 4294901760
      %6326 = vmatpush1.msra.mxu0 %v6325
      %6327 = vmatprep.subr.mxu0 0.0
      %v6328 = vand.u32 %v3845, 4294901760
      %v6329 = vsub.f32 %v3845, %v6328
      %v6330 = vand.u32 %v6329, 4294901760
      %6331 = vmatpush1.msra.mxu0 %v6330
      %6332 = vmatprep.subr.mxu0 0.0
      %v6333 = vand.u32 %v3846, 4294901760
      %v6334 = vsub.f32 %v3846, %v6333
      %v6335 = vand.u32 %v6334, 4294901760
      %6336 = vmatpush1.msra.mxu0 %v6335
      %6337 = vmatprep.subr.mxu0 0.0
      %v6338 = vand.u32 %v3847, 4294901760
      %v6339 = vsub.f32 %v3847, %v6338
      %v6340 = vand.u32 %v6339, 4294901760
      %6341 = vmatpush1.msra.mxu0 %v6340
      %6342 = vmatprep.subr.mxu0 0.0
      %v6343 = vand.u32 %v3848, 4294901760
      %v6344 = vsub.f32 %v3848, %v6343
      %v6345 = vand.u32 %v6344, 4294901760
      %6346 = vmatpush1.msra.mxu0 %v6345
      %6347 = vmatprep.subr.mxu0 0.0
      %v6348 = vand.u32 %v3849, 4294901760
      %v6349 = vsub.f32 %v3849, %v6348
      %v6350 = vand.u32 %v6349, 4294901760
      %6351 = vmatpush1.msra.mxu0 %v6350
      %6352 = vmatprep.subr.mxu0 0.0
      %v6353 = vand.u32 %v3850, 4294901760
      %v6354 = vsub.f32 %v3850, %v6353
      %v6355 = vand.u32 %v6354, 4294901760
      %6356 = vmatpush1.msra.mxu0 %v6355
      %v6357 = vand.u32 %v3752, 4294901760
      %6358 = vmatprep.mubr.f32.mxu0 %v6357
      %v6359 = vand.u32 %v3751, 4294901760
      %6360 = vmatmul.mubr.f32.gmra.mrb[0].mxu0 %v6359
      %v6361 = vpop.f32.mrb[0].mxu0
      %v6362 = vadd.f32 %v6194, %v6361
      %v6363 = vpop.f32.mrb[0].mxu0
      %6364 = vdwg.mxu0
      %6365 = vmatprep.subr.mxu0 0.0
      %v6366 = vand.u32 %v3819, 4294901760
      %6367 = vmatpush1.msra.mxu0 %v6366
      %6368 = vmatprep.subr.mxu0 0.0
      %v6369 = vand.u32 %v3820, 4294901760
      %6370 = vmatpush1.msra.mxu0 %v6369
      %6371 = vmatprep.subr.mxu0 0.0
      %v6372 = vand.u32 %v3821, 4294901760
      %6373 = vmatpush1.msra.mxu0 %v6372
      %6374 = vmatprep.subr.mxu0 0.0
      %v6375 = vand.u32 %v3822, 4294901760
      %6376 = vmatpush1.msra.mxu0 %v6375
      %6377 = vmatprep.subr.mxu0 0.0
      %v6378 = vand.u32 %v3823, 4294901760
      %6379 = vmatpush1.msra.mxu0 %v6378
      %6380 = vmatprep.subr.mxu0 0.0
      %v6381 = vand.u32 %v3824, 4294901760
      %6382 = vmatpush1.msra.mxu0 %v6381
      %6383 = vmatprep.subr.mxu0 0.0
      %v6384 = vand.u32 %v3825, 4294901760
      %6385 = vmatpush1.msra.mxu0 %v6384
      %6386 = vmatprep.subr.mxu0 0.0
      %v6387 = vand.u32 %v3826, 4294901760
      %6388 = vmatpush1.msra.mxu0 %v6387
      %6389 = vmatprep.subr.mxu0 0.0
      %v6390 = vand.u32 %v3827, 4294901760
      %6391 = vmatpush1.msra.mxu0 %v6390
      %6392 = vmatprep.subr.mxu0 0.0
      %v6393 = vand.u32 %v3828, 4294901760
      %6394 = vmatpush1.msra.mxu0 %v6393
      %6395 = vmatprep.subr.mxu0 0.0
      %v6396 = vand.u32 %v3829, 4294901760
      %6397 = vmatpush1.msra.mxu0 %v6396
      %6398 = vmatprep.subr.mxu0 0.0
      %v6399 = vand.u32 %v3830, 4294901760
      %6400 = vmatpush1.msra.mxu0 %v6399
      %6401 = vmatprep.subr.mxu0 0.0
      %v6402 = vand.u32 %v3831, 4294901760
      %6403 = vmatpush1.msra.mxu0 %v6402
      %6404 = vmatprep.subr.mxu0 0.0
      %v6405 = vand.u32 %v3832, 4294901760
      %6406 = vmatpush1.msra.mxu0 %v6405
      %6407 = vmatprep.subr.mxu0 0.0
      %v6408 = vand.u32 %v3833, 4294901760
      %6409 = vmatpush1.msra.mxu0 %v6408
      %6410 = vmatprep.subr.mxu0 0.0
      %v6411 = vand.u32 %v3834, 4294901760
      %6412 = vmatpush1.msra.mxu0 %v6411
      %6413 = vmatprep.subr.mxu0 0.0
      %v6414 = vand.u32 %v3835, 4294901760
      %6415 = vmatpush1.msra.mxu0 %v6414
      %6416 = vmatprep.subr.mxu0 0.0
      %v6417 = vand.u32 %v3836, 4294901760
      %6418 = vmatpush1.msra.mxu0 %v6417
      %6419 = vmatprep.subr.mxu0 0.0
      %v6420 = vand.u32 %v3837, 4294901760
      %6421 = vmatpush1.msra.mxu0 %v6420
      %6422 = vmatprep.subr.mxu0 0.0
      %v6423 = vand.u32 %v3838, 4294901760
      %6424 = vmatpush1.msra.mxu0 %v6423
      %6425 = vmatprep.subr.mxu0 0.0
      %v6426 = vand.u32 %v3839, 4294901760
      %6427 = vmatpush1.msra.mxu0 %v6426
      %6428 = vmatprep.subr.mxu0 0.0
      %v6429 = vand.u32 %v3840, 4294901760
      %6430 = vmatpush1.msra.mxu0 %v6429
      %6431 = vmatprep.subr.mxu0 0.0
      %v6432 = vand.u32 %v3841, 4294901760
      %6433 = vmatpush1.msra.mxu0 %v6432
      %6434 = vmatprep.subr.mxu0 0.0
      %v6435 = vand.u32 %v3842, 4294901760
      %6436 = vmatpush1.msra.mxu0 %v6435
      %6437 = vmatprep.subr.mxu0 0.0
      %v6438 = vand.u32 %v3843, 4294901760
      %6439 = vmatpush1.msra.mxu0 %v6438
      %6440 = vmatprep.subr.mxu0 0.0
      %v6441 = vand.u32 %v3844, 4294901760
      %6442 = vmatpush1.msra.mxu0 %v6441
      %6443 = vmatprep.subr.mxu0 0.0
      %v6444 = vand.u32 %v3845, 4294901760
      %6445 = vmatpush1.msra.mxu0 %v6444
      %6446 = vmatprep.subr.mxu0 0.0
      %v6447 = vand.u32 %v3846, 4294901760
      %6448 = vmatpush1.msra.mxu0 %v6447
      %6449 = vmatprep.subr.mxu0 0.0
      %v6450 = vand.u32 %v3847, 4294901760
      %6451 = vmatpush1.msra.mxu0 %v6450
      %6452 = vmatprep.subr.mxu0 0.0
      %v6453 = vand.u32 %v3848, 4294901760
      %6454 = vmatpush1.msra.mxu0 %v6453
      %6455 = vmatprep.subr.mxu0 0.0
      %v6456 = vand.u32 %v3849, 4294901760
      %6457 = vmatpush1.msra.mxu0 %v6456
      %6458 = vmatprep.subr.mxu0 0.0
      %v6459 = vand.u32 %v3850, 4294901760
      %6460 = vmatpush1.msra.mxu0 %v6459
      %v6461 = vand.u32 %v3752, 4294901760
      %6462 = vmatprep.mubr.f32.mxu0 %v6461
      %v6463 = vand.u32 %v3751, 4294901760
      %6464 = vmatmul.mubr.f32.gmra.mrb[0].mxu0 %v6463
      %v6465 = vpop.f32.mrb[0].mxu0
      %v6466 = vadd.f32 %v6362, %v6465
      %v6467 = vpop.f32.mrb[0].mxu0
      %6468 = vdwg.mxu0
      %6469 = vmatprep.subr.mxu0 0.0
      %v6470 = vand.u32 %v3851, 4294901760
      %6471 = vmatpush1.msra.mxu0 %v6470
      %6472 = vmatprep.subr.mxu0 0.0
      %v6473 = vand.u32 %v3852, 4294901760
      %6474 = vmatpush1.msra.mxu0 %v6473
      %6475 = vmatprep.subr.mxu0 0.0
      %v6476 = vand.u32 %v3853, 4294901760
      %6477 = vmatpush1.msra.mxu0 %v6476
      %6478 = vmatprep.subr.mxu0 0.0
      %v6479 = vand.u32 %v3854, 4294901760
      %6480 = vmatpush1.msra.mxu0 %v6479
      %6481 = vmatprep.subr.mxu0 0.0
      %v6482 = vand.u32 %v3855, 4294901760
      %6483 = vmatpush1.msra.mxu0 %v6482
      %6484 = vmatprep.subr.mxu0 0.0
      %v6485 = vand.u32 %v3856, 4294901760
      %6486 = vmatpush1.msra.mxu0 %v6485
      %6487 = vmatprep.subr.mxu0 0.0
      %v6488 = vand.u32 %v3857, 4294901760
      %6489 = vmatpush1.msra.mxu0 %v6488
      %6490 = vmatprep.subr.mxu0 0.0
      %v6491 = vand.u32 %v3858, 4294901760
      %6492 = vmatpush1.msra.mxu0 %v6491
      %6493 = vmatprep.subr.mxu0 0.0
      %v6494 = vand.u32 %v3859, 4294901760
      %6495 = vmatpush1.msra.mxu0 %v6494
      %6496 = vmatprep.subr.mxu0 0.0
      %v6497 = vand.u32 %v3860, 4294901760
      %6498 = vmatpush1.msra.mxu0 %v6497
      %6499 = vmatprep.subr.mxu0 0.0
      %v6500 = vand.u32 %v3861, 4294901760
      %6501 = vmatpush1.msra.mxu0 %v6500
      %6502 = vmatprep.subr.mxu0 0.0
      %v6503 = vand.u32 %v3862, 4294901760
      %6504 = vmatpush1.msra.mxu0 %v6503
      %6505 = vmatprep.subr.mxu0 0.0
      %v6506 = vand.u32 %v3863, 4294901760
      %6507 = vmatpush1.msra.mxu0 %v6506
      %6508 = vmatprep.subr.mxu0 0.0
      %v6509 = vand.u32 %v3864, 4294901760
      %6510 = vmatpush1.msra.mxu0 %v6509
      %6511 = vmatprep.subr.mxu0 0.0
      %v6512 = vand.u32 %v3865, 4294901760
      %6513 = vmatpush1.msra.mxu0 %v6512
      %6514 = vmatprep.subr.mxu0 0.0
      %v6515 = vand.u32 %v3866, 4294901760
      %6516 = vmatpush1.msra.mxu0 %v6515
      %6517 = vmatprep.subr.mxu0 0.0
      %v6518 = vand.u32 %v3867, 4294901760
      %6519 = vmatpush1.msra.mxu0 %v6518
      %6520 = vmatprep.subr.mxu0 0.0
      %v6521 = vand.u32 %v3868, 4294901760
      %6522 = vmatpush1.msra.mxu0 %v6521
      %6523 = vmatprep.subr.mxu0 0.0
      %v6524 = vand.u32 %v3869, 4294901760
      %6525 = vmatpush1.msra.mxu0 %v6524
      %6526 = vmatprep.subr.mxu0 0.0
      %v6527 = vand.u32 %v3870, 4294901760
      %6528 = vmatpush1.msra.mxu0 %v6527
      %6529 = vmatprep.subr.mxu0 0.0
      %v6530 = vand.u32 %v3871, 4294901760
      %6531 = vmatpush1.msra.mxu0 %v6530
      %6532 = vmatprep.subr.mxu0 0.0
      %v6533 = vand.u32 %v3872, 4294901760
      %6534 = vmatpush1.msra.mxu0 %v6533
      %6535 = vmatprep.subr.mxu0 0.0
      %v6536 = vand.u32 %v3873, 4294901760
      %6537 = vmatpush1.msra.mxu0 %v6536
      %6538 = vmatprep.subr.mxu0 0.0
      %v6539 = vand.u32 %v3874, 4294901760
      %6540 = vmatpush1.msra.mxu0 %v6539
      %6541 = vmatprep.subr.mxu0 0.0
      %v6542 = vand.u32 %v3875, 4294901760
      %6543 = vmatpush1.msra.mxu0 %v6542
      %6544 = vmatprep.subr.mxu0 0.0
      %v6545 = vand.u32 %v3876, 4294901760
      %6546 = vmatpush1.msra.mxu0 %v6545
      %6547 = vmatprep.subr.mxu0 0.0
      %v6548 = vand.u32 %v3877, 4294901760
      %6549 = vmatpush1.msra.mxu0 %v6548
      %6550 = vmatprep.subr.mxu0 0.0
      %v6551 = vand.u32 %v3878, 4294901760
      %6552 = vmatpush1.msra.mxu0 %v6551
      %6553 = vmatprep.subr.mxu0 0.0
      %v6554 = vand.u32 %v3879, 4294901760
      %6555 = vmatpush1.msra.mxu0 %v6554
      %6556 = vmatprep.subr.mxu0 0.0
      %v6557 = vand.u32 %v3880, 4294901760
      %6558 = vmatpush1.msra.mxu0 %v6557
      %6559 = vmatprep.subr.mxu0 0.0
      %v6560 = vand.u32 %v3881, 4294901760
      %6561 = vmatpush1.msra.mxu0 %v6560
      %6562 = vmatprep.subr.mxu0 0.0
      %v6563 = vand.u32 %v3882, 4294901760
      %6564 = vmatpush1.msra.mxu0 %v6563
      %v6565 = vand.u32 %v3754, 4294901760
      %v6566 = vsub.f32 %v3754, %v6565
      %v6567 = vand.u32 %v6566, 4294901760
      %v6568 = vsub.f32 %v6566, %v6567
      %v6569 = vand.u32 %v6568, 4294901760
      %6570 = vmatprep.mubr.f32.mxu0 %v6569
      %v6571 = vand.u32 %v3753, 4294901760
      %v6572 = vsub.f32 %v3753, %v6571
      %v6573 = vand.u32 %v6572, 4294901760
      %v6574 = vsub.f32 %v6572, %v6573
      %v6575 = vand.u32 %v6574, 4294901760
      %6576 = vmatmul.mubr.f32.gmra.mrb[0].mxu0 %v6575
      %v6577 = vpop.f32.mrb[0].mxu0
      %v6578 = vadd.f32 %v6466, %v6577
      %v6579 = vpop.f32.mrb[0].mxu0
      %6580 = vdwg.mxu0
      %6581 = vmatprep.subr.mxu0 0.0
      %v6582 = vand.u32 %v3851, 4294901760
      %v6583 = vsub.f32 %v3851, %v6582
      %v6584 = vand.u32 %v6583, 4294901760
      %v6585 = vsub.f32 %v6583, %v6584
      %v6586 = vand.u32 %v6585, 4294901760
      %6587 = vmatpush1.msra.mxu0 %v6586
      %6588 = vmatprep.subr.mxu0 0.0
      %v6589 = vand.u32 %v3852, 4294901760
      %v6590 = vsub.f32 %v3852, %v6589
      %v6591 = vand.u32 %v6590, 4294901760
      %v6592 = vsub.f32 %v6590, %v6591
      %v6593 = vand.u32 %v6592, 4294901760
      %6594 = vmatpush1.msra.mxu0 %v6593
      %6595 = vmatprep.subr.mxu0 0.0
      %v6596 = vand.u32 %v3853, 4294901760
      %v6597 = vsub.f32 %v3853, %v6596
      %v6598 = vand.u32 %v6597, 4294901760
      %v6599 = vsub.f32 %v6597, %v6598
      %v6600 = vand.u32 %v6599, 4294901760
      %6601 = vmatpush1.msra.mxu0 %v6600
      %6602 = vmatprep.subr.mxu0 0.0
      %v6603 = vand.u32 %v3854, 4294901760
      %v6604 = vsub.f32 %v3854, %v6603
      %v6605 = vand.u32 %v6604, 4294901760
      %v6606 = vsub.f32 %v6604, %v6605
      %v6607 = vand.u32 %v6606, 4294901760
      %6608 = vmatpush1.msra.mxu0 %v6607
      %6609 = vmatprep.subr.mxu0 0.0
      %v6610 = vand.u32 %v3855, 4294901760
      %v6611 = vsub.f32 %v3855, %v6610
      %v6612 = vand.u32 %v6611, 4294901760
      %v6613 = vsub.f32 %v6611, %v6612
      %v6614 = vand.u32 %v6613, 4294901760
      %6615 = vmatpush1.msra.mxu0 %v6614
      %6616 = vmatprep.subr.mxu0 0.0
      %v6617 = vand.u32 %v3856, 4294901760
      %v6618 = vsub.f32 %v3856, %v6617
      %v6619 = vand.u32 %v6618, 4294901760
      %v6620 = vsub.f32 %v6618, %v6619
      %v6621 = vand.u32 %v6620, 4294901760
      %6622 = vmatpush1.msra.mxu0 %v6621
      %6623 = vmatprep.subr.mxu0 0.0
      %v6624 = vand.u32 %v3857, 4294901760
      %v6625 = vsub.f32 %v3857, %v6624
      %v6626 = vand.u32 %v6625, 4294901760
      %v6627 = vsub.f32 %v6625, %v6626
      %v6628 = vand.u32 %v6627, 4294901760
      %6629 = vmatpush1.msra.mxu0 %v6628
      %6630 = vmatprep.subr.mxu0 0.0
      %v6631 = vand.u32 %v3858, 4294901760
      %v6632 = vsub.f32 %v3858, %v6631
      %v6633 = vand.u32 %v6632, 4294901760
      %v6634 = vsub.f32 %v6632, %v6633
      %v6635 = vand.u32 %v6634, 4294901760
      %6636 = vmatpush1.msra.mxu0 %v6635
      %6637 = vmatprep.subr.mxu0 0.0
      %v6638 = vand.u32 %v3859, 4294901760
      %v6639 = vsub.f32 %v3859, %v6638
      %v6640 = vand.u32 %v6639, 4294901760
      %v6641 = vsub.f32 %v6639, %v6640
      %v6642 = vand.u32 %v6641, 4294901760
      %6643 = vmatpush1.msra.mxu0 %v6642
      %6644 = vmatprep.subr.mxu0 0.0
      %v6645 = vand.u32 %v3860, 4294901760
      %v6646 = vsub.f32 %v3860, %v6645
      %v6647 = vand.u32 %v6646, 4294901760
      %v6648 = vsub.f32 %v6646, %v6647
      %v6649 = vand.u32 %v6648, 4294901760
      %6650 = vmatpush1.msra.mxu0 %v6649
      %6651 = vmatprep.subr.mxu0 0.0
      %v6652 = vand.u32 %v3861, 4294901760
      %v6653 = vsub.f32 %v3861, %v6652
      %v6654 = vand.u32 %v6653, 4294901760
      %v6655 = vsub.f32 %v6653, %v6654
      %v6656 = vand.u32 %v6655, 4294901760
      %6657 = vmatpush1.msra.mxu0 %v6656
      %6658 = vmatprep.subr.mxu0 0.0
      %v6659 = vand.u32 %v3862, 4294901760
      %v6660 = vsub.f32 %v3862, %v6659
      %v6661 = vand.u32 %v6660, 4294901760
      %v6662 = vsub.f32 %v6660, %v6661
      %v6663 = vand.u32 %v6662, 4294901760
      %6664 = vmatpush1.msra.mxu0 %v6663
      %6665 = vmatprep.subr.mxu0 0.0
      %v6666 = vand.u32 %v3863, 4294901760
      %v6667 = vsub.f32 %v3863, %v6666
      %v6668 = vand.u32 %v6667, 4294901760
      %v6669 = vsub.f32 %v6667, %v6668
      %v6670 = vand.u32 %v6669, 4294901760
      %6671 = vmatpush1.msra.mxu0 %v6670
      %6672 = vmatprep.subr.mxu0 0.0
      %v6673 = vand.u32 %v3864, 4294901760
      %v6674 = vsub.f32 %v3864, %v6673
      %v6675 = vand.u32 %v6674, 4294901760
      %v6676 = vsub.f32 %v6674, %v6675
      %v6677 = vand.u32 %v6676, 4294901760
      %6678 = vmatpush1.msra.mxu0 %v6677
      %6679 = vmatprep.subr.mxu0 0.0
      %v6680 = vand.u32 %v3865, 4294901760
      %v6681 = vsub.f32 %v3865, %v6680
      %v6682 = vand.u32 %v6681, 4294901760
      %v6683 = vsub.f32 %v6681, %v6682
      %v6684 = vand.u32 %v6683, 4294901760
      %6685 = vmatpush1.msra.mxu0 %v6684
      %6686 = vmatprep.subr.mxu0 0.0
      %v6687 = vand.u32 %v3866, 4294901760
      %v6688 = vsub.f32 %v3866, %v6687
      %v6689 = vand.u32 %v6688, 4294901760
      %v6690 = vsub.f32 %v6688, %v6689
      %v6691 = vand.u32 %v6690, 4294901760
      %6692 = vmatpush1.msra.mxu0 %v6691
      %6693 = vmatprep.subr.mxu0 0.0
      %v6694 = vand.u32 %v3867, 4294901760
      %v6695 = vsub.f32 %v3867, %v6694
      %v6696 = vand.u32 %v6695, 4294901760
      %v6697 = vsub.f32 %v6695, %v6696
      %v6698 = vand.u32 %v6697, 4294901760
      %6699 = vmatpush1.msra.mxu0 %v6698
      %6700 = vmatprep.subr.mxu0 0.0
      %v6701 = vand.u32 %v3868, 4294901760
      %v6702 = vsub.f32 %v3868, %v6701
      %v6703 = vand.u32 %v6702, 4294901760
      %v6704 = vsub.f32 %v6702, %v6703
      %v6705 = vand.u32 %v6704, 4294901760
      %6706 = vmatpush1.msra.mxu0 %v6705
      %6707 = vmatprep.subr.mxu0 0.0
      %v6708 = vand.u32 %v3869, 4294901760
      %v6709 = vsub.f32 %v3869, %v6708
      %v6710 = vand.u32 %v6709, 4294901760
      %v6711 = vsub.f32 %v6709, %v6710
      %v6712 = vand.u32 %v6711, 4294901760
      %6713 = vmatpush1.msra.mxu0 %v6712
      %6714 = vmatprep.subr.mxu0 0.0
      %v6715 = vand.u32 %v3870, 4294901760
      %v6716 = vsub.f32 %v3870, %v6715
      %v6717 = vand.u32 %v6716, 4294901760
      %v6718 = vsub.f32 %v6716, %v6717
      %v6719 = vand.u32 %v6718, 4294901760
      %6720 = vmatpush1.msra.mxu0 %v6719
      %6721 = vmatprep.subr.mxu0 0.0
      %v6722 = vand.u32 %v3871, 4294901760
      %v6723 = vsub.f32 %v3871, %v6722
      %v6724 = vand.u32 %v6723, 4294901760
      %v6725 = vsub.f32 %v6723, %v6724
      %v6726 = vand.u32 %v6725, 4294901760
      %6727 = vmatpush1.msra.mxu0 %v6726
      %6728 = vmatprep.subr.mxu0 0.0
      %v6729 = vand.u32 %v3872, 4294901760
      %v6730 = vsub.f32 %v3872, %v6729
      %v6731 = vand.u32 %v6730, 4294901760
      %v6732 = vsub.f32 %v6730, %v6731
      %v6733 = vand.u32 %v6732, 4294901760
      %6734 = vmatpush1.msra.mxu0 %v6733
      %6735 = vmatprep.subr.mxu0 0.0
      %v6736 = vand.u32 %v3873, 4294901760
      %v6737 = vsub.f32 %v3873, %v6736
      %v6738 = vand.u32 %v6737, 4294901760
      %v6739 = vsub.f32 %v6737, %v6738
      %v6740 = vand.u32 %v6739, 4294901760
      %6741 = vmatpush1.msra.mxu0 %v6740
      %6742 = vmatprep.subr.mxu0 0.0
      %v6743 = vand.u32 %v3874, 4294901760
      %v6744 = vsub.f32 %v3874, %v6743
      %v6745 = vand.u32 %v6744, 4294901760
      %v6746 = vsub.f32 %v6744, %v6745
      %v6747 = vand.u32 %v6746, 4294901760
      %6748 = vmatpush1.msra.mxu0 %v6747
      %6749 = vmatprep.subr.mxu0 0.0
      %v6750 = vand.u32 %v3875, 4294901760
      %v6751 = vsub.f32 %v3875, %v6750
      %v6752 = vand.u32 %v6751, 4294901760
      %v6753 = vsub.f32 %v6751, %v6752
      %v6754 = vand.u32 %v6753, 4294901760
      %6755 = vmatpush1.msra.mxu0 %v6754
      %6756 = vmatprep.subr.mxu0 0.0
      %v6757 = vand.u32 %v3876, 4294901760
      %v6758 = vsub.f32 %v3876, %v6757
      %v6759 = vand.u32 %v6758, 4294901760
      %v6760 = vsub.f32 %v6758, %v6759
      %v6761 = vand.u32 %v6760, 4294901760
      %6762 = vmatpush1.msra.mxu0 %v6761
      %6763 = vmatprep.subr.mxu0 0.0
      %v6764 = vand.u32 %v3877, 4294901760
      %v6765 = vsub.f32 %v3877, %v6764
      %v6766 = vand.u32 %v6765, 4294901760
      %v6767 = vsub.f32 %v6765, %v6766
      %v6768 = vand.u32 %v6767, 4294901760
      %6769 = vmatpush1.msra.mxu0 %v6768
      %6770 = vmatprep.subr.mxu0 0.0
      %v6771 = vand.u32 %v3878, 4294901760
      %v6772 = vsub.f32 %v3878, %v6771
      %v6773 = vand.u32 %v6772, 4294901760
      %v6774 = vsub.f32 %v6772, %v6773
      %v6775 = vand.u32 %v6774, 4294901760
      %6776 = vmatpush1.msra.mxu0 %v6775
      %6777 = vmatprep.subr.mxu0 0.0
      %v6778 = vand.u32 %v3879, 4294901760
      %v6779 = vsub.f32 %v3879, %v6778
      %v6780 = vand.u32 %v6779, 4294901760
      %v6781 = vsub.f32 %v6779, %v6780
      %v6782 = vand.u32 %v6781, 4294901760
      %6783 = vmatpush1.msra.mxu0 %v6782
      %6784 = vmatprep.subr.mxu0 0.0
      %v6785 = vand.u32 %v3880, 4294901760
      %v6786 = vsub.f32 %v3880, %v6785
      %v6787 = vand.u32 %v6786, 4294901760
      %v6788 = vsub.f32 %v6786, %v6787
      %v6789 = vand.u32 %v6788, 4294901760
      %6790 = vmatpush1.msra.mxu0 %v6789
      %6791 = vmatprep.subr.mxu0 0.0
      %v6792 = vand.u32 %v3881, 4294901760
      %v6793 = vsub.f32 %v3881, %v6792
      %v6794 = vand.u32 %v6793, 4294901760
      %v6795 = vsub.f32 %v6793, %v6794
      %v6796 = vand.u32 %v6795, 4294901760
      %6797 = vmatpush1.msra.mxu0 %v6796
      %6798 = vmatprep.subr.mxu0 0.0
      %v6799 = vand.u32 %v3882, 4294901760
      %v6800 = vsub.f32 %v3882, %v6799
      %v6801 = vand.u32 %v6800, 4294901760
      %v6802 = vsub.f32 %v6800, %v6801
      %v6803 = vand.u32 %v6802, 4294901760
      %6804 = vmatpush1.msra.mxu0 %v6803
      %v6805 = vand.u32 %v3754, 4294901760
      %6806 = vmatprep.mubr.f32.mxu0 %v6805
      %v6807 = vand.u32 %v3753, 4294901760
      %6808 = vmatmul.mubr.f32.gmra.mrb[0].mxu0 %v6807
      %v6809 = vpop.f32.mrb[0].mxu0
      %v6810 = vadd.f32 %v6578, %v6809
      %v6811 = vpop.f32.mrb[0].mxu0
      %6812 = vdwg.mxu0
      %6813 = vmatprep.subr.mxu0 0.0
      %v6814 = vand.u32 %v3851, 4294901760
      %v6815 = vsub.f32 %v3851, %v6814
      %6816 = vmatpush1.msra.mxu0 %v6815
      %6817 = vmatprep.subr.mxu0 0.0
      %v6818 = vand.u32 %v3852, 4294901760
      %v6819 = vsub.f32 %v3852, %v6818
      %6820 = vmatpush1.msra.mxu0 %v6819
      %6821 = vmatprep.subr.mxu0 0.0
      %v6822 = vand.u32 %v3853, 4294901760
      %v6823 = vsub.f32 %v3853, %v6822
      %6824 = vmatpush1.msra.mxu0 %v6823
      %6825 = vmatprep.subr.mxu0 0.0
      %v6826 = vand.u32 %v3854, 4294901760
      %v6827 = vsub.f32 %v3854, %v6826
      %6828 = vmatpush1.msra.mxu0 %v6827
      %6829 = vmatprep.subr.mxu0 0.0
      %v6830 = vand.u32 %v3855, 4294901760
      %v6831 = vsub.f32 %v3855, %v6830
      %6832 = vmatpush1.msra.mxu0 %v6831
      %6833 = vmatprep.subr.mxu0 0.0
      %v6834 = vand.u32 %v3856, 4294901760
      %v6835 = vsub.f32 %v3856, %v6834
      %6836 = vmatpush1.msra.mxu0 %v6835
      %6837 = vmatprep.subr.mxu0 0.0
      %v6838 = vand.u32 %v3857, 4294901760
      %v6839 = vsub.f32 %v3857, %v6838
      %6840 = vmatpush1.msra.mxu0 %v6839
      %6841 = vmatprep.subr.mxu0 0.0
      %v6842 = vand.u32 %v3858, 4294901760
      %v6843 = vsub.f32 %v3858, %v6842
      %6844 = vmatpush1.msra.mxu0 %v6843
      %6845 = vmatprep.subr.mxu0 0.0
      %v6846 = vand.u32 %v3859, 4294901760
      %v6847 = vsub.f32 %v3859, %v6846
      %6848 = vmatpush1.msra.mxu0 %v6847
      %6849 = vmatprep.subr.mxu0 0.0
      %v6850 = vand.u32 %v3860, 4294901760
      %v6851 = vsub.f32 %v3860, %v6850
      %6852 = vmatpush1.msra.mxu0 %v6851
      %6853 = vmatprep.subr.mxu0 0.0
      %v6854 = vand.u32 %v3861, 4294901760
      %v6855 = vsub.f32 %v3861, %v6854
      %6856 = vmatpush1.msra.mxu0 %v6855
      %6857 = vmatprep.subr.mxu0 0.0
      %v6858 = vand.u32 %v3862, 4294901760
      %v6859 = vsub.f32 %v3862, %v6858
      %6860 = vmatpush1.msra.mxu0 %v6859
      %6861 = vmatprep.subr.mxu0 0.0
      %v6862 = vand.u32 %v3863, 4294901760
      %v6863 = vsub.f32 %v3863, %v6862
      %6864 = vmatpush1.msra.mxu0 %v6863
      %6865 = vmatprep.subr.mxu0 0.0
      %v6866 = vand.u32 %v3864, 4294901760
      %v6867 = vsub.f32 %v3864, %v6866
      %6868 = vmatpush1.msra.mxu0 %v6867
      %6869 = vmatprep.subr.mxu0 0.0
      %v6870 = vand.u32 %v3865, 4294901760
      %v6871 = vsub.f32 %v3865, %v6870
      %6872 = vmatpush1.msra.mxu0 %v6871
      %6873 = vmatprep.subr.mxu0 0.0
      %v6874 = vand.u32 %v3866, 4294901760
      %v6875 = vsub.f32 %v3866, %v6874
      %6876 = vmatpush1.msra.mxu0 %v6875
      %6877 = vmatprep.subr.mxu0 0.0
      %v6878 = vand.u32 %v3867, 4294901760
      %v6879 = vsub.f32 %v3867, %v6878
      %6880 = vmatpush1.msra.mxu0 %v6879
      %6881 = vmatprep.subr.mxu0 0.0
      %v6882 = vand.u32 %v3868, 4294901760
      %v6883 = vsub.f32 %v3868, %v6882
      %6884 = vmatpush1.msra.mxu0 %v6883
      %6885 = vmatprep.subr.mxu0 0.0
      %v6886 = vand.u32 %v3869, 4294901760
      %v6887 = vsub.f32 %v3869, %v6886
      %6888 = vmatpush1.msra.mxu0 %v6887
      %6889 = vmatprep.subr.mxu0 0.0
      %v6890 = vand.u32 %v3870, 4294901760
      %v6891 = vsub.f32 %v3870, %v6890
      %6892 = vmatpush1.msra.mxu0 %v6891
      %6893 = vmatprep.subr.mxu0 0.0
      %v6894 = vand.u32 %v3871, 4294901760
      %v6895 = vsub.f32 %v3871, %v6894
      %6896 = vmatpush1.msra.mxu0 %v6895
      %6897 = vmatprep.subr.mxu0 0.0
      %v6898 = vand.u32 %v3872, 4294901760
      %v6899 = vsub.f32 %v3872, %v6898
      %6900 = vmatpush1.msra.mxu0 %v6899
      %6901 = vmatprep.subr.mxu0 0.0
      %v6902 = vand.u32 %v3873, 4294901760
      %v6903 = vsub.f32 %v3873, %v6902
      %6904 = vmatpush1.msra.mxu0 %v6903
      %6905 = vmatprep.subr.mxu0 0.0
      %v6906 = vand.u32 %v3874, 4294901760
      %v6907 = vsub.f32 %v3874, %v6906
      %6908 = vmatpush1.msra.mxu0 %v6907
      %6909 = vmatprep.subr.mxu0 0.0
      %v6910 = vand.u32 %v3875, 4294901760
      %v6911 = vsub.f32 %v3875, %v6910
      %6912 = vmatpush1.msra.mxu0 %v6911
      %6913 = vmatprep.subr.mxu0 0.0
      %v6914 = vand.u32 %v3876, 4294901760
      %v6915 = vsub.f32 %v3876, %v6914
      %6916 = vmatpush1.msra.mxu0 %v6915
      %6917 = vmatprep.subr.mxu0 0.0
      %v6918 = vand.u32 %v3877, 4294901760
      %v6919 = vsub.f32 %v3877, %v6918
      %6920 = vmatpush1.msra.mxu0 %v6919
      %6921 = vmatprep.subr.mxu0 0.0
      %v6922 = vand.u32 %v3878, 4294901760
      %v6923 = vsub.f32 %v3878, %v6922
      %6924 = vmatpush1.msra.mxu0 %v6923
      %6925 = vmatprep.subr.mxu0 0.0
      %v6926 = vand.u32 %v3879, 4294901760
      %v6927 = vsub.f32 %v3879, %v6926
      %6928 = vmatpush1.msra.mxu0 %v6927
      %6929 = vmatprep.subr.mxu0 0.0
      %v6930 = vand.u32 %v3880, 4294901760
      %v6931 = vsub.f32 %v3880, %v6930
      %6932 = vmatpush1.msra.mxu0 %v6931
      %6933 = vmatprep.subr.mxu0 0.0
      %v6934 = vand.u32 %v3881, 4294901760
      %v6935 = vsub.f32 %v3881, %v6934
      %6936 = vmatpush1.msra.mxu0 %v6935
      %6937 = vmatprep.subr.mxu0 0.0
      %v6938 = vand.u32 %v3882, 4294901760
      %v6939 = vsub.f32 %v3882, %v6938
      %6940 = vmatpush1.msra.mxu0 %v6939
      %v6941 = vand.u32 %v3754, 4294901760
      %v6942 = vsub.f32 %v3754, %v6941
      %6943 = vmatprep.mubr.f32.mxu0 %v6942
      %v6944 = vand.u32 %v3753, 4294901760
      %v6945 = vsub.f32 %v3753, %v6944
      %6946 = vmatmul.mubr.f32.gmra.mrb[0].mxu0 %v6945
      %v6947 = vpop.f32.mrb[0].mxu0
      %v6948 = vadd.f32 %v6810, %v6947
      %v6949 = vpop.f32.mrb[0].mxu0
      %6950 = vdwg.mxu0
      %6951 = vmatprep.subr.mxu0 0.0
      %v6952 = vand.u32 %v3851, 4294901760
      %6953 = vmatpush1.msra.mxu0 %v6952
      %6954 = vmatprep.subr.mxu0 0.0
      %v6955 = vand.u32 %v3852, 4294901760
      %6956 = vmatpush1.msra.mxu0 %v6955
      %6957 = vmatprep.subr.mxu0 0.0
      %v6958 = vand.u32 %v3853, 4294901760
      %6959 = vmatpush1.msra.mxu0 %v6958
      %6960 = vmatprep.subr.mxu0 0.0
      %v6961 = vand.u32 %v3854, 4294901760
      %6962 = vmatpush1.msra.mxu0 %v6961
      %6963 = vmatprep.subr.mxu0 0.0
      %v6964 = vand.u32 %v3855, 4294901760
      %6965 = vmatpush1.msra.mxu0 %v6964
      %6966 = vmatprep.subr.mxu0 0.0
      %v6967 = vand.u32 %v3856, 4294901760
      %6968 = vmatpush1.msra.mxu0 %v6967
      %6969 = vmatprep.subr.mxu0 0.0
      %v6970 = vand.u32 %v3857, 4294901760
      %6971 = vmatpush1.msra.mxu0 %v6970
      %6972 = vmatprep.subr.mxu0 0.0
      %v6973 = vand.u32 %v3858, 4294901760
      %6974 = vmatpush1.msra.mxu0 %v6973
      %6975 = vmatprep.subr.mxu0 0.0
      %v6976 = vand.u32 %v3859, 4294901760
      %6977 = vmatpush1.msra.mxu0 %v6976
      %6978 = vmatprep.subr.mxu0 0.0
      %v6979 = vand.u32 %v3860, 4294901760
      %6980 = vmatpush1.msra.mxu0 %v6979
      %6981 = vmatprep.subr.mxu0 0.0
      %v6982 = vand.u32 %v3861, 4294901760
      %6983 = vmatpush1.msra.mxu0 %v6982
      %6984 = vmatprep.subr.mxu0 0.0
      %v6985 = vand.u32 %v3862, 4294901760
      %6986 = vmatpush1.msra.mxu0 %v6985
      %6987 = vmatprep.subr.mxu0 0.0
      %v6988 = vand.u32 %v3863, 4294901760
      %6989 = vmatpush1.msra.mxu0 %v6988
      %6990 = vmatprep.subr.mxu0 0.0
      %v6991 = vand.u32 %v3864, 4294901760
      %6992 = vmatpush1.msra.mxu0 %v6991
      %6993 = vmatprep.subr.mxu0 0.0
      %v6994 = vand.u32 %v3865, 4294901760
      %6995 = vmatpush1.msra.mxu0 %v6994
      %6996 = vmatprep.subr.mxu0 0.0
      %v6997 = vand.u32 %v3866, 4294901760
      %6998 = vmatpush1.msra.mxu0 %v6997
      %6999 = vmatprep.subr.mxu0 0.0
      %v7000 = vand.u32 %v3867, 4294901760
      %7001 = vmatpush1.msra.mxu0 %v7000
      %7002 = vmatprep.subr.mxu0 0.0
      %v7003 = vand.u32 %v3868, 4294901760
      %7004 = vmatpush1.msra.mxu0 %v7003
      %7005 = vmatprep.subr.mxu0 0.0
      %v7006 = vand.u32 %v3869, 4294901760
      %7007 = vmatpush1.msra.mxu0 %v7006
      %7008 = vmatprep.subr.mxu0 0.0
      %v7009 = vand.u32 %v3870, 4294901760
      %7010 = vmatpush1.msra.mxu0 %v7009
      %7011 = vmatprep.subr.mxu0 0.0
      %v7012 = vand.u32 %v3871, 4294901760
      %7013 = vmatpush1.msra.mxu0 %v7012
      %7014 = vmatprep.subr.mxu0 0.0
      %v7015 = vand.u32 %v3872, 4294901760
      %7016 = vmatpush1.msra.mxu0 %v7015
      %7017 = vmatprep.subr.mxu0 0.0
      %v7018 = vand.u32 %v3873, 4294901760
      %7019 = vmatpush1.msra.mxu0 %v7018
      %7020 = vmatprep.subr.mxu0 0.0
      %v7021 = vand.u32 %v3874, 4294901760
      %7022 = vmatpush1.msra.mxu0 %v7021
      %7023 = vmatprep.subr.mxu0 0.0
      %v7024 = vand.u32 %v3875, 4294901760
      %7025 = vmatpush1.msra.mxu0 %v7024
      %7026 = vmatprep.subr.mxu0 0.0
      %v7027 = vand.u32 %v3876, 4294901760
      %7028 = vmatpush1.msra.mxu0 %v7027
      %7029 = vmatprep.subr.mxu0 0.0
      %v7030 = vand.u32 %v3877, 4294901760
      %7031 = vmatpush1.msra.mxu0 %v7030
      %7032 = vmatprep.subr.mxu0 0.0
      %v7033 = vand.u32 %v3878, 4294901760
      %7034 = vmatpush1.msra.mxu0 %v7033
      %7035 = vmatprep.subr.mxu0 0.0
      %v7036 = vand.u32 %v3879, 4294901760
      %7037 = vmatpush1.msra.mxu0 %v7036
      %7038 = vmatprep.subr.mxu0 0.0
      %v7039 = vand.u32 %v3880, 4294901760
      %7040 = vmatpush1.msra.mxu0 %v7039
      %7041 = vmatprep.subr.mxu0 0.0
      %v7042 = vand.u32 %v3881, 4294901760
      %7043 = vmatpush1.msra.mxu0 %v7042
      %7044 = vmatprep.subr.mxu0 0.0
      %v7045 = vand.u32 %v3882, 4294901760
      %7046 = vmatpush1.msra.mxu0 %v7045
      %v7047 = vand.u32 %v3754, 4294901760
      %v7048 = vsub.f32 %v3754, %v7047
      %v7049 = vand.u32 %v7048, 4294901760
      %7050 = vmatprep.mubr.f32.mxu0 %v7049
      %v7051 = vand.u32 %v3753, 4294901760
      %v7052 = vsub.f32 %v3753, %v7051
      %v7053 = vand.u32 %v7052, 4294901760
      %7054 = vmatmul.mubr.f32.gmra.mrb[0].mxu0 %v7053
      %v7055 = vpop.f32.mrb[0].mxu0
      %v7056 = vadd.f32 %v6948, %v7055
      %v7057 = vpop.f32.mrb[0].mxu0
      %7058 = vdwg.mxu0
      %7059 = vmatprep.subr.mxu0 0.0
      %v7060 = vand.u32 %v3851, 4294901760
      %v7061 = vsub.f32 %v3851, %v7060
      %v7062 = vand.u32 %v7061, 4294901760
      %7063 = vmatpush1.msra.mxu0 %v7062
      %7064 = vmatprep.subr.mxu0 0.0
      %v7065 = vand.u32 %v3852, 4294901760
      %v7066 = vsub.f32 %v3852, %v7065
      %v7067 = vand.u32 %v7066, 4294901760
      %7068 = vmatpush1.msra.mxu0 %v7067
      %7069 = vmatprep.subr.mxu0 0.0
      %v7070 = vand.u32 %v3853, 4294901760
      %v7071 = vsub.f32 %v3853, %v7070
      %v7072 = vand.u32 %v7071, 4294901760
      %7073 = vmatpush1.msra.mxu0 %v7072
      %7074 = vmatprep.subr.mxu0 0.0
      %v7075 = vand.u32 %v3854, 4294901760
      %v7076 = vsub.f32 %v3854, %v7075
      %v7077 = vand.u32 %v7076, 4294901760
      %7078 = vmatpush1.msra.mxu0 %v7077
      %7079 = vmatprep.subr.mxu0 0.0
      %v7080 = vand.u32 %v3855, 4294901760
      %v7081 = vsub.f32 %v3855, %v7080
      %v7082 = vand.u32 %v7081, 4294901760
      %7083 = vmatpush1.msra.mxu0 %v7082
      %7084 = vmatprep.subr.mxu0 0.0
      %v7085 = vand.u32 %v3856, 4294901760
      %v7086 = vsub.f32 %v3856, %v7085
      %v7087 = vand.u32 %v7086, 4294901760
      %7088 = vmatpush1.msra.mxu0 %v7087
      %7089 = vmatprep.subr.mxu0 0.0
      %v7090 = vand.u32 %v3857, 4294901760
      %v7091 = vsub.f32 %v3857, %v7090
      %v7092 = vand.u32 %v7091, 4294901760
      %7093 = vmatpush1.msra.mxu0 %v7092
      %7094 = vmatprep.subr.mxu0 0.0
      %v7095 = vand.u32 %v3858, 4294901760
      %v7096 = vsub.f32 %v3858, %v7095
      %v7097 = vand.u32 %v7096, 4294901760
      %7098 = vmatpush1.msra.mxu0 %v7097
      %7099 = vmatprep.subr.mxu0 0.0
      %v7100 = vand.u32 %v3859, 4294901760
      %v7101 = vsub.f32 %v3859, %v7100
      %v7102 = vand.u32 %v7101, 4294901760
      %7103 = vmatpush1.msra.mxu0 %v7102
      %7104 = vmatprep.subr.mxu0 0.0
      %v7105 = vand.u32 %v3860, 4294901760
      %v7106 = vsub.f32 %v3860, %v7105
      %v7107 = vand.u32 %v7106, 4294901760
      %7108 = vmatpush1.msra.mxu0 %v7107
      %7109 = vmatprep.subr.mxu0 0.0
      %v7110 = vand.u32 %v3861, 4294901760
      %v7111 = vsub.f32 %v3861, %v7110
      %v7112 = vand.u32 %v7111, 4294901760
      %7113 = vmatpush1.msra.mxu0 %v7112
      %7114 = vmatprep.subr.mxu0 0.0
      %v7115 = vand.u32 %v3862, 4294901760
      %v7116 = vsub.f32 %v3862, %v7115
      %v7117 = vand.u32 %v7116, 4294901760
      %7118 = vmatpush1.msra.mxu0 %v7117
      %7119 = vmatprep.subr.mxu0 0.0
      %v7120 = vand.u32 %v3863, 4294901760
      %v7121 = vsub.f32 %v3863, %v7120
      %v7122 = vand.u32 %v7121, 4294901760
      %7123 = vmatpush1.msra.mxu0 %v7122
      %7124 = vmatprep.subr.mxu0 0.0
      %v7125 = vand.u32 %v3864, 4294901760
      %v7126 = vsub.f32 %v3864, %v7125
      %v7127 = vand.u32 %v7126, 4294901760
      %7128 = vmatpush1.msra.mxu0 %v7127
      %7129 = vmatprep.subr.mxu0 0.0
      %v7130 = vand.u32 %v3865, 4294901760
      %v7131 = vsub.f32 %v3865, %v7130
      %v7132 = vand.u32 %v7131, 4294901760
      %7133 = vmatpush1.msra.mxu0 %v7132
      %7134 = vmatprep.subr.mxu0 0.0
      %v7135 = vand.u32 %v3866, 4294901760
      %v7136 = vsub.f32 %v3866, %v7135
      %v7137 = vand.u32 %v7136, 4294901760
      %7138 = vmatpush1.msra.mxu0 %v7137
      %7139 = vmatprep.subr.mxu0 0.0
      %v7140 = vand.u32 %v3867, 4294901760
      %v7141 = vsub.f32 %v3867, %v7140
      %v7142 = vand.u32 %v7141, 4294901760
      %7143 = vmatpush1.msra.mxu0 %v7142
      %7144 = vmatprep.subr.mxu0 0.0
      %v7145 = vand.u32 %v3868, 4294901760
      %v7146 = vsub.f32 %v3868, %v7145
      %v7147 = vand.u32 %v7146, 4294901760
      %7148 = vmatpush1.msra.mxu0 %v7147
      %7149 = vmatprep.subr.mxu0 0.0
      %v7150 = vand.u32 %v3869, 4294901760
      %v7151 = vsub.f32 %v3869, %v7150
      %v7152 = vand.u32 %v7151, 4294901760
      %7153 = vmatpush1.msra.mxu0 %v7152
      %7154 = vmatprep.subr.mxu0 0.0
      %v7155 = vand.u32 %v3870, 4294901760
      %v7156 = vsub.f32 %v3870, %v7155
      %v7157 = vand.u32 %v7156, 4294901760
      %7158 = vmatpush1.msra.mxu0 %v7157
      %7159 = vmatprep.subr.mxu0 0.0
      %v7160 = vand.u32 %v3871, 4294901760
      %v7161 = vsub.f32 %v3871, %v7160
      %v7162 = vand.u32 %v7161, 4294901760
      %7163 = vmatpush1.msra.mxu0 %v7162
      %7164 = vmatprep.subr.mxu0 0.0
      %v7165 = vand.u32 %v3872, 4294901760
      %v7166 = vsub.f32 %v3872, %v7165
      %v7167 = vand.u32 %v7166, 4294901760
      %7168 = vmatpush1.msra.mxu0 %v7167
      %7169 = vmatprep.subr.mxu0 0.0
      %v7170 = vand.u32 %v3873, 4294901760
      %v7171 = vsub.f32 %v3873, %v7170
      %v7172 = vand.u32 %v7171, 4294901760
      %7173 = vmatpush1.msra.mxu0 %v7172
      %7174 = vmatprep.subr.mxu0 0.0
      %v7175 = vand.u32 %v3874, 4294901760
      %v7176 = vsub.f32 %v3874, %v7175
      %v7177 = vand.u32 %v7176, 4294901760
      %7178 = vmatpush1.msra.mxu0 %v7177
      %7179 = vmatprep.subr.mxu0 0.0
      %v7180 = vand.u32 %v3875, 4294901760
      %v7181 = vsub.f32 %v3875, %v7180
      %v7182 = vand.u32 %v7181, 4294901760
      %7183 = vmatpush1.msra.mxu0 %v7182
      %7184 = vmatprep.subr.mxu0 0.0
      %v7185 = vand.u32 %v3876, 4294901760
      %v7186 = vsub.f32 %v3876, %v7185
      %v7187 = vand.u32 %v7186, 4294901760
      %7188 = vmatpush1.msra.mxu0 %v7187
      %7189 = vmatprep.subr.mxu0 0.0
      %v7190 = vand.u32 %v3877, 4294901760
      %v7191 = vsub.f32 %v3877, %v7190
      %v7192 = vand.u32 %v7191, 4294901760
      %7193 = vmatpush1.msra.mxu0 %v7192
      %7194 = vmatprep.subr.mxu0 0.0
      %v7195 = vand.u32 %v3878, 4294901760
      %v7196 = vsub.f32 %v3878, %v7195
      %v7197 = vand.u32 %v7196, 4294901760
      %7198 = vmatpush1.msra.mxu0 %v7197
      %7199 = vmatprep.subr.mxu0 0.0
      %v7200 = vand.u32 %v3879, 4294901760
      %v7201 = vsub.f32 %v3879, %v7200
      %v7202 = vand.u32 %v7201, 4294901760
      %7203 = vmatpush1.msra.mxu0 %v7202
      %7204 = vmatprep.subr.mxu0 0.0
      %v7205 = vand.u32 %v3880, 4294901760
      %v7206 = vsub.f32 %v3880, %v7205
      %v7207 = vand.u32 %v7206, 4294901760
      %7208 = vmatpush1.msra.mxu0 %v7207
      %7209 = vmatprep.subr.mxu0 0.0
      %v7210 = vand.u32 %v3881, 4294901760
      %v7211 = vsub.f32 %v3881, %v7210
      %v7212 = vand.u32 %v7211, 4294901760
      %7213 = vmatpush1.msra.mxu0 %v7212
      %7214 = vmatprep.subr.mxu0 0.0
      %v7215 = vand.u32 %v3882, 4294901760
      %v7216 = vsub.f32 %v3882, %v7215
      %v7217 = vand.u32 %v7216, 4294901760
      %7218 = vmatpush1.msra.mxu0 %v7217
      %v7219 = vand.u32 %v3754, 4294901760
      %7220 = vmatprep.mubr.f32.mxu0 %v7219
      %v7221 = vand.u32 %v3753, 4294901760
      %7222 = vmatmul.mubr.f32.gmra.mrb[0].mxu0 %v7221
      %v7223 = vpop.f32.mrb[0].mxu0
      %v7224 = vadd.f32 %v7056, %v7223
      %v7225 = vpop.f32.mrb[0].mxu0
      %7226 = vdwg.mxu0
      %7227 = vmatprep.subr.mxu0 0.0
      %v7228 = vand.u32 %v3851, 4294901760
      %7229 = vmatpush1.msra.mxu0 %v7228
      %7230 = vmatprep.subr.mxu0 0.0
      %v7231 = vand.u32 %v3852, 4294901760
      %7232 = vmatpush1.msra.mxu0 %v7231
      %7233 = vmatprep.subr.mxu0 0.0
      %v7234 = vand.u32 %v3853, 4294901760
      %7235 = vmatpush1.msra.mxu0 %v7234
      %7236 = vmatprep.subr.mxu0 0.0
      %v7237 = vand.u32 %v3854, 4294901760
      %7238 = vmatpush1.msra.mxu0 %v7237
      %7239 = vmatprep.subr.mxu0 0.0
      %v7240 = vand.u32 %v3855, 4294901760
      %7241 = vmatpush1.msra.mxu0 %v7240
      %7242 = vmatprep.subr.mxu0 0.0
      %v7243 = vand.u32 %v3856, 4294901760
      %7244 = vmatpush1.msra.mxu0 %v7243
      %7245 = vmatprep.subr.mxu0 0.0
      %v7246 = vand.u32 %v3857, 4294901760
      %7247 = vmatpush1.msra.mxu0 %v7246
      %7248 = vmatprep.subr.mxu0 0.0
      %v7249 = vand.u32 %v3858, 4294901760
      %7250 = vmatpush1.msra.mxu0 %v7249
      %7251 = vmatprep.subr.mxu0 0.0
      %v7252 = vand.u32 %v3859, 4294901760
      %7253 = vmatpush1.msra.mxu0 %v7252
      %7254 = vmatprep.subr.mxu0 0.0
      %v7255 = vand.u32 %v3860, 4294901760
      %7256 = vmatpush1.msra.mxu0 %v7255
      %7257 = vmatprep.subr.mxu0 0.0
      %v7258 = vand.u32 %v3861, 4294901760
      %7259 = vmatpush1.msra.mxu0 %v7258
      %7260 = vmatprep.subr.mxu0 0.0
      %v7261 = vand.u32 %v3862, 4294901760
      %7262 = vmatpush1.msra.mxu0 %v7261
      %7263 = vmatprep.subr.mxu0 0.0
      %v7264 = vand.u32 %v3863, 4294901760
      %7265 = vmatpush1.msra.mxu0 %v7264
      %7266 = vmatprep.subr.mxu0 0.0
      %v7267 = vand.u32 %v3864, 4294901760
      %7268 = vmatpush1.msra.mxu0 %v7267
      %7269 = vmatprep.subr.mxu0 0.0
      %v7270 = vand.u32 %v3865, 4294901760
      %7271 = vmatpush1.msra.mxu0 %v7270
      %7272 = vmatprep.subr.mxu0 0.0
      %v7273 = vand.u32 %v3866, 4294901760
      %7274 = vmatpush1.msra.mxu0 %v7273
      %7275 = vmatprep.subr.mxu0 0.0
      %v7276 = vand.u32 %v3867, 4294901760
      %7277 = vmatpush1.msra.mxu0 %v7276
      %7278 = vmatprep.subr.mxu0 0.0
      %v7279 = vand.u32 %v3868, 4294901760
      %7280 = vmatpush1.msra.mxu0 %v7279
      %7281 = vmatprep.subr.mxu0 0.0
      %v7282 = vand.u32 %v3869, 4294901760
      %7283 = vmatpush1.msra.mxu0 %v7282
      %7284 = vmatprep.subr.mxu0 0.0
      %v7285 = vand.u32 %v3870, 4294901760
      %7286 = vmatpush1.msra.mxu0 %v7285
      %7287 = vmatprep.subr.mxu0 0.0
      %v7288 = vand.u32 %v3871, 4294901760
      %7289 = vmatpush1.msra.mxu0 %v7288
      %7290 = vmatprep.subr.mxu0 0.0
      %v7291 = vand.u32 %v3872, 4294901760
      %7292 = vmatpush1.msra.mxu0 %v7291
      %7293 = vmatprep.subr.mxu0 0.0
      %v7294 = vand.u32 %v3873, 4294901760
      %7295 = vmatpush1.msra.mxu0 %v7294
      %7296 = vmatprep.subr.mxu0 0.0
      %v7297 = vand.u32 %v3874, 4294901760
      %7298 = vmatpush1.msra.mxu0 %v7297
      %7299 = vmatprep.subr.mxu0 0.0
      %v7300 = vand.u32 %v3875, 4294901760
      %7301 = vmatpush1.msra.mxu0 %v7300
      %7302 = vmatprep.subr.mxu0 0.0
      %v7303 = vand.u32 %v3876, 4294901760
      %7304 = vmatpush1.msra.mxu0 %v7303
      %7305 = vmatprep.subr.mxu0 0.0
      %v7306 = vand.u32 %v3877, 4294901760
      %7307 = vmatpush1.msra.mxu0 %v7306
      %7308 = vmatprep.subr.mxu0 0.0
      %v7309 = vand.u32 %v3878, 4294901760
      %7310 = vmatpush1.msra.mxu0 %v7309
      %7311 = vmatprep.subr.mxu0 0.0
      %v7312 = vand.u32 %v3879, 4294901760
      %7313 = vmatpush1.msra.mxu0 %v7312
      %7314 = vmatprep.subr.mxu0 0.0
      %v7315 = vand.u32 %v3880, 4294901760
      %7316 = vmatpush1.msra.mxu0 %v7315
      %7317 = vmatprep.subr.mxu0 0.0
      %v7318 = vand.u32 %v3881, 4294901760
      %7319 = vmatpush1.msra.mxu0 %v7318
      %7320 = vmatprep.subr.mxu0 0.0
      %v7321 = vand.u32 %v3882, 4294901760
      %7322 = vmatpush1.msra.mxu0 %v7321
      %v7323 = vand.u32 %v3754, 4294901760
      %7324 = vmatprep.mubr.f32.mxu0 %v7323
      %v7325 = vand.u32 %v3753, 4294901760
      %7326 = vmatmul.mubr.f32.gmra.mrb[0].mxu0 %v7325
      %v7327 = vpop.f32.mrb[0].mxu0
      %v7328 = vadd.f32 %v7224, %v7327
      %v7329 = vpop.f32.mrb[0].mxu0
      %7330 = vdwg.mxu0
      %v7331 = vmul.f32 %v7328, 0.999995
      %v7332 = vxor.u32 %v7331, 2147483648
      %v7333 = vmul.f32 %v7332, 1.442695
      %v7334 = vpow.pop %v7333
      %v7335 = vadd.f32 %v7334, 1.0
      %v7336 = vrcp.pop %v7335
      %v7337 = vmul.f32 1.0, %v7336
      %vm7338 = vcmask 261120
      %7339 = vst.msk [vmem:[%s165] sm:$0xff] %vm7338, %v7337
      %p7340 = scmp.lt.s32.totalorder %s14, 1
      %s7341 = scalar_select %p7340, %s14, 1
      %s7342 = smul.addr %s7341, 8
      %s7343 = scalar_lea.vmem %s3, %s7342
      // Predicated region
      $region33: #{mlp_forward.1} parent=31 // pred_check
        %p7344 = pneg %p100
      $region34: #{mlp_forward.1} parent=31 // pred_check_branch
        %7346 = sbr.rel (%p7344) target = $region36
      $region35: #{mlp_forward.1} parent=31 // pred_region
        _
      $region36: #{mlp_forward.1} parent=31 // pred_fallthru
        _
    $region32: #{mlp_forward.1} parent=5 // pred_fallthru
      _
    %p7347 = scmp.le.s32.totalorder 2, %s9
    // Predicated region
    $region37: #{mlp_forward.1} parent=5 // pred_check
      %p7348 = pneg %p7347
    $region38: #{mlp_forward.1} parent=5 // pred_check_branch
      %7350 = sbr.rel (%p7348) target = $region40
    $region39: #{mlp_forward.1} parent=5 // pred_region
      %s7351 = ssub.s32 %s9, 2
      // Predicated region
      $region41: #{mlp_forward.1} parent=39 // pred_check
        %p7352 = pneg %p106
      $region42: #{mlp_forward.1} parent=39 // pred_check_branch
        %7354 = sbr.rel (%p7352) target = $region44
      $region43: #{mlp_forward.1} parent=39 // pred_region
        %p7355 = scmp.lt.s32.totalorder %s15, 1
        %s7356 = scalar_select %p7355, %s15, 1
        %s7357 = smul.addr %s7356, 8
        %s7358 = scalar_lea.vmem %s3, %s7357
      $region44: #{mlp_forward.1} parent=39 // pred_fallthru
        _
    $region40: #{mlp_forward.1} parent=5 // pred_fallthru
      _
  $region6: #{mlp_forward.1} parent=0 // loop_footer
    %s13 = sadd.s32 1, %s9
  $region7: #{mlp_forward.1} parent=0 // loop_footer_branch
    %8 = sbr.rel target = $region3
  $region8: #{mlp_forward.1} parent=0 // loop_exit
    _

</llo_original>
